<compile_context>
chip_gen: v6e
topology: v6e:2x2x1
jax: 0.10.0
libtpu: 0.0.40
codegen_flags: <defaults>
</compile_context>

<pallas_src>
import numpy as np
import jax
import jax.numpy as jnp
from jax.experimental import pallas as pl
from jax.experimental.pallas import tpu as pltpu

KSIZE = 7
PAD = KSIZE // 2                      # 3
VMEM_BUDGET = 40 * 1024 * 1024        # per-step resident-bytes target (fits v7x's 64 MiB)
VMEM_LIMIT = 64 * 1024 * 1024         # scoped-VMEM limit handed to Mosaic (>= defaults)


def pixel_attention_kernel(xw_ref, pw_ref, wx_ref, wp_ref, b_ref, o_ref):
    """One (lane-tile, row-tile) block.

    xw_ref / pw_ref : (TH+6, W+6, TL)  halo'd, reflect-padded x / pattn1 (native dtype)
    wx_ref / wp_ref : (49, TL) f32     tap-major depthwise filters (x / pattn1 halves)
    b_ref           : (1, TL)  f32     bias
    o_ref           : (TH, W, TL)      sigmoid output (native dtype)
    """
    TH, W, TL = o_ref.shape
    wx = wx_ref[...]                  # (49, TL) f32, tiny, stays resident
    wp = wp_ref[...]

    acc = jnp.zeros((TH, W, TL), jnp.float32)
    # Unrolled 7x7 taps.  Outer loop over the W-shift j: load + cast the shifted
    # slab once; the 7 H-shifts are cheap leading-dim slices of that f32 slab.
    for j in range(KSIZE):
        xs = xw_ref[:, pl.ds(j, W), :].astype(jnp.float32)    # (TH+6, W, TL)
        ps = pw_ref[:, pl.ds(j, W), :].astype(jnp.float32)
        for i in range(KSIZE):
            k = i * KSIZE + j
            acc = acc + xs[i:i + TH] * wx[k:k + 1, :] + ps[i:i + TH] * wp[k:k + 1, :]

    acc = acc + b_ref[...]
    # Sigmoid: exp goes to the EUP.  (pl.reciprocal(1+e, approx=True) would also move
    # the divide to the EUP, at ~1e-3 accuracy cost -- kept exact to match PyTorch.)
    out = 1.0 / (1.0 + jnp.exp(-acc))
    o_ref[...] = out.astype(o_ref.dtype)


def _reflect_idx(n, pad, length):
    """Source indices of a reflect-pad (edge-excluding, PyTorch 'reflect') of an axis
    of size n; `length` may exceed n + 2*pad (extra rows are clamped -- they only
    feed output rows that are discarded)."""
    idx = np.arange(length) - pad
    idx = np.where(idx < 0, -idx, idx)
    idx = np.where(idx >= n, 2 * (n - 1) - idx, idx)
    return np.clip(idx, 0, n - 1)


def _pick_lane_tile(L):
    # Keep lane blocks dense (full dim or a 128-multiple) and modest (<= 512) so the
    # per-step VMEM footprint stays small on v7x.
    if L <= 512:
        return L
    for t in (512, 256, 128):
        if L % t == 0:
            return t
    return L   # ragged lane axis: correct, but masked partial stores


def _pick_row_tile(H, W, TL, in_item, out_item, budget):
    Wp = W + 2 * PAD

    def usage(th):
        inp = 2 * 2 * (th + 2 * PAD) * Wp * TL * in_item    # 2 inputs, double-buffered
        out = 2 * th * W * TL * out_item                    # double-buffered output
        tmp = (th + 2 * (th + 2 * PAD)) * W * TL * 4        # f32 acc + xs + ps slabs
        return inp + out + tmp

    th = min(H, 256)                  # cap so large H still gives many pipeline steps
    while th > 8 and usage(th) > budget:
        th = max(8, th // 2)
    return th


def pixel_attention(x, pattn1, weight, bias):
    """x, pattn1: (B, C, H, W); weight: (C, 2, 7, 7); bias: (C,).

    Returns (B, C, H, W) = sigmoid(grouped reflect-padded 7x7 conv of the interleaved
    [x, pattn1] stack) -- same semantics as the PyTorch module.
    """
    B, C, H, W = x.shape
    assert pattn1.shape == (B, C, H, W)
    assert weight.shape == (C, 2, KSIZE, KSIZE)
    assert bias.shape == (C,)
    out_dtype = x.dtype

    L = B * C                                       # batch folded into the lane axis
    TL = _pick_lane_tile(L)
    TH = _pick_row_tile(H, W, TL, jnp.dtype(x.dtype).itemsize,
                        jnp.dtype(out_dtype).itemsize, VMEM_BUDGET)
    nH = (H + TH - 1) // TH
    nL = L // TL
    Hp_out = nH * TH                                # output rows incl. tail padding
    Wp = W + 2 * PAD

    # Layout + reflect pad + halo windows fused into one gather pass per input:
    # (B,C,H,W) -> lanes-last (H,W,B*C), then gather reflect-padded columns and
    # overlapping (TH+6)-row windows.
    # TODO(synk): a manual halo DMA (memory_space=pl.ANY + make_async_copy) would
    # avoid re-reading the 6 duplicated halo rows per row tile and the lanes-last
    # transpose entirely.
    col_idx = jnp.asarray(_reflect_idx(W, PAD, Wp))
    row_win = jnp.asarray(
        _reflect_idx(H, PAD, Hp_out + 2 * PAD)[
            np.arange(nH)[:, None] * TH + np.arange(TH + 2 * PAD)[None, :]])

    def to_windows(a):
        al = jnp.transpose(a, (2, 3, 0, 1)).reshape(H, W, L)   # lane index = b*C + c
        return jnp.take(al, col_idx, axis=1)[row_win]          # (nH, TH+6, Wp, L)

    xw = to_windows(x)
    pw = to_windows(pattn1)

    # Grouped-filter split: weight[c, 0] multiplies x[:, c], weight[c, 1] multiplies
    # pattn1[:, c]; tiled B times along lanes to match lane = b*C + c.
    wx = jnp.tile(jnp.transpose(weight[:, 0], (1, 2, 0)).reshape(KSIZE * KSIZE, C),
                  (1, B)).astype(jnp.float32)
    wp = jnp.tile(jnp.transpose(weight[:, 1], (1, 2, 0)).reshape(KSIZE * KSIZE, C),
                  (1, B)).astype(jnp.float32)
    b2 = jnp.tile(bias.reshape(1, C), (1, B)).astype(jnp.float32)

    out_win = pl.pallas_call(
        pixel_attention_kernel,
        out_shape=jax.ShapeDtypeStruct((nH, TH, W, L), out_dtype),
        grid=(nL, nH),                              # row axis innermost: weights resident
        in_specs=[
            pl.BlockSpec((None, TH + 2 * PAD, Wp, TL), lambda l, h: (h, 0, 0, l)),
            pl.BlockSpec((None, TH + 2 * PAD, Wp, TL), lambda l, h: (h, 0, 0, l)),
            pl.BlockSpec((KSIZE * KSIZE, TL), lambda l, h: (0, l)),
            pl.BlockSpec((KSIZE * KSIZE, TL), lambda l, h: (0, l)),
            pl.BlockSpec((1, TL), lambda l, h: (0, l)),
        ],
        out_specs=pl.BlockSpec((None, TH, W, TL), lambda l, h: (h, 0, 0, l)),
        compiler_params=pltpu.CompilerParams(
            dimension_semantics=("parallel", "parallel"),
            vmem_limit_bytes=VMEM_LIMIT,
        ),
    )(xw, pw, wx, wp, b2)

    out = out_win.reshape(Hp_out, W, B, C)[:H]      # drop row-tile tail padding
    return jnp.transpose(out, (2, 3, 0, 1))         # back to NCHW


def _reference(x, pattn1, weight, bias):
    # Pure-JAX reference matching the PyTorch module exactly.
    B, C, H, W = x.shape
    x2 = jnp.stack([x, pattn1], axis=2).reshape(B, 2 * C, H, W)      # interleave
    x2p = jnp.pad(x2, ((0, 0), (0, 0), (PAD, PAD), (PAD, PAD)), mode="reflect")
    out = jax.lax.conv_general_dilated(
        x2p.astype(jnp.float32), weight.astype(jnp.float32),
        window_strides=(1, 1), padding="VALID",
        dimension_numbers=("NCHW", "OIHW", "NCHW"),
        feature_group_count=C,
        precision=jax.lax.Precision.HIGHEST)
    out = out + bias.reshape(1, C, 1, 1)
    return jax.nn.sigmoid(out).astype(x.dtype)


if __name__ == "__main__":
    # dim=4 -> module is Conv2d(8, 4, 7, padding=3, reflect, groups=4)
    B, C, H, W = 2, 4, 16, 16
    key = jax.random.PRNGKey(0)
    kx, kp, kw, kb = jax.random.split(key, 4)

    x = jax.random.normal(kx, (B, C, H, W), dtype=jnp.float32)
    pattn1 = jax.random.normal(kp, (B, C, H, W), dtype=jnp.float32)
    weight = jax.random.normal(kw, (C, 2, KSIZE, KSIZE), dtype=jnp.float32) * 0.1
    bias = jax.random.normal(kb, (C,), dtype=jnp.float32) * 0.1

    out = pixel_attention(x, pattn1, weight, bias)
    out = jax.block_until_ready(out)

    ref = _reference(x, pattn1, weight, bias)
    assert out.shape == (B, C, H, W)
    max_err = float(jnp.max(jnp.abs(out - ref)))
    assert jnp.allclose(out, ref, atol=1e-5, rtol=1e-5), f"max_err={max_err}"

    print("KERNEL_OK")
</pallas_src>

<mosaic_0001>
module attributes {stable_mosaic.version = 11 : i64} {
  func.func @pixel_attention_kernel(%arg0: i32, %arg1: i32, %arg2: memref<1x22x22x8xf32, #tpu.memory_space<vmem>>, %arg3: memref<1x22x22x8xf32, #tpu.memory_space<vmem>>, %arg4: memref<49x8xf32, #tpu.memory_space<vmem>>, %arg5: memref<49x8xf32, #tpu.memory_space<vmem>>, %arg6: memref<1x8xf32, #tpu.memory_space<vmem>>, %arg7: memref<1x16x16x8xf32, #tpu.memory_space<vmem>>) attributes {dimension_semantics = [#tpu.dimension_semantics<parallel>, #tpu.dimension_semantics<parallel>], iteration_bounds = array<i64: 1, 1>, scalar_prefetch = 0 : i64, scratch_operands = 0 : i64, tpu.core_type = #tpu.core_type<tc>, window_params = [{transform_indices = @transform_0, window_bounds = array<i64: 1, 22, 22, 8>}, {transform_indices = @transform_1, window_bounds = array<i64: 1, 22, 22, 8>}, {transform_indices = @transform_2, window_bounds = array<i64: 49, 8>}, {transform_indices = @transform_3, window_bounds = array<i64: 49, 8>}, {transform_indices = @transform_4, window_bounds = array<i64: 1, 8>}, {transform_indices = @transform_5, window_bounds = array<i64: 1, 16, 16, 8>}]} {
    %c0 = arith.constant 0 : index
    %c0_0 = arith.constant 0 : index
    %0 = vector.load %arg4[%c0, %c0_0] : memref<49x8xf32, #tpu.memory_space<vmem>>, vector<49x8xf32>
    %c0_1 = arith.constant 0 : index
    %c0_2 = arith.constant 0 : index
    %1 = vector.load %arg5[%c0_1, %c0_2] : memref<49x8xf32, #tpu.memory_space<vmem>>, vector<49x8xf32>
    %cst = arith.constant 0.000000e+00 : f32
    %2 = vector.broadcast %cst : f32 to vector<16x16x8xf32>
    %c0_3 = arith.constant 0 : index
    %c0_4 = arith.constant 0 : index
    %c0_5 = arith.constant 0 : index
    %c0_6 = arith.constant 0 : index
    %3 = vector.load %arg2[%c0_3, %c0_4, %c0_5, %c0_6] : memref<1x22x22x8xf32, #tpu.memory_space<vmem>>, vector<1x22x16x8xf32>
    %4 = vector.shape_cast %3 : vector<1x22x16x8xf32> to vector<22x16x8xf32>
    %c0_7 = arith.constant 0 : index
    %c0_8 = arith.constant 0 : index
    %c0_9 = arith.constant 0 : index
    %c0_10 = arith.constant 0 : index
    %5 = vector.load %arg3[%c0_7, %c0_8, %c0_9, %c0_10] : memref<1x22x22x8xf32, #tpu.memory_space<vmem>>, vector<1x22x16x8xf32>
    %6 = vector.shape_cast %5 : vector<1x22x16x8xf32> to vector<22x16x8xf32>
    %7 = vector.extract_strided_slice %4 {offsets = [0, 0, 0], sizes = [16, 16, 8], strides = [1, 1, 1]} : vector<22x16x8xf32> to vector<16x16x8xf32>
    %8 = vector.extract_strided_slice %0 {offsets = [0, 0], sizes = [1, 8], strides = [1, 1]} : vector<49x8xf32> to vector<1x8xf32>
    %9 = vector.shape_cast %8 : vector<1x8xf32> to vector<1x1x8xf32>
    %10 = vector.broadcast %9 : vector<1x1x8xf32> to vector<16x16x8xf32>
    %11 = arith.mulf %7, %10 : vector<16x16x8xf32>
    %12 = arith.addf %2, %11 : vector<16x16x8xf32>
    %13 = vector.extract_strided_slice %6 {offsets = [0, 0, 0], sizes = [16, 16, 8], strides = [1, 1, 1]} : vector<22x16x8xf32> to vector<16x16x8xf32>
    %14 = vector.extract_strided_slice %1 {offsets = [0, 0], sizes = [1, 8], strides = [1, 1]} : vector<49x8xf32> to vector<1x8xf32>
    %15 = vector.shape_cast %14 : vector<1x8xf32> to vector<1x1x8xf32>
    %16 = vector.broadcast %15 : vector<1x1x8xf32> to vector<16x16x8xf32>
    %17 = arith.mulf %13, %16 : vector<16x16x8xf32>
    %18 = arith.addf %12, %17 : vector<16x16x8xf32>
    %19 = vector.extract_strided_slice %4 {offsets = [1, 0, 0], sizes = [16, 16, 8], strides = [1, 1, 1]} : vector<22x16x8xf32> to vector<16x16x8xf32>
    %20 = vector.extract_strided_slice %0 {offsets = [7, 0], sizes = [1, 8], strides = [1, 1]} : vector<49x8xf32> to vector<1x8xf32>
    %21 = vector.shape_cast %20 : vector<1x8xf32> to vector<1x1x8xf32>
    %22 = vector.broadcast %21 : vector<1x1x8xf32> to vector<16x16x8xf32>
    %23 = arith.mulf %19, %22 : vector<16x16x8xf32>
    %24 = arith.addf %18, %23 : vector<16x16x8xf32>
    %25 = vector.extract_strided_slice %6 {offsets = [1, 0, 0], sizes = [16, 16, 8], strides = [1, 1, 1]} : vector<22x16x8xf32> to vector<16x16x8xf32>
    %26 = vector.extract_strided_slice %1 {offsets = [7, 0], sizes = [1, 8], strides = [1, 1]} : vector<49x8xf32> to vector<1x8xf32>
    %27 = vector.shape_cast %26 : vector<1x8xf32> to vector<1x1x8xf32>
    %28 = vector.broadcast %27 : vector<1x1x8xf32> to vector<16x16x8xf32>
    %29 = arith.mulf %25, %28 : vector<16x16x8xf32>
    %30 = arith.addf %24, %29 : vector<16x16x8xf32>
    %31 = vector.extract_strided_slice %4 {offsets = [2, 0, 0], sizes = [16, 16, 8], strides = [1, 1, 1]} : vector<22x16x8xf32> to vector<16x16x8xf32>
    %32 = vector.extract_strided_slice %0 {offsets = [14, 0], sizes = [1, 8], strides = [1, 1]} : vector<49x8xf32> to vector<1x8xf32>
    %33 = vector.shape_cast %32 : vector<1x8xf32> to vector<1x1x8xf32>
    %34 = vector.broadcast %33 : vector<1x1x8xf32> to vector<16x16x8xf32>
    %35 = arith.mulf %31, %34 : vector<16x16x8xf32>
    %36 = arith.addf %30, %35 : vector<16x16x8xf32>
    %37 = vector.extract_strided_slice %6 {offsets = [2, 0, 0], sizes = [16, 16, 8], strides = [1, 1, 1]} : vector<22x16x8xf32> to vector<16x16x8xf32>
    %38 = vector.extract_strided_slice %1 {offsets = [14, 0], sizes = [1, 8], strides = [1, 1]} : vector<49x8xf32> to vector<1x8xf32>
    %39 = vector.shape_cast %38 : vector<1x8xf32> to vector<1x1x8xf32>
    %40 = vector.broadcast %39 : vector<1x1x8xf32> to vector<16x16x8xf32>
    %41 = arith.mulf %37, %40 : vector<16x16x8xf32>
    %42 = arith.addf %36, %41 : vector<16x16x8xf32>
    %43 = vector.extract_strided_slice %4 {offsets = [3, 0, 0], sizes = [16, 16, 8], strides = [1, 1, 1]} : vector<22x16x8xf32> to vector<16x16x8xf32>
    %44 = vector.extract_strided_slice %0 {offsets = [21, 0], sizes = [1, 8], strides = [1, 1]} : vector<49x8xf32> to vector<1x8xf32>
    %45 = vector.shape_cast %44 : vector<1x8xf32> to vector<1x1x8xf32>
    %46 = vector.broadcast %45 : vector<1x1x8xf32> to vector<16x16x8xf32>
    %47 = arith.mulf %43, %46 : vector<16x16x8xf32>
    %48 = arith.addf %42, %47 : vector<16x16x8xf32>
    %49 = vector.extract_strided_slice %6 {offsets = [3, 0, 0], sizes = [16, 16, 8], strides = [1, 1, 1]} : vector<22x16x8xf32> to vector<16x16x8xf32>
    %50 = vector.extract_strided_slice %1 {offsets = [21, 0], sizes = [1, 8], strides = [1, 1]} : vector<49x8xf32> to vector<1x8xf32>
    %51 = vector.shape_cast %50 : vector<1x8xf32> to vector<1x1x8xf32>
    %52 = vector.broadcast %51 : vector<1x1x8xf32> to vector<16x16x8xf32>
    %53 = arith.mulf %49, %52 : vector<16x16x8xf32>
    %54 = arith.addf %48, %53 : vector<16x16x8xf32>
    %55 = vector.extract_strided_slice %4 {offsets = [4, 0, 0], sizes = [16, 16, 8], strides = [1, 1, 1]} : vector<22x16x8xf32> to vector<16x16x8xf32>
    %56 = vector.extract_strided_slice %0 {offsets = [28, 0], sizes = [1, 8], strides = [1, 1]} : vector<49x8xf32> to vector<1x8xf32>
    %57 = vector.shape_cast %56 : vector<1x8xf32> to vector<1x1x8xf32>
    %58 = vector.broadcast %57 : vector<1x1x8xf32> to vector<16x16x8xf32>
    %59 = arith.mulf %55, %58 : vector<16x16x8xf32>
    %60 = arith.addf %54, %59 : vector<16x16x8xf32>
    %61 = vector.extract_strided_slice %6 {offsets = [4, 0, 0], sizes = [16, 16, 8], strides = [1, 1, 1]} : vector<22x16x8xf32> to vector<16x16x8xf32>
    %62 = vector.extract_strided_slice %1 {offsets = [28, 0], sizes = [1, 8], strides = [1, 1]} : vector<49x8xf32> to vector<1x8xf32>
    %63 = vector.shape_cast %62 : vector<1x8xf32> to vector<1x1x8xf32>
    %64 = vector.broadcast %63 : vector<1x1x8xf32> to vector<16x16x8xf32>
    %65 = arith.mulf %61, %64 : vector<16x16x8xf32>
    %66 = arith.addf %60, %65 : vector<16x16x8xf32>
    %67 = vector.extract_strided_slice %4 {offsets = [5, 0, 0], sizes = [16, 16, 8], strides = [1, 1, 1]} : vector<22x16x8xf32> to vector<16x16x8xf32>
    %68 = vector.extract_strided_slice %0 {offsets = [35, 0], sizes = [1, 8], strides = [1, 1]} : vector<49x8xf32> to vector<1x8xf32>
    %69 = vector.shape_cast %68 : vector<1x8xf32> to vector<1x1x8xf32>
    %70 = vector.broadcast %69 : vector<1x1x8xf32> to vector<16x16x8xf32>
    %71 = arith.mulf %67, %70 : vector<16x16x8xf32>
    %72 = arith.addf %66, %71 : vector<16x16x8xf32>
    %73 = vector.extract_strided_slice %6 {offsets = [5, 0, 0], sizes = [16, 16, 8], strides = [1, 1, 1]} : vector<22x16x8xf32> to vector<16x16x8xf32>
    %74 = vector.extract_strided_slice %1 {offsets = [35, 0], sizes = [1, 8], strides = [1, 1]} : vector<49x8xf32> to vector<1x8xf32>
    %75 = vector.shape_cast %74 : vector<1x8xf32> to vector<1x1x8xf32>
    %76 = vector.broadcast %75 : vector<1x1x8xf32> to vector<16x16x8xf32>
    %77 = arith.mulf %73, %76 : vector<16x16x8xf32>
    %78 = arith.addf %72, %77 : vector<16x16x8xf32>
    %79 = vector.extract_strided_slice %4 {offsets = [6, 0, 0], sizes = [16, 16, 8], strides = [1, 1, 1]} : vector<22x16x8xf32> to vector<16x16x8xf32>
    %80 = vector.extract_strided_slice %0 {offsets = [42, 0], sizes = [1, 8], strides = [1, 1]} : vector<49x8xf32> to vector<1x8xf32>
    %81 = vector.shape_cast %80 : vector<1x8xf32> to vector<1x1x8xf32>
    %82 = vector.broadcast %81 : vector<1x1x8xf32> to vector<16x16x8xf32>
    %83 = arith.mulf %79, %82 : vector<16x16x8xf32>
    %84 = arith.addf %78, %83 : vector<16x16x8xf32>
    %85 = vector.extract_strided_slice %6 {offsets = [6, 0, 0], sizes = [16, 16, 8], strides = [1, 1, 1]} : vector<22x16x8xf32> to vector<16x16x8xf32>
    %86 = vector.extract_strided_slice %1 {offsets = [42, 0], sizes = [1, 8], strides = [1, 1]} : vector<49x8xf32> to vector<1x8xf32>
    %87 = vector.shape_cast %86 : vector<1x8xf32> to vector<1x1x8xf32>
    %88 = vector.broadcast %87 : vector<1x1x8xf32> to vector<16x16x8xf32>
    %89 = arith.mulf %85, %88 : vector<16x16x8xf32>
    %90 = arith.addf %84, %89 : vector<16x16x8xf32>
    %c0_11 = arith.constant 0 : index
    %c0_12 = arith.constant 0 : index
    %c1 = arith.constant 1 : index
    %c0_13 = arith.constant 0 : index
    %91 = vector.load %arg2[%c0_11, %c0_12, %c1, %c0_13] : memref<1x22x22x8xf32, #tpu.memory_space<vmem>>, vector<1x22x16x8xf32>
    %92 = vector.shape_cast %91 : vector<1x22x16x8xf32> to vector<22x16x8xf32>
    %c0_14 = arith.constant 0 : index
    %c0_15 = arith.constant 0 : index
    %c1_16 = arith.constant 1 : index
    %c0_17 = arith.constant 0 : index
    %93 = vector.load %arg3[%c0_14, %c0_15, %c1_16, %c0_17] : memref<1x22x22x8xf32, #tpu.memory_space<vmem>>, vector<1x22x16x8xf32>
    %94 = vector.shape_cast %93 : vector<1x22x16x8xf32> to vector<22x16x8xf32>
    %95 = vector.extract_strided_slice %92 {offsets = [0, 0, 0], sizes = [16, 16, 8], strides = [1, 1, 1]} : vector<22x16x8xf32> to vector<16x16x8xf32>
    %96 = vector.extract_strided_slice %0 {offsets = [1, 0], sizes = [1, 8], strides = [1, 1]} : vector<49x8xf32> to vector<1x8xf32>
    %97 = vector.shape_cast %96 : vector<1x8xf32> to vector<1x1x8xf32>
    %98 = vector.broadcast %97 : vector<1x1x8xf32> to vector<16x16x8xf32>
    %99 = arith.mulf %95, %98 : vector<16x16x8xf32>
    %100 = arith.addf %90, %99 : vector<16x16x8xf32>
    %101 = vector.extract_strided_slice %94 {offsets = [0, 0, 0], sizes = [16, 16, 8], strides = [1, 1, 1]} : vector<22x16x8xf32> to vector<16x16x8xf32>
    %102 = vector.extract_strided_slice %1 {offsets = [1, 0], sizes = [1, 8], strides = [1, 1]} : vector<49x8xf32> to vector<1x8xf32>
    %103 = vector.shape_cast %102 : vector<1x8xf32> to vector<1x1x8xf32>
    %104 = vector.broadcast %103 : vector<1x1x8xf32> to vector<16x16x8xf32>
    %105 = arith.mulf %101, %104 : vector<16x16x8xf32>
    %106 = arith.addf %100, %105 : vector<16x16x8xf32>
    %107 = vector.extract_strided_slice %92 {offsets = [1, 0, 0], sizes = [16, 16, 8], strides = [1, 1, 1]} : vector<22x16x8xf32> to vector<16x16x8xf32>
    %108 = vector.extract_strided_slice %0 {offsets = [8, 0], sizes = [1, 8], strides = [1, 1]} : vector<49x8xf32> to vector<1x8xf32>
    %109 = vector.shape_cast %108 : vector<1x8xf32> to vector<1x1x8xf32>
    %110 = vector.broadcast %109 : vector<1x1x8xf32> to vector<16x16x8xf32>
    %111 = arith.mulf %107, %110 : vector<16x16x8xf32>
    %112 = arith.addf %106, %111 : vector<16x16x8xf32>
    %113 = vector.extract_strided_slice %94 {offsets = [1, 0, 0], sizes = [16, 16, 8], strides = [1, 1, 1]} : vector<22x16x8xf32> to vector<16x16x8xf32>
    %114 = vector.extract_strided_slice %1 {offsets = [8, 0], sizes = [1, 8], strides = [1, 1]} : vector<49x8xf32> to vector<1x8xf32>
    %115 = vector.shape_cast %114 : vector<1x8xf32> to vector<1x1x8xf32>
    %116 = vector.broadcast %115 : vector<1x1x8xf32> to vector<16x16x8xf32>
    %117 = arith.mulf %113, %116 : vector<16x16x8xf32>
    %118 = arith.addf %112, %117 : vector<16x16x8xf32>
    %119 = vector.extract_strided_slice %92 {offsets = [2, 0, 0], sizes = [16, 16, 8], strides = [1, 1, 1]} : vector<22x16x8xf32> to vector<16x16x8xf32>
    %120 = vector.extract_strided_slice %0 {offsets = [15, 0], sizes = [1, 8], strides = [1, 1]} : vector<49x8xf32> to vector<1x8xf32>
    %121 = vector.shape_cast %120 : vector<1x8xf32> to vector<1x1x8xf32>
    %122 = vector.broadcast %121 : vector<1x1x8xf32> to vector<16x16x8xf32>
    %123 = arith.mulf %119, %122 : vector<16x16x8xf32>
    %124 = arith.addf %118, %123 : vector<16x16x8xf32>
    %125 = vector.extract_strided_slice %94 {offsets = [2, 0, 0], sizes = [16, 16, 8], strides = [1, 1, 1]} : vector<22x16x8xf32> to vector<16x16x8xf32>
    %126 = vector.extract_strided_slice %1 {offsets = [15, 0], sizes = [1, 8], strides = [1, 1]} : vector<49x8xf32> to vector<1x8xf32>
    %127 = vector.shape_cast %126 : vector<1x8xf32> to vector<1x1x8xf32>
    %128 = vector.broadcast %127 : vector<1x1x8xf32> to vector<16x16x8xf32>
    %129 = arith.mulf %125, %128 : vector<16x16x8xf32>
    %130 = arith.addf %124, %129 : vector<16x16x8xf32>
    %131 = vector.extract_strided_slice %92 {offsets = [3, 0, 0], sizes = [16, 16, 8], strides = [1, 1, 1]} : vector<22x16x8xf32> to vector<16x16x8xf32>
    %132 = vector.extract_strided_slice %0 {offsets = [22, 0], sizes = [1, 8], strides = [1, 1]} : vector<49x8xf32> to vector<1x8xf32>
    %133 = vector.shape_cast %132 : vector<1x8xf32> to vector<1x1x8xf32>
    %134 = vector.broadcast %133 : vector<1x1x8xf32> to vector<16x16x8xf32>
    %135 = arith.mulf %131, %134 : vector<16x16x8xf32>
    %136 = arith.addf %130, %135 : vector<16x16x8xf32>
    %137 = vector.extract_strided_slice %94 {offsets = [3, 0, 0], sizes = [16, 16, 8], strides = [1, 1, 1]} : vector<22x16x8xf32> to vector<16x16x8xf32>
    %138 = vector.extract_strided_slice %1 {offsets = [22, 0], sizes = [1, 8], strides = [1, 1]} : vector<49x8xf32> to vector<1x8xf32>
    %139 = vector.shape_cast %138 : vector<1x8xf32> to vector<1x1x8xf32>
    %140 = vector.broadcast %139 : vector<1x1x8xf32> to vector<16x16x8xf32>
    %141 = arith.mulf %137, %140 : vector<16x16x8xf32>
    %142 = arith.addf %136, %141 : vector<16x16x8xf32>
    %143 = vector.extract_strided_slice %92 {offsets = [4, 0, 0], sizes = [16, 16, 8], strides = [1, 1, 1]} : vector<22x16x8xf32> to vector<16x16x8xf32>
    %144 = vector.extract_strided_slice %0 {offsets = [29, 0], sizes = [1, 8], strides = [1, 1]} : vector<49x8xf32> to vector<1x8xf32>
    %145 = vector.shape_cast %144 : vector<1x8xf32> to vector<1x1x8xf32>
    %146 = vector.broadcast %145 : vector<1x1x8xf32> to vector<16x16x8xf32>
    %147 = arith.mulf %143, %146 : vector<16x16x8xf32>
    %148 = arith.addf %142, %147 : vector<16x16x8xf32>
    %149 = vector.extract_strided_slice %94 {offsets = [4, 0, 0], sizes = [16, 16, 8], strides = [1, 1, 1]} : vector<22x16x8xf32> to vector<16x16x8xf32>
    %150 = vector.extract_strided_slice %1 {offsets = [29, 0], sizes = [1, 8], strides = [1, 1]} : vector<49x8xf32> to vector<1x8xf32>
    %151 = vector.shape_cast %150 : vector<1x8xf32> to vector<1x1x8xf32>
    %152 = vector.broadcast %151 : vector<1x1x8xf32> to vector<16x16x8xf32>
    %153 = arith.mulf %149, %152 : vector<16x16x8xf32>
    %154 = arith.addf %148, %153 : vector<16x16x8xf32>
    %155 = vector.extract_strided_slice %92 {offsets = [5, 0, 0], sizes = [16, 16, 8], strides = [1, 1, 1]} : vector<22x16x8xf32> to vector<16x16x8xf32>
    %156 = vector.extract_strided_slice %0 {offsets = [36, 0], sizes = [1, 8], strides = [1, 1]} : vector<49x8xf32> to vector<1x8xf32>
    %157 = vector.shape_cast %156 : vector<1x8xf32> to vector<1x1x8xf32>
    %158 = vector.broadcast %157 : vector<1x1x8xf32> to vector<16x16x8xf32>
    %159 = arith.mulf %155, %158 : vector<16x16x8xf32>
    %160 = arith.addf %154, %159 : vector<16x16x8xf32>
    %161 = vector.extract_strided_slice %94 {offsets = [5, 0, 0], sizes = [16, 16, 8], strides = [1, 1, 1]} : vector<22x16x8xf32> to vector<16x16x8xf32>
    %162 = vector.extract_strided_slice %1 {offsets = [36, 0], sizes = [1, 8], strides = [1, 1]} : vector<49x8xf32> to vector<1x8xf32>
    %163 = vector.shape_cast %162 : vector<1x8xf32> to vector<1x1x8xf32>
    %164 = vector.broadcast %163 : vector<1x1x8xf32> to vector<16x16x8xf32>
    %165 = arith.mulf %161, %164 : vector<16x16x8xf32>
    %166 = arith.addf %160, %165 : vector<16x16x8xf32>
    %167 = vector.extract_strided_slice %92 {offsets = [6, 0, 0], sizes = [16, 16, 8], strides = [1, 1, 1]} : vector<22x16x8xf32> to vector<16x16x8xf32>
    %168 = vector.extract_strided_slice %0 {offsets = [43, 0], sizes = [1, 8], strides = [1, 1]} : vector<49x8xf32> to vector<1x8xf32>
    %169 = vector.shape_cast %168 : vector<1x8xf32> to vector<1x1x8xf32>
    %170 = vector.broadcast %169 : vector<1x1x8xf32> to vector<16x16x8xf32>
    %171 = arith.mulf %167, %170 : vector<16x16x8xf32>
    %172 = arith.addf %166, %171 : vector<16x16x8xf32>
    %173 = vector.extract_strided_slice %94 {offsets = [6, 0, 0], sizes = [16, 16, 8], strides = [1, 1, 1]} : vector<22x16x8xf32> to vector<16x16x8xf32>
    %174 = vector.extract_strided_slice %1 {offsets = [43, 0], sizes = [1, 8], strides = [1, 1]} : vector<49x8xf32> to vector<1x8xf32>
    %175 = vector.shape_cast %174 : vector<1x8xf32> to vector<1x1x8xf32>
    %176 = vector.broadcast %175 : vector<1x1x8xf32> to vector<16x16x8xf32>
    %177 = arith.mulf %173, %176 : vector<16x16x8xf32>
    %178 = arith.addf %172, %177 : vector<16x16x8xf32>
    %c0_18 = arith.constant 0 : index
    %c0_19 = arith.constant 0 : index
    %c2 = arith.constant 2 : index
    %c0_20 = arith.constant 0 : index
    %179 = vector.load %arg2[%c0_18, %c0_19, %c2, %c0_20] : memref<1x22x22x8xf32, #tpu.memory_space<vmem>>, vector<1x22x16x8xf32>
    %180 = vector.shape_cast %179 : vector<1x22x16x8xf32> to vector<22x16x8xf32>
    %c0_21 = arith.constant 0 : index
    %c0_22 = arith.constant 0 : index
    %c2_23 = arith.constant 2 : index
    %c0_24 = arith.constant 0 : index
    %181 = vector.load %arg3[%c0_21, %c0_22, %c2_23, %c0_24] : memref<1x22x22x8xf32, #tpu.memory_space<vmem>>, vector<1x22x16x8xf32>
    %182 = vector.shape_cast %181 : vector<1x22x16x8xf32> to vector<22x16x8xf32>
    %183 = vector.extract_strided_slice %180 {offsets = [0, 0, 0], sizes = [16, 16, 8], strides = [1, 1, 1]} : vector<22x16x8xf32> to vector<16x16x8xf32>
    %184 = vector.extract_strided_slice %0 {offsets = [2, 0], sizes = [1, 8], strides = [1, 1]} : vector<49x8xf32> to vector<1x8xf32>
    %185 = vector.shape_cast %184 : vector<1x8xf32> to vector<1x1x8xf32>
    %186 = vector.broadcast %185 : vector<1x1x8xf32> to vector<16x16x8xf32>
    %187 = arith.mulf %183, %186 : vector<16x16x8xf32>
    %188 = arith.addf %178, %187 : vector<16x16x8xf32>
    %189 = vector.extract_strided_slice %182 {offsets = [0, 0, 0], sizes = [16, 16, 8], strides = [1, 1, 1]} : vector<22x16x8xf32> to vector<16x16x8xf32>
    %190 = vector.extract_strided_slice %1 {offsets = [2, 0], sizes = [1, 8], strides = [1, 1]} : vector<49x8xf32> to vector<1x8xf32>
    %191 = vector.shape_cast %190 : vector<1x8xf32> to vector<1x1x8xf32>
    %192 = vector.broadcast %191 : vector<1x1x8xf32> to vector<16x16x8xf32>
    %193 = arith.mulf %189, %192 : vector<16x16x8xf32>
    %194 = arith.addf %188, %193 : vector<16x16x8xf32>
    %195 = vector.extract_strided_slice %180 {offsets = [1, 0, 0], sizes = [16, 16, 8], strides = [1, 1, 1]} : vector<22x16x8xf32> to vector<16x16x8xf32>
    %196 = vector.extract_strided_slice %0 {offsets = [9, 0], sizes = [1, 8], strides = [1, 1]} : vector<49x8xf32> to vector<1x8xf32>
    %197 = vector.shape_cast %196 : vector<1x8xf32> to vector<1x1x8xf32>
    %198 = vector.broadcast %197 : vector<1x1x8xf32> to vector<16x16x8xf32>
    %199 = arith.mulf %195, %198 : vector<16x16x8xf32>
    %200 = arith.addf %194, %199 : vector<16x16x8xf32>
    %201 = vector.extract_strided_slice %182 {offsets = [1, 0, 0], sizes = [16, 16, 8], strides = [1, 1, 1]} : vector<22x16x8xf32> to vector<16x16x8xf32>
    %202 = vector.extract_strided_slice %1 {offsets = [9, 0], sizes = [1, 8], strides = [1, 1]} : vector<49x8xf32> to vector<1x8xf32>
    %203 = vector.shape_cast %202 : vector<1x8xf32> to vector<1x1x8xf32>
    %204 = vector.broadcast %203 : vector<1x1x8xf32> to vector<16x16x8xf32>
    %205 = arith.mulf %201, %204 : vector<16x16x8xf32>
    %206 = arith.addf %200, %205 : vector<16x16x8xf32>
    %207 = vector.extract_strided_slice %180 {offsets = [2, 0, 0], sizes = [16, 16, 8], strides = [1, 1, 1]} : vector<22x16x8xf32> to vector<16x16x8xf32>
    %208 = vector.extract_strided_slice %0 {offsets = [16, 0], sizes = [1, 8], strides = [1, 1]} : vector<49x8xf32> to vector<1x8xf32>
    %209 = vector.shape_cast %208 : vector<1x8xf32> to vector<1x1x8xf32>
    %210 = vector.broadcast %209 : vector<1x1x8xf32> to vector<16x16x8xf32>
    %211 = arith.mulf %207, %210 : vector<16x16x8xf32>
    %212 = arith.addf %206, %211 : vector<16x16x8xf32>
    %213 = vector.extract_strided_slice %182 {offsets = [2, 0, 0], sizes = [16, 16, 8], strides = [1, 1, 1]} : vector<22x16x8xf32> to vector<16x16x8xf32>
    %214 = vector.extract_strided_slice %1 {offsets = [16, 0], sizes = [1, 8], strides = [1, 1]} : vector<49x8xf32> to vector<1x8xf32>
    %215 = vector.shape_cast %214 : vector<1x8xf32> to vector<1x1x8xf32>
    %216 = vector.broadcast %215 : vector<1x1x8xf32> to vector<16x16x8xf32>
    %217 = arith.mulf %213, %216 : vector<16x16x8xf32>
    %218 = arith.addf %212, %217 : vector<16x16x8xf32>
    %219 = vector.extract_strided_slice %180 {offsets = [3, 0, 0], sizes = [16, 16, 8], strides = [1, 1, 1]} : vector<22x16x8xf32> to vector<16x16x8xf32>
    %220 = vector.extract_strided_slice %0 {offsets = [23, 0], sizes = [1, 8], strides = [1, 1]} : vector<49x8xf32> to vector<1x8xf32>
    %221 = vector.shape_cast %220 : vector<1x8xf32> to vector<1x1x8xf32>
    %222 = vector.broadcast %221 : vector<1x1x8xf32> to vector<16x16x8xf32>
    %223 = arith.mulf %219, %222 : vector<16x16x8xf32>
    %224 = arith.addf %218, %223 : vector<16x16x8xf32>
    %225 = vector.extract_strided_slice %182 {offsets = [3, 0, 0], sizes = [16, 16, 8], strides = [1, 1, 1]} : vector<22x16x8xf32> to vector<16x16x8xf32>
    %226 = vector.extract_strided_slice %1 {offsets = [23, 0], sizes = [1, 8], strides = [1, 1]} : vector<49x8xf32> to vector<1x8xf32>
    %227 = vector.shape_cast %226 : vector<1x8xf32> to vector<1x1x8xf32>
    %228 = vector.broadcast %227 : vector<1x1x8xf32> to vector<16x16x8xf32>
    %229 = arith.mulf %225, %228 : vector<16x16x8xf32>
    %230 = arith.addf %224, %229 : vector<16x16x8xf32>
    %231 = vector.extract_strided_slice %180 {offsets = [4, 0, 0], sizes = [16, 16, 8], strides = [1, 1, 1]} : vector<22x16x8xf32> to vector<16x16x8xf32>
    %232 = vector.extract_strided_slice %0 {offsets = [30, 0], sizes = [1, 8], strides = [1, 1]} : vector<49x8xf32> to vector<1x8xf32>
    %233 = vector.shape_cast %232 : vector<1x8xf32> to vector<1x1x8xf32>
    %234 = vector.broadcast %233 : vector<1x1x8xf32> to vector<16x16x8xf32>
    %235 = arith.mulf %231, %234 : vector<16x16x8xf32>
    %236 = arith.addf %230, %235 : vector<16x16x8xf32>
    %237 = vector.extract_strided_slice %182 {offsets = [4, 0, 0], sizes = [16, 16, 8], strides = [1, 1, 1]} : vector<22x16x8xf32> to vector<16x16x8xf32>
    %238 = vector.extract_strided_slice %1 {offsets = [30, 0], sizes = [1, 8], strides = [1, 1]} : vector<49x8xf32> to vector<1x8xf32>
    %239 = vector.shape_cast %238 : vector<1x8xf32> to vector<1x1x8xf32>
    %240 = vector.broadcast %239 : vector<1x1x8xf32> to vector<16x16x8xf32>
    %241 = arith.mulf %237, %240 : vector<16x16x8xf32>
    %242 = arith.addf %236, %241 : vector<16x16x8xf32>
    %243 = vector.extract_strided_slice %180 {offsets = [5, 0, 0], sizes = [16, 16, 8], strides = [1, 1, 1]} : vector<22x16x8xf32> to vector<16x16x8xf32>
    %244 = vector.extract_strided_slice %0 {offsets = [37, 0], sizes = [1, 8], strides = [1, 1]} : vector<49x8xf32> to vector<1x8xf32>
    %245 = vector.shape_cast %244 : vector<1x8xf32> to vector<1x1x8xf32>
    %246 = vector.broadcast %245 : vector<1x1x8xf32> to vector<16x16x8xf32>
    %247 = arith.mulf %243, %246 : vector<16x16x8xf32>
    %248 = arith.addf %242, %247 : vector<16x16x8xf32>
    %249 = vector.extract_strided_slice %182 {offsets = [5, 0, 0], sizes = [16, 16, 8], strides = [1, 1, 1]} : vector<22x16x8xf32> to vector<16x16x8xf32>
    %250 = vector.extract_strided_slice %1 {offsets = [37, 0], sizes = [1, 8], strides = [1, 1]} : vector<49x8xf32> to vector<1x8xf32>
    %251 = vector.shape_cast %250 : vector<1x8xf32> to vector<1x1x8xf32>
    %252 = vector.broadcast %251 : vector<1x1x8xf32> to vector<16x16x8xf32>
    %253 = arith.mulf %249, %252 : vector<16x16x8xf32>
    %254 = arith.addf %248, %253 : vector<16x16x8xf32>
    %255 = vector.extract_strided_slice %180 {offsets = [6, 0, 0], sizes = [16, 16, 8], strides = [1, 1, 1]} : vector<22x16x8xf32> to vector<16x16x8xf32>
    %256 = vector.extract_strided_slice %0 {offsets = [44, 0], sizes = [1, 8], strides = [1, 1]} : vector<49x8xf32> to vector<1x8xf32>
    %257 = vector.shape_cast %256 : vector<1x8xf32> to vector<1x1x8xf32>
    %258 = vector.broadcast %257 : vector<1x1x8xf32> to vector<16x16x8xf32>
    %259 = arith.mulf %255, %258 : vector<16x16x8xf32>
    %260 = arith.addf %254, %259 : vector<16x16x8xf32>
    %261 = vector.extract_strided_slice %182 {offsets = [6, 0, 0], sizes = [16, 16, 8], strides = [1, 1, 1]} : vector<22x16x8xf32> to vector<16x16x8xf32>
    %262 = vector.extract_strided_slice %1 {offsets = [44, 0], sizes = [1, 8], strides = [1, 1]} : vector<49x8xf32> to vector<1x8xf32>
    %263 = vector.shape_cast %262 : vector<1x8xf32> to vector<1x1x8xf32>
    %264 = vector.broadcast %263 : vector<1x1x8xf32> to vector<16x16x8xf32>
    %265 = arith.mulf %261, %264 : vector<16x16x8xf32>
    %266 = arith.addf %260, %265 : vector<16x16x8xf32>
    %c0_25 = arith.constant 0 : index
    %c0_26 = arith.constant 0 : index
    %c3 = arith.constant 3 : index
    %c0_27 = arith.constant 0 : index
    %267 = vector.load %arg2[%c0_25, %c0_26, %c3, %c0_27] : memref<1x22x22x8xf32, #tpu.memory_space<vmem>>, vector<1x22x16x8xf32>
    %268 = vector.shape_cast %267 : vector<1x22x16x8xf32> to vector<22x16x8xf32>
    %c0_28 = arith.constant 0 : index
    %c0_29 = arith.constant 0 : index
    %c3_30 = arith.constant 3 : index
    %c0_31 = arith.constant 0 : index
    %269 = vector.load %arg3[%c0_28, %c0_29, %c3_30, %c0_31] : memref<1x22x22x8xf32, #tpu.memory_space<vmem>>, vector<1x22x16x8xf32>
    %270 = vector.shape_cast %269 : vector<1x22x16x8xf32> to vector<22x16x8xf32>
    %271 = vector.extract_strided_slice %268 {offsets = [0, 0, 0], sizes = [16, 16, 8], strides = [1, 1, 1]} : vector<22x16x8xf32> to vector<16x16x8xf32>
    %272 = vector.extract_strided_slice %0 {offsets = [3, 0], sizes = [1, 8], strides = [1, 1]} : vector<49x8xf32> to vector<1x8xf32>
    %273 = vector.shape_cast %272 : vector<1x8xf32> to vector<1x1x8xf32>
    %274 = vector.broadcast %273 : vector<1x1x8xf32> to vector<16x16x8xf32>
    %275 = arith.mulf %271, %274 : vector<16x16x8xf32>
    %276 = arith.addf %266, %275 : vector<16x16x8xf32>
    %277 = vector.extract_strided_slice %270 {offsets = [0, 0, 0], sizes = [16, 16, 8], strides = [1, 1, 1]} : vector<22x16x8xf32> to vector<16x16x8xf32>
    %278 = vector.extract_strided_slice %1 {offsets = [3, 0], sizes = [1, 8], strides = [1, 1]} : vector<49x8xf32> to vector<1x8xf32>
    %279 = vector.shape_cast %278 : vector<1x8xf32> to vector<1x1x8xf32>
    %280 = vector.broadcast %279 : vector<1x1x8xf32> to vector<16x16x8xf32>
    %281 = arith.mulf %277, %280 : vector<16x16x8xf32>
    %282 = arith.addf %276, %281 : vector<16x16x8xf32>
    %283 = vector.extract_strided_slice %268 {offsets = [1, 0, 0], sizes = [16, 16, 8], strides = [1, 1, 1]} : vector<22x16x8xf32> to vector<16x16x8xf32>
    %284 = vector.extract_strided_slice %0 {offsets = [10, 0], sizes = [1, 8], strides = [1, 1]} : vector<49x8xf32> to vector<1x8xf32>
    %285 = vector.shape_cast %284 : vector<1x8xf32> to vector<1x1x8xf32>
    %286 = vector.broadcast %285 : vector<1x1x8xf32> to vector<16x16x8xf32>
    %287 = arith.mulf %283, %286 : vector<16x16x8xf32>
    %288 = arith.addf %282, %287 : vector<16x16x8xf32>
    %289 = vector.extract_strided_slice %270 {offsets = [1, 0, 0], sizes = [16, 16, 8], strides = [1, 1, 1]} : vector<22x16x8xf32> to vector<16x16x8xf32>
    %290 = vector.extract_strided_slice %1 {offsets = [10, 0], sizes = [1, 8], strides = [1, 1]} : vector<49x8xf32> to vector<1x8xf32>
    %291 = vector.shape_cast %290 : vector<1x8xf32> to vector<1x1x8xf32>
    %292 = vector.broadcast %291 : vector<1x1x8xf32> to vector<16x16x8xf32>
    %293 = arith.mulf %289, %292 : vector<16x16x8xf32>
    %294 = arith.addf %288, %293 : vector<16x16x8xf32>
    %295 = vector.extract_strided_slice %268 {offsets = [2, 0, 0], sizes = [16, 16, 8], strides = [1, 1, 1]} : vector<22x16x8xf32> to vector<16x16x8xf32>
    %296 = vector.extract_strided_slice %0 {offsets = [17, 0], sizes = [1, 8], strides = [1, 1]} : vector<49x8xf32> to vector<1x8xf32>
    %297 = vector.shape_cast %296 : vector<1x8xf32> to vector<1x1x8xf32>
    %298 = vector.broadcast %297 : vector<1x1x8xf32> to vector<16x16x8xf32>
    %299 = arith.mulf %295, %298 : vector<16x16x8xf32>
    %300 = arith.addf %294, %299 : vector<16x16x8xf32>
    %301 = vector.extract_strided_slice %270 {offsets = [2, 0, 0], sizes = [16, 16, 8], strides = [1, 1, 1]} : vector<22x16x8xf32> to vector<16x16x8xf32>
    %302 = vector.extract_strided_slice %1 {offsets = [17, 0], sizes = [1, 8], strides = [1, 1]} : vector<49x8xf32> to vector<1x8xf32>
    %303 = vector.shape_cast %302 : vector<1x8xf32> to vector<1x1x8xf32>
    %304 = vector.broadcast %303 : vector<1x1x8xf32> to vector<16x16x8xf32>
    %305 = arith.mulf %301, %304 : vector<16x16x8xf32>
    %306 = arith.addf %300, %305 : vector<16x16x8xf32>
    %307 = vector.extract_strided_slice %268 {offsets = [3, 0, 0], sizes = [16, 16, 8], strides = [1, 1, 1]} : vector<22x16x8xf32> to vector<16x16x8xf32>
    %308 = vector.extract_strided_slice %0 {offsets = [24, 0], sizes = [1, 8], strides = [1, 1]} : vector<49x8xf32> to vector<1x8xf32>
    %309 = vector.shape_cast %308 : vector<1x8xf32> to vector<1x1x8xf32>
    %310 = vector.broadcast %309 : vector<1x1x8xf32> to vector<16x16x8xf32>
    %311 = arith.mulf %307, %310 : vector<16x16x8xf32>
    %312 = arith.addf %306, %311 : vector<16x16x8xf32>
    %313 = vector.extract_strided_slice %270 {offsets = [3, 0, 0], sizes = [16, 16, 8], strides = [1, 1, 1]} : vector<22x16x8xf32> to vector<16x16x8xf32>
    %314 = vector.extract_strided_slice %1 {offsets = [24, 0], sizes = [1, 8], strides = [1, 1]} : vector<49x8xf32> to vector<1x8xf32>
    %315 = vector.shape_cast %314 : vector<1x8xf32> to vector<1x1x8xf32>
    %316 = vector.broadcast %315 : vector<1x1x8xf32> to vector<16x16x8xf32>
    %317 = arith.mulf %313, %316 : vector<16x16x8xf32>
    %318 = arith.addf %312, %317 : vector<16x16x8xf32>
    %319 = vector.extract_strided_slice %268 {offsets = [4, 0, 0], sizes = [16, 16, 8], strides = [1, 1, 1]} : vector<22x16x8xf32> to vector<16x16x8xf32>
    %320 = vector.extract_strided_slice %0 {offsets = [31, 0], sizes = [1, 8], strides = [1, 1]} : vector<49x8xf32> to vector<1x8xf32>
    %321 = vector.shape_cast %320 : vector<1x8xf32> to vector<1x1x8xf32>
    %322 = vector.broadcast %321 : vector<1x1x8xf32> to vector<16x16x8xf32>
    %323 = arith.mulf %319, %322 : vector<16x16x8xf32>
    %324 = arith.addf %318, %323 : vector<16x16x8xf32>
    %325 = vector.extract_strided_slice %270 {offsets = [4, 0, 0], sizes = [16, 16, 8], strides = [1, 1, 1]} : vector<22x16x8xf32> to vector<16x16x8xf32>
    %326 = vector.extract_strided_slice %1 {offsets = [31, 0], sizes = [1, 8], strides = [1, 1]} : vector<49x8xf32> to vector<1x8xf32>
    %327 = vector.shape_cast %326 : vector<1x8xf32> to vector<1x1x8xf32>
    %328 = vector.broadcast %327 : vector<1x1x8xf32> to vector<16x16x8xf32>
    %329 = arith.mulf %325, %328 : vector<16x16x8xf32>
    %330 = arith.addf %324, %329 : vector<16x16x8xf32>
    %331 = vector.extract_strided_slice %268 {offsets = [5, 0, 0], sizes = [16, 16, 8], strides = [1, 1, 1]} : vector<22x16x8xf32> to vector<16x16x8xf32>
    %332 = vector.extract_strided_slice %0 {offsets = [38, 0], sizes = [1, 8], strides = [1, 1]} : vector<49x8xf32> to vector<1x8xf32>
    %333 = vector.shape_cast %332 : vector<1x8xf32> to vector<1x1x8xf32>
    %334 = vector.broadcast %333 : vector<1x1x8xf32> to vector<16x16x8xf32>
    %335 = arith.mulf %331, %334 : vector<16x16x8xf32>
    %336 = arith.addf %330, %335 : vector<16x16x8xf32>
    %337 = vector.extract_strided_slice %270 {offsets = [5, 0, 0], sizes = [16, 16, 8], strides = [1, 1, 1]} : vector<22x16x8xf32> to vector<16x16x8xf32>
    %338 = vector.extract_strided_slice %1 {offsets = [38, 0], sizes = [1, 8], strides = [1, 1]} : vector<49x8xf32> to vector<1x8xf32>
    %339 = vector.shape_cast %338 : vector<1x8xf32> to vector<1x1x8xf32>
    %340 = vector.broadcast %339 : vector<1x1x8xf32> to vector<16x16x8xf32>
    %341 = arith.mulf %337, %340 : vector<16x16x8xf32>
    %342 = arith.addf %336, %341 : vector<16x16x8xf32>
    %343 = vector.extract_strided_slice %268 {offsets = [6, 0, 0], sizes = [16, 16, 8], strides = [1, 1, 1]} : vector<22x16x8xf32> to vector<16x16x8xf32>
    %344 = vector.extract_strided_slice %0 {offsets = [45, 0], sizes = [1, 8], strides = [1, 1]} : vector<49x8xf32> to vector<1x8xf32>
    %345 = vector.shape_cast %344 : vector<1x8xf32> to vector<1x1x8xf32>
    %346 = vector.broadcast %345 : vector<1x1x8xf32> to vector<16x16x8xf32>
    %347 = arith.mulf %343, %346 : vector<16x16x8xf32>
    %348 = arith.addf %342, %347 : vector<16x16x8xf32>
    %349 = vector.extract_strided_slice %270 {offsets = [6, 0, 0], sizes = [16, 16, 8], strides = [1, 1, 1]} : vector<22x16x8xf32> to vector<16x16x8xf32>
    %350 = vector.extract_strided_slice %1 {offsets = [45, 0], sizes = [1, 8], strides = [1, 1]} : vector<49x8xf32> to vector<1x8xf32>
    %351 = vector.shape_cast %350 : vector<1x8xf32> to vector<1x1x8xf32>
    %352 = vector.broadcast %351 : vector<1x1x8xf32> to vector<16x16x8xf32>
    %353 = arith.mulf %349, %352 : vector<16x16x8xf32>
    %354 = arith.addf %348, %353 : vector<16x16x8xf32>
    %c0_32 = arith.constant 0 : index
    %c0_33 = arith.constant 0 : index
    %c4 = arith.constant 4 : index
    %c0_34 = arith.constant 0 : index
    %355 = vector.load %arg2[%c0_32, %c0_33, %c4, %c0_34] : memref<1x22x22x8xf32, #tpu.memory_space<vmem>>, vector<1x22x16x8xf32>
    %356 = vector.shape_cast %355 : vector<1x22x16x8xf32> to vector<22x16x8xf32>
    %c0_35 = arith.constant 0 : index
    %c0_36 = arith.constant 0 : index
    %c4_37 = arith.constant 4 : index
    %c0_38 = arith.constant 0 : index
    %357 = vector.load %arg3[%c0_35, %c0_36, %c4_37, %c0_38] : memref<1x22x22x8xf32, #tpu.memory_space<vmem>>, vector<1x22x16x8xf32>
    %358 = vector.shape_cast %357 : vector<1x22x16x8xf32> to vector<22x16x8xf32>
    %359 = vector.extract_strided_slice %356 {offsets = [0, 0, 0], sizes = [16, 16, 8], strides = [1, 1, 1]} : vector<22x16x8xf32> to vector<16x16x8xf32>
    %360 = vector.extract_strided_slice %0 {offsets = [4, 0], sizes = [1, 8], strides = [1, 1]} : vector<49x8xf32> to vector<1x8xf32>
    %361 = vector.shape_cast %360 : vector<1x8xf32> to vector<1x1x8xf32>
    %362 = vector.broadcast %361 : vector<1x1x8xf32> to vector<16x16x8xf32>
    %363 = arith.mulf %359, %362 : vector<16x16x8xf32>
    %364 = arith.addf %354, %363 : vector<16x16x8xf32>
    %365 = vector.extract_strided_slice %358 {offsets = [0, 0, 0], sizes = [16, 16, 8], strides = [1, 1, 1]} : vector<22x16x8xf32> to vector<16x16x8xf32>
    %366 = vector.extract_strided_slice %1 {offsets = [4, 0], sizes = [1, 8], strides = [1, 1]} : vector<49x8xf32> to vector<1x8xf32>
    %367 = vector.shape_cast %366 : vector<1x8xf32> to vector<1x1x8xf32>
    %368 = vector.broadcast %367 : vector<1x1x8xf32> to vector<16x16x8xf32>
    %369 = arith.mulf %365, %368 : vector<16x16x8xf32>
    %370 = arith.addf %364, %369 : vector<16x16x8xf32>
    %371 = vector.extract_strided_slice %356 {offsets = [1, 0, 0], sizes = [16, 16, 8], strides = [1, 1, 1]} : vector<22x16x8xf32> to vector<16x16x8xf32>
    %372 = vector.extract_strided_slice %0 {offsets = [11, 0], sizes = [1, 8], strides = [1, 1]} : vector<49x8xf32> to vector<1x8xf32>
    %373 = vector.shape_cast %372 : vector<1x8xf32> to vector<1x1x8xf32>
    %374 = vector.broadcast %373 : vector<1x1x8xf32> to vector<16x16x8xf32>
    %375 = arith.mulf %371, %374 : vector<16x16x8xf32>
    %376 = arith.addf %370, %375 : vector<16x16x8xf32>
    %377 = vector.extract_strided_slice %358 {offsets = [1, 0, 0], sizes = [16, 16, 8], strides = [1, 1, 1]} : vector<22x16x8xf32> to vector<16x16x8xf32>
    %378 = vector.extract_strided_slice %1 {offsets = [11, 0], sizes = [1, 8], strides = [1, 1]} : vector<49x8xf32> to vector<1x8xf32>
    %379 = vector.shape_cast %378 : vector<1x8xf32> to vector<1x1x8xf32>
    %380 = vector.broadcast %379 : vector<1x1x8xf32> to vector<16x16x8xf32>
    %381 = arith.mulf %377, %380 : vector<16x16x8xf32>
    %382 = arith.addf %376, %381 : vector<16x16x8xf32>
    %383 = vector.extract_strided_slice %356 {offsets = [2, 0, 0], sizes = [16, 16, 8], strides = [1, 1, 1]} : vector<22x16x8xf32> to vector<16x16x8xf32>
    %384 = vector.extract_strided_slice %0 {offsets = [18, 0], sizes = [1, 8], strides = [1, 1]} : vector<49x8xf32> to vector<1x8xf32>
    %385 = vector.shape_cast %384 : vector<1x8xf32> to vector<1x1x8xf32>
    %386 = vector.broadcast %385 : vector<1x1x8xf32> to vector<16x16x8xf32>
    %387 = arith.mulf %383, %386 : vector<16x16x8xf32>
    %388 = arith.addf %382, %387 : vector<16x16x8xf32>
    %389 = vector.extract_strided_slice %358 {offsets = [2, 0, 0], sizes = [16, 16, 8], strides = [1, 1, 1]} : vector<22x16x8xf32> to vector<16x16x8xf32>
    %390 = vector.extract_strided_slice %1 {offsets = [18, 0], sizes = [1, 8], strides = [1, 1]} : vector<49x8xf32> to vector<1x8xf32>
    %391 = vector.shape_cast %390 : vector<1x8xf32> to vector<1x1x8xf32>
    %392 = vector.broadcast %391 : vector<1x1x8xf32> to vector<16x16x8xf32>
    %393 = arith.mulf %389, %392 : vector<16x16x8xf32>
    %394 = arith.addf %388, %393 : vector<16x16x8xf32>
    %395 = vector.extract_strided_slice %356 {offsets = [3, 0, 0], sizes = [16, 16, 8], strides = [1, 1, 1]} : vector<22x16x8xf32> to vector<16x16x8xf32>
    %396 = vector.extract_strided_slice %0 {offsets = [25, 0], sizes = [1, 8], strides = [1, 1]} : vector<49x8xf32> to vector<1x8xf32>
    %397 = vector.shape_cast %396 : vector<1x8xf32> to vector<1x1x8xf32>
    %398 = vector.broadcast %397 : vector<1x1x8xf32> to vector<16x16x8xf32>
    %399 = arith.mulf %395, %398 : vector<16x16x8xf32>
    %400 = arith.addf %394, %399 : vector<16x16x8xf32>
    %401 = vector.extract_strided_slice %358 {offsets = [3, 0, 0], sizes = [16, 16, 8], strides = [1, 1, 1]} : vector<22x16x8xf32> to vector<16x16x8xf32>
    %402 = vector.extract_strided_slice %1 {offsets = [25, 0], sizes = [1, 8], strides = [1, 1]} : vector<49x8xf32> to vector<1x8xf32>
    %403 = vector.shape_cast %402 : vector<1x8xf32> to vector<1x1x8xf32>
    %404 = vector.broadcast %403 : vector<1x1x8xf32> to vector<16x16x8xf32>
    %405 = arith.mulf %401, %404 : vector<16x16x8xf32>
    %406 = arith.addf %400, %405 : vector<16x16x8xf32>
    %407 = vector.extract_strided_slice %356 {offsets = [4, 0, 0], sizes = [16, 16, 8], strides = [1, 1, 1]} : vector<22x16x8xf32> to vector<16x16x8xf32>
    %408 = vector.extract_strided_slice %0 {offsets = [32, 0], sizes = [1, 8], strides = [1, 1]} : vector<49x8xf32> to vector<1x8xf32>
    %409 = vector.shape_cast %408 : vector<1x8xf32> to vector<1x1x8xf32>
    %410 = vector.broadcast %409 : vector<1x1x8xf32> to vector<16x16x8xf32>
    %411 = arith.mulf %407, %410 : vector<16x16x8xf32>
    %412 = arith.addf %406, %411 : vector<16x16x8xf32>
    %413 = vector.extract_strided_slice %358 {offsets = [4, 0, 0], sizes = [16, 16, 8], strides = [1, 1, 1]} : vector<22x16x8xf32> to vector<16x16x8xf32>
    %414 = vector.extract_strided_slice %1 {offsets = [32, 0], sizes = [1, 8], strides = [1, 1]} : vector<49x8xf32> to vector<1x8xf32>
    %415 = vector.shape_cast %414 : vector<1x8xf32> to vector<1x1x8xf32>
    %416 = vector.broadcast %415 : vector<1x1x8xf32> to vector<16x16x8xf32>
    %417 = arith.mulf %413, %416 : vector<16x16x8xf32>
    %418 = arith.addf %412, %417 : vector<16x16x8xf32>
    %419 = vector.extract_strided_slice %356 {offsets = [5, 0, 0], sizes = [16, 16, 8], strides = [1, 1, 1]} : vector<22x16x8xf32> to vector<16x16x8xf32>
    %420 = vector.extract_strided_slice %0 {offsets = [39, 0], sizes = [1, 8], strides = [1, 1]} : vector<49x8xf32> to vector<1x8xf32>
    %421 = vector.shape_cast %420 : vector<1x8xf32> to vector<1x1x8xf32>
    %422 = vector.broadcast %421 : vector<1x1x8xf32> to vector<16x16x8xf32>
    %423 = arith.mulf %419, %422 : vector<16x16x8xf32>
    %424 = arith.addf %418, %423 : vector<16x16x8xf32>
    %425 = vector.extract_strided_slice %358 {offsets = [5, 0, 0], sizes = [16, 16, 8], strides = [1, 1, 1]} : vector<22x16x8xf32> to vector<16x16x8xf32>
    %426 = vector.extract_strided_slice %1 {offsets = [39, 0], sizes = [1, 8], strides = [1, 1]} : vector<49x8xf32> to vector<1x8xf32>
    %427 = vector.shape_cast %426 : vector<1x8xf32> to vector<1x1x8xf32>
    %428 = vector.broadcast %427 : vector<1x1x8xf32> to vector<16x16x8xf32>
    %429 = arith.mulf %425, %428 : vector<16x16x8xf32>
    %430 = arith.addf %424, %429 : vector<16x16x8xf32>
    %431 = vector.extract_strided_slice %356 {offsets = [6, 0, 0], sizes = [16, 16, 8], strides = [1, 1, 1]} : vector<22x16x8xf32> to vector<16x16x8xf32>
    %432 = vector.extract_strided_slice %0 {offsets = [46, 0], sizes = [1, 8], strides = [1, 1]} : vector<49x8xf32> to vector<1x8xf32>
    %433 = vector.shape_cast %432 : vector<1x8xf32> to vector<1x1x8xf32>
    %434 = vector.broadcast %433 : vector<1x1x8xf32> to vector<16x16x8xf32>
    %435 = arith.mulf %431, %434 : vector<16x16x8xf32>
    %436 = arith.addf %430, %435 : vector<16x16x8xf32>
    %437 = vector.extract_strided_slice %358 {offsets = [6, 0, 0], sizes = [16, 16, 8], strides = [1, 1, 1]} : vector<22x16x8xf32> to vector<16x16x8xf32>
    %438 = vector.extract_strided_slice %1 {offsets = [46, 0], sizes = [1, 8], strides = [1, 1]} : vector<49x8xf32> to vector<1x8xf32>
    %439 = vector.shape_cast %438 : vector<1x8xf32> to vector<1x1x8xf32>
    %440 = vector.broadcast %439 : vector<1x1x8xf32> to vector<16x16x8xf32>
    %441 = arith.mulf %437, %440 : vector<16x16x8xf32>
    %442 = arith.addf %436, %441 : vector<16x16x8xf32>
    %c0_39 = arith.constant 0 : index
    %c0_40 = arith.constant 0 : index
    %c5 = arith.constant 5 : index
    %c0_41 = arith.constant 0 : index
    %443 = vector.load %arg2[%c0_39, %c0_40, %c5, %c0_41] : memref<1x22x22x8xf32, #tpu.memory_space<vmem>>, vector<1x22x16x8xf32>
    %444 = vector.shape_cast %443 : vector<1x22x16x8xf32> to vector<22x16x8xf32>
    %c0_42 = arith.constant 0 : index
    %c0_43 = arith.constant 0 : index
    %c5_44 = arith.constant 5 : index
    %c0_45 = arith.constant 0 : index
    %445 = vector.load %arg3[%c0_42, %c0_43, %c5_44, %c0_45] : memref<1x22x22x8xf32, #tpu.memory_space<vmem>>, vector<1x22x16x8xf32>
    %446 = vector.shape_cast %445 : vector<1x22x16x8xf32> to vector<22x16x8xf32>
    %447 = vector.extract_strided_slice %444 {offsets = [0, 0, 0], sizes = [16, 16, 8], strides = [1, 1, 1]} : vector<22x16x8xf32> to vector<16x16x8xf32>
    %448 = vector.extract_strided_slice %0 {offsets = [5, 0], sizes = [1, 8], strides = [1, 1]} : vector<49x8xf32> to vector<1x8xf32>
    %449 = vector.shape_cast %448 : vector<1x8xf32> to vector<1x1x8xf32>
    %450 = vector.broadcast %449 : vector<1x1x8xf32> to vector<16x16x8xf32>
    %451 = arith.mulf %447, %450 : vector<16x16x8xf32>
    %452 = arith.addf %442, %451 : vector<16x16x8xf32>
    %453 = vector.extract_strided_slice %446 {offsets = [0, 0, 0], sizes = [16, 16, 8], strides = [1, 1, 1]} : vector<22x16x8xf32> to vector<16x16x8xf32>
    %454 = vector.extract_strided_slice %1 {offsets = [5, 0], sizes = [1, 8], strides = [1, 1]} : vector<49x8xf32> to vector<1x8xf32>
    %455 = vector.shape_cast %454 : vector<1x8xf32> to vector<1x1x8xf32>
    %456 = vector.broadcast %455 : vector<1x1x8xf32> to vector<16x16x8xf32>
    %457 = arith.mulf %453, %456 : vector<16x16x8xf32>
    %458 = arith.addf %452, %457 : vector<16x16x8xf32>
    %459 = vector.extract_strided_slice %444 {offsets = [1, 0, 0], sizes = [16, 16, 8], strides = [1, 1, 1]} : vector<22x16x8xf32> to vector<16x16x8xf32>
    %460 = vector.extract_strided_slice %0 {offsets = [12, 0], sizes = [1, 8], strides = [1, 1]} : vector<49x8xf32> to vector<1x8xf32>
    %461 = vector.shape_cast %460 : vector<1x8xf32> to vector<1x1x8xf32>
    %462 = vector.broadcast %461 : vector<1x1x8xf32> to vector<16x16x8xf32>
    %463 = arith.mulf %459, %462 : vector<16x16x8xf32>
    %464 = arith.addf %458, %463 : vector<16x16x8xf32>
    %465 = vector.extract_strided_slice %446 {offsets = [1, 0, 0], sizes = [16, 16, 8], strides = [1, 1, 1]} : vector<22x16x8xf32> to vector<16x16x8xf32>
    %466 = vector.extract_strided_slice %1 {offsets = [12, 0], sizes = [1, 8], strides = [1, 1]} : vector<49x8xf32> to vector<1x8xf32>
    %467 = vector.shape_cast %466 : vector<1x8xf32> to vector<1x1x8xf32>
    %468 = vector.broadcast %467 : vector<1x1x8xf32> to vector<16x16x8xf32>
    %469 = arith.mulf %465, %468 : vector<16x16x8xf32>
    %470 = arith.addf %464, %469 : vector<16x16x8xf32>
    %471 = vector.extract_strided_slice %444 {offsets = [2, 0, 0], sizes = [16, 16, 8], strides = [1, 1, 1]} : vector<22x16x8xf32> to vector<16x16x8xf32>
    %472 = vector.extract_strided_slice %0 {offsets = [19, 0], sizes = [1, 8], strides = [1, 1]} : vector<49x8xf32> to vector<1x8xf32>
    %473 = vector.shape_cast %472 : vector<1x8xf32> to vector<1x1x8xf32>
    %474 = vector.broadcast %473 : vector<1x1x8xf32> to vector<16x16x8xf32>
    %475 = arith.mulf %471, %474 : vector<16x16x8xf32>
    %476 = arith.addf %470, %475 : vector<16x16x8xf32>
    %477 = vector.extract_strided_slice %446 {offsets = [2, 0, 0], sizes = [16, 16, 8], strides = [1, 1, 1]} : vector<22x16x8xf32> to vector<16x16x8xf32>
    %478 = vector.extract_strided_slice %1 {offsets = [19, 0], sizes = [1, 8], strides = [1, 1]} : vector<49x8xf32> to vector<1x8xf32>
    %479 = vector.shape_cast %478 : vector<1x8xf32> to vector<1x1x8xf32>
    %480 = vector.broadcast %479 : vector<1x1x8xf32> to vector<16x16x8xf32>
    %481 = arith.mulf %477, %480 : vector<16x16x8xf32>
    %482 = arith.addf %476, %481 : vector<16x16x8xf32>
    %483 = vector.extract_strided_slice %444 {offsets = [3, 0, 0], sizes = [16, 16, 8], strides = [1, 1, 1]} : vector<22x16x8xf32> to vector<16x16x8xf32>
    %484 = vector.extract_strided_slice %0 {offsets = [26, 0], sizes = [1, 8], strides = [1, 1]} : vector<49x8xf32> to vector<1x8xf32>
    %485 = vector.shape_cast %484 : vector<1x8xf32> to vector<1x1x8xf32>
    %486 = vector.broadcast %485 : vector<1x1x8xf32> to vector<16x16x8xf32>
    %487 = arith.mulf %483, %486 : vector<16x16x8xf32>
    %488 = arith.addf %482, %487 : vector<16x16x8xf32>
    %489 = vector.extract_strided_slice %446 {offsets = [3, 0, 0], sizes = [16, 16, 8], strides = [1, 1, 1]} : vector<22x16x8xf32> to vector<16x16x8xf32>
    %490 = vector.extract_strided_slice %1 {offsets = [26, 0], sizes = [1, 8], strides = [1, 1]} : vector<49x8xf32> to vector<1x8xf32>
    %491 = vector.shape_cast %490 : vector<1x8xf32> to vector<1x1x8xf32>
    %492 = vector.broadcast %491 : vector<1x1x8xf32> to vector<16x16x8xf32>
    %493 = arith.mulf %489, %492 : vector<16x16x8xf32>
    %494 = arith.addf %488, %493 : vector<16x16x8xf32>
    %495 = vector.extract_strided_slice %444 {offsets = [4, 0, 0], sizes = [16, 16, 8], strides = [1, 1, 1]} : vector<22x16x8xf32> to vector<16x16x8xf32>
    %496 = vector.extract_strided_slice %0 {offsets = [33, 0], sizes = [1, 8], strides = [1, 1]} : vector<49x8xf32> to vector<1x8xf32>
    %497 = vector.shape_cast %496 : vector<1x8xf32> to vector<1x1x8xf32>
    %498 = vector.broadcast %497 : vector<1x1x8xf32> to vector<16x16x8xf32>
    %499 = arith.mulf %495, %498 : vector<16x16x8xf32>
    %500 = arith.addf %494, %499 : vector<16x16x8xf32>
    %501 = vector.extract_strided_slice %446 {offsets = [4, 0, 0], sizes = [16, 16, 8], strides = [1, 1, 1]} : vector<22x16x8xf32> to vector<16x16x8xf32>
    %502 = vector.extract_strided_slice %1 {offsets = [33, 0], sizes = [1, 8], strides = [1, 1]} : vector<49x8xf32> to vector<1x8xf32>
    %503 = vector.shape_cast %502 : vector<1x8xf32> to vector<1x1x8xf32>
    %504 = vector.broadcast %503 : vector<1x1x8xf32> to vector<16x16x8xf32>
    %505 = arith.mulf %501, %504 : vector<16x16x8xf32>
    %506 = arith.addf %500, %505 : vector<16x16x8xf32>
    %507 = vector.extract_strided_slice %444 {offsets = [5, 0, 0], sizes = [16, 16, 8], strides = [1, 1, 1]} : vector<22x16x8xf32> to vector<16x16x8xf32>
    %508 = vector.extract_strided_slice %0 {offsets = [40, 0], sizes = [1, 8], strides = [1, 1]} : vector<49x8xf32> to vector<1x8xf32>
    %509 = vector.shape_cast %508 : vector<1x8xf32> to vector<1x1x8xf32>
    %510 = vector.broadcast %509 : vector<1x1x8xf32> to vector<16x16x8xf32>
    %511 = arith.mulf %507, %510 : vector<16x16x8xf32>
    %512 = arith.addf %506, %511 : vector<16x16x8xf32>
    %513 = vector.extract_strided_slice %446 {offsets = [5, 0, 0], sizes = [16, 16, 8], strides = [1, 1, 1]} : vector<22x16x8xf32> to vector<16x16x8xf32>
    %514 = vector.extract_strided_slice %1 {offsets = [40, 0], sizes = [1, 8], strides = [1, 1]} : vector<49x8xf32> to vector<1x8xf32>
    %515 = vector.shape_cast %514 : vector<1x8xf32> to vector<1x1x8xf32>
    %516 = vector.broadcast %515 : vector<1x1x8xf32> to vector<16x16x8xf32>
    %517 = arith.mulf %513, %516 : vector<16x16x8xf32>
    %518 = arith.addf %512, %517 : vector<16x16x8xf32>
    %519 = vector.extract_strided_slice %444 {offsets = [6, 0, 0], sizes = [16, 16, 8], strides = [1, 1, 1]} : vector<22x16x8xf32> to vector<16x16x8xf32>
    %520 = vector.extract_strided_slice %0 {offsets = [47, 0], sizes = [1, 8], strides = [1, 1]} : vector<49x8xf32> to vector<1x8xf32>
    %521 = vector.shape_cast %520 : vector<1x8xf32> to vector<1x1x8xf32>
    %522 = vector.broadcast %521 : vector<1x1x8xf32> to vector<16x16x8xf32>
    %523 = arith.mulf %519, %522 : vector<16x16x8xf32>
    %524 = arith.addf %518, %523 : vector<16x16x8xf32>
    %525 = vector.extract_strided_slice %446 {offsets = [6, 0, 0], sizes = [16, 16, 8], strides = [1, 1, 1]} : vector<22x16x8xf32> to vector<16x16x8xf32>
    %526 = vector.extract_strided_slice %1 {offsets = [47, 0], sizes = [1, 8], strides = [1, 1]} : vector<49x8xf32> to vector<1x8xf32>
    %527 = vector.shape_cast %526 : vector<1x8xf32> to vector<1x1x8xf32>
    %528 = vector.broadcast %527 : vector<1x1x8xf32> to vector<16x16x8xf32>
    %529 = arith.mulf %525, %528 : vector<16x16x8xf32>
    %530 = arith.addf %524, %529 : vector<16x16x8xf32>
    %c0_46 = arith.constant 0 : index
    %c0_47 = arith.constant 0 : index
    %c6 = arith.constant 6 : index
    %c0_48 = arith.constant 0 : index
    %531 = vector.load %arg2[%c0_46, %c0_47, %c6, %c0_48] : memref<1x22x22x8xf32, #tpu.memory_space<vmem>>, vector<1x22x16x8xf32>
    %532 = vector.shape_cast %531 : vector<1x22x16x8xf32> to vector<22x16x8xf32>
    %c0_49 = arith.constant 0 : index
    %c0_50 = arith.constant 0 : index
    %c6_51 = arith.constant 6 : index
    %c0_52 = arith.constant 0 : index
    %533 = vector.load %arg3[%c0_49, %c0_50, %c6_51, %c0_52] : memref<1x22x22x8xf32, #tpu.memory_space<vmem>>, vector<1x22x16x8xf32>
    %534 = vector.shape_cast %533 : vector<1x22x16x8xf32> to vector<22x16x8xf32>
    %535 = vector.extract_strided_slice %532 {offsets = [0, 0, 0], sizes = [16, 16, 8], strides = [1, 1, 1]} : vector<22x16x8xf32> to vector<16x16x8xf32>
    %536 = vector.extract_strided_slice %0 {offsets = [6, 0], sizes = [1, 8], strides = [1, 1]} : vector<49x8xf32> to vector<1x8xf32>
    %537 = vector.shape_cast %536 : vector<1x8xf32> to vector<1x1x8xf32>
    %538 = vector.broadcast %537 : vector<1x1x8xf32> to vector<16x16x8xf32>
    %539 = arith.mulf %535, %538 : vector<16x16x8xf32>
    %540 = arith.addf %530, %539 : vector<16x16x8xf32>
    %541 = vector.extract_strided_slice %534 {offsets = [0, 0, 0], sizes = [16, 16, 8], strides = [1, 1, 1]} : vector<22x16x8xf32> to vector<16x16x8xf32>
    %542 = vector.extract_strided_slice %1 {offsets = [6, 0], sizes = [1, 8], strides = [1, 1]} : vector<49x8xf32> to vector<1x8xf32>
    %543 = vector.shape_cast %542 : vector<1x8xf32> to vector<1x1x8xf32>
    %544 = vector.broadcast %543 : vector<1x1x8xf32> to vector<16x16x8xf32>
    %545 = arith.mulf %541, %544 : vector<16x16x8xf32>
    %546 = arith.addf %540, %545 : vector<16x16x8xf32>
    %547 = vector.extract_strided_slice %532 {offsets = [1, 0, 0], sizes = [16, 16, 8], strides = [1, 1, 1]} : vector<22x16x8xf32> to vector<16x16x8xf32>
    %548 = vector.extract_strided_slice %0 {offsets = [13, 0], sizes = [1, 8], strides = [1, 1]} : vector<49x8xf32> to vector<1x8xf32>
    %549 = vector.shape_cast %548 : vector<1x8xf32> to vector<1x1x8xf32>
    %550 = vector.broadcast %549 : vector<1x1x8xf32> to vector<16x16x8xf32>
    %551 = arith.mulf %547, %550 : vector<16x16x8xf32>
    %552 = arith.addf %546, %551 : vector<16x16x8xf32>
    %553 = vector.extract_strided_slice %534 {offsets = [1, 0, 0], sizes = [16, 16, 8], strides = [1, 1, 1]} : vector<22x16x8xf32> to vector<16x16x8xf32>
    %554 = vector.extract_strided_slice %1 {offsets = [13, 0], sizes = [1, 8], strides = [1, 1]} : vector<49x8xf32> to vector<1x8xf32>
    %555 = vector.shape_cast %554 : vector<1x8xf32> to vector<1x1x8xf32>
    %556 = vector.broadcast %555 : vector<1x1x8xf32> to vector<16x16x8xf32>
    %557 = arith.mulf %553, %556 : vector<16x16x8xf32>
    %558 = arith.addf %552, %557 : vector<16x16x8xf32>
    %559 = vector.extract_strided_slice %532 {offsets = [2, 0, 0], sizes = [16, 16, 8], strides = [1, 1, 1]} : vector<22x16x8xf32> to vector<16x16x8xf32>
    %560 = vector.extract_strided_slice %0 {offsets = [20, 0], sizes = [1, 8], strides = [1, 1]} : vector<49x8xf32> to vector<1x8xf32>
    %561 = vector.shape_cast %560 : vector<1x8xf32> to vector<1x1x8xf32>
    %562 = vector.broadcast %561 : vector<1x1x8xf32> to vector<16x16x8xf32>
    %563 = arith.mulf %559, %562 : vector<16x16x8xf32>
    %564 = arith.addf %558, %563 : vector<16x16x8xf32>
    %565 = vector.extract_strided_slice %534 {offsets = [2, 0, 0], sizes = [16, 16, 8], strides = [1, 1, 1]} : vector<22x16x8xf32> to vector<16x16x8xf32>
    %566 = vector.extract_strided_slice %1 {offsets = [20, 0], sizes = [1, 8], strides = [1, 1]} : vector<49x8xf32> to vector<1x8xf32>
    %567 = vector.shape_cast %566 : vector<1x8xf32> to vector<1x1x8xf32>
    %568 = vector.broadcast %567 : vector<1x1x8xf32> to vector<16x16x8xf32>
    %569 = arith.mulf %565, %568 : vector<16x16x8xf32>
    %570 = arith.addf %564, %569 : vector<16x16x8xf32>
    %571 = vector.extract_strided_slice %532 {offsets = [3, 0, 0], sizes = [16, 16, 8], strides = [1, 1, 1]} : vector<22x16x8xf32> to vector<16x16x8xf32>
    %572 = vector.extract_strided_slice %0 {offsets = [27, 0], sizes = [1, 8], strides = [1, 1]} : vector<49x8xf32> to vector<1x8xf32>
    %573 = vector.shape_cast %572 : vector<1x8xf32> to vector<1x1x8xf32>
    %574 = vector.broadcast %573 : vector<1x1x8xf32> to vector<16x16x8xf32>
    %575 = arith.mulf %571, %574 : vector<16x16x8xf32>
    %576 = arith.addf %570, %575 : vector<16x16x8xf32>
    %577 = vector.extract_strided_slice %534 {offsets = [3, 0, 0], sizes = [16, 16, 8], strides = [1, 1, 1]} : vector<22x16x8xf32> to vector<16x16x8xf32>
    %578 = vector.extract_strided_slice %1 {offsets = [27, 0], sizes = [1, 8], strides = [1, 1]} : vector<49x8xf32> to vector<1x8xf32>
    %579 = vector.shape_cast %578 : vector<1x8xf32> to vector<1x1x8xf32>
    %580 = vector.broadcast %579 : vector<1x1x8xf32> to vector<16x16x8xf32>
    %581 = arith.mulf %577, %580 : vector<16x16x8xf32>
    %582 = arith.addf %576, %581 : vector<16x16x8xf32>
    %583 = vector.extract_strided_slice %532 {offsets = [4, 0, 0], sizes = [16, 16, 8], strides = [1, 1, 1]} : vector<22x16x8xf32> to vector<16x16x8xf32>
    %584 = vector.extract_strided_slice %0 {offsets = [34, 0], sizes = [1, 8], strides = [1, 1]} : vector<49x8xf32> to vector<1x8xf32>
    %585 = vector.shape_cast %584 : vector<1x8xf32> to vector<1x1x8xf32>
    %586 = vector.broadcast %585 : vector<1x1x8xf32> to vector<16x16x8xf32>
    %587 = arith.mulf %583, %586 : vector<16x16x8xf32>
    %588 = arith.addf %582, %587 : vector<16x16x8xf32>
    %589 = vector.extract_strided_slice %534 {offsets = [4, 0, 0], sizes = [16, 16, 8], strides = [1, 1, 1]} : vector<22x16x8xf32> to vector<16x16x8xf32>
    %590 = vector.extract_strided_slice %1 {offsets = [34, 0], sizes = [1, 8], strides = [1, 1]} : vector<49x8xf32> to vector<1x8xf32>
    %591 = vector.shape_cast %590 : vector<1x8xf32> to vector<1x1x8xf32>
    %592 = vector.broadcast %591 : vector<1x1x8xf32> to vector<16x16x8xf32>
    %593 = arith.mulf %589, %592 : vector<16x16x8xf32>
    %594 = arith.addf %588, %593 : vector<16x16x8xf32>
    %595 = vector.extract_strided_slice %532 {offsets = [5, 0, 0], sizes = [16, 16, 8], strides = [1, 1, 1]} : vector<22x16x8xf32> to vector<16x16x8xf32>
    %596 = vector.extract_strided_slice %0 {offsets = [41, 0], sizes = [1, 8], strides = [1, 1]} : vector<49x8xf32> to vector<1x8xf32>
    %597 = vector.shape_cast %596 : vector<1x8xf32> to vector<1x1x8xf32>
    %598 = vector.broadcast %597 : vector<1x1x8xf32> to vector<16x16x8xf32>
    %599 = arith.mulf %595, %598 : vector<16x16x8xf32>
    %600 = arith.addf %594, %599 : vector<16x16x8xf32>
    %601 = vector.extract_strided_slice %534 {offsets = [5, 0, 0], sizes = [16, 16, 8], strides = [1, 1, 1]} : vector<22x16x8xf32> to vector<16x16x8xf32>
    %602 = vector.extract_strided_slice %1 {offsets = [41, 0], sizes = [1, 8], strides = [1, 1]} : vector<49x8xf32> to vector<1x8xf32>
    %603 = vector.shape_cast %602 : vector<1x8xf32> to vector<1x1x8xf32>
    %604 = vector.broadcast %603 : vector<1x1x8xf32> to vector<16x16x8xf32>
    %605 = arith.mulf %601, %604 : vector<16x16x8xf32>
    %606 = arith.addf %600, %605 : vector<16x16x8xf32>
    %607 = vector.extract_strided_slice %532 {offsets = [6, 0, 0], sizes = [16, 16, 8], strides = [1, 1, 1]} : vector<22x16x8xf32> to vector<16x16x8xf32>
    %608 = vector.extract_strided_slice %0 {offsets = [48, 0], sizes = [1, 8], strides = [1, 1]} : vector<49x8xf32> to vector<1x8xf32>
    %609 = vector.shape_cast %608 : vector<1x8xf32> to vector<1x1x8xf32>
    %610 = vector.broadcast %609 : vector<1x1x8xf32> to vector<16x16x8xf32>
    %611 = arith.mulf %607, %610 : vector<16x16x8xf32>
    %612 = arith.addf %606, %611 : vector<16x16x8xf32>
    %613 = vector.extract_strided_slice %534 {offsets = [6, 0, 0], sizes = [16, 16, 8], strides = [1, 1, 1]} : vector<22x16x8xf32> to vector<16x16x8xf32>
    %614 = vector.extract_strided_slice %1 {offsets = [48, 0], sizes = [1, 8], strides = [1, 1]} : vector<49x8xf32> to vector<1x8xf32>
    %615 = vector.shape_cast %614 : vector<1x8xf32> to vector<1x1x8xf32>
    %616 = vector.broadcast %615 : vector<1x1x8xf32> to vector<16x16x8xf32>
    %617 = arith.mulf %613, %616 : vector<16x16x8xf32>
    %618 = arith.addf %612, %617 : vector<16x16x8xf32>
    %c0_53 = arith.constant 0 : index
    %c0_54 = arith.constant 0 : index
    %619 = vector.load %arg6[%c0_53, %c0_54] : memref<1x8xf32, #tpu.memory_space<vmem>>, vector<1x8xf32>
    %620 = vector.shape_cast %619 : vector<1x8xf32> to vector<1x1x8xf32>
    %621 = vector.broadcast %620 : vector<1x1x8xf32> to vector<16x16x8xf32>
    %622 = arith.addf %618, %621 : vector<16x16x8xf32>
    %cst_55 = arith.constant 0.000000e+00 : f32
    %623 = vector.broadcast %cst_55 : f32 to vector<16x16x8xf32>
    %624 = arith.subf %623, %622 : vector<16x16x8xf32>
    %625 = math.exp %624 : vector<16x16x8xf32>
    %cst_56 = arith.constant 1.000000e+00 : f32
    %626 = vector.broadcast %cst_56 : f32 to vector<16x16x8xf32>
    %627 = arith.addf %626, %625 : vector<16x16x8xf32>
    %cst_57 = arith.constant 1.000000e+00 : f32
    %628 = vector.broadcast %cst_57 : f32 to vector<16x16x8xf32>
    %629 = arith.divf %628, %627 : vector<16x16x8xf32>
    %c0_58 = arith.constant 0 : index
    %c0_59 = arith.constant 0 : index
    %c0_60 = arith.constant 0 : index
    %c0_61 = arith.constant 0 : index
    %630 = vector.load %arg7[%c0_58, %c0_59, %c0_60, %c0_61] : memref<1x16x16x8xf32, #tpu.memory_space<vmem>>, vector<1x16x16x8xf32>
    %631 = vector.shape_cast %630 : vector<1x16x16x8xf32> to vector<16x16x8xf32>
    %632 = vector.shape_cast %629 : vector<16x16x8xf32> to vector<1x16x16x8xf32>
    tpu.vector_store %arg7[%c0_58, %c0_59, %c0_60, %c0_61], %632 {strides = array<i32>} : memref<1x16x16x8xf32, #tpu.memory_space<vmem>>, vector<1x16x16x8xf32>,
    return
  }
  func.func @transform_0(%arg0: i32, %arg1: i32) -> (i32, i32, i32, i32) {
    %c0_i32 = arith.constant 0 : i32
    %c0_i32_0 = arith.constant 0 : i32
    %c0_i32_1 = arith.constant 0 : i32
    return %arg1, %c0_i32, %c0_i32_0, %arg0 : i32, i32, i32, i32
  }
  func.func @transform_1(%arg0: i32, %arg1: i32) -> (i32, i32, i32, i32) {
    %c0_i32 = arith.constant 0 : i32
    %c0_i32_0 = arith.constant 0 : i32
    %c0_i32_1 = arith.constant 0 : i32
    return %arg1, %c0_i32, %c0_i32_0, %arg0 : i32, i32, i32, i32
  }
  func.func @transform_2(%arg0: i32, %arg1: i32) -> (i32, i32) {
    %c0_i32 = arith.constant 0 : i32
    %c0_i32_0 = arith.constant 0 : i32
    return %c0_i32, %arg0 : i32, i32
  }
  func.func @transform_3(%arg0: i32, %arg1: i32) -> (i32, i32) {
    %c0_i32 = arith.constant 0 : i32
    %c0_i32_0 = arith.constant 0 : i32
    return %c0_i32, %arg0 : i32, i32
  }
  func.func @transform_4(%arg0: i32, %arg1: i32) -> (i32, i32) {
    %c0_i32 = arith.constant 0 : i32
    %c0_i32_0 = arith.constant 0 : i32
    return %c0_i32, %arg0 : i32, i32
  }
  func.func @transform_5(%arg0: i32, %arg1: i32) -> (i32, i32, i32, i32) {
    %c0_i32 = arith.constant 0 : i32
    %c0_i32_0 = arith.constant 0 : i32
    %c0_i32_1 = arith.constant 0 : i32
    return %arg1, %c0_i32, %c0_i32_0, %arg0 : i32, i32, i32, i32
  }
}

</mosaic_0001>

<llo_original>
// kernel: tpu_custom_call.1
$region0: #{tpu_custom_call.1}
  #allocation0 [shape = 'u32[]', space=smem, size = 0x4, offset = 0x4, fixed_abs, tag = 'smem constant byte address 0x4 - core index']
  #allocation1 [shape = 'u32[144,128]{1,0:T(1,128)}', space=vmem, size = 0x12000, scoped, tag = 'internal scratch']
  %s0 = inlined_call_operand.vmem [shape: f32[1,22,22,8], index: 0, kind: input, shape index: {}]
  %s1 = inlined_call_operand.vmem [shape: f32[1,22,22,8], index: 1, kind: input, shape index: {}]
  %s2 = inlined_call_operand.vmem [shape: f32[49,8], index: 2, kind: input, shape index: {}]
  %s3 = inlined_call_operand.vmem [shape: f32[49,8], index: 3, kind: input, shape index: {}]
  %s4 = inlined_call_operand.vmem [shape: f32[1,8], index: 4, kind: input, shape index: {}]
  %s5 = inlined_call_operand.vmem [shape: f32[1,16,16,8], index: 5, kind: output, shape index: {}]
  %s6 = sld [smem:[#allocation0]]
  $region30: #{tpu_custom_call.1} parent=0
    _
  %s8 = ssub.s32 1, %s6
  %s9 = scalar_select 0, %s8, %s6
  // Predicated region
  $region2: #{tpu_custom_call.1} parent=0 // pred_check
    _
  $region3: #{tpu_custom_call.1} parent=0 // pred_check_branch
    %11 = sbr.rel (0) target = $region5
  $region4: #{tpu_custom_call.1} parent=0 // pred_region
    _
  $region5: #{tpu_custom_call.1} parent=0 // pred_fallthru
    _
  // Predicated region
  $region6: #{tpu_custom_call.1} parent=0 // pred_check
    _
  $region7: #{tpu_custom_call.1} parent=0 // pred_check_branch
    %13 = sbr.rel (0) target = $region9
  $region8: #{tpu_custom_call.1} parent=0 // pred_region
    _
  $region9: #{tpu_custom_call.1} parent=0 // pred_fallthru
    _
  // Predicated region
  $region10: #{tpu_custom_call.1} parent=0 // pred_check
    _
  $region11: #{tpu_custom_call.1} parent=0 // pred_check_branch
    %15 = sbr.rel (0) target = $region13
  $region12: #{tpu_custom_call.1} parent=0 // pred_region
    _
  $region13: #{tpu_custom_call.1} parent=0 // pred_fallthru
    _
  // Predicated region
  $region14: #{tpu_custom_call.1} parent=0 // pred_check
    _
  $region15: #{tpu_custom_call.1} parent=0 // pred_check_branch
    %17 = sbr.rel (0) target = $region17
  $region16: #{tpu_custom_call.1} parent=0 // pred_region
    _
  $region17: #{tpu_custom_call.1} parent=0 // pred_fallthru
    _
  // Predicated region
  $region18: #{tpu_custom_call.1} parent=0 // pred_check
    _
  $region19: #{tpu_custom_call.1} parent=0 // pred_check_branch
    %19 = sbr.rel (0) target = $region21
  $region20: #{tpu_custom_call.1} parent=0 // pred_region
    _
  $region21: #{tpu_custom_call.1} parent=0 // pred_fallthru
    _
  %v20 = vld [vmem:[%s2] sm:$0xff]
  %v21 = vld [vmem:[%s2 + $0x8] sm:$0xff]
  %v22 = vld [vmem:[%s2 + $0x10] sm:$0xff]
  %v23 = vld [vmem:[%s2 + $0x18] sm:$0xff]
  %v24 = vld [vmem:[%s2 + $0x20] sm:$0xff]
  %v25 = vld [vmem:[%s2 + $0x28] sm:$0xff]
  %v26 = vld [vmem:[%s2 + $0x30] sm:$0x1]
  %v27 = vld [vmem:[%s3] sm:$0xff]
  %v28 = vld [vmem:[%s3 + $0x8] sm:$0xff]
  %v29 = vld [vmem:[%s3 + $0x10] sm:$0xff]
  %v30 = vld [vmem:[%s3 + $0x18] sm:$0xff]
  %v31 = vld [vmem:[%s3 + $0x20] sm:$0xff]
  %v32 = vld [vmem:[%s3 + $0x28] sm:$0xff]
  %v33 = vld [vmem:[%s3 + $0x30] sm:$0x1]
  %v34 = vld [vmem:[%s0] sm:$0xff]
  %v35 = vld [vmem:[%s0 + $0x8] sm:$0xff]
  %v36 = vld [vmem:[%s0 + $0x18] sm:$0xff]
  %v37 = vld [vmem:[%s0 + $0x20] sm:$0xff]
  %v38 = vld [vmem:[%s0 + $0x30] sm:$0xff]
  %v39 = vld [vmem:[%s0 + $0x38] sm:$0xff]
  %v40 = vld [vmem:[%s0 + $0x48] sm:$0xff]
  %v41 = vld [vmem:[%s0 + $0x50] sm:$0xff]
  %v42 = vld [vmem:[%s0 + $0x60] sm:$0xff]
  %v43 = vld [vmem:[%s0 + $0x68] sm:$0xff]
  %v44 = vld [vmem:[%s0 + $0x78] sm:$0xff]
  %v45 = vld [vmem:[%s0 + $0x80] sm:$0xff]
  %v46 = vld [vmem:[%s0 + $0x90] sm:$0xff]
  %v47 = vld [vmem:[%s0 + $0x98] sm:$0xff]
  %v48 = vld [vmem:[%s0 + $0xa8] sm:$0xff]
  %v49 = vld [vmem:[%s0 + $0xb0] sm:$0xff]
  %v50 = vld [vmem:[%s0 + $0xc0] sm:$0xff]
  %v51 = vld [vmem:[%s0 + $0xc8] sm:$0xff]
  %v52 = vld [vmem:[%s0 + $0xd8] sm:$0xff]
  %v53 = vld [vmem:[%s0 + $0xe0] sm:$0xff]
  %v54 = vld [vmem:[%s0 + $0xf0] sm:$0xff]
  %v55 = vld [vmem:[%s0 + $0xf8] sm:$0xff]
  %v56 = vld [vmem:[%s0 + $0x108] sm:$0xff]
  %v57 = vld [vmem:[%s0 + $0x110] sm:$0xff]
  %v58 = vld [vmem:[%s0 + $0x120] sm:$0xff]
  %v59 = vld [vmem:[%s0 + $0x128] sm:$0xff]
  %v60 = vld [vmem:[%s0 + $0x138] sm:$0xff]
  %v61 = vld [vmem:[%s0 + $0x140] sm:$0xff]
  %v62 = vld [vmem:[%s0 + $0x150] sm:$0xff]
  %v63 = vld [vmem:[%s0 + $0x158] sm:$0xff]
  %v64 = vld [vmem:[%s0 + $0x168] sm:$0xff]
  %v65 = vld [vmem:[%s0 + $0x170] sm:$0xff]
  %v66 = vld [vmem:[%s0 + $0x180] sm:$0xff]
  %v67 = vld [vmem:[%s0 + $0x188] sm:$0xff]
  %v68 = vld [vmem:[%s0 + $0x198] sm:$0xff]
  %v69 = vld [vmem:[%s0 + $0x1a0] sm:$0xff]
  %v70 = vld [vmem:[%s0 + $0x1b0] sm:$0xff]
  %v71 = vld [vmem:[%s0 + $0x1b8] sm:$0xff]
  %v72 = vld [vmem:[%s0 + $0x1c8] sm:$0xff]
  %v73 = vld [vmem:[%s0 + $0x1d0] sm:$0xff]
  %v74 = vld [vmem:[%s0 + $0x1e0] sm:$0xff]
  %v75 = vld [vmem:[%s0 + $0x1e8] sm:$0xff]
  %v76 = vld [vmem:[%s0 + $0x1f8] sm:$0xff]
  %v77 = vld [vmem:[%s0 + $0x200] sm:$0xff]
  %v78 = vld [vmem:[%s1] sm:$0xff]
  %v79 = vld [vmem:[%s1 + $0x8] sm:$0xff]
  %v80 = vld [vmem:[%s1 + $0x18] sm:$0xff]
  %v81 = vld [vmem:[%s1 + $0x20] sm:$0xff]
  %v82 = vld [vmem:[%s1 + $0x30] sm:$0xff]
  %v83 = vld [vmem:[%s1 + $0x38] sm:$0xff]
  %v84 = vld [vmem:[%s1 + $0x48] sm:$0xff]
  %v85 = vld [vmem:[%s1 + $0x50] sm:$0xff]
  %v86 = vld [vmem:[%s1 + $0x60] sm:$0xff]
  %v87 = vld [vmem:[%s1 + $0x68] sm:$0xff]
  %v88 = vld [vmem:[%s1 + $0x78] sm:$0xff]
  %v89 = vld [vmem:[%s1 + $0x80] sm:$0xff]
  %v90 = vld [vmem:[%s1 + $0x90] sm:$0xff]
  %v91 = vld [vmem:[%s1 + $0x98] sm:$0xff]
  %v92 = vld [vmem:[%s1 + $0xa8] sm:$0xff]
  %v93 = vld [vmem:[%s1 + $0xb0] sm:$0xff]
  %v94 = vld [vmem:[%s1 + $0xc0] sm:$0xff]
  %v95 = vld [vmem:[%s1 + $0xc8] sm:$0xff]
  %v96 = vld [vmem:[%s1 + $0xd8] sm:$0xff]
  %v97 = vld [vmem:[%s1 + $0xe0] sm:$0xff]
  %v98 = vld [vmem:[%s1 + $0xf0] sm:$0xff]
  %v99 = vld [vmem:[%s1 + $0xf8] sm:$0xff]
  %v100 = vld [vmem:[%s1 + $0x108] sm:$0xff]
  %v101 = vld [vmem:[%s1 + $0x110] sm:$0xff]
  %v102 = vld [vmem:[%s1 + $0x120] sm:$0xff]
  %v103 = vld [vmem:[%s1 + $0x128] sm:$0xff]
  %v104 = vld [vmem:[%s1 + $0x138] sm:$0xff]
  %v105 = vld [vmem:[%s1 + $0x140] sm:$0xff]
  %v106 = vld [vmem:[%s1 + $0x150] sm:$0xff]
  %v107 = vld [vmem:[%s1 + $0x158] sm:$0xff]
  %v108 = vld [vmem:[%s1 + $0x168] sm:$0xff]
  %v109 = vld [vmem:[%s1 + $0x170] sm:$0xff]
  %v110 = vld [vmem:[%s1 + $0x180] sm:$0xff]
  %v111 = vld [vmem:[%s1 + $0x188] sm:$0xff]
  %v112 = vld [vmem:[%s1 + $0x198] sm:$0xff]
  %v113 = vld [vmem:[%s1 + $0x1a0] sm:$0xff]
  %v114 = vld [vmem:[%s1 + $0x1b0] sm:$0xff]
  %v115 = vld [vmem:[%s1 + $0x1b8] sm:$0xff]
  %v116 = vld [vmem:[%s1 + $0x1c8] sm:$0xff]
  %v117 = vld [vmem:[%s1 + $0x1d0] sm:$0xff]
  %v118 = vld [vmem:[%s1 + $0x1e0] sm:$0xff]
  %v119 = vld [vmem:[%s1 + $0x1e8] sm:$0xff]
  %v120 = vld [vmem:[%s1 + $0x1f8] sm:$0xff]
  %v121 = vld [vmem:[%s1 + $0x200] sm:$0xff]
  %v122 = vlaneseq
  %v123 = vshrl.u32 %v122, 7
  %v124 = vsub.s32 0, %v123
  %v125 = vrot.slane %v20, %v124
  %v126 = vmul.f32 %v34, %v125
  %v127 = vmul.f32 %v35, %v125
  %v128 = vmul.f32 %v36, %v125
  %v129 = vmul.f32 %v37, %v125
  %v130 = vmul.f32 %v38, %v125
  %v131 = vmul.f32 %v39, %v125
  %v132 = vmul.f32 %v40, %v125
  %v133 = vmul.f32 %v41, %v125
  %v134 = vmul.f32 %v42, %v125
  %v135 = vmul.f32 %v43, %v125
  %v136 = vmul.f32 %v44, %v125
  %v137 = vmul.f32 %v45, %v125
  %v138 = vmul.f32 %v46, %v125
  %v139 = vmul.f32 %v47, %v125
  %v140 = vmul.f32 %v48, %v125
  %v141 = vmul.f32 %v49, %v125
  %v142 = vmul.f32 %v50, %v125
  %v143 = vmul.f32 %v51, %v125
  %v144 = vmul.f32 %v52, %v125
  %v145 = vmul.f32 %v53, %v125
  %v146 = vmul.f32 %v54, %v125
  %v147 = vmul.f32 %v55, %v125
  %v148 = vmul.f32 %v56, %v125
  %v149 = vmul.f32 %v57, %v125
  %v150 = vmul.f32 %v58, %v125
  %v151 = vmul.f32 %v59, %v125
  %v152 = vmul.f32 %v60, %v125
  %v153 = vmul.f32 %v61, %v125
  %v154 = vmul.f32 %v62, %v125
  %v155 = vmul.f32 %v63, %v125
  %v156 = vmul.f32 %v64, %v125
  %v157 = vmul.f32 %v65, %v125
  %v158 = vadd.f32 %v126, 0.0
  %v159 = vadd.f32 %v127, 0.0
  %v160 = vadd.f32 %v128, 0.0
  %v161 = vadd.f32 %v129, 0.0
  %v162 = vadd.f32 %v130, 0.0
  %v163 = vadd.f32 %v131, 0.0
  %v164 = vadd.f32 %v132, 0.0
  %v165 = vadd.f32 %v133, 0.0
  %v166 = vadd.f32 %v134, 0.0
  %v167 = vadd.f32 %v135, 0.0
  %v168 = vadd.f32 %v136, 0.0
  %v169 = vadd.f32 %v137, 0.0
  %v170 = vadd.f32 %v138, 0.0
  %v171 = vadd.f32 %v139, 0.0
  %v172 = vadd.f32 %v140, 0.0
  %v173 = vadd.f32 %v141, 0.0
  %v174 = vadd.f32 %v142, 0.0
  %v175 = vadd.f32 %v143, 0.0
  %v176 = vadd.f32 %v144, 0.0
  %v177 = vadd.f32 %v145, 0.0
  %v178 = vadd.f32 %v146, 0.0
  %v179 = vadd.f32 %v147, 0.0
  %v180 = vadd.f32 %v148, 0.0
  %v181 = vadd.f32 %v149, 0.0
  %v182 = vadd.f32 %v150, 0.0
  %v183 = vadd.f32 %v151, 0.0
  %v184 = vadd.f32 %v152, 0.0
  %v185 = vadd.f32 %v153, 0.0
  %v186 = vadd.f32 %v154, 0.0
  %v187 = vadd.f32 %v155, 0.0
  %v188 = vadd.f32 %v156, 0.0
  %v189 = vadd.f32 %v157, 0.0
  %v190 = vlaneseq
  %v191 = vshrl.u32 %v190, 7
  %v192 = vsub.s32 0, %v191
  %v193 = vrot.slane %v27, %v192
  %v194 = vmul.f32 %v78, %v193
  %v195 = vmul.f32 %v79, %v193
  %v196 = vmul.f32 %v80, %v193
  %v197 = vmul.f32 %v81, %v193
  %v198 = vmul.f32 %v82, %v193
  %v199 = vmul.f32 %v83, %v193
  %v200 = vmul.f32 %v84, %v193
  %v201 = vmul.f32 %v85, %v193
  %v202 = vmul.f32 %v86, %v193
  %v203 = vmul.f32 %v87, %v193
  %v204 = vmul.f32 %v88, %v193
  %v205 = vmul.f32 %v89, %v193
  %v206 = vmul.f32 %v90, %v193
  %v207 = vmul.f32 %v91, %v193
  %v208 = vmul.f32 %v92, %v193
  %v209 = vmul.f32 %v93, %v193
  %v210 = vmul.f32 %v94, %v193
  %v211 = vmul.f32 %v95, %v193
  %v212 = vmul.f32 %v96, %v193
  %v213 = vmul.f32 %v97, %v193
  %v214 = vmul.f32 %v98, %v193
  %v215 = vmul.f32 %v99, %v193
  %v216 = vmul.f32 %v100, %v193
  %v217 = vmul.f32 %v101, %v193
  %v218 = vmul.f32 %v102, %v193
  %v219 = vmul.f32 %v103, %v193
  %v220 = vmul.f32 %v104, %v193
  %v221 = vmul.f32 %v105, %v193
  %v222 = vmul.f32 %v106, %v193
  %v223 = vmul.f32 %v107, %v193
  %v224 = vmul.f32 %v108, %v193
  %v225 = vmul.f32 %v109, %v193
  %v226 = vadd.f32 %v158, %v194
  %v227 = vadd.f32 %v159, %v195
  %v228 = vadd.f32 %v160, %v196
  %v229 = vadd.f32 %v161, %v197
  %v230 = vadd.f32 %v162, %v198
  %v231 = vadd.f32 %v163, %v199
  %v232 = vadd.f32 %v164, %v200
  %v233 = vadd.f32 %v165, %v201
  %v234 = vadd.f32 %v166, %v202
  %v235 = vadd.f32 %v167, %v203
  %v236 = vadd.f32 %v168, %v204
  %v237 = vadd.f32 %v169, %v205
  %v238 = vadd.f32 %v170, %v206
  %v239 = vadd.f32 %v171, %v207
  %v240 = vadd.f32 %v172, %v208
  %v241 = vadd.f32 %v173, %v209
  %v242 = vadd.f32 %v174, %v210
  %v243 = vadd.f32 %v175, %v211
  %v244 = vadd.f32 %v176, %v212
  %v245 = vadd.f32 %v177, %v213
  %v246 = vadd.f32 %v178, %v214
  %v247 = vadd.f32 %v179, %v215
  %v248 = vadd.f32 %v180, %v216
  %v249 = vadd.f32 %v181, %v217
  %v250 = vadd.f32 %v182, %v218
  %v251 = vadd.f32 %v183, %v219
  %v252 = vadd.f32 %v184, %v220
  %v253 = vadd.f32 %v185, %v221
  %v254 = vadd.f32 %v186, %v222
  %v255 = vadd.f32 %v187, %v223
  %v256 = vadd.f32 %v188, %v224
  %v257 = vadd.f32 %v189, %v225
  %v258 = vlaneseq
  %v259 = vshrl.u32 %v258, 7
  %v260 = vsub.s32 7, %v259
  %v261 = vrot.slane %v20, %v260
  %v262 = vmul.f32 %v36, %v261
  %v263 = vmul.f32 %v37, %v261
  %v264 = vmul.f32 %v38, %v261
  %v265 = vmul.f32 %v39, %v261
  %v266 = vmul.f32 %v40, %v261
  %v267 = vmul.f32 %v41, %v261
  %v268 = vmul.f32 %v42, %v261
  %v269 = vmul.f32 %v43, %v261
  %v270 = vmul.f32 %v44, %v261
  %v271 = vmul.f32 %v45, %v261
  %v272 = vmul.f32 %v46, %v261
  %v273 = vmul.f32 %v47, %v261
  %v274 = vmul.f32 %v48, %v261
  %v275 = vmul.f32 %v49, %v261
  %v276 = vmul.f32 %v50, %v261
  %v277 = vmul.f32 %v51, %v261
  %v278 = vmul.f32 %v52, %v261
  %v279 = vmul.f32 %v53, %v261
  %v280 = vmul.f32 %v54, %v261
  %v281 = vmul.f32 %v55, %v261
  %v282 = vmul.f32 %v56, %v261
  %v283 = vmul.f32 %v57, %v261
  %v284 = vmul.f32 %v58, %v261
  %v285 = vmul.f32 %v59, %v261
  %v286 = vmul.f32 %v60, %v261
  %v287 = vmul.f32 %v61, %v261
  %v288 = vmul.f32 %v62, %v261
  %v289 = vmul.f32 %v63, %v261
  %v290 = vmul.f32 %v64, %v261
  %v291 = vmul.f32 %v65, %v261
  %v292 = vmul.f32 %v66, %v261
  %v293 = vmul.f32 %v67, %v261
  %v294 = vadd.f32 %v226, %v262
  %v295 = vadd.f32 %v227, %v263
  %v296 = vadd.f32 %v228, %v264
  %v297 = vadd.f32 %v229, %v265
  %v298 = vadd.f32 %v230, %v266
  %v299 = vadd.f32 %v231, %v267
  %v300 = vadd.f32 %v232, %v268
  %v301 = vadd.f32 %v233, %v269
  %v302 = vadd.f32 %v234, %v270
  %v303 = vadd.f32 %v235, %v271
  %v304 = vadd.f32 %v236, %v272
  %v305 = vadd.f32 %v237, %v273
  %v306 = vadd.f32 %v238, %v274
  %v307 = vadd.f32 %v239, %v275
  %v308 = vadd.f32 %v240, %v276
  %v309 = vadd.f32 %v241, %v277
  %v310 = vadd.f32 %v242, %v278
  %v311 = vadd.f32 %v243, %v279
  %v312 = vadd.f32 %v244, %v280
  %v313 = vadd.f32 %v245, %v281
  %v314 = vadd.f32 %v246, %v282
  %v315 = vadd.f32 %v247, %v283
  %v316 = vadd.f32 %v248, %v284
  %v317 = vadd.f32 %v249, %v285
  %v318 = vadd.f32 %v250, %v286
  %v319 = vadd.f32 %v251, %v287
  %v320 = vadd.f32 %v252, %v288
  %v321 = vadd.f32 %v253, %v289
  %v322 = vadd.f32 %v254, %v290
  %v323 = vadd.f32 %v255, %v291
  %v324 = vadd.f32 %v256, %v292
  %v325 = vadd.f32 %v257, %v293
  %v326 = vlaneseq
  %v327 = vshrl.u32 %v326, 7
  %v328 = vsub.s32 7, %v327
  %v329 = vrot.slane %v27, %v328
  %v330 = vmul.f32 %v80, %v329
  %v331 = vmul.f32 %v81, %v329
  %v332 = vmul.f32 %v82, %v329
  %v333 = vmul.f32 %v83, %v329
  %v334 = vmul.f32 %v84, %v329
  %v335 = vmul.f32 %v85, %v329
  %v336 = vmul.f32 %v86, %v329
  %v337 = vmul.f32 %v87, %v329
  %v338 = vmul.f32 %v88, %v329
  %v339 = vmul.f32 %v89, %v329
  %v340 = vmul.f32 %v90, %v329
  %v341 = vmul.f32 %v91, %v329
  %v342 = vmul.f32 %v92, %v329
  %v343 = vmul.f32 %v93, %v329
  %v344 = vmul.f32 %v94, %v329
  %v345 = vmul.f32 %v95, %v329
  %v346 = vmul.f32 %v96, %v329
  %v347 = vmul.f32 %v97, %v329
  %v348 = vmul.f32 %v98, %v329
  %v349 = vmul.f32 %v99, %v329
  %v350 = vmul.f32 %v100, %v329
  %v351 = vmul.f32 %v101, %v329
  %v352 = vmul.f32 %v102, %v329
  %v353 = vmul.f32 %v103, %v329
  %v354 = vmul.f32 %v104, %v329
  %v355 = vmul.f32 %v105, %v329
  %v356 = vmul.f32 %v106, %v329
  %v357 = vmul.f32 %v107, %v329
  %v358 = vmul.f32 %v108, %v329
  %v359 = vmul.f32 %v109, %v329
  %v360 = vmul.f32 %v110, %v329
  %v361 = vmul.f32 %v111, %v329
  %v362 = vadd.f32 %v294, %v330
  %v363 = vadd.f32 %v295, %v331
  %v364 = vadd.f32 %v296, %v332
  %v365 = vadd.f32 %v297, %v333
  %v366 = vadd.f32 %v298, %v334
  %v367 = vadd.f32 %v299, %v335
  %v368 = vadd.f32 %v300, %v336
  %v369 = vadd.f32 %v301, %v337
  %v370 = vadd.f32 %v302, %v338
  %v371 = vadd.f32 %v303, %v339
  %v372 = vadd.f32 %v304, %v340
  %v373 = vadd.f32 %v305, %v341
  %v374 = vadd.f32 %v306, %v342
  %v375 = vadd.f32 %v307, %v343
  %v376 = vadd.f32 %v308, %v344
  %v377 = vadd.f32 %v309, %v345
  %v378 = vadd.f32 %v310, %v346
  %v379 = vadd.f32 %v311, %v347
  %v380 = vadd.f32 %v312, %v348
  %v381 = vadd.f32 %v313, %v349
  %v382 = vadd.f32 %v314, %v350
  %v383 = vadd.f32 %v315, %v351
  %v384 = vadd.f32 %v316, %v352
  %v385 = vadd.f32 %v317, %v353
  %v386 = vadd.f32 %v318, %v354
  %v387 = vadd.f32 %v319, %v355
  %v388 = vadd.f32 %v320, %v356
  %v389 = vadd.f32 %v321, %v357
  %v390 = vadd.f32 %v322, %v358
  %v391 = vadd.f32 %v323, %v359
  %v392 = vadd.f32 %v324, %v360
  %v393 = vadd.f32 %v325, %v361
  %v394 = vlaneseq
  %v395 = vshrl.u32 %v394, 7
  %v396 = vsub.s32 6, %v395
  %v397 = vrot.slane %v21, %v396
  %v398 = vmul.f32 %v38, %v397
  %v399 = vmul.f32 %v39, %v397
  %v400 = vmul.f32 %v40, %v397
  %v401 = vmul.f32 %v41, %v397
  %v402 = vmul.f32 %v42, %v397
  %v403 = vmul.f32 %v43, %v397
  %v404 = vmul.f32 %v44, %v397
  %v405 = vmul.f32 %v45, %v397
  %v406 = vmul.f32 %v46, %v397
  %v407 = vmul.f32 %v47, %v397
  %v408 = vmul.f32 %v48, %v397
  %v409 = vmul.f32 %v49, %v397
  %v410 = vmul.f32 %v50, %v397
  %v411 = vmul.f32 %v51, %v397
  %v412 = vmul.f32 %v52, %v397
  %v413 = vmul.f32 %v53, %v397
  %v414 = vmul.f32 %v54, %v397
  %v415 = vmul.f32 %v55, %v397
  %v416 = vmul.f32 %v56, %v397
  %v417 = vmul.f32 %v57, %v397
  %v418 = vmul.f32 %v58, %v397
  %v419 = vmul.f32 %v59, %v397
  %v420 = vmul.f32 %v60, %v397
  %v421 = vmul.f32 %v61, %v397
  %v422 = vmul.f32 %v62, %v397
  %v423 = vmul.f32 %v63, %v397
  %v424 = vmul.f32 %v64, %v397
  %v425 = vmul.f32 %v65, %v397
  %v426 = vmul.f32 %v66, %v397
  %v427 = vmul.f32 %v67, %v397
  %v428 = vmul.f32 %v68, %v397
  %v429 = vmul.f32 %v69, %v397
  %v430 = vadd.f32 %v362, %v398
  %v431 = vadd.f32 %v363, %v399
  %v432 = vadd.f32 %v364, %v400
  %v433 = vadd.f32 %v365, %v401
  %v434 = vadd.f32 %v366, %v402
  %v435 = vadd.f32 %v367, %v403
  %v436 = vadd.f32 %v368, %v404
  %v437 = vadd.f32 %v369, %v405
  %v438 = vadd.f32 %v370, %v406
  %v439 = vadd.f32 %v371, %v407
  %v440 = vadd.f32 %v372, %v408
  %v441 = vadd.f32 %v373, %v409
  %v442 = vadd.f32 %v374, %v410
  %v443 = vadd.f32 %v375, %v411
  %v444 = vadd.f32 %v376, %v412
  %v445 = vadd.f32 %v377, %v413
  %v446 = vadd.f32 %v378, %v414
  %v447 = vadd.f32 %v379, %v415
  %v448 = vadd.f32 %v380, %v416
  %v449 = vadd.f32 %v381, %v417
  %v450 = vadd.f32 %v382, %v418
  %v451 = vadd.f32 %v383, %v419
  %v452 = vadd.f32 %v384, %v420
  %v453 = vadd.f32 %v385, %v421
  %v454 = vadd.f32 %v386, %v422
  %v455 = vadd.f32 %v387, %v423
  %v456 = vadd.f32 %v388, %v424
  %v457 = vadd.f32 %v389, %v425
  %v458 = vadd.f32 %v390, %v426
  %v459 = vadd.f32 %v391, %v427
  %v460 = vadd.f32 %v392, %v428
  %v461 = vadd.f32 %v393, %v429
  %v462 = vlaneseq
  %v463 = vshrl.u32 %v462, 7
  %v464 = vsub.s32 6, %v463
  %v465 = vrot.slane %v28, %v464
  %v466 = vmul.f32 %v82, %v465
  %v467 = vmul.f32 %v83, %v465
  %v468 = vmul.f32 %v84, %v465
  %v469 = vmul.f32 %v85, %v465
  %v470 = vmul.f32 %v86, %v465
  %v471 = vmul.f32 %v87, %v465
  %v472 = vmul.f32 %v88, %v465
  %v473 = vmul.f32 %v89, %v465
  %v474 = vmul.f32 %v90, %v465
  %v475 = vmul.f32 %v91, %v465
  %v476 = vmul.f32 %v92, %v465
  %v477 = vmul.f32 %v93, %v465
  %v478 = vmul.f32 %v94, %v465
  %v479 = vmul.f32 %v95, %v465
  %v480 = vmul.f32 %v96, %v465
  %v481 = vmul.f32 %v97, %v465
  %v482 = vmul.f32 %v98, %v465
  %v483 = vmul.f32 %v99, %v465
  %v484 = vmul.f32 %v100, %v465
  %v485 = vmul.f32 %v101, %v465
  %v486 = vmul.f32 %v102, %v465
  %v487 = vmul.f32 %v103, %v465
  %v488 = vmul.f32 %v104, %v465
  %v489 = vmul.f32 %v105, %v465
  %v490 = vmul.f32 %v106, %v465
  %v491 = vmul.f32 %v107, %v465
  %v492 = vmul.f32 %v108, %v465
  %v493 = vmul.f32 %v109, %v465
  %v494 = vmul.f32 %v110, %v465
  %v495 = vmul.f32 %v111, %v465
  %v496 = vmul.f32 %v112, %v465
  %v497 = vmul.f32 %v113, %v465
  %v498 = vadd.f32 %v430, %v466
  %v499 = vadd.f32 %v431, %v467
  %v500 = vadd.f32 %v432, %v468
  %v501 = vadd.f32 %v433, %v469
  %v502 = vadd.f32 %v434, %v470
  %v503 = vadd.f32 %v435, %v471
  %v504 = vadd.f32 %v436, %v472
  %v505 = vadd.f32 %v437, %v473
  %v506 = vadd.f32 %v438, %v474
  %v507 = vadd.f32 %v439, %v475
  %v508 = vadd.f32 %v440, %v476
  %v509 = vadd.f32 %v441, %v477
  %v510 = vadd.f32 %v442, %v478
  %v511 = vadd.f32 %v443, %v479
  %v512 = vadd.f32 %v444, %v480
  %v513 = vadd.f32 %v445, %v481
  %v514 = vadd.f32 %v446, %v482
  %v515 = vadd.f32 %v447, %v483
  %v516 = vadd.f32 %v448, %v484
  %v517 = vadd.f32 %v449, %v485
  %v518 = vadd.f32 %v450, %v486
  %v519 = vadd.f32 %v451, %v487
  %v520 = vadd.f32 %v452, %v488
  %v521 = vadd.f32 %v453, %v489
  %v522 = vadd.f32 %v454, %v490
  %v523 = vadd.f32 %v455, %v491
  %v524 = vadd.f32 %v456, %v492
  %v525 = vadd.f32 %v457, %v493
  %v526 = vadd.f32 %v458, %v494
  %v527 = vadd.f32 %v459, %v495
  %v528 = vadd.f32 %v460, %v496
  %v529 = vadd.f32 %v461, %v497
  %v530 = vlaneseq
  %v531 = vshrl.u32 %v530, 7
  %v532 = vsub.s32 5, %v531
  %v533 = vrot.slane %v22, %v532
  %v534 = vmul.f32 %v40, %v533
  %v535 = vmul.f32 %v41, %v533
  %v536 = vmul.f32 %v42, %v533
  %v537 = vmul.f32 %v43, %v533
  %v538 = vmul.f32 %v44, %v533
  %v539 = vmul.f32 %v45, %v533
  %v540 = vmul.f32 %v46, %v533
  %v541 = vmul.f32 %v47, %v533
  %v542 = vmul.f32 %v48, %v533
  %v543 = vmul.f32 %v49, %v533
  %v544 = vmul.f32 %v50, %v533
  %v545 = vmul.f32 %v51, %v533
  %v546 = vmul.f32 %v52, %v533
  %v547 = vmul.f32 %v53, %v533
  %v548 = vmul.f32 %v54, %v533
  %v549 = vmul.f32 %v55, %v533
  %v550 = vmul.f32 %v56, %v533
  %v551 = vmul.f32 %v57, %v533
  %v552 = vmul.f32 %v58, %v533
  %v553 = vmul.f32 %v59, %v533
  %v554 = vmul.f32 %v60, %v533
  %v555 = vmul.f32 %v61, %v533
  %v556 = vmul.f32 %v62, %v533
  %v557 = vmul.f32 %v63, %v533
  %v558 = vmul.f32 %v64, %v533
  %v559 = vmul.f32 %v65, %v533
  %v560 = vmul.f32 %v66, %v533
  %v561 = vmul.f32 %v67, %v533
  %v562 = vmul.f32 %v68, %v533
  %v563 = vmul.f32 %v69, %v533
  %v564 = vmul.f32 %v70, %v533
  %v565 = vmul.f32 %v71, %v533
  %v566 = vadd.f32 %v498, %v534
  %v567 = vadd.f32 %v499, %v535
  %v568 = vadd.f32 %v500, %v536
  %v569 = vadd.f32 %v501, %v537
  %v570 = vadd.f32 %v502, %v538
  %v571 = vadd.f32 %v503, %v539
  %v572 = vadd.f32 %v504, %v540
  %v573 = vadd.f32 %v505, %v541
  %v574 = vadd.f32 %v506, %v542
  %v575 = vadd.f32 %v507, %v543
  %v576 = vadd.f32 %v508, %v544
  %v577 = vadd.f32 %v509, %v545
  %v578 = vadd.f32 %v510, %v546
  %v579 = vadd.f32 %v511, %v547
  %v580 = vadd.f32 %v512, %v548
  %v581 = vadd.f32 %v513, %v549
  %v582 = vadd.f32 %v514, %v550
  %v583 = vadd.f32 %v515, %v551
  %v584 = vadd.f32 %v516, %v552
  %v585 = vadd.f32 %v517, %v553
  %v586 = vadd.f32 %v518, %v554
  %v587 = vadd.f32 %v519, %v555
  %v588 = vadd.f32 %v520, %v556
  %v589 = vadd.f32 %v521, %v557
  %v590 = vadd.f32 %v522, %v558
  %v591 = vadd.f32 %v523, %v559
  %v592 = vadd.f32 %v524, %v560
  %v593 = vadd.f32 %v525, %v561
  %v594 = vadd.f32 %v526, %v562
  %v595 = vadd.f32 %v527, %v563
  %v596 = vadd.f32 %v528, %v564
  %v597 = vadd.f32 %v529, %v565
  %v598 = vlaneseq
  %v599 = vshrl.u32 %v598, 7
  %v600 = vsub.s32 5, %v599
  %v601 = vrot.slane %v29, %v600
  %v602 = vmul.f32 %v84, %v601
  %v603 = vmul.f32 %v85, %v601
  %v604 = vmul.f32 %v86, %v601
  %v605 = vmul.f32 %v87, %v601
  %v606 = vmul.f32 %v88, %v601
  %v607 = vmul.f32 %v89, %v601
  %v608 = vmul.f32 %v90, %v601
  %v609 = vmul.f32 %v91, %v601
  %v610 = vmul.f32 %v92, %v601
  %v611 = vmul.f32 %v93, %v601
  %v612 = vmul.f32 %v94, %v601
  %v613 = vmul.f32 %v95, %v601
  %v614 = vmul.f32 %v96, %v601
  %v615 = vmul.f32 %v97, %v601
  %v616 = vmul.f32 %v98, %v601
  %v617 = vmul.f32 %v99, %v601
  %v618 = vmul.f32 %v100, %v601
  %v619 = vmul.f32 %v101, %v601
  %v620 = vmul.f32 %v102, %v601
  %v621 = vmul.f32 %v103, %v601
  %v622 = vmul.f32 %v104, %v601
  %v623 = vmul.f32 %v105, %v601
  %v624 = vmul.f32 %v106, %v601
  %v625 = vmul.f32 %v107, %v601
  %v626 = vmul.f32 %v108, %v601
  %v627 = vmul.f32 %v109, %v601
  %v628 = vmul.f32 %v110, %v601
  %v629 = vmul.f32 %v111, %v601
  %v630 = vmul.f32 %v112, %v601
  %v631 = vmul.f32 %v113, %v601
  %v632 = vmul.f32 %v114, %v601
  %v633 = vmul.f32 %v115, %v601
  %v634 = vadd.f32 %v566, %v602
  %v635 = vadd.f32 %v567, %v603
  %v636 = vadd.f32 %v568, %v604
  %v637 = vadd.f32 %v569, %v605
  %v638 = vadd.f32 %v570, %v606
  %v639 = vadd.f32 %v571, %v607
  %v640 = vadd.f32 %v572, %v608
  %v641 = vadd.f32 %v573, %v609
  %v642 = vadd.f32 %v574, %v610
  %v643 = vadd.f32 %v575, %v611
  %v644 = vadd.f32 %v576, %v612
  %v645 = vadd.f32 %v577, %v613
  %v646 = vadd.f32 %v578, %v614
  %v647 = vadd.f32 %v579, %v615
  %v648 = vadd.f32 %v580, %v616
  %v649 = vadd.f32 %v581, %v617
  %v650 = vadd.f32 %v582, %v618
  %v651 = vadd.f32 %v583, %v619
  %v652 = vadd.f32 %v584, %v620
  %v653 = vadd.f32 %v585, %v621
  %v654 = vadd.f32 %v586, %v622
  %v655 = vadd.f32 %v587, %v623
  %v656 = vadd.f32 %v588, %v624
  %v657 = vadd.f32 %v589, %v625
  %v658 = vadd.f32 %v590, %v626
  %v659 = vadd.f32 %v591, %v627
  %v660 = vadd.f32 %v592, %v628
  %v661 = vadd.f32 %v593, %v629
  %v662 = vadd.f32 %v594, %v630
  %v663 = vadd.f32 %v595, %v631
  %v664 = vadd.f32 %v596, %v632
  %v665 = vadd.f32 %v597, %v633
  %v666 = vlaneseq
  %v667 = vshrl.u32 %v666, 7
  %v668 = vsub.s32 4, %v667
  %v669 = vrot.slane %v23, %v668
  %v670 = vmul.f32 %v42, %v669
  %v671 = vmul.f32 %v43, %v669
  %v672 = vmul.f32 %v44, %v669
  %v673 = vmul.f32 %v45, %v669
  %v674 = vmul.f32 %v46, %v669
  %v675 = vmul.f32 %v47, %v669
  %v676 = vmul.f32 %v48, %v669
  %v677 = vmul.f32 %v49, %v669
  %v678 = vmul.f32 %v50, %v669
  %v679 = vmul.f32 %v51, %v669
  %v680 = vmul.f32 %v52, %v669
  %v681 = vmul.f32 %v53, %v669
  %v682 = vmul.f32 %v54, %v669
  %v683 = vmul.f32 %v55, %v669
  %v684 = vmul.f32 %v56, %v669
  %v685 = vmul.f32 %v57, %v669
  %v686 = vmul.f32 %v58, %v669
  %v687 = vmul.f32 %v59, %v669
  %v688 = vmul.f32 %v60, %v669
  %v689 = vmul.f32 %v61, %v669
  %v690 = vmul.f32 %v62, %v669
  %v691 = vmul.f32 %v63, %v669
  %v692 = vmul.f32 %v64, %v669
  %v693 = vmul.f32 %v65, %v669
  %v694 = vmul.f32 %v66, %v669
  %v695 = vmul.f32 %v67, %v669
  %v696 = vmul.f32 %v68, %v669
  %v697 = vmul.f32 %v69, %v669
  %v698 = vmul.f32 %v70, %v669
  %v699 = vmul.f32 %v71, %v669
  %v700 = vmul.f32 %v72, %v669
  %v701 = vmul.f32 %v73, %v669
  %v702 = vadd.f32 %v634, %v670
  %v703 = vadd.f32 %v635, %v671
  %v704 = vadd.f32 %v636, %v672
  %v705 = vadd.f32 %v637, %v673
  %v706 = vadd.f32 %v638, %v674
  %v707 = vadd.f32 %v639, %v675
  %v708 = vadd.f32 %v640, %v676
  %v709 = vadd.f32 %v641, %v677
  %v710 = vadd.f32 %v642, %v678
  %v711 = vadd.f32 %v643, %v679
  %v712 = vadd.f32 %v644, %v680
  %v713 = vadd.f32 %v645, %v681
  %v714 = vadd.f32 %v646, %v682
  %v715 = vadd.f32 %v647, %v683
  %v716 = vadd.f32 %v648, %v684
  %v717 = vadd.f32 %v649, %v685
  %v718 = vadd.f32 %v650, %v686
  %v719 = vadd.f32 %v651, %v687
  %v720 = vadd.f32 %v652, %v688
  %v721 = vadd.f32 %v653, %v689
  %v722 = vadd.f32 %v654, %v690
  %v723 = vadd.f32 %v655, %v691
  %v724 = vadd.f32 %v656, %v692
  %v725 = vadd.f32 %v657, %v693
  %v726 = vadd.f32 %v658, %v694
  %v727 = vadd.f32 %v659, %v695
  %v728 = vadd.f32 %v660, %v696
  %v729 = vadd.f32 %v661, %v697
  %v730 = vadd.f32 %v662, %v698
  %v731 = vadd.f32 %v663, %v699
  %v732 = vadd.f32 %v664, %v700
  %v733 = vadd.f32 %v665, %v701
  %v734 = vlaneseq
  %v735 = vshrl.u32 %v734, 7
  %v736 = vsub.s32 4, %v735
  %v737 = vrot.slane %v30, %v736
  %v738 = vmul.f32 %v86, %v737
  %v739 = vmul.f32 %v87, %v737
  %v740 = vmul.f32 %v88, %v737
  %v741 = vmul.f32 %v89, %v737
  %v742 = vmul.f32 %v90, %v737
  %v743 = vmul.f32 %v91, %v737
  %v744 = vmul.f32 %v92, %v737
  %v745 = vmul.f32 %v93, %v737
  %v746 = vmul.f32 %v94, %v737
  %v747 = vmul.f32 %v95, %v737
  %v748 = vmul.f32 %v96, %v737
  %v749 = vmul.f32 %v97, %v737
  %v750 = vmul.f32 %v98, %v737
  %v751 = vmul.f32 %v99, %v737
  %v752 = vmul.f32 %v100, %v737
  %v753 = vmul.f32 %v101, %v737
  %v754 = vmul.f32 %v102, %v737
  %v755 = vmul.f32 %v103, %v737
  %v756 = vmul.f32 %v104, %v737
  %v757 = vmul.f32 %v105, %v737
  %v758 = vmul.f32 %v106, %v737
  %v759 = vmul.f32 %v107, %v737
  %v760 = vmul.f32 %v108, %v737
  %v761 = vmul.f32 %v109, %v737
  %v762 = vmul.f32 %v110, %v737
  %v763 = vmul.f32 %v111, %v737
  %v764 = vmul.f32 %v112, %v737
  %v765 = vmul.f32 %v113, %v737
  %v766 = vmul.f32 %v114, %v737
  %v767 = vmul.f32 %v115, %v737
  %v768 = vmul.f32 %v116, %v737
  %v769 = vmul.f32 %v117, %v737
  %v770 = vadd.f32 %v702, %v738
  %v771 = vadd.f32 %v703, %v739
  %v772 = vadd.f32 %v704, %v740
  %v773 = vadd.f32 %v705, %v741
  %v774 = vadd.f32 %v706, %v742
  %v775 = vadd.f32 %v707, %v743
  %v776 = vadd.f32 %v708, %v744
  %v777 = vadd.f32 %v709, %v745
  %v778 = vadd.f32 %v710, %v746
  %v779 = vadd.f32 %v711, %v747
  %v780 = vadd.f32 %v712, %v748
  %v781 = vadd.f32 %v713, %v749
  %v782 = vadd.f32 %v714, %v750
  %v783 = vadd.f32 %v715, %v751
  %v784 = vadd.f32 %v716, %v752
  %v785 = vadd.f32 %v717, %v753
  %v786 = vadd.f32 %v718, %v754
  %v787 = vadd.f32 %v719, %v755
  %v788 = vadd.f32 %v720, %v756
  %v789 = vadd.f32 %v721, %v757
  %v790 = vadd.f32 %v722, %v758
  %v791 = vadd.f32 %v723, %v759
  %v792 = vadd.f32 %v724, %v760
  %v793 = vadd.f32 %v725, %v761
  %v794 = vadd.f32 %v726, %v762
  %v795 = vadd.f32 %v727, %v763
  %v796 = vadd.f32 %v728, %v764
  %v797 = vadd.f32 %v729, %v765
  %v798 = vadd.f32 %v730, %v766
  %v799 = vadd.f32 %v731, %v767
  %v800 = vadd.f32 %v732, %v768
  %v801 = vadd.f32 %v733, %v769
  %v802 = vlaneseq
  %v803 = vshrl.u32 %v802, 7
  %v804 = vsub.s32 3, %v803
  %v805 = vrot.slane %v24, %v804
  %v806 = vmul.f32 %v44, %v805
  %v807 = vmul.f32 %v45, %v805
  %v808 = vmul.f32 %v46, %v805
  %v809 = vmul.f32 %v47, %v805
  %v810 = vmul.f32 %v48, %v805
  %v811 = vmul.f32 %v49, %v805
  %v812 = vmul.f32 %v50, %v805
  %v813 = vmul.f32 %v51, %v805
  %v814 = vmul.f32 %v52, %v805
  %v815 = vmul.f32 %v53, %v805
  %v816 = vmul.f32 %v54, %v805
  %v817 = vmul.f32 %v55, %v805
  %v818 = vmul.f32 %v56, %v805
  %v819 = vmul.f32 %v57, %v805
  %v820 = vmul.f32 %v58, %v805
  %v821 = vmul.f32 %v59, %v805
  %v822 = vmul.f32 %v60, %v805
  %v823 = vmul.f32 %v61, %v805
  %v824 = vmul.f32 %v62, %v805
  %v825 = vmul.f32 %v63, %v805
  %v826 = vmul.f32 %v64, %v805
  %v827 = vmul.f32 %v65, %v805
  %v828 = vmul.f32 %v66, %v805
  %v829 = vmul.f32 %v67, %v805
  %v830 = vmul.f32 %v68, %v805
  %v831 = vmul.f32 %v69, %v805
  %v832 = vmul.f32 %v70, %v805
  %v833 = vmul.f32 %v71, %v805
  %v834 = vmul.f32 %v72, %v805
  %v835 = vmul.f32 %v73, %v805
  %v836 = vmul.f32 %v74, %v805
  %v837 = vmul.f32 %v75, %v805
  %v838 = vadd.f32 %v770, %v806
  %v839 = vadd.f32 %v771, %v807
  %v840 = vadd.f32 %v772, %v808
  %v841 = vadd.f32 %v773, %v809
  %v842 = vadd.f32 %v774, %v810
  %v843 = vadd.f32 %v775, %v811
  %v844 = vadd.f32 %v776, %v812
  %v845 = vadd.f32 %v777, %v813
  %v846 = vadd.f32 %v778, %v814
  %v847 = vadd.f32 %v779, %v815
  %v848 = vadd.f32 %v780, %v816
  %v849 = vadd.f32 %v781, %v817
  %v850 = vadd.f32 %v782, %v818
  %v851 = vadd.f32 %v783, %v819
  %v852 = vadd.f32 %v784, %v820
  %v853 = vadd.f32 %v785, %v821
  %v854 = vadd.f32 %v786, %v822
  %v855 = vadd.f32 %v787, %v823
  %v856 = vadd.f32 %v788, %v824
  %v857 = vadd.f32 %v789, %v825
  %v858 = vadd.f32 %v790, %v826
  %v859 = vadd.f32 %v791, %v827
  %v860 = vadd.f32 %v792, %v828
  %v861 = vadd.f32 %v793, %v829
  %v862 = vadd.f32 %v794, %v830
  %v863 = vadd.f32 %v795, %v831
  %v864 = vadd.f32 %v796, %v832
  %v865 = vadd.f32 %v797, %v833
  %v866 = vadd.f32 %v798, %v834
  %v867 = vadd.f32 %v799, %v835
  %v868 = vadd.f32 %v800, %v836
  %v869 = vadd.f32 %v801, %v837
  %v870 = vlaneseq
  %v871 = vshrl.u32 %v870, 7
  %v872 = vsub.s32 3, %v871
  %v873 = vrot.slane %v31, %v872
  %v874 = vmul.f32 %v88, %v873
  %v875 = vmul.f32 %v89, %v873
  %v876 = vmul.f32 %v90, %v873
  %v877 = vmul.f32 %v91, %v873
  %v878 = vmul.f32 %v92, %v873
  %v879 = vmul.f32 %v93, %v873
  %v880 = vmul.f32 %v94, %v873
  %v881 = vmul.f32 %v95, %v873
  %v882 = vmul.f32 %v96, %v873
  %v883 = vmul.f32 %v97, %v873
  %v884 = vmul.f32 %v98, %v873
  %v885 = vmul.f32 %v99, %v873
  %v886 = vmul.f32 %v100, %v873
  %v887 = vmul.f32 %v101, %v873
  %v888 = vmul.f32 %v102, %v873
  %v889 = vmul.f32 %v103, %v873
  %v890 = vmul.f32 %v104, %v873
  %v891 = vmul.f32 %v105, %v873
  %v892 = vmul.f32 %v106, %v873
  %v893 = vmul.f32 %v107, %v873
  %v894 = vmul.f32 %v108, %v873
  %v895 = vmul.f32 %v109, %v873
  %v896 = vmul.f32 %v110, %v873
  %v897 = vmul.f32 %v111, %v873
  %v898 = vmul.f32 %v112, %v873
  %v899 = vmul.f32 %v113, %v873
  %v900 = vmul.f32 %v114, %v873
  %v901 = vmul.f32 %v115, %v873
  %v902 = vmul.f32 %v116, %v873
  %v903 = vmul.f32 %v117, %v873
  %v904 = vmul.f32 %v118, %v873
  %v905 = vmul.f32 %v119, %v873
  %v906 = vadd.f32 %v838, %v874
  %v907 = vadd.f32 %v839, %v875
  %v908 = vadd.f32 %v840, %v876
  %v909 = vadd.f32 %v841, %v877
  %v910 = vadd.f32 %v842, %v878
  %v911 = vadd.f32 %v843, %v879
  %v912 = vadd.f32 %v844, %v880
  %v913 = vadd.f32 %v845, %v881
  %v914 = vadd.f32 %v846, %v882
  %v915 = vadd.f32 %v847, %v883
  %v916 = vadd.f32 %v848, %v884
  %v917 = vadd.f32 %v849, %v885
  %v918 = vadd.f32 %v850, %v886
  %v919 = vadd.f32 %v851, %v887
  %v920 = vadd.f32 %v852, %v888
  %v921 = vadd.f32 %v853, %v889
  %v922 = vadd.f32 %v854, %v890
  %v923 = vadd.f32 %v855, %v891
  %v924 = vadd.f32 %v856, %v892
  %v925 = vadd.f32 %v857, %v893
  %v926 = vadd.f32 %v858, %v894
  %v927 = vadd.f32 %v859, %v895
  %v928 = vadd.f32 %v860, %v896
  %v929 = vadd.f32 %v861, %v897
  %v930 = vadd.f32 %v862, %v898
  %v931 = vadd.f32 %v863, %v899
  %v932 = vadd.f32 %v864, %v900
  %v933 = vadd.f32 %v865, %v901
  %v934 = vadd.f32 %v866, %v902
  %v935 = vadd.f32 %v867, %v903
  %v936 = vadd.f32 %v868, %v904
  %v937 = vadd.f32 %v869, %v905
  %v938 = vlaneseq
  %v939 = vshrl.u32 %v938, 7
  %v940 = vsub.s32 2, %v939
  %v941 = vrot.slane %v25, %v940
  %v942 = vmul.f32 %v46, %v941
  %v943 = vmul.f32 %v47, %v941
  %v944 = vmul.f32 %v48, %v941
  %v945 = vmul.f32 %v49, %v941
  %v946 = vmul.f32 %v50, %v941
  %v947 = vmul.f32 %v51, %v941
  %v948 = vmul.f32 %v52, %v941
  %v949 = vmul.f32 %v53, %v941
  %v950 = vmul.f32 %v54, %v941
  %v951 = vmul.f32 %v55, %v941
  %v952 = vmul.f32 %v56, %v941
  %v953 = vmul.f32 %v57, %v941
  %v954 = vmul.f32 %v58, %v941
  %v955 = vmul.f32 %v59, %v941
  %v956 = vmul.f32 %v60, %v941
  %v957 = vmul.f32 %v61, %v941
  %v958 = vmul.f32 %v62, %v941
  %v959 = vmul.f32 %v63, %v941
  %v960 = vmul.f32 %v64, %v941
  %v961 = vmul.f32 %v65, %v941
  %v962 = vmul.f32 %v66, %v941
  %v963 = vmul.f32 %v67, %v941
  %v964 = vmul.f32 %v68, %v941
  %v965 = vmul.f32 %v69, %v941
  %v966 = vmul.f32 %v70, %v941
  %v967 = vmul.f32 %v71, %v941
  %v968 = vmul.f32 %v72, %v941
  %v969 = vmul.f32 %v73, %v941
  %v970 = vmul.f32 %v74, %v941
  %v971 = vmul.f32 %v75, %v941
  %v972 = vmul.f32 %v76, %v941
  %v973 = vmul.f32 %v77, %v941
  %v974 = vadd.f32 %v906, %v942
  %v975 = vadd.f32 %v907, %v943
  %v976 = vadd.f32 %v908, %v944
  %v977 = vadd.f32 %v909, %v945
  %v978 = vadd.f32 %v910, %v946
  %v979 = vadd.f32 %v911, %v947
  %v980 = vadd.f32 %v912, %v948
  %v981 = vadd.f32 %v913, %v949
  %v982 = vadd.f32 %v914, %v950
  %v983 = vadd.f32 %v915, %v951
  %v984 = vadd.f32 %v916, %v952
  %v985 = vadd.f32 %v917, %v953
  %v986 = vadd.f32 %v918, %v954
  %v987 = vadd.f32 %v919, %v955
  %v988 = vadd.f32 %v920, %v956
  %v989 = vadd.f32 %v921, %v957
  %v990 = vadd.f32 %v922, %v958
  %v991 = vadd.f32 %v923, %v959
  %v992 = vadd.f32 %v924, %v960
  %v993 = vadd.f32 %v925, %v961
  %v994 = vadd.f32 %v926, %v962
  %v995 = vadd.f32 %v927, %v963
  %v996 = vadd.f32 %v928, %v964
  %v997 = vadd.f32 %v929, %v965
  %v998 = vadd.f32 %v930, %v966
  %v999 = vadd.f32 %v931, %v967
  %v1000 = vadd.f32 %v932, %v968
  %v1001 = vadd.f32 %v933, %v969
  %v1002 = vadd.f32 %v934, %v970
  %v1003 = vadd.f32 %v935, %v971
  %v1004 = vadd.f32 %v936, %v972
  %v1005 = vadd.f32 %v937, %v973
  %v1006 = vlaneseq
  %v1007 = vshrl.u32 %v1006, 7
  %v1008 = vsub.s32 2, %v1007
  %v1009 = vrot.slane %v32, %v1008
  %v1010 = vmul.f32 %v90, %v1009
  %v1011 = vmul.f32 %v91, %v1009
  %v1012 = vmul.f32 %v92, %v1009
  %v1013 = vmul.f32 %v93, %v1009
  %v1014 = vmul.f32 %v94, %v1009
  %v1015 = vmul.f32 %v95, %v1009
  %v1016 = vmul.f32 %v96, %v1009
  %v1017 = vmul.f32 %v97, %v1009
  %v1018 = vmul.f32 %v98, %v1009
  %v1019 = vmul.f32 %v99, %v1009
  %v1020 = vmul.f32 %v100, %v1009
  %v1021 = vmul.f32 %v101, %v1009
  %v1022 = vmul.f32 %v102, %v1009
  %v1023 = vmul.f32 %v103, %v1009
  %v1024 = vmul.f32 %v104, %v1009
  %v1025 = vmul.f32 %v105, %v1009
  %v1026 = vmul.f32 %v106, %v1009
  %v1027 = vmul.f32 %v107, %v1009
  %v1028 = vmul.f32 %v108, %v1009
  %v1029 = vmul.f32 %v109, %v1009
  %v1030 = vmul.f32 %v110, %v1009
  %v1031 = vmul.f32 %v111, %v1009
  %v1032 = vmul.f32 %v112, %v1009
  %v1033 = vmul.f32 %v113, %v1009
  %v1034 = vmul.f32 %v114, %v1009
  %v1035 = vmul.f32 %v115, %v1009
  %v1036 = vmul.f32 %v116, %v1009
  %v1037 = vmul.f32 %v117, %v1009
  %v1038 = vmul.f32 %v118, %v1009
  %v1039 = vmul.f32 %v119, %v1009
  %v1040 = vmul.f32 %v120, %v1009
  %v1041 = vmul.f32 %v121, %v1009
  %v1042 = vadd.f32 %v974, %v1010
  %v1043 = vadd.f32 %v975, %v1011
  %v1044 = vadd.f32 %v976, %v1012
  %v1045 = vadd.f32 %v977, %v1013
  %v1046 = vadd.f32 %v978, %v1014
  %v1047 = vadd.f32 %v979, %v1015
  %v1048 = vadd.f32 %v980, %v1016
  %v1049 = vadd.f32 %v981, %v1017
  %v1050 = vadd.f32 %v982, %v1018
  %v1051 = vadd.f32 %v983, %v1019
  %v1052 = vadd.f32 %v984, %v1020
  %v1053 = vadd.f32 %v985, %v1021
  %v1054 = vadd.f32 %v986, %v1022
  %v1055 = vadd.f32 %v987, %v1023
  %v1056 = vadd.f32 %v988, %v1024
  %v1057 = vadd.f32 %v989, %v1025
  %v1058 = vadd.f32 %v990, %v1026
  %v1059 = vadd.f32 %v991, %v1027
  %v1060 = vadd.f32 %v992, %v1028
  %v1061 = vadd.f32 %v993, %v1029
  %v1062 = vadd.f32 %v994, %v1030
  %v1063 = vadd.f32 %v995, %v1031
  %v1064 = vadd.f32 %v996, %v1032
  %v1065 = vadd.f32 %v997, %v1033
  %v1066 = vadd.f32 %v998, %v1034
  %v1067 = vadd.f32 %v999, %v1035
  %v1068 = vadd.f32 %v1000, %v1036
  %v1069 = vadd.f32 %v1001, %v1037
  %v1070 = vadd.f32 %v1002, %v1038
  %v1071 = vadd.f32 %v1003, %v1039
  %v1072 = vadd.f32 %v1004, %v1040
  %v1073 = vadd.f32 %v1005, %v1041
  %v1074 = vld [vmem:[%s0 + $0x1] sm:$0xff]
  %v1075 = vld [vmem:[%s0 + $0x9] sm:$0xff]
  %v1076 = vld [vmem:[%s0 + $0x19] sm:$0xff]
  %v1077 = vld [vmem:[%s0 + $0x21] sm:$0xff]
  %v1078 = vld [vmem:[%s0 + $0x31] sm:$0xff]
  %v1079 = vld [vmem:[%s0 + $0x39] sm:$0xff]
  %v1080 = vld [vmem:[%s0 + $0x49] sm:$0xff]
  %v1081 = vld [vmem:[%s0 + $0x51] sm:$0xff]
  %v1082 = vld [vmem:[%s0 + $0x61] sm:$0xff]
  %v1083 = vld [vmem:[%s0 + $0x69] sm:$0xff]
  %v1084 = vld [vmem:[%s0 + $0x79] sm:$0xff]
  %v1085 = vld [vmem:[%s0 + $0x81] sm:$0xff]
  %v1086 = vld [vmem:[%s0 + $0x91] sm:$0xff]
  %v1087 = vld [vmem:[%s0 + $0x99] sm:$0xff]
  %v1088 = vld [vmem:[%s0 + $0xa9] sm:$0xff]
  %v1089 = vld [vmem:[%s0 + $0xb1] sm:$0xff]
  %v1090 = vld [vmem:[%s0 + $0xc1] sm:$0xff]
  %v1091 = vld [vmem:[%s0 + $0xc9] sm:$0xff]
  %v1092 = vld [vmem:[%s0 + $0xd9] sm:$0xff]
  %v1093 = vld [vmem:[%s0 + $0xe1] sm:$0xff]
  %v1094 = vld [vmem:[%s0 + $0xf1] sm:$0xff]
  %v1095 = vld [vmem:[%s0 + $0xf9] sm:$0xff]
  %v1096 = vld [vmem:[%s0 + $0x109] sm:$0xff]
  %v1097 = vld [vmem:[%s0 + $0x111] sm:$0xff]
  %v1098 = vld [vmem:[%s0 + $0x121] sm:$0xff]
  %v1099 = vld [vmem:[%s0 + $0x129] sm:$0xff]
  %v1100 = vld [vmem:[%s0 + $0x139] sm:$0xff]
  %v1101 = vld [vmem:[%s0 + $0x141] sm:$0xff]
  %v1102 = vld [vmem:[%s0 + $0x151] sm:$0xff]
  %v1103 = vld [vmem:[%s0 + $0x159] sm:$0xff]
  %v1104 = vld [vmem:[%s0 + $0x169] sm:$0xff]
  %v1105 = vld [vmem:[%s0 + $0x171] sm:$0xff]
  %v1106 = vld [vmem:[%s0 + $0x181] sm:$0xff]
  %v1107 = vld [vmem:[%s0 + $0x189] sm:$0xff]
  %v1108 = vld [vmem:[%s0 + $0x199] sm:$0xff]
  %v1109 = vld [vmem:[%s0 + $0x1a1] sm:$0xff]
  %v1110 = vld [vmem:[%s0 + $0x1b1] sm:$0xff]
  %v1111 = vld [vmem:[%s0 + $0x1b9] sm:$0xff]
  %v1112 = vld [vmem:[%s0 + $0x1c9] sm:$0xff]
  %v1113 = vld [vmem:[%s0 + $0x1d1] sm:$0xff]
  %v1114 = vld [vmem:[%s0 + $0x1e1] sm:$0xff]
  %v1115 = vld [vmem:[%s0 + $0x1e9] sm:$0xff]
  %v1116 = vld [vmem:[%s0 + $0x1f9] sm:$0xff]
  %v1117 = vld [vmem:[%s0 + $0x201] sm:$0xff]
  %v1118 = vld [vmem:[%s1 + $0x1] sm:$0xff]
  %v1119 = vld [vmem:[%s1 + $0x9] sm:$0xff]
  %v1120 = vld [vmem:[%s1 + $0x19] sm:$0xff]
  %v1121 = vld [vmem:[%s1 + $0x21] sm:$0xff]
  %v1122 = vld [vmem:[%s1 + $0x31] sm:$0xff]
  %v1123 = vld [vmem:[%s1 + $0x39] sm:$0xff]
  %v1124 = vld [vmem:[%s1 + $0x49] sm:$0xff]
  %v1125 = vld [vmem:[%s1 + $0x51] sm:$0xff]
  %v1126 = vld [vmem:[%s1 + $0x61] sm:$0xff]
  %v1127 = vld [vmem:[%s1 + $0x69] sm:$0xff]
  %v1128 = vld [vmem:[%s1 + $0x79] sm:$0xff]
  %v1129 = vld [vmem:[%s1 + $0x81] sm:$0xff]
  %v1130 = vld [vmem:[%s1 + $0x91] sm:$0xff]
  %v1131 = vld [vmem:[%s1 + $0x99] sm:$0xff]
  %v1132 = vld [vmem:[%s1 + $0xa9] sm:$0xff]
  %v1133 = vld [vmem:[%s1 + $0xb1] sm:$0xff]
  %v1134 = vld [vmem:[%s1 + $0xc1] sm:$0xff]
  %v1135 = vld [vmem:[%s1 + $0xc9] sm:$0xff]
  %v1136 = vld [vmem:[%s1 + $0xd9] sm:$0xff]
  %v1137 = vld [vmem:[%s1 + $0xe1] sm:$0xff]
  %v1138 = vld [vmem:[%s1 + $0xf1] sm:$0xff]
  %v1139 = vld [vmem:[%s1 + $0xf9] sm:$0xff]
  %v1140 = vld [vmem:[%s1 + $0x109] sm:$0xff]
  %v1141 = vld [vmem:[%s1 + $0x111] sm:$0xff]
  %v1142 = vld [vmem:[%s1 + $0x121] sm:$0xff]
  %v1143 = vld [vmem:[%s1 + $0x129] sm:$0xff]
  %v1144 = vld [vmem:[%s1 + $0x139] sm:$0xff]
  %v1145 = vld [vmem:[%s1 + $0x141] sm:$0xff]
  %v1146 = vld [vmem:[%s1 + $0x151] sm:$0xff]
  %v1147 = vld [vmem:[%s1 + $0x159] sm:$0xff]
  %v1148 = vld [vmem:[%s1 + $0x169] sm:$0xff]
  %v1149 = vld [vmem:[%s1 + $0x171] sm:$0xff]
  %v1150 = vld [vmem:[%s1 + $0x181] sm:$0xff]
  %v1151 = vld [vmem:[%s1 + $0x189] sm:$0xff]
  %v1152 = vld [vmem:[%s1 + $0x199] sm:$0xff]
  %v1153 = vld [vmem:[%s1 + $0x1a1] sm:$0xff]
  %v1154 = vld [vmem:[%s1 + $0x1b1] sm:$0xff]
  %v1155 = vld [vmem:[%s1 + $0x1b9] sm:$0xff]
  %v1156 = vld [vmem:[%s1 + $0x1c9] sm:$0xff]
  %v1157 = vld [vmem:[%s1 + $0x1d1] sm:$0xff]
  %v1158 = vld [vmem:[%s1 + $0x1e1] sm:$0xff]
  %v1159 = vld [vmem:[%s1 + $0x1e9] sm:$0xff]
  %v1160 = vld [vmem:[%s1 + $0x1f9] sm:$0xff]
  %v1161 = vld [vmem:[%s1 + $0x201] sm:$0xff]
  %v1162 = vlaneseq
  %v1163 = vshrl.u32 %v1162, 7
  %v1164 = vsub.s32 1, %v1163
  %v1165 = vrot.slane %v20, %v1164
  %v1166 = vmul.f32 %v1074, %v1165
  %v1167 = vmul.f32 %v1075, %v1165
  %v1168 = vmul.f32 %v1076, %v1165
  %v1169 = vmul.f32 %v1077, %v1165
  %v1170 = vmul.f32 %v1078, %v1165
  %v1171 = vmul.f32 %v1079, %v1165
  %v1172 = vmul.f32 %v1080, %v1165
  %v1173 = vmul.f32 %v1081, %v1165
  %v1174 = vmul.f32 %v1082, %v1165
  %v1175 = vmul.f32 %v1083, %v1165
  %v1176 = vmul.f32 %v1084, %v1165
  %v1177 = vmul.f32 %v1085, %v1165
  %v1178 = vmul.f32 %v1086, %v1165
  %v1179 = vmul.f32 %v1087, %v1165
  %v1180 = vmul.f32 %v1088, %v1165
  %v1181 = vmul.f32 %v1089, %v1165
  %v1182 = vmul.f32 %v1090, %v1165
  %v1183 = vmul.f32 %v1091, %v1165
  %v1184 = vmul.f32 %v1092, %v1165
  %v1185 = vmul.f32 %v1093, %v1165
  %v1186 = vmul.f32 %v1094, %v1165
  %v1187 = vmul.f32 %v1095, %v1165
  %v1188 = vmul.f32 %v1096, %v1165
  %v1189 = vmul.f32 %v1097, %v1165
  %v1190 = vmul.f32 %v1098, %v1165
  %v1191 = vmul.f32 %v1099, %v1165
  %v1192 = vmul.f32 %v1100, %v1165
  %v1193 = vmul.f32 %v1101, %v1165
  %v1194 = vmul.f32 %v1102, %v1165
  %v1195 = vmul.f32 %v1103, %v1165
  %v1196 = vmul.f32 %v1104, %v1165
  %v1197 = vmul.f32 %v1105, %v1165
  %v1198 = vadd.f32 %v1042, %v1166
  %v1199 = vadd.f32 %v1043, %v1167
  %v1200 = vadd.f32 %v1044, %v1168
  %v1201 = vadd.f32 %v1045, %v1169
  %v1202 = vadd.f32 %v1046, %v1170
  %v1203 = vadd.f32 %v1047, %v1171
  %v1204 = vadd.f32 %v1048, %v1172
  %v1205 = vadd.f32 %v1049, %v1173
  %v1206 = vadd.f32 %v1050, %v1174
  %v1207 = vadd.f32 %v1051, %v1175
  %v1208 = vadd.f32 %v1052, %v1176
  %v1209 = vadd.f32 %v1053, %v1177
  %v1210 = vadd.f32 %v1054, %v1178
  %v1211 = vadd.f32 %v1055, %v1179
  %v1212 = vadd.f32 %v1056, %v1180
  %v1213 = vadd.f32 %v1057, %v1181
  %v1214 = vadd.f32 %v1058, %v1182
  %v1215 = vadd.f32 %v1059, %v1183
  %v1216 = vadd.f32 %v1060, %v1184
  %v1217 = vadd.f32 %v1061, %v1185
  %v1218 = vadd.f32 %v1062, %v1186
  %v1219 = vadd.f32 %v1063, %v1187
  %v1220 = vadd.f32 %v1064, %v1188
  %v1221 = vadd.f32 %v1065, %v1189
  %v1222 = vadd.f32 %v1066, %v1190
  %v1223 = vadd.f32 %v1067, %v1191
  %v1224 = vadd.f32 %v1068, %v1192
  %v1225 = vadd.f32 %v1069, %v1193
  %v1226 = vadd.f32 %v1070, %v1194
  %v1227 = vadd.f32 %v1071, %v1195
  %v1228 = vadd.f32 %v1072, %v1196
  %v1229 = vadd.f32 %v1073, %v1197
  %v1230 = vlaneseq
  %v1231 = vshrl.u32 %v1230, 7
  %v1232 = vsub.s32 1, %v1231
  %v1233 = vrot.slane %v27, %v1232
  %v1234 = vmul.f32 %v1118, %v1233
  %v1235 = vmul.f32 %v1119, %v1233
  %v1236 = vmul.f32 %v1120, %v1233
  %v1237 = vmul.f32 %v1121, %v1233
  %v1238 = vmul.f32 %v1122, %v1233
  %v1239 = vmul.f32 %v1123, %v1233
  %v1240 = vmul.f32 %v1124, %v1233
  %v1241 = vmul.f32 %v1125, %v1233
  %v1242 = vmul.f32 %v1126, %v1233
  %v1243 = vmul.f32 %v1127, %v1233
  %v1244 = vmul.f32 %v1128, %v1233
  %v1245 = vmul.f32 %v1129, %v1233
  %v1246 = vmul.f32 %v1130, %v1233
  %v1247 = vmul.f32 %v1131, %v1233
  %v1248 = vmul.f32 %v1132, %v1233
  %v1249 = vmul.f32 %v1133, %v1233
  %v1250 = vmul.f32 %v1134, %v1233
  %v1251 = vmul.f32 %v1135, %v1233
  %v1252 = vmul.f32 %v1136, %v1233
  %v1253 = vmul.f32 %v1137, %v1233
  %v1254 = vmul.f32 %v1138, %v1233
  %v1255 = vmul.f32 %v1139, %v1233
  %v1256 = vmul.f32 %v1140, %v1233
  %v1257 = vmul.f32 %v1141, %v1233
  %v1258 = vmul.f32 %v1142, %v1233
  %v1259 = vmul.f32 %v1143, %v1233
  %v1260 = vmul.f32 %v1144, %v1233
  %v1261 = vmul.f32 %v1145, %v1233
  %v1262 = vmul.f32 %v1146, %v1233
  %v1263 = vmul.f32 %v1147, %v1233
  %v1264 = vmul.f32 %v1148, %v1233
  %v1265 = vmul.f32 %v1149, %v1233
  %v1266 = vadd.f32 %v1198, %v1234
  %v1267 = vadd.f32 %v1199, %v1235
  %v1268 = vadd.f32 %v1200, %v1236
  %v1269 = vadd.f32 %v1201, %v1237
  %v1270 = vadd.f32 %v1202, %v1238
  %v1271 = vadd.f32 %v1203, %v1239
  %v1272 = vadd.f32 %v1204, %v1240
  %v1273 = vadd.f32 %v1205, %v1241
  %v1274 = vadd.f32 %v1206, %v1242
  %v1275 = vadd.f32 %v1207, %v1243
  %v1276 = vadd.f32 %v1208, %v1244
  %v1277 = vadd.f32 %v1209, %v1245
  %v1278 = vadd.f32 %v1210, %v1246
  %v1279 = vadd.f32 %v1211, %v1247
  %v1280 = vadd.f32 %v1212, %v1248
  %v1281 = vadd.f32 %v1213, %v1249
  %v1282 = vadd.f32 %v1214, %v1250
  %v1283 = vadd.f32 %v1215, %v1251
  %v1284 = vadd.f32 %v1216, %v1252
  %v1285 = vadd.f32 %v1217, %v1253
  %v1286 = vadd.f32 %v1218, %v1254
  %v1287 = vadd.f32 %v1219, %v1255
  %v1288 = vadd.f32 %v1220, %v1256
  %v1289 = vadd.f32 %v1221, %v1257
  %v1290 = vadd.f32 %v1222, %v1258
  %v1291 = vadd.f32 %v1223, %v1259
  %v1292 = vadd.f32 %v1224, %v1260
  %v1293 = vadd.f32 %v1225, %v1261
  %v1294 = vadd.f32 %v1226, %v1262
  %v1295 = vadd.f32 %v1227, %v1263
  %v1296 = vadd.f32 %v1228, %v1264
  %v1297 = vadd.f32 %v1229, %v1265
  %v1298 = vlaneseq
  %v1299 = vshrl.u32 %v1298, 7
  %v1300 = vsub.s32 0, %v1299
  %v1301 = vrot.slane %v21, %v1300
  %v1302 = vmul.f32 %v1076, %v1301
  %v1303 = vmul.f32 %v1077, %v1301
  %v1304 = vmul.f32 %v1078, %v1301
  %v1305 = vmul.f32 %v1079, %v1301
  %v1306 = vmul.f32 %v1080, %v1301
  %v1307 = vmul.f32 %v1081, %v1301
  %v1308 = vmul.f32 %v1082, %v1301
  %v1309 = vmul.f32 %v1083, %v1301
  %v1310 = vmul.f32 %v1084, %v1301
  %v1311 = vmul.f32 %v1085, %v1301
  %v1312 = vmul.f32 %v1086, %v1301
  %v1313 = vmul.f32 %v1087, %v1301
  %v1314 = vmul.f32 %v1088, %v1301
  %v1315 = vmul.f32 %v1089, %v1301
  %v1316 = vmul.f32 %v1090, %v1301
  %v1317 = vmul.f32 %v1091, %v1301
  %v1318 = vmul.f32 %v1092, %v1301
  %v1319 = vmul.f32 %v1093, %v1301
  %v1320 = vmul.f32 %v1094, %v1301
  %v1321 = vmul.f32 %v1095, %v1301
  %v1322 = vmul.f32 %v1096, %v1301
  %v1323 = vmul.f32 %v1097, %v1301
  %v1324 = vmul.f32 %v1098, %v1301
  %v1325 = vmul.f32 %v1099, %v1301
  %v1326 = vmul.f32 %v1100, %v1301
  %v1327 = vmul.f32 %v1101, %v1301
  %v1328 = vmul.f32 %v1102, %v1301
  %v1329 = vmul.f32 %v1103, %v1301
  %v1330 = vmul.f32 %v1104, %v1301
  %v1331 = vmul.f32 %v1105, %v1301
  %v1332 = vmul.f32 %v1106, %v1301
  %v1333 = vmul.f32 %v1107, %v1301
  %v1334 = vadd.f32 %v1266, %v1302
  %v1335 = vadd.f32 %v1267, %v1303
  %v1336 = vadd.f32 %v1268, %v1304
  %v1337 = vadd.f32 %v1269, %v1305
  %v1338 = vadd.f32 %v1270, %v1306
  %v1339 = vadd.f32 %v1271, %v1307
  %v1340 = vadd.f32 %v1272, %v1308
  %v1341 = vadd.f32 %v1273, %v1309
  %v1342 = vadd.f32 %v1274, %v1310
  %v1343 = vadd.f32 %v1275, %v1311
  %v1344 = vadd.f32 %v1276, %v1312
  %v1345 = vadd.f32 %v1277, %v1313
  %v1346 = vadd.f32 %v1278, %v1314
  %v1347 = vadd.f32 %v1279, %v1315
  %v1348 = vadd.f32 %v1280, %v1316
  %v1349 = vadd.f32 %v1281, %v1317
  %v1350 = vadd.f32 %v1282, %v1318
  %v1351 = vadd.f32 %v1283, %v1319
  %v1352 = vadd.f32 %v1284, %v1320
  %v1353 = vadd.f32 %v1285, %v1321
  %v1354 = vadd.f32 %v1286, %v1322
  %v1355 = vadd.f32 %v1287, %v1323
  %v1356 = vadd.f32 %v1288, %v1324
  %v1357 = vadd.f32 %v1289, %v1325
  %v1358 = vadd.f32 %v1290, %v1326
  %v1359 = vadd.f32 %v1291, %v1327
  %v1360 = vadd.f32 %v1292, %v1328
  %v1361 = vadd.f32 %v1293, %v1329
  %v1362 = vadd.f32 %v1294, %v1330
  %v1363 = vadd.f32 %v1295, %v1331
  %v1364 = vadd.f32 %v1296, %v1332
  %v1365 = vadd.f32 %v1297, %v1333
  %v1366 = vlaneseq
  %v1367 = vshrl.u32 %v1366, 7
  %v1368 = vsub.s32 0, %v1367
  %v1369 = vrot.slane %v28, %v1368
  %v1370 = vmul.f32 %v1120, %v1369
  %v1371 = vmul.f32 %v1121, %v1369
  %v1372 = vmul.f32 %v1122, %v1369
  %v1373 = vmul.f32 %v1123, %v1369
  %v1374 = vmul.f32 %v1124, %v1369
  %v1375 = vmul.f32 %v1125, %v1369
  %v1376 = vmul.f32 %v1126, %v1369
  %v1377 = vmul.f32 %v1127, %v1369
  %v1378 = vmul.f32 %v1128, %v1369
  %v1379 = vmul.f32 %v1129, %v1369
  %v1380 = vmul.f32 %v1130, %v1369
  %v1381 = vmul.f32 %v1131, %v1369
  %v1382 = vmul.f32 %v1132, %v1369
  %v1383 = vmul.f32 %v1133, %v1369
  %v1384 = vmul.f32 %v1134, %v1369
  %v1385 = vmul.f32 %v1135, %v1369
  %v1386 = vmul.f32 %v1136, %v1369
  %v1387 = vmul.f32 %v1137, %v1369
  %v1388 = vmul.f32 %v1138, %v1369
  %v1389 = vmul.f32 %v1139, %v1369
  %v1390 = vmul.f32 %v1140, %v1369
  %v1391 = vmul.f32 %v1141, %v1369
  %v1392 = vmul.f32 %v1142, %v1369
  %v1393 = vmul.f32 %v1143, %v1369
  %v1394 = vmul.f32 %v1144, %v1369
  %v1395 = vmul.f32 %v1145, %v1369
  %v1396 = vmul.f32 %v1146, %v1369
  %v1397 = vmul.f32 %v1147, %v1369
  %v1398 = vmul.f32 %v1148, %v1369
  %v1399 = vmul.f32 %v1149, %v1369
  %v1400 = vmul.f32 %v1150, %v1369
  %v1401 = vmul.f32 %v1151, %v1369
  %v1402 = vadd.f32 %v1334, %v1370
  %v1403 = vadd.f32 %v1335, %v1371
  %v1404 = vadd.f32 %v1336, %v1372
  %v1405 = vadd.f32 %v1337, %v1373
  %v1406 = vadd.f32 %v1338, %v1374
  %v1407 = vadd.f32 %v1339, %v1375
  %v1408 = vadd.f32 %v1340, %v1376
  %v1409 = vadd.f32 %v1341, %v1377
  %v1410 = vadd.f32 %v1342, %v1378
  %v1411 = vadd.f32 %v1343, %v1379
  %v1412 = vadd.f32 %v1344, %v1380
  %v1413 = vadd.f32 %v1345, %v1381
  %v1414 = vadd.f32 %v1346, %v1382
  %v1415 = vadd.f32 %v1347, %v1383
  %v1416 = vadd.f32 %v1348, %v1384
  %v1417 = vadd.f32 %v1349, %v1385
  %v1418 = vadd.f32 %v1350, %v1386
  %v1419 = vadd.f32 %v1351, %v1387
  %v1420 = vadd.f32 %v1352, %v1388
  %v1421 = vadd.f32 %v1353, %v1389
  %v1422 = vadd.f32 %v1354, %v1390
  %v1423 = vadd.f32 %v1355, %v1391
  %v1424 = vadd.f32 %v1356, %v1392
  %v1425 = vadd.f32 %v1357, %v1393
  %v1426 = vadd.f32 %v1358, %v1394
  %v1427 = vadd.f32 %v1359, %v1395
  %v1428 = vadd.f32 %v1360, %v1396
  %v1429 = vadd.f32 %v1361, %v1397
  %v1430 = vadd.f32 %v1362, %v1398
  %v1431 = vadd.f32 %v1363, %v1399
  %v1432 = vadd.f32 %v1364, %v1400
  %v1433 = vadd.f32 %v1365, %v1401
  %v1434 = vlaneseq
  %v1435 = vshrl.u32 %v1434, 7
  %v1436 = vsub.s32 7, %v1435
  %v1437 = vrot.slane %v21, %v1436
  %v1438 = vmul.f32 %v1078, %v1437
  %v1439 = vmul.f32 %v1079, %v1437
  %v1440 = vmul.f32 %v1080, %v1437
  %v1441 = vmul.f32 %v1081, %v1437
  %v1442 = vmul.f32 %v1082, %v1437
  %v1443 = vmul.f32 %v1083, %v1437
  %v1444 = vmul.f32 %v1084, %v1437
  %v1445 = vmul.f32 %v1085, %v1437
  %v1446 = vmul.f32 %v1086, %v1437
  %v1447 = vmul.f32 %v1087, %v1437
  %v1448 = vmul.f32 %v1088, %v1437
  %v1449 = vmul.f32 %v1089, %v1437
  %v1450 = vmul.f32 %v1090, %v1437
  %v1451 = vmul.f32 %v1091, %v1437
  %v1452 = vmul.f32 %v1092, %v1437
  %v1453 = vmul.f32 %v1093, %v1437
  %v1454 = vmul.f32 %v1094, %v1437
  %v1455 = vmul.f32 %v1095, %v1437
  %v1456 = vmul.f32 %v1096, %v1437
  %v1457 = vmul.f32 %v1097, %v1437
  %v1458 = vmul.f32 %v1098, %v1437
  %v1459 = vmul.f32 %v1099, %v1437
  %v1460 = vmul.f32 %v1100, %v1437
  %v1461 = vmul.f32 %v1101, %v1437
  %v1462 = vmul.f32 %v1102, %v1437
  %v1463 = vmul.f32 %v1103, %v1437
  %v1464 = vmul.f32 %v1104, %v1437
  %v1465 = vmul.f32 %v1105, %v1437
  %v1466 = vmul.f32 %v1106, %v1437
  %v1467 = vmul.f32 %v1107, %v1437
  %v1468 = vmul.f32 %v1108, %v1437
  %v1469 = vmul.f32 %v1109, %v1437
  %v1470 = vadd.f32 %v1402, %v1438
  %v1471 = vadd.f32 %v1403, %v1439
  %v1472 = vadd.f32 %v1404, %v1440
  %v1473 = vadd.f32 %v1405, %v1441
  %v1474 = vadd.f32 %v1406, %v1442
  %v1475 = vadd.f32 %v1407, %v1443
  %v1476 = vadd.f32 %v1408, %v1444
  %v1477 = vadd.f32 %v1409, %v1445
  %v1478 = vadd.f32 %v1410, %v1446
  %v1479 = vadd.f32 %v1411, %v1447
  %v1480 = vadd.f32 %v1412, %v1448
  %v1481 = vadd.f32 %v1413, %v1449
  %v1482 = vadd.f32 %v1414, %v1450
  %v1483 = vadd.f32 %v1415, %v1451
  %v1484 = vadd.f32 %v1416, %v1452
  %v1485 = vadd.f32 %v1417, %v1453
  %v1486 = vadd.f32 %v1418, %v1454
  %v1487 = vadd.f32 %v1419, %v1455
  %v1488 = vadd.f32 %v1420, %v1456
  %v1489 = vadd.f32 %v1421, %v1457
  %v1490 = vadd.f32 %v1422, %v1458
  %v1491 = vadd.f32 %v1423, %v1459
  %v1492 = vadd.f32 %v1424, %v1460
  %v1493 = vadd.f32 %v1425, %v1461
  %v1494 = vadd.f32 %v1426, %v1462
  %v1495 = vadd.f32 %v1427, %v1463
  %v1496 = vadd.f32 %v1428, %v1464
  %v1497 = vadd.f32 %v1429, %v1465
  %v1498 = vadd.f32 %v1430, %v1466
  %v1499 = vadd.f32 %v1431, %v1467
  %v1500 = vadd.f32 %v1432, %v1468
  %v1501 = vadd.f32 %v1433, %v1469
  %v1502 = vlaneseq
  %v1503 = vshrl.u32 %v1502, 7
  %v1504 = vsub.s32 7, %v1503
  %v1505 = vrot.slane %v28, %v1504
  %v1506 = vmul.f32 %v1122, %v1505
  %v1507 = vmul.f32 %v1123, %v1505
  %v1508 = vmul.f32 %v1124, %v1505
  %v1509 = vmul.f32 %v1125, %v1505
  %v1510 = vmul.f32 %v1126, %v1505
  %v1511 = vmul.f32 %v1127, %v1505
  %v1512 = vmul.f32 %v1128, %v1505
  %v1513 = vmul.f32 %v1129, %v1505
  %v1514 = vmul.f32 %v1130, %v1505
  %v1515 = vmul.f32 %v1131, %v1505
  %v1516 = vmul.f32 %v1132, %v1505
  %v1517 = vmul.f32 %v1133, %v1505
  %v1518 = vmul.f32 %v1134, %v1505
  %v1519 = vmul.f32 %v1135, %v1505
  %v1520 = vmul.f32 %v1136, %v1505
  %v1521 = vmul.f32 %v1137, %v1505
  %v1522 = vmul.f32 %v1138, %v1505
  %v1523 = vmul.f32 %v1139, %v1505
  %v1524 = vmul.f32 %v1140, %v1505
  %v1525 = vmul.f32 %v1141, %v1505
  %v1526 = vmul.f32 %v1142, %v1505
  %v1527 = vmul.f32 %v1143, %v1505
  %v1528 = vmul.f32 %v1144, %v1505
  %v1529 = vmul.f32 %v1145, %v1505
  %v1530 = vmul.f32 %v1146, %v1505
  %v1531 = vmul.f32 %v1147, %v1505
  %v1532 = vmul.f32 %v1148, %v1505
  %v1533 = vmul.f32 %v1149, %v1505
  %v1534 = vmul.f32 %v1150, %v1505
  %v1535 = vmul.f32 %v1151, %v1505
  %v1536 = vmul.f32 %v1152, %v1505
  %v1537 = vmul.f32 %v1153, %v1505
  %v1538 = vadd.f32 %v1470, %v1506
  %v1539 = vadd.f32 %v1471, %v1507
  %v1540 = vadd.f32 %v1472, %v1508
  %v1541 = vadd.f32 %v1473, %v1509
  %v1542 = vadd.f32 %v1474, %v1510
  %v1543 = vadd.f32 %v1475, %v1511
  %v1544 = vadd.f32 %v1476, %v1512
  %v1545 = vadd.f32 %v1477, %v1513
  %v1546 = vadd.f32 %v1478, %v1514
  %v1547 = vadd.f32 %v1479, %v1515
  %v1548 = vadd.f32 %v1480, %v1516
  %v1549 = vadd.f32 %v1481, %v1517
  %v1550 = vadd.f32 %v1482, %v1518
  %v1551 = vadd.f32 %v1483, %v1519
  %v1552 = vadd.f32 %v1484, %v1520
  %v1553 = vadd.f32 %v1485, %v1521
  %v1554 = vadd.f32 %v1486, %v1522
  %v1555 = vadd.f32 %v1487, %v1523
  %v1556 = vadd.f32 %v1488, %v1524
  %v1557 = vadd.f32 %v1489, %v1525
  %v1558 = vadd.f32 %v1490, %v1526
  %v1559 = vadd.f32 %v1491, %v1527
  %v1560 = vadd.f32 %v1492, %v1528
  %v1561 = vadd.f32 %v1493, %v1529
  %v1562 = vadd.f32 %v1494, %v1530
  %v1563 = vadd.f32 %v1495, %v1531
  %v1564 = vadd.f32 %v1496, %v1532
  %v1565 = vadd.f32 %v1497, %v1533
  %v1566 = vadd.f32 %v1498, %v1534
  %v1567 = vadd.f32 %v1499, %v1535
  %v1568 = vadd.f32 %v1500, %v1536
  %v1569 = vadd.f32 %v1501, %v1537
  %v1570 = vlaneseq
  %v1571 = vshrl.u32 %v1570, 7
  %v1572 = vsub.s32 6, %v1571
  %v1573 = vrot.slane %v22, %v1572
  %v1574 = vmul.f32 %v1080, %v1573
  %v1575 = vmul.f32 %v1081, %v1573
  %v1576 = vmul.f32 %v1082, %v1573
  %v1577 = vmul.f32 %v1083, %v1573
  %v1578 = vmul.f32 %v1084, %v1573
  %v1579 = vmul.f32 %v1085, %v1573
  %v1580 = vmul.f32 %v1086, %v1573
  %v1581 = vmul.f32 %v1087, %v1573
  %v1582 = vmul.f32 %v1088, %v1573
  %v1583 = vmul.f32 %v1089, %v1573
  %v1584 = vmul.f32 %v1090, %v1573
  %v1585 = vmul.f32 %v1091, %v1573
  %v1586 = vmul.f32 %v1092, %v1573
  %v1587 = vmul.f32 %v1093, %v1573
  %v1588 = vmul.f32 %v1094, %v1573
  %v1589 = vmul.f32 %v1095, %v1573
  %v1590 = vmul.f32 %v1096, %v1573
  %v1591 = vmul.f32 %v1097, %v1573
  %v1592 = vmul.f32 %v1098, %v1573
  %v1593 = vmul.f32 %v1099, %v1573
  %v1594 = vmul.f32 %v1100, %v1573
  %v1595 = vmul.f32 %v1101, %v1573
  %v1596 = vmul.f32 %v1102, %v1573
  %v1597 = vmul.f32 %v1103, %v1573
  %v1598 = vmul.f32 %v1104, %v1573
  %v1599 = vmul.f32 %v1105, %v1573
  %v1600 = vmul.f32 %v1106, %v1573
  %v1601 = vmul.f32 %v1107, %v1573
  %v1602 = vmul.f32 %v1108, %v1573
  %v1603 = vmul.f32 %v1109, %v1573
  %v1604 = vmul.f32 %v1110, %v1573
  %v1605 = vmul.f32 %v1111, %v1573
  %v1606 = vadd.f32 %v1538, %v1574
  %v1607 = vadd.f32 %v1539, %v1575
  %v1608 = vadd.f32 %v1540, %v1576
  %v1609 = vadd.f32 %v1541, %v1577
  %v1610 = vadd.f32 %v1542, %v1578
  %v1611 = vadd.f32 %v1543, %v1579
  %v1612 = vadd.f32 %v1544, %v1580
  %v1613 = vadd.f32 %v1545, %v1581
  %v1614 = vadd.f32 %v1546, %v1582
  %v1615 = vadd.f32 %v1547, %v1583
  %v1616 = vadd.f32 %v1548, %v1584
  %v1617 = vadd.f32 %v1549, %v1585
  %v1618 = vadd.f32 %v1550, %v1586
  %v1619 = vadd.f32 %v1551, %v1587
  %v1620 = vadd.f32 %v1552, %v1588
  %v1621 = vadd.f32 %v1553, %v1589
  %v1622 = vadd.f32 %v1554, %v1590
  %v1623 = vadd.f32 %v1555, %v1591
  %v1624 = vadd.f32 %v1556, %v1592
  %v1625 = vadd.f32 %v1557, %v1593
  %v1626 = vadd.f32 %v1558, %v1594
  %v1627 = vadd.f32 %v1559, %v1595
  %v1628 = vadd.f32 %v1560, %v1596
  %v1629 = vadd.f32 %v1561, %v1597
  %v1630 = vadd.f32 %v1562, %v1598
  %v1631 = vadd.f32 %v1563, %v1599
  %v1632 = vadd.f32 %v1564, %v1600
  %v1633 = vadd.f32 %v1565, %v1601
  %v1634 = vadd.f32 %v1566, %v1602
  %v1635 = vadd.f32 %v1567, %v1603
  %v1636 = vadd.f32 %v1568, %v1604
  %v1637 = vadd.f32 %v1569, %v1605
  %v1638 = vlaneseq
  %v1639 = vshrl.u32 %v1638, 7
  %v1640 = vsub.s32 6, %v1639
  %v1641 = vrot.slane %v29, %v1640
  %v1642 = vmul.f32 %v1124, %v1641
  %v1643 = vmul.f32 %v1125, %v1641
  %v1644 = vmul.f32 %v1126, %v1641
  %v1645 = vmul.f32 %v1127, %v1641
  %v1646 = vmul.f32 %v1128, %v1641
  %v1647 = vmul.f32 %v1129, %v1641
  %v1648 = vmul.f32 %v1130, %v1641
  %v1649 = vmul.f32 %v1131, %v1641
  %v1650 = vmul.f32 %v1132, %v1641
  %v1651 = vmul.f32 %v1133, %v1641
  %v1652 = vmul.f32 %v1134, %v1641
  %v1653 = vmul.f32 %v1135, %v1641
  %v1654 = vmul.f32 %v1136, %v1641
  %v1655 = vmul.f32 %v1137, %v1641
  %v1656 = vmul.f32 %v1138, %v1641
  %v1657 = vmul.f32 %v1139, %v1641
  %v1658 = vmul.f32 %v1140, %v1641
  %v1659 = vmul.f32 %v1141, %v1641
  %v1660 = vmul.f32 %v1142, %v1641
  %v1661 = vmul.f32 %v1143, %v1641
  %v1662 = vmul.f32 %v1144, %v1641
  %v1663 = vmul.f32 %v1145, %v1641
  %v1664 = vmul.f32 %v1146, %v1641
  %v1665 = vmul.f32 %v1147, %v1641
  %v1666 = vmul.f32 %v1148, %v1641
  %v1667 = vmul.f32 %v1149, %v1641
  %v1668 = vmul.f32 %v1150, %v1641
  %v1669 = vmul.f32 %v1151, %v1641
  %v1670 = vmul.f32 %v1152, %v1641
  %v1671 = vmul.f32 %v1153, %v1641
  %v1672 = vmul.f32 %v1154, %v1641
  %v1673 = vmul.f32 %v1155, %v1641
  %v1674 = vadd.f32 %v1606, %v1642
  %v1675 = vadd.f32 %v1607, %v1643
  %v1676 = vadd.f32 %v1608, %v1644
  %v1677 = vadd.f32 %v1609, %v1645
  %v1678 = vadd.f32 %v1610, %v1646
  %v1679 = vadd.f32 %v1611, %v1647
  %v1680 = vadd.f32 %v1612, %v1648
  %v1681 = vadd.f32 %v1613, %v1649
  %v1682 = vadd.f32 %v1614, %v1650
  %v1683 = vadd.f32 %v1615, %v1651
  %v1684 = vadd.f32 %v1616, %v1652
  %v1685 = vadd.f32 %v1617, %v1653
  %v1686 = vadd.f32 %v1618, %v1654
  %v1687 = vadd.f32 %v1619, %v1655
  %v1688 = vadd.f32 %v1620, %v1656
  %v1689 = vadd.f32 %v1621, %v1657
  %v1690 = vadd.f32 %v1622, %v1658
  %v1691 = vadd.f32 %v1623, %v1659
  %v1692 = vadd.f32 %v1624, %v1660
  %v1693 = vadd.f32 %v1625, %v1661
  %v1694 = vadd.f32 %v1626, %v1662
  %v1695 = vadd.f32 %v1627, %v1663
  %v1696 = vadd.f32 %v1628, %v1664
  %v1697 = vadd.f32 %v1629, %v1665
  %v1698 = vadd.f32 %v1630, %v1666
  %v1699 = vadd.f32 %v1631, %v1667
  %v1700 = vadd.f32 %v1632, %v1668
  %v1701 = vadd.f32 %v1633, %v1669
  %v1702 = vadd.f32 %v1634, %v1670
  %v1703 = vadd.f32 %v1635, %v1671
  %v1704 = vadd.f32 %v1636, %v1672
  %v1705 = vadd.f32 %v1637, %v1673
  %v1706 = vlaneseq
  %v1707 = vshrl.u32 %v1706, 7
  %v1708 = vsub.s32 5, %v1707
  %v1709 = vrot.slane %v23, %v1708
  %v1710 = vmul.f32 %v1082, %v1709
  %v1711 = vmul.f32 %v1083, %v1709
  %v1712 = vmul.f32 %v1084, %v1709
  %v1713 = vmul.f32 %v1085, %v1709
  %v1714 = vmul.f32 %v1086, %v1709
  %v1715 = vmul.f32 %v1087, %v1709
  %v1716 = vmul.f32 %v1088, %v1709
  %v1717 = vmul.f32 %v1089, %v1709
  %v1718 = vmul.f32 %v1090, %v1709
  %v1719 = vmul.f32 %v1091, %v1709
  %v1720 = vmul.f32 %v1092, %v1709
  %v1721 = vmul.f32 %v1093, %v1709
  %v1722 = vmul.f32 %v1094, %v1709
  %v1723 = vmul.f32 %v1095, %v1709
  %v1724 = vmul.f32 %v1096, %v1709
  %v1725 = vmul.f32 %v1097, %v1709
  %v1726 = vmul.f32 %v1098, %v1709
  %v1727 = vmul.f32 %v1099, %v1709
  %v1728 = vmul.f32 %v1100, %v1709
  %v1729 = vmul.f32 %v1101, %v1709
  %v1730 = vmul.f32 %v1102, %v1709
  %v1731 = vmul.f32 %v1103, %v1709
  %v1732 = vmul.f32 %v1104, %v1709
  %v1733 = vmul.f32 %v1105, %v1709
  %v1734 = vmul.f32 %v1106, %v1709
  %v1735 = vmul.f32 %v1107, %v1709
  %v1736 = vmul.f32 %v1108, %v1709
  %v1737 = vmul.f32 %v1109, %v1709
  %v1738 = vmul.f32 %v1110, %v1709
  %v1739 = vmul.f32 %v1111, %v1709
  %v1740 = vmul.f32 %v1112, %v1709
  %v1741 = vmul.f32 %v1113, %v1709
  %v1742 = vadd.f32 %v1674, %v1710
  %v1743 = vadd.f32 %v1675, %v1711
  %v1744 = vadd.f32 %v1676, %v1712
  %v1745 = vadd.f32 %v1677, %v1713
  %v1746 = vadd.f32 %v1678, %v1714
  %v1747 = vadd.f32 %v1679, %v1715
  %v1748 = vadd.f32 %v1680, %v1716
  %v1749 = vadd.f32 %v1681, %v1717
  %v1750 = vadd.f32 %v1682, %v1718
  %v1751 = vadd.f32 %v1683, %v1719
  %v1752 = vadd.f32 %v1684, %v1720
  %v1753 = vadd.f32 %v1685, %v1721
  %v1754 = vadd.f32 %v1686, %v1722
  %v1755 = vadd.f32 %v1687, %v1723
  %v1756 = vadd.f32 %v1688, %v1724
  %v1757 = vadd.f32 %v1689, %v1725
  %v1758 = vadd.f32 %v1690, %v1726
  %v1759 = vadd.f32 %v1691, %v1727
  %v1760 = vadd.f32 %v1692, %v1728
  %v1761 = vadd.f32 %v1693, %v1729
  %v1762 = vadd.f32 %v1694, %v1730
  %v1763 = vadd.f32 %v1695, %v1731
  %v1764 = vadd.f32 %v1696, %v1732
  %v1765 = vadd.f32 %v1697, %v1733
  %v1766 = vadd.f32 %v1698, %v1734
  %v1767 = vadd.f32 %v1699, %v1735
  %v1768 = vadd.f32 %v1700, %v1736
  %v1769 = vadd.f32 %v1701, %v1737
  %v1770 = vadd.f32 %v1702, %v1738
  %v1771 = vadd.f32 %v1703, %v1739
  %v1772 = vadd.f32 %v1704, %v1740
  %v1773 = vadd.f32 %v1705, %v1741
  %v1774 = vlaneseq
  %v1775 = vshrl.u32 %v1774, 7
  %v1776 = vsub.s32 5, %v1775
  %v1777 = vrot.slane %v30, %v1776
  %v1778 = vmul.f32 %v1126, %v1777
  %v1779 = vmul.f32 %v1127, %v1777
  %v1780 = vmul.f32 %v1128, %v1777
  %v1781 = vmul.f32 %v1129, %v1777
  %v1782 = vmul.f32 %v1130, %v1777
  %v1783 = vmul.f32 %v1131, %v1777
  %v1784 = vmul.f32 %v1132, %v1777
  %v1785 = vmul.f32 %v1133, %v1777
  %v1786 = vmul.f32 %v1134, %v1777
  %v1787 = vmul.f32 %v1135, %v1777
  %v1788 = vmul.f32 %v1136, %v1777
  %v1789 = vmul.f32 %v1137, %v1777
  %v1790 = vmul.f32 %v1138, %v1777
  %v1791 = vmul.f32 %v1139, %v1777
  %v1792 = vmul.f32 %v1140, %v1777
  %v1793 = vmul.f32 %v1141, %v1777
  %v1794 = vmul.f32 %v1142, %v1777
  %v1795 = vmul.f32 %v1143, %v1777
  %v1796 = vmul.f32 %v1144, %v1777
  %v1797 = vmul.f32 %v1145, %v1777
  %v1798 = vmul.f32 %v1146, %v1777
  %v1799 = vmul.f32 %v1147, %v1777
  %v1800 = vmul.f32 %v1148, %v1777
  %v1801 = vmul.f32 %v1149, %v1777
  %v1802 = vmul.f32 %v1150, %v1777
  %v1803 = vmul.f32 %v1151, %v1777
  %v1804 = vmul.f32 %v1152, %v1777
  %v1805 = vmul.f32 %v1153, %v1777
  %v1806 = vmul.f32 %v1154, %v1777
  %v1807 = vmul.f32 %v1155, %v1777
  %v1808 = vmul.f32 %v1156, %v1777
  %v1809 = vmul.f32 %v1157, %v1777
  %v1810 = vadd.f32 %v1742, %v1778
  %v1811 = vadd.f32 %v1743, %v1779
  %v1812 = vadd.f32 %v1744, %v1780
  %v1813 = vadd.f32 %v1745, %v1781
  %v1814 = vadd.f32 %v1746, %v1782
  %v1815 = vadd.f32 %v1747, %v1783
  %v1816 = vadd.f32 %v1748, %v1784
  %v1817 = vadd.f32 %v1749, %v1785
  %v1818 = vadd.f32 %v1750, %v1786
  %v1819 = vadd.f32 %v1751, %v1787
  %v1820 = vadd.f32 %v1752, %v1788
  %v1821 = vadd.f32 %v1753, %v1789
  %v1822 = vadd.f32 %v1754, %v1790
  %v1823 = vadd.f32 %v1755, %v1791
  %v1824 = vadd.f32 %v1756, %v1792
  %v1825 = vadd.f32 %v1757, %v1793
  %v1826 = vadd.f32 %v1758, %v1794
  %v1827 = vadd.f32 %v1759, %v1795
  %v1828 = vadd.f32 %v1760, %v1796
  %v1829 = vadd.f32 %v1761, %v1797
  %v1830 = vadd.f32 %v1762, %v1798
  %v1831 = vadd.f32 %v1763, %v1799
  %v1832 = vadd.f32 %v1764, %v1800
  %v1833 = vadd.f32 %v1765, %v1801
  %v1834 = vadd.f32 %v1766, %v1802
  %v1835 = vadd.f32 %v1767, %v1803
  %v1836 = vadd.f32 %v1768, %v1804
  %v1837 = vadd.f32 %v1769, %v1805
  %v1838 = vadd.f32 %v1770, %v1806
  %v1839 = vadd.f32 %v1771, %v1807
  %v1840 = vadd.f32 %v1772, %v1808
  %v1841 = vadd.f32 %v1773, %v1809
  %v1842 = vlaneseq
  %v1843 = vshrl.u32 %v1842, 7
  %v1844 = vsub.s32 4, %v1843
  %v1845 = vrot.slane %v24, %v1844
  %v1846 = vmul.f32 %v1084, %v1845
  %v1847 = vmul.f32 %v1085, %v1845
  %v1848 = vmul.f32 %v1086, %v1845
  %v1849 = vmul.f32 %v1087, %v1845
  %v1850 = vmul.f32 %v1088, %v1845
  %v1851 = vmul.f32 %v1089, %v1845
  %v1852 = vmul.f32 %v1090, %v1845
  %v1853 = vmul.f32 %v1091, %v1845
  %v1854 = vmul.f32 %v1092, %v1845
  %v1855 = vmul.f32 %v1093, %v1845
  %v1856 = vmul.f32 %v1094, %v1845
  %v1857 = vmul.f32 %v1095, %v1845
  %v1858 = vmul.f32 %v1096, %v1845
  %v1859 = vmul.f32 %v1097, %v1845
  %v1860 = vmul.f32 %v1098, %v1845
  %v1861 = vmul.f32 %v1099, %v1845
  %v1862 = vmul.f32 %v1100, %v1845
  %v1863 = vmul.f32 %v1101, %v1845
  %v1864 = vmul.f32 %v1102, %v1845
  %v1865 = vmul.f32 %v1103, %v1845
  %v1866 = vmul.f32 %v1104, %v1845
  %v1867 = vmul.f32 %v1105, %v1845
  %v1868 = vmul.f32 %v1106, %v1845
  %v1869 = vmul.f32 %v1107, %v1845
  %v1870 = vmul.f32 %v1108, %v1845
  %v1871 = vmul.f32 %v1109, %v1845
  %v1872 = vmul.f32 %v1110, %v1845
  %v1873 = vmul.f32 %v1111, %v1845
  %v1874 = vmul.f32 %v1112, %v1845
  %v1875 = vmul.f32 %v1113, %v1845
  %v1876 = vmul.f32 %v1114, %v1845
  %v1877 = vmul.f32 %v1115, %v1845
  %v1878 = vadd.f32 %v1810, %v1846
  %v1879 = vadd.f32 %v1811, %v1847
  %v1880 = vadd.f32 %v1812, %v1848
  %v1881 = vadd.f32 %v1813, %v1849
  %v1882 = vadd.f32 %v1814, %v1850
  %v1883 = vadd.f32 %v1815, %v1851
  %v1884 = vadd.f32 %v1816, %v1852
  %v1885 = vadd.f32 %v1817, %v1853
  %v1886 = vadd.f32 %v1818, %v1854
  %v1887 = vadd.f32 %v1819, %v1855
  %v1888 = vadd.f32 %v1820, %v1856
  %v1889 = vadd.f32 %v1821, %v1857
  %v1890 = vadd.f32 %v1822, %v1858
  %v1891 = vadd.f32 %v1823, %v1859
  %v1892 = vadd.f32 %v1824, %v1860
  %v1893 = vadd.f32 %v1825, %v1861
  %v1894 = vadd.f32 %v1826, %v1862
  %v1895 = vadd.f32 %v1827, %v1863
  %v1896 = vadd.f32 %v1828, %v1864
  %v1897 = vadd.f32 %v1829, %v1865
  %v1898 = vadd.f32 %v1830, %v1866
  %v1899 = vadd.f32 %v1831, %v1867
  %v1900 = vadd.f32 %v1832, %v1868
  %v1901 = vadd.f32 %v1833, %v1869
  %v1902 = vadd.f32 %v1834, %v1870
  %v1903 = vadd.f32 %v1835, %v1871
  %v1904 = vadd.f32 %v1836, %v1872
  %v1905 = vadd.f32 %v1837, %v1873
  %v1906 = vadd.f32 %v1838, %v1874
  %v1907 = vadd.f32 %v1839, %v1875
  %v1908 = vadd.f32 %v1840, %v1876
  %v1909 = vadd.f32 %v1841, %v1877
  %v1910 = vlaneseq
  %v1911 = vshrl.u32 %v1910, 7
  %v1912 = vsub.s32 4, %v1911
  %v1913 = vrot.slane %v31, %v1912
  %v1914 = vmul.f32 %v1128, %v1913
  %v1915 = vmul.f32 %v1129, %v1913
  %v1916 = vmul.f32 %v1130, %v1913
  %v1917 = vmul.f32 %v1131, %v1913
  %v1918 = vmul.f32 %v1132, %v1913
  %v1919 = vmul.f32 %v1133, %v1913
  %v1920 = vmul.f32 %v1134, %v1913
  %v1921 = vmul.f32 %v1135, %v1913
  %v1922 = vmul.f32 %v1136, %v1913
  %v1923 = vmul.f32 %v1137, %v1913
  %v1924 = vmul.f32 %v1138, %v1913
  %v1925 = vmul.f32 %v1139, %v1913
  %v1926 = vmul.f32 %v1140, %v1913
  %v1927 = vmul.f32 %v1141, %v1913
  %v1928 = vmul.f32 %v1142, %v1913
  %v1929 = vmul.f32 %v1143, %v1913
  %v1930 = vmul.f32 %v1144, %v1913
  %v1931 = vmul.f32 %v1145, %v1913
  %v1932 = vmul.f32 %v1146, %v1913
  %v1933 = vmul.f32 %v1147, %v1913
  %v1934 = vmul.f32 %v1148, %v1913
  %v1935 = vmul.f32 %v1149, %v1913
  %v1936 = vmul.f32 %v1150, %v1913
  %v1937 = vmul.f32 %v1151, %v1913
  %v1938 = vmul.f32 %v1152, %v1913
  %v1939 = vmul.f32 %v1153, %v1913
  %v1940 = vmul.f32 %v1154, %v1913
  %v1941 = vmul.f32 %v1155, %v1913
  %v1942 = vmul.f32 %v1156, %v1913
  %v1943 = vmul.f32 %v1157, %v1913
  %v1944 = vmul.f32 %v1158, %v1913
  %v1945 = vmul.f32 %v1159, %v1913
  %v1946 = vadd.f32 %v1878, %v1914
  %v1947 = vadd.f32 %v1879, %v1915
  %v1948 = vadd.f32 %v1880, %v1916
  %v1949 = vadd.f32 %v1881, %v1917
  %v1950 = vadd.f32 %v1882, %v1918
  %v1951 = vadd.f32 %v1883, %v1919
  %v1952 = vadd.f32 %v1884, %v1920
  %v1953 = vadd.f32 %v1885, %v1921
  %v1954 = vadd.f32 %v1886, %v1922
  %v1955 = vadd.f32 %v1887, %v1923
  %v1956 = vadd.f32 %v1888, %v1924
  %v1957 = vadd.f32 %v1889, %v1925
  %v1958 = vadd.f32 %v1890, %v1926
  %v1959 = vadd.f32 %v1891, %v1927
  %v1960 = vadd.f32 %v1892, %v1928
  %v1961 = vadd.f32 %v1893, %v1929
  %v1962 = vadd.f32 %v1894, %v1930
  %v1963 = vadd.f32 %v1895, %v1931
  %v1964 = vadd.f32 %v1896, %v1932
  %v1965 = vadd.f32 %v1897, %v1933
  %v1966 = vadd.f32 %v1898, %v1934
  %v1967 = vadd.f32 %v1899, %v1935
  %v1968 = vadd.f32 %v1900, %v1936
  %v1969 = vadd.f32 %v1901, %v1937
  %v1970 = vadd.f32 %v1902, %v1938
  %v1971 = vadd.f32 %v1903, %v1939
  %v1972 = vadd.f32 %v1904, %v1940
  %v1973 = vadd.f32 %v1905, %v1941
  %v1974 = vadd.f32 %v1906, %v1942
  %v1975 = vadd.f32 %v1907, %v1943
  %v1976 = vadd.f32 %v1908, %v1944
  %v1977 = vadd.f32 %v1909, %v1945
  %v1978 = vlaneseq
  %v1979 = vshrl.u32 %v1978, 7
  %v1980 = vsub.s32 3, %v1979
  %v1981 = vrot.slane %v25, %v1980
  %v1982 = vmul.f32 %v1086, %v1981
  %v1983 = vmul.f32 %v1087, %v1981
  %v1984 = vmul.f32 %v1088, %v1981
  %v1985 = vmul.f32 %v1089, %v1981
  %v1986 = vmul.f32 %v1090, %v1981
  %v1987 = vmul.f32 %v1091, %v1981
  %v1988 = vmul.f32 %v1092, %v1981
  %v1989 = vmul.f32 %v1093, %v1981
  %v1990 = vmul.f32 %v1094, %v1981
  %v1991 = vmul.f32 %v1095, %v1981
  %v1992 = vmul.f32 %v1096, %v1981
  %v1993 = vmul.f32 %v1097, %v1981
  %v1994 = vmul.f32 %v1098, %v1981
  %v1995 = vmul.f32 %v1099, %v1981
  %v1996 = vmul.f32 %v1100, %v1981
  %v1997 = vmul.f32 %v1101, %v1981
  %v1998 = vmul.f32 %v1102, %v1981
  %v1999 = vmul.f32 %v1103, %v1981
  %v2000 = vmul.f32 %v1104, %v1981
  %v2001 = vmul.f32 %v1105, %v1981
  %v2002 = vmul.f32 %v1106, %v1981
  %v2003 = vmul.f32 %v1107, %v1981
  %v2004 = vmul.f32 %v1108, %v1981
  %v2005 = vmul.f32 %v1109, %v1981
  %v2006 = vmul.f32 %v1110, %v1981
  %v2007 = vmul.f32 %v1111, %v1981
  %v2008 = vmul.f32 %v1112, %v1981
  %v2009 = vmul.f32 %v1113, %v1981
  %v2010 = vmul.f32 %v1114, %v1981
  %v2011 = vmul.f32 %v1115, %v1981
  %v2012 = vmul.f32 %v1116, %v1981
  %v2013 = vmul.f32 %v1117, %v1981
  %v2014 = vadd.f32 %v1946, %v1982
  %v2015 = vadd.f32 %v1947, %v1983
  %v2016 = vadd.f32 %v1948, %v1984
  %v2017 = vadd.f32 %v1949, %v1985
  %v2018 = vadd.f32 %v1950, %v1986
  %v2019 = vadd.f32 %v1951, %v1987
  %v2020 = vadd.f32 %v1952, %v1988
  %v2021 = vadd.f32 %v1953, %v1989
  %v2022 = vadd.f32 %v1954, %v1990
  %v2023 = vadd.f32 %v1955, %v1991
  %v2024 = vadd.f32 %v1956, %v1992
  %v2025 = vadd.f32 %v1957, %v1993
  %v2026 = vadd.f32 %v1958, %v1994
  %v2027 = vadd.f32 %v1959, %v1995
  %v2028 = vadd.f32 %v1960, %v1996
  %v2029 = vadd.f32 %v1961, %v1997
  %v2030 = vadd.f32 %v1962, %v1998
  %v2031 = vadd.f32 %v1963, %v1999
  %v2032 = vadd.f32 %v1964, %v2000
  %v2033 = vadd.f32 %v1965, %v2001
  %v2034 = vadd.f32 %v1966, %v2002
  %v2035 = vadd.f32 %v1967, %v2003
  %v2036 = vadd.f32 %v1968, %v2004
  %v2037 = vadd.f32 %v1969, %v2005
  %v2038 = vadd.f32 %v1970, %v2006
  %v2039 = vadd.f32 %v1971, %v2007
  %v2040 = vadd.f32 %v1972, %v2008
  %v2041 = vadd.f32 %v1973, %v2009
  %v2042 = vadd.f32 %v1974, %v2010
  %v2043 = vadd.f32 %v1975, %v2011
  %v2044 = vadd.f32 %v1976, %v2012
  %v2045 = vadd.f32 %v1977, %v2013
  %v2046 = vlaneseq
  %v2047 = vshrl.u32 %v2046, 7
  %v2048 = vsub.s32 3, %v2047
  %v2049 = vrot.slane %v32, %v2048
  %v2050 = vmul.f32 %v1130, %v2049
  %v2051 = vmul.f32 %v1131, %v2049
  %v2052 = vmul.f32 %v1132, %v2049
  %v2053 = vmul.f32 %v1133, %v2049
  %v2054 = vmul.f32 %v1134, %v2049
  %v2055 = vmul.f32 %v1135, %v2049
  %v2056 = vmul.f32 %v1136, %v2049
  %v2057 = vmul.f32 %v1137, %v2049
  %v2058 = vmul.f32 %v1138, %v2049
  %v2059 = vmul.f32 %v1139, %v2049
  %v2060 = vmul.f32 %v1140, %v2049
  %v2061 = vmul.f32 %v1141, %v2049
  %v2062 = vmul.f32 %v1142, %v2049
  %v2063 = vmul.f32 %v1143, %v2049
  %v2064 = vmul.f32 %v1144, %v2049
  %v2065 = vmul.f32 %v1145, %v2049
  %v2066 = vmul.f32 %v1146, %v2049
  %v2067 = vmul.f32 %v1147, %v2049
  %v2068 = vmul.f32 %v1148, %v2049
  %v2069 = vmul.f32 %v1149, %v2049
  %v2070 = vmul.f32 %v1150, %v2049
  %v2071 = vmul.f32 %v1151, %v2049
  %v2072 = vmul.f32 %v1152, %v2049
  %v2073 = vmul.f32 %v1153, %v2049
  %v2074 = vmul.f32 %v1154, %v2049
  %v2075 = vmul.f32 %v1155, %v2049
  %v2076 = vmul.f32 %v1156, %v2049
  %v2077 = vmul.f32 %v1157, %v2049
  %v2078 = vmul.f32 %v1158, %v2049
  %v2079 = vmul.f32 %v1159, %v2049
  %v2080 = vmul.f32 %v1160, %v2049
  %v2081 = vmul.f32 %v1161, %v2049
  %v2082 = vadd.f32 %v2014, %v2050
  %v2083 = vadd.f32 %v2015, %v2051
  %v2084 = vadd.f32 %v2016, %v2052
  %v2085 = vadd.f32 %v2017, %v2053
  %v2086 = vadd.f32 %v2018, %v2054
  %v2087 = vadd.f32 %v2019, %v2055
  %v2088 = vadd.f32 %v2020, %v2056
  %v2089 = vadd.f32 %v2021, %v2057
  %v2090 = vadd.f32 %v2022, %v2058
  %v2091 = vadd.f32 %v2023, %v2059
  %v2092 = vadd.f32 %v2024, %v2060
  %v2093 = vadd.f32 %v2025, %v2061
  %v2094 = vadd.f32 %v2026, %v2062
  %v2095 = vadd.f32 %v2027, %v2063
  %v2096 = vadd.f32 %v2028, %v2064
  %v2097 = vadd.f32 %v2029, %v2065
  %v2098 = vadd.f32 %v2030, %v2066
  %v2099 = vadd.f32 %v2031, %v2067
  %v2100 = vadd.f32 %v2032, %v2068
  %v2101 = vadd.f32 %v2033, %v2069
  %v2102 = vadd.f32 %v2034, %v2070
  %v2103 = vadd.f32 %v2035, %v2071
  %v2104 = vadd.f32 %v2036, %v2072
  %v2105 = vadd.f32 %v2037, %v2073
  %v2106 = vadd.f32 %v2038, %v2074
  %v2107 = vadd.f32 %v2039, %v2075
  %v2108 = vadd.f32 %v2040, %v2076
  %v2109 = vadd.f32 %v2041, %v2077
  %v2110 = vadd.f32 %v2042, %v2078
  %v2111 = vadd.f32 %v2043, %v2079
  %v2112 = vadd.f32 %v2044, %v2080
  %v2113 = vadd.f32 %v2045, %v2081
  %v2114 = vld [vmem:[%s0 + $0x2] sm:$0xff]
  %v2115 = vld [vmem:[%s0 + $0xa] sm:$0xff]
  %v2116 = vld [vmem:[%s0 + $0x1a] sm:$0xff]
  %v2117 = vld [vmem:[%s0 + $0x22] sm:$0xff]
  %v2118 = vld [vmem:[%s0 + $0x32] sm:$0xff]
  %v2119 = vld [vmem:[%s0 + $0x3a] sm:$0xff]
  %v2120 = vld [vmem:[%s0 + $0x4a] sm:$0xff]
  %v2121 = vld [vmem:[%s0 + $0x52] sm:$0xff]
  %v2122 = vld [vmem:[%s0 + $0x62] sm:$0xff]
  %v2123 = vld [vmem:[%s0 + $0x6a] sm:$0xff]
  %v2124 = vld [vmem:[%s0 + $0x7a] sm:$0xff]
  %v2125 = vld [vmem:[%s0 + $0x82] sm:$0xff]
  %v2126 = vld [vmem:[%s0 + $0x92] sm:$0xff]
  %v2127 = vld [vmem:[%s0 + $0x9a] sm:$0xff]
  %v2128 = vld [vmem:[%s0 + $0xaa] sm:$0xff]
  %v2129 = vld [vmem:[%s0 + $0xb2] sm:$0xff]
  %v2130 = vld [vmem:[%s0 + $0xc2] sm:$0xff]
  %v2131 = vld [vmem:[%s0 + $0xca] sm:$0xff]
  %v2132 = vld [vmem:[%s0 + $0xda] sm:$0xff]
  %v2133 = vld [vmem:[%s0 + $0xe2] sm:$0xff]
  %v2134 = vld [vmem:[%s0 + $0xf2] sm:$0xff]
  %v2135 = vld [vmem:[%s0 + $0xfa] sm:$0xff]
  %v2136 = vld [vmem:[%s0 + $0x10a] sm:$0xff]
  %v2137 = vld [vmem:[%s0 + $0x112] sm:$0xff]
  %v2138 = vld [vmem:[%s0 + $0x122] sm:$0xff]
  %v2139 = vld [vmem:[%s0 + $0x12a] sm:$0xff]
  %v2140 = vld [vmem:[%s0 + $0x13a] sm:$0xff]
  %v2141 = vld [vmem:[%s0 + $0x142] sm:$0xff]
  %v2142 = vld [vmem:[%s0 + $0x152] sm:$0xff]
  %v2143 = vld [vmem:[%s0 + $0x15a] sm:$0xff]
  %v2144 = vld [vmem:[%s0 + $0x16a] sm:$0xff]
  %v2145 = vld [vmem:[%s0 + $0x172] sm:$0xff]
  %v2146 = vld [vmem:[%s0 + $0x182] sm:$0xff]
  %v2147 = vld [vmem:[%s0 + $0x18a] sm:$0xff]
  %v2148 = vld [vmem:[%s0 + $0x19a] sm:$0xff]
  %v2149 = vld [vmem:[%s0 + $0x1a2] sm:$0xff]
  %v2150 = vld [vmem:[%s0 + $0x1b2] sm:$0xff]
  %v2151 = vld [vmem:[%s0 + $0x1ba] sm:$0xff]
  %v2152 = vld [vmem:[%s0 + $0x1ca] sm:$0xff]
  %v2153 = vld [vmem:[%s0 + $0x1d2] sm:$0xff]
  %v2154 = vld [vmem:[%s0 + $0x1e2] sm:$0xff]
  %v2155 = vld [vmem:[%s0 + $0x1ea] sm:$0xff]
  %v2156 = vld [vmem:[%s0 + $0x1fa] sm:$0xff]
  %v2157 = vld [vmem:[%s0 + $0x202] sm:$0xff]
  %v2158 = vld [vmem:[%s1 + $0x2] sm:$0xff]
  %v2159 = vld [vmem:[%s1 + $0xa] sm:$0xff]
  %v2160 = vld [vmem:[%s1 + $0x1a] sm:$0xff]
  %v2161 = vld [vmem:[%s1 + $0x22] sm:$0xff]
  %v2162 = vld [vmem:[%s1 + $0x32] sm:$0xff]
  %v2163 = vld [vmem:[%s1 + $0x3a] sm:$0xff]
  %v2164 = vld [vmem:[%s1 + $0x4a] sm:$0xff]
  %v2165 = vld [vmem:[%s1 + $0x52] sm:$0xff]
  %v2166 = vld [vmem:[%s1 + $0x62] sm:$0xff]
  %v2167 = vld [vmem:[%s1 + $0x6a] sm:$0xff]
  %v2168 = vld [vmem:[%s1 + $0x7a] sm:$0xff]
  %v2169 = vld [vmem:[%s1 + $0x82] sm:$0xff]
  %v2170 = vld [vmem:[%s1 + $0x92] sm:$0xff]
  %v2171 = vld [vmem:[%s1 + $0x9a] sm:$0xff]
  %v2172 = vld [vmem:[%s1 + $0xaa] sm:$0xff]
  %v2173 = vld [vmem:[%s1 + $0xb2] sm:$0xff]
  %v2174 = vld [vmem:[%s1 + $0xc2] sm:$0xff]
  %v2175 = vld [vmem:[%s1 + $0xca] sm:$0xff]
  %v2176 = vld [vmem:[%s1 + $0xda] sm:$0xff]
  %v2177 = vld [vmem:[%s1 + $0xe2] sm:$0xff]
  %v2178 = vld [vmem:[%s1 + $0xf2] sm:$0xff]
  %v2179 = vld [vmem:[%s1 + $0xfa] sm:$0xff]
  %v2180 = vld [vmem:[%s1 + $0x10a] sm:$0xff]
  %v2181 = vld [vmem:[%s1 + $0x112] sm:$0xff]
  %v2182 = vld [vmem:[%s1 + $0x122] sm:$0xff]
  %v2183 = vld [vmem:[%s1 + $0x12a] sm:$0xff]
  %v2184 = vld [vmem:[%s1 + $0x13a] sm:$0xff]
  %v2185 = vld [vmem:[%s1 + $0x142] sm:$0xff]
  %v2186 = vld [vmem:[%s1 + $0x152] sm:$0xff]
  %v2187 = vld [vmem:[%s1 + $0x15a] sm:$0xff]
  %v2188 = vld [vmem:[%s1 + $0x16a] sm:$0xff]
  %v2189 = vld [vmem:[%s1 + $0x172] sm:$0xff]
  %v2190 = vld [vmem:[%s1 + $0x182] sm:$0xff]
  %v2191 = vld [vmem:[%s1 + $0x18a] sm:$0xff]
  %v2192 = vld [vmem:[%s1 + $0x19a] sm:$0xff]
  %v2193 = vld [vmem:[%s1 + $0x1a2] sm:$0xff]
  %v2194 = vld [vmem:[%s1 + $0x1b2] sm:$0xff]
  %v2195 = vld [vmem:[%s1 + $0x1ba] sm:$0xff]
  %v2196 = vld [vmem:[%s1 + $0x1ca] sm:$0xff]
  %v2197 = vld [vmem:[%s1 + $0x1d2] sm:$0xff]
  %v2198 = vld [vmem:[%s1 + $0x1e2] sm:$0xff]
  %v2199 = vld [vmem:[%s1 + $0x1ea] sm:$0xff]
  %v2200 = vld [vmem:[%s1 + $0x1fa] sm:$0xff]
  %v2201 = vld [vmem:[%s1 + $0x202] sm:$0xff]
  %v2202 = vlaneseq
  %v2203 = vshrl.u32 %v2202, 7
  %v2204 = vsub.s32 2, %v2203
  %v2205 = vrot.slane %v20, %v2204
  %v2206 = vmul.f32 %v2114, %v2205
  %v2207 = vmul.f32 %v2115, %v2205
  %v2208 = vmul.f32 %v2116, %v2205
  %v2209 = vmul.f32 %v2117, %v2205
  %v2210 = vmul.f32 %v2118, %v2205
  %v2211 = vmul.f32 %v2119, %v2205
  %v2212 = vmul.f32 %v2120, %v2205
  %v2213 = vmul.f32 %v2121, %v2205
  %v2214 = vmul.f32 %v2122, %v2205
  %v2215 = vmul.f32 %v2123, %v2205
  %v2216 = vmul.f32 %v2124, %v2205
  %v2217 = vmul.f32 %v2125, %v2205
  %v2218 = vmul.f32 %v2126, %v2205
  %v2219 = vmul.f32 %v2127, %v2205
  %v2220 = vmul.f32 %v2128, %v2205
  %v2221 = vmul.f32 %v2129, %v2205
  %v2222 = vmul.f32 %v2130, %v2205
  %v2223 = vmul.f32 %v2131, %v2205
  %v2224 = vmul.f32 %v2132, %v2205
  %v2225 = vmul.f32 %v2133, %v2205
  %v2226 = vmul.f32 %v2134, %v2205
  %v2227 = vmul.f32 %v2135, %v2205
  %v2228 = vmul.f32 %v2136, %v2205
  %v2229 = vmul.f32 %v2137, %v2205
  %v2230 = vmul.f32 %v2138, %v2205
  %v2231 = vmul.f32 %v2139, %v2205
  %v2232 = vmul.f32 %v2140, %v2205
  %v2233 = vmul.f32 %v2141, %v2205
  %v2234 = vmul.f32 %v2142, %v2205
  %v2235 = vmul.f32 %v2143, %v2205
  %v2236 = vmul.f32 %v2144, %v2205
  %v2237 = vmul.f32 %v2145, %v2205
  %v2238 = vadd.f32 %v2082, %v2206
  %v2239 = vadd.f32 %v2083, %v2207
  %v2240 = vadd.f32 %v2084, %v2208
  %v2241 = vadd.f32 %v2085, %v2209
  %v2242 = vadd.f32 %v2086, %v2210
  %v2243 = vadd.f32 %v2087, %v2211
  %v2244 = vadd.f32 %v2088, %v2212
  %v2245 = vadd.f32 %v2089, %v2213
  %v2246 = vadd.f32 %v2090, %v2214
  %v2247 = vadd.f32 %v2091, %v2215
  %v2248 = vadd.f32 %v2092, %v2216
  %v2249 = vadd.f32 %v2093, %v2217
  %v2250 = vadd.f32 %v2094, %v2218
  %v2251 = vadd.f32 %v2095, %v2219
  %v2252 = vadd.f32 %v2096, %v2220
  %v2253 = vadd.f32 %v2097, %v2221
  %v2254 = vadd.f32 %v2098, %v2222
  %v2255 = vadd.f32 %v2099, %v2223
  %v2256 = vadd.f32 %v2100, %v2224
  %v2257 = vadd.f32 %v2101, %v2225
  %v2258 = vadd.f32 %v2102, %v2226
  %v2259 = vadd.f32 %v2103, %v2227
  %v2260 = vadd.f32 %v2104, %v2228
  %v2261 = vadd.f32 %v2105, %v2229
  %v2262 = vadd.f32 %v2106, %v2230
  %v2263 = vadd.f32 %v2107, %v2231
  %v2264 = vadd.f32 %v2108, %v2232
  %v2265 = vadd.f32 %v2109, %v2233
  %v2266 = vadd.f32 %v2110, %v2234
  %v2267 = vadd.f32 %v2111, %v2235
  %v2268 = vadd.f32 %v2112, %v2236
  %v2269 = vadd.f32 %v2113, %v2237
  %v2270 = vlaneseq
  %v2271 = vshrl.u32 %v2270, 7
  %v2272 = vsub.s32 2, %v2271
  %v2273 = vrot.slane %v27, %v2272
  %v2274 = vmul.f32 %v2158, %v2273
  %v2275 = vmul.f32 %v2159, %v2273
  %v2276 = vmul.f32 %v2160, %v2273
  %v2277 = vmul.f32 %v2161, %v2273
  %v2278 = vmul.f32 %v2162, %v2273
  %v2279 = vmul.f32 %v2163, %v2273
  %v2280 = vmul.f32 %v2164, %v2273
  %v2281 = vmul.f32 %v2165, %v2273
  %v2282 = vmul.f32 %v2166, %v2273
  %v2283 = vmul.f32 %v2167, %v2273
  %v2284 = vmul.f32 %v2168, %v2273
  %v2285 = vmul.f32 %v2169, %v2273
  %v2286 = vmul.f32 %v2170, %v2273
  %v2287 = vmul.f32 %v2171, %v2273
  %v2288 = vmul.f32 %v2172, %v2273
  %v2289 = vmul.f32 %v2173, %v2273
  %v2290 = vmul.f32 %v2174, %v2273
  %v2291 = vmul.f32 %v2175, %v2273
  %v2292 = vmul.f32 %v2176, %v2273
  %v2293 = vmul.f32 %v2177, %v2273
  %v2294 = vmul.f32 %v2178, %v2273
  %v2295 = vmul.f32 %v2179, %v2273
  %v2296 = vmul.f32 %v2180, %v2273
  %v2297 = vmul.f32 %v2181, %v2273
  %v2298 = vmul.f32 %v2182, %v2273
  %v2299 = vmul.f32 %v2183, %v2273
  %v2300 = vmul.f32 %v2184, %v2273
  %v2301 = vmul.f32 %v2185, %v2273
  %v2302 = vmul.f32 %v2186, %v2273
  %v2303 = vmul.f32 %v2187, %v2273
  %v2304 = vmul.f32 %v2188, %v2273
  %v2305 = vmul.f32 %v2189, %v2273
  %v2306 = vadd.f32 %v2238, %v2274
  %v2307 = vadd.f32 %v2239, %v2275
  %v2308 = vadd.f32 %v2240, %v2276
  %v2309 = vadd.f32 %v2241, %v2277
  %v2310 = vadd.f32 %v2242, %v2278
  %v2311 = vadd.f32 %v2243, %v2279
  %v2312 = vadd.f32 %v2244, %v2280
  %v2313 = vadd.f32 %v2245, %v2281
  %v2314 = vadd.f32 %v2246, %v2282
  %v2315 = vadd.f32 %v2247, %v2283
  %v2316 = vadd.f32 %v2248, %v2284
  %v2317 = vadd.f32 %v2249, %v2285
  %v2318 = vadd.f32 %v2250, %v2286
  %v2319 = vadd.f32 %v2251, %v2287
  %v2320 = vadd.f32 %v2252, %v2288
  %v2321 = vadd.f32 %v2253, %v2289
  %v2322 = vadd.f32 %v2254, %v2290
  %v2323 = vadd.f32 %v2255, %v2291
  %v2324 = vadd.f32 %v2256, %v2292
  %v2325 = vadd.f32 %v2257, %v2293
  %v2326 = vadd.f32 %v2258, %v2294
  %v2327 = vadd.f32 %v2259, %v2295
  %v2328 = vadd.f32 %v2260, %v2296
  %v2329 = vadd.f32 %v2261, %v2297
  %v2330 = vadd.f32 %v2262, %v2298
  %v2331 = vadd.f32 %v2263, %v2299
  %v2332 = vadd.f32 %v2264, %v2300
  %v2333 = vadd.f32 %v2265, %v2301
  %v2334 = vadd.f32 %v2266, %v2302
  %v2335 = vadd.f32 %v2267, %v2303
  %v2336 = vadd.f32 %v2268, %v2304
  %v2337 = vadd.f32 %v2269, %v2305
  %v2338 = vlaneseq
  %v2339 = vshrl.u32 %v2338, 7
  %v2340 = vsub.s32 1, %v2339
  %v2341 = vrot.slane %v21, %v2340
  %v2342 = vmul.f32 %v2116, %v2341
  %v2343 = vmul.f32 %v2117, %v2341
  %v2344 = vmul.f32 %v2118, %v2341
  %v2345 = vmul.f32 %v2119, %v2341
  %v2346 = vmul.f32 %v2120, %v2341
  %v2347 = vmul.f32 %v2121, %v2341
  %v2348 = vmul.f32 %v2122, %v2341
  %v2349 = vmul.f32 %v2123, %v2341
  %v2350 = vmul.f32 %v2124, %v2341
  %v2351 = vmul.f32 %v2125, %v2341
  %v2352 = vmul.f32 %v2126, %v2341
  %v2353 = vmul.f32 %v2127, %v2341
  %v2354 = vmul.f32 %v2128, %v2341
  %v2355 = vmul.f32 %v2129, %v2341
  %v2356 = vmul.f32 %v2130, %v2341
  %v2357 = vmul.f32 %v2131, %v2341
  %v2358 = vmul.f32 %v2132, %v2341
  %v2359 = vmul.f32 %v2133, %v2341
  %v2360 = vmul.f32 %v2134, %v2341
  %v2361 = vmul.f32 %v2135, %v2341
  %v2362 = vmul.f32 %v2136, %v2341
  %v2363 = vmul.f32 %v2137, %v2341
  %v2364 = vmul.f32 %v2138, %v2341
  %v2365 = vmul.f32 %v2139, %v2341
  %v2366 = vmul.f32 %v2140, %v2341
  %v2367 = vmul.f32 %v2141, %v2341
  %v2368 = vmul.f32 %v2142, %v2341
  %v2369 = vmul.f32 %v2143, %v2341
  %v2370 = vmul.f32 %v2144, %v2341
  %v2371 = vmul.f32 %v2145, %v2341
  %v2372 = vmul.f32 %v2146, %v2341
  %v2373 = vmul.f32 %v2147, %v2341
  %v2374 = vadd.f32 %v2306, %v2342
  %v2375 = vadd.f32 %v2307, %v2343
  %v2376 = vadd.f32 %v2308, %v2344
  %v2377 = vadd.f32 %v2309, %v2345
  %v2378 = vadd.f32 %v2310, %v2346
  %v2379 = vadd.f32 %v2311, %v2347
  %v2380 = vadd.f32 %v2312, %v2348
  %v2381 = vadd.f32 %v2313, %v2349
  %v2382 = vadd.f32 %v2314, %v2350
  %v2383 = vadd.f32 %v2315, %v2351
  %v2384 = vadd.f32 %v2316, %v2352
  %v2385 = vadd.f32 %v2317, %v2353
  %v2386 = vadd.f32 %v2318, %v2354
  %v2387 = vadd.f32 %v2319, %v2355
  %v2388 = vadd.f32 %v2320, %v2356
  %v2389 = vadd.f32 %v2321, %v2357
  %v2390 = vadd.f32 %v2322, %v2358
  %v2391 = vadd.f32 %v2323, %v2359
  %v2392 = vadd.f32 %v2324, %v2360
  %v2393 = vadd.f32 %v2325, %v2361
  %v2394 = vadd.f32 %v2326, %v2362
  %v2395 = vadd.f32 %v2327, %v2363
  %v2396 = vadd.f32 %v2328, %v2364
  %v2397 = vadd.f32 %v2329, %v2365
  %v2398 = vadd.f32 %v2330, %v2366
  %v2399 = vadd.f32 %v2331, %v2367
  %v2400 = vadd.f32 %v2332, %v2368
  %v2401 = vadd.f32 %v2333, %v2369
  %v2402 = vadd.f32 %v2334, %v2370
  %v2403 = vadd.f32 %v2335, %v2371
  %v2404 = vadd.f32 %v2336, %v2372
  %v2405 = vadd.f32 %v2337, %v2373
  %v2406 = vlaneseq
  %v2407 = vshrl.u32 %v2406, 7
  %v2408 = vsub.s32 1, %v2407
  %v2409 = vrot.slane %v28, %v2408
  %v2410 = vmul.f32 %v2160, %v2409
  %v2411 = vmul.f32 %v2161, %v2409
  %v2412 = vmul.f32 %v2162, %v2409
  %v2413 = vmul.f32 %v2163, %v2409
  %v2414 = vmul.f32 %v2164, %v2409
  %v2415 = vmul.f32 %v2165, %v2409
  %v2416 = vmul.f32 %v2166, %v2409
  %v2417 = vmul.f32 %v2167, %v2409
  %v2418 = vmul.f32 %v2168, %v2409
  %v2419 = vmul.f32 %v2169, %v2409
  %v2420 = vmul.f32 %v2170, %v2409
  %v2421 = vmul.f32 %v2171, %v2409
  %v2422 = vmul.f32 %v2172, %v2409
  %v2423 = vmul.f32 %v2173, %v2409
  %v2424 = vmul.f32 %v2174, %v2409
  %v2425 = vmul.f32 %v2175, %v2409
  %v2426 = vmul.f32 %v2176, %v2409
  %v2427 = vmul.f32 %v2177, %v2409
  %v2428 = vmul.f32 %v2178, %v2409
  %v2429 = vmul.f32 %v2179, %v2409
  %v2430 = vmul.f32 %v2180, %v2409
  %v2431 = vmul.f32 %v2181, %v2409
  %v2432 = vmul.f32 %v2182, %v2409
  %v2433 = vmul.f32 %v2183, %v2409
  %v2434 = vmul.f32 %v2184, %v2409
  %v2435 = vmul.f32 %v2185, %v2409
  %v2436 = vmul.f32 %v2186, %v2409
  %v2437 = vmul.f32 %v2187, %v2409
  %v2438 = vmul.f32 %v2188, %v2409
  %v2439 = vmul.f32 %v2189, %v2409
  %v2440 = vmul.f32 %v2190, %v2409
  %v2441 = vmul.f32 %v2191, %v2409
  %v2442 = vadd.f32 %v2374, %v2410
  %v2443 = vadd.f32 %v2375, %v2411
  %v2444 = vadd.f32 %v2376, %v2412
  %v2445 = vadd.f32 %v2377, %v2413
  %v2446 = vadd.f32 %v2378, %v2414
  %v2447 = vadd.f32 %v2379, %v2415
  %v2448 = vadd.f32 %v2380, %v2416
  %v2449 = vadd.f32 %v2381, %v2417
  %v2450 = vadd.f32 %v2382, %v2418
  %v2451 = vadd.f32 %v2383, %v2419
  %v2452 = vadd.f32 %v2384, %v2420
  %v2453 = vadd.f32 %v2385, %v2421
  %v2454 = vadd.f32 %v2386, %v2422
  %v2455 = vadd.f32 %v2387, %v2423
  %v2456 = vadd.f32 %v2388, %v2424
  %v2457 = vadd.f32 %v2389, %v2425
  %v2458 = vadd.f32 %v2390, %v2426
  %v2459 = vadd.f32 %v2391, %v2427
  %v2460 = vadd.f32 %v2392, %v2428
  %v2461 = vadd.f32 %v2393, %v2429
  %v2462 = vadd.f32 %v2394, %v2430
  %v2463 = vadd.f32 %v2395, %v2431
  %v2464 = vadd.f32 %v2396, %v2432
  %v2465 = vadd.f32 %v2397, %v2433
  %v2466 = vadd.f32 %v2398, %v2434
  %v2467 = vadd.f32 %v2399, %v2435
  %v2468 = vadd.f32 %v2400, %v2436
  %v2469 = vadd.f32 %v2401, %v2437
  %v2470 = vadd.f32 %v2402, %v2438
  %v2471 = vadd.f32 %v2403, %v2439
  %v2472 = vadd.f32 %v2404, %v2440
  %v2473 = vadd.f32 %v2405, %v2441
  %v2474 = vlaneseq
  %v2475 = vshrl.u32 %v2474, 7
  %v2476 = vsub.s32 0, %v2475
  %v2477 = vrot.slane %v22, %v2476
  %v2478 = vmul.f32 %v2118, %v2477
  %v2479 = vmul.f32 %v2119, %v2477
  %v2480 = vmul.f32 %v2120, %v2477
  %v2481 = vmul.f32 %v2121, %v2477
  %v2482 = vmul.f32 %v2122, %v2477
  %v2483 = vmul.f32 %v2123, %v2477
  %v2484 = vmul.f32 %v2124, %v2477
  %v2485 = vmul.f32 %v2125, %v2477
  %v2486 = vmul.f32 %v2126, %v2477
  %v2487 = vmul.f32 %v2127, %v2477
  %v2488 = vmul.f32 %v2128, %v2477
  %v2489 = vmul.f32 %v2129, %v2477
  %v2490 = vmul.f32 %v2130, %v2477
  %v2491 = vmul.f32 %v2131, %v2477
  %v2492 = vmul.f32 %v2132, %v2477
  %v2493 = vmul.f32 %v2133, %v2477
  %v2494 = vmul.f32 %v2134, %v2477
  %v2495 = vmul.f32 %v2135, %v2477
  %v2496 = vmul.f32 %v2136, %v2477
  %v2497 = vmul.f32 %v2137, %v2477
  %v2498 = vmul.f32 %v2138, %v2477
  %v2499 = vmul.f32 %v2139, %v2477
  %v2500 = vmul.f32 %v2140, %v2477
  %v2501 = vmul.f32 %v2141, %v2477
  %v2502 = vmul.f32 %v2142, %v2477
  %v2503 = vmul.f32 %v2143, %v2477
  %v2504 = vmul.f32 %v2144, %v2477
  %v2505 = vmul.f32 %v2145, %v2477
  %v2506 = vmul.f32 %v2146, %v2477
  %v2507 = vmul.f32 %v2147, %v2477
  %v2508 = vmul.f32 %v2148, %v2477
  %v2509 = vmul.f32 %v2149, %v2477
  %v2510 = vadd.f32 %v2442, %v2478
  %v2511 = vadd.f32 %v2443, %v2479
  %v2512 = vadd.f32 %v2444, %v2480
  %v2513 = vadd.f32 %v2445, %v2481
  %v2514 = vadd.f32 %v2446, %v2482
  %v2515 = vadd.f32 %v2447, %v2483
  %v2516 = vadd.f32 %v2448, %v2484
  %v2517 = vadd.f32 %v2449, %v2485
  %v2518 = vadd.f32 %v2450, %v2486
  %v2519 = vadd.f32 %v2451, %v2487
  %v2520 = vadd.f32 %v2452, %v2488
  %v2521 = vadd.f32 %v2453, %v2489
  %v2522 = vadd.f32 %v2454, %v2490
  %v2523 = vadd.f32 %v2455, %v2491
  %v2524 = vadd.f32 %v2456, %v2492
  %v2525 = vadd.f32 %v2457, %v2493
  %v2526 = vadd.f32 %v2458, %v2494
  %v2527 = vadd.f32 %v2459, %v2495
  %v2528 = vadd.f32 %v2460, %v2496
  %v2529 = vadd.f32 %v2461, %v2497
  %v2530 = vadd.f32 %v2462, %v2498
  %v2531 = vadd.f32 %v2463, %v2499
  %v2532 = vadd.f32 %v2464, %v2500
  %v2533 = vadd.f32 %v2465, %v2501
  %v2534 = vadd.f32 %v2466, %v2502
  %v2535 = vadd.f32 %v2467, %v2503
  %v2536 = vadd.f32 %v2468, %v2504
  %v2537 = vadd.f32 %v2469, %v2505
  %v2538 = vadd.f32 %v2470, %v2506
  %v2539 = vadd.f32 %v2471, %v2507
  %v2540 = vadd.f32 %v2472, %v2508
  %v2541 = vadd.f32 %v2473, %v2509
  %v2542 = vlaneseq
  %v2543 = vshrl.u32 %v2542, 7
  %v2544 = vsub.s32 0, %v2543
  %v2545 = vrot.slane %v29, %v2544
  %v2546 = vmul.f32 %v2162, %v2545
  %v2547 = vmul.f32 %v2163, %v2545
  %v2548 = vmul.f32 %v2164, %v2545
  %v2549 = vmul.f32 %v2165, %v2545
  %v2550 = vmul.f32 %v2166, %v2545
  %v2551 = vmul.f32 %v2167, %v2545
  %v2552 = vmul.f32 %v2168, %v2545
  %v2553 = vmul.f32 %v2169, %v2545
  %v2554 = vmul.f32 %v2170, %v2545
  %v2555 = vmul.f32 %v2171, %v2545
  %v2556 = vmul.f32 %v2172, %v2545
  %v2557 = vmul.f32 %v2173, %v2545
  %v2558 = vmul.f32 %v2174, %v2545
  %v2559 = vmul.f32 %v2175, %v2545
  %v2560 = vmul.f32 %v2176, %v2545
  %v2561 = vmul.f32 %v2177, %v2545
  %v2562 = vmul.f32 %v2178, %v2545
  %v2563 = vmul.f32 %v2179, %v2545
  %v2564 = vmul.f32 %v2180, %v2545
  %v2565 = vmul.f32 %v2181, %v2545
  %v2566 = vmul.f32 %v2182, %v2545
  %v2567 = vmul.f32 %v2183, %v2545
  %v2568 = vmul.f32 %v2184, %v2545
  %v2569 = vmul.f32 %v2185, %v2545
  %v2570 = vmul.f32 %v2186, %v2545
  %v2571 = vmul.f32 %v2187, %v2545
  %v2572 = vmul.f32 %v2188, %v2545
  %v2573 = vmul.f32 %v2189, %v2545
  %v2574 = vmul.f32 %v2190, %v2545
  %v2575 = vmul.f32 %v2191, %v2545
  %v2576 = vmul.f32 %v2192, %v2545
  %v2577 = vmul.f32 %v2193, %v2545
  %v2578 = vadd.f32 %v2510, %v2546
  %v2579 = vadd.f32 %v2511, %v2547
  %v2580 = vadd.f32 %v2512, %v2548
  %v2581 = vadd.f32 %v2513, %v2549
  %v2582 = vadd.f32 %v2514, %v2550
  %v2583 = vadd.f32 %v2515, %v2551
  %v2584 = vadd.f32 %v2516, %v2552
  %v2585 = vadd.f32 %v2517, %v2553
  %v2586 = vadd.f32 %v2518, %v2554
  %v2587 = vadd.f32 %v2519, %v2555
  %v2588 = vadd.f32 %v2520, %v2556
  %v2589 = vadd.f32 %v2521, %v2557
  %v2590 = vadd.f32 %v2522, %v2558
  %v2591 = vadd.f32 %v2523, %v2559
  %v2592 = vadd.f32 %v2524, %v2560
  %v2593 = vadd.f32 %v2525, %v2561
  %v2594 = vadd.f32 %v2526, %v2562
  %v2595 = vadd.f32 %v2527, %v2563
  %v2596 = vadd.f32 %v2528, %v2564
  %v2597 = vadd.f32 %v2529, %v2565
  %v2598 = vadd.f32 %v2530, %v2566
  %v2599 = vadd.f32 %v2531, %v2567
  %v2600 = vadd.f32 %v2532, %v2568
  %v2601 = vadd.f32 %v2533, %v2569
  %v2602 = vadd.f32 %v2534, %v2570
  %v2603 = vadd.f32 %v2535, %v2571
  %v2604 = vadd.f32 %v2536, %v2572
  %v2605 = vadd.f32 %v2537, %v2573
  %v2606 = vadd.f32 %v2538, %v2574
  %v2607 = vadd.f32 %v2539, %v2575
  %v2608 = vadd.f32 %v2540, %v2576
  %v2609 = vadd.f32 %v2541, %v2577
  %v2610 = vlaneseq
  %v2611 = vshrl.u32 %v2610, 7
  %v2612 = vsub.s32 7, %v2611
  %v2613 = vrot.slane %v22, %v2612
  %v2614 = vmul.f32 %v2120, %v2613
  %v2615 = vmul.f32 %v2121, %v2613
  %v2616 = vmul.f32 %v2122, %v2613
  %v2617 = vmul.f32 %v2123, %v2613
  %v2618 = vmul.f32 %v2124, %v2613
  %v2619 = vmul.f32 %v2125, %v2613
  %v2620 = vmul.f32 %v2126, %v2613
  %v2621 = vmul.f32 %v2127, %v2613
  %v2622 = vmul.f32 %v2128, %v2613
  %v2623 = vmul.f32 %v2129, %v2613
  %v2624 = vmul.f32 %v2130, %v2613
  %v2625 = vmul.f32 %v2131, %v2613
  %v2626 = vmul.f32 %v2132, %v2613
  %v2627 = vmul.f32 %v2133, %v2613
  %v2628 = vmul.f32 %v2134, %v2613
  %v2629 = vmul.f32 %v2135, %v2613
  %v2630 = vmul.f32 %v2136, %v2613
  %v2631 = vmul.f32 %v2137, %v2613
  %v2632 = vmul.f32 %v2138, %v2613
  %v2633 = vmul.f32 %v2139, %v2613
  %v2634 = vmul.f32 %v2140, %v2613
  %v2635 = vmul.f32 %v2141, %v2613
  %v2636 = vmul.f32 %v2142, %v2613
  %v2637 = vmul.f32 %v2143, %v2613
  %v2638 = vmul.f32 %v2144, %v2613
  %v2639 = vmul.f32 %v2145, %v2613
  %v2640 = vmul.f32 %v2146, %v2613
  %v2641 = vmul.f32 %v2147, %v2613
  %v2642 = vmul.f32 %v2148, %v2613
  %v2643 = vmul.f32 %v2149, %v2613
  %v2644 = vmul.f32 %v2150, %v2613
  %v2645 = vmul.f32 %v2151, %v2613
  %v2646 = vadd.f32 %v2578, %v2614
  %v2647 = vadd.f32 %v2579, %v2615
  %v2648 = vadd.f32 %v2580, %v2616
  %v2649 = vadd.f32 %v2581, %v2617
  %v2650 = vadd.f32 %v2582, %v2618
  %v2651 = vadd.f32 %v2583, %v2619
  %v2652 = vadd.f32 %v2584, %v2620
  %v2653 = vadd.f32 %v2585, %v2621
  %v2654 = vadd.f32 %v2586, %v2622
  %v2655 = vadd.f32 %v2587, %v2623
  %v2656 = vadd.f32 %v2588, %v2624
  %v2657 = vadd.f32 %v2589, %v2625
  %v2658 = vadd.f32 %v2590, %v2626
  %v2659 = vadd.f32 %v2591, %v2627
  %v2660 = vadd.f32 %v2592, %v2628
  %v2661 = vadd.f32 %v2593, %v2629
  %v2662 = vadd.f32 %v2594, %v2630
  %v2663 = vadd.f32 %v2595, %v2631
  %v2664 = vadd.f32 %v2596, %v2632
  %v2665 = vadd.f32 %v2597, %v2633
  %v2666 = vadd.f32 %v2598, %v2634
  %v2667 = vadd.f32 %v2599, %v2635
  %v2668 = vadd.f32 %v2600, %v2636
  %v2669 = vadd.f32 %v2601, %v2637
  %v2670 = vadd.f32 %v2602, %v2638
  %v2671 = vadd.f32 %v2603, %v2639
  %v2672 = vadd.f32 %v2604, %v2640
  %v2673 = vadd.f32 %v2605, %v2641
  %v2674 = vadd.f32 %v2606, %v2642
  %v2675 = vadd.f32 %v2607, %v2643
  %v2676 = vadd.f32 %v2608, %v2644
  %v2677 = vadd.f32 %v2609, %v2645
  %v2678 = vlaneseq
  %v2679 = vshrl.u32 %v2678, 7
  %v2680 = vsub.s32 7, %v2679
  %v2681 = vrot.slane %v29, %v2680
  %v2682 = vmul.f32 %v2164, %v2681
  %v2683 = vmul.f32 %v2165, %v2681
  %v2684 = vmul.f32 %v2166, %v2681
  %v2685 = vmul.f32 %v2167, %v2681
  %v2686 = vmul.f32 %v2168, %v2681
  %v2687 = vmul.f32 %v2169, %v2681
  %v2688 = vmul.f32 %v2170, %v2681
  %v2689 = vmul.f32 %v2171, %v2681
  %v2690 = vmul.f32 %v2172, %v2681
  %v2691 = vmul.f32 %v2173, %v2681
  %v2692 = vmul.f32 %v2174, %v2681
  %v2693 = vmul.f32 %v2175, %v2681
  %v2694 = vmul.f32 %v2176, %v2681
  %v2695 = vmul.f32 %v2177, %v2681
  %v2696 = vmul.f32 %v2178, %v2681
  %v2697 = vmul.f32 %v2179, %v2681
  %v2698 = vmul.f32 %v2180, %v2681
  %v2699 = vmul.f32 %v2181, %v2681
  %v2700 = vmul.f32 %v2182, %v2681
  %v2701 = vmul.f32 %v2183, %v2681
  %v2702 = vmul.f32 %v2184, %v2681
  %v2703 = vmul.f32 %v2185, %v2681
  %v2704 = vmul.f32 %v2186, %v2681
  %v2705 = vmul.f32 %v2187, %v2681
  %v2706 = vmul.f32 %v2188, %v2681
  %v2707 = vmul.f32 %v2189, %v2681
  %v2708 = vmul.f32 %v2190, %v2681
  %v2709 = vmul.f32 %v2191, %v2681
  %v2710 = vmul.f32 %v2192, %v2681
  %v2711 = vmul.f32 %v2193, %v2681
  %v2712 = vmul.f32 %v2194, %v2681
  %v2713 = vmul.f32 %v2195, %v2681
  %v2714 = vadd.f32 %v2646, %v2682
  %v2715 = vadd.f32 %v2647, %v2683
  %v2716 = vadd.f32 %v2648, %v2684
  %v2717 = vadd.f32 %v2649, %v2685
  %v2718 = vadd.f32 %v2650, %v2686
  %v2719 = vadd.f32 %v2651, %v2687
  %v2720 = vadd.f32 %v2652, %v2688
  %v2721 = vadd.f32 %v2653, %v2689
  %v2722 = vadd.f32 %v2654, %v2690
  %v2723 = vadd.f32 %v2655, %v2691
  %v2724 = vadd.f32 %v2656, %v2692
  %v2725 = vadd.f32 %v2657, %v2693
  %v2726 = vadd.f32 %v2658, %v2694
  %v2727 = vadd.f32 %v2659, %v2695
  %v2728 = vadd.f32 %v2660, %v2696
  %v2729 = vadd.f32 %v2661, %v2697
  %v2730 = vadd.f32 %v2662, %v2698
  %v2731 = vadd.f32 %v2663, %v2699
  %v2732 = vadd.f32 %v2664, %v2700
  %v2733 = vadd.f32 %v2665, %v2701
  %v2734 = vadd.f32 %v2666, %v2702
  %v2735 = vadd.f32 %v2667, %v2703
  %v2736 = vadd.f32 %v2668, %v2704
  %v2737 = vadd.f32 %v2669, %v2705
  %v2738 = vadd.f32 %v2670, %v2706
  %v2739 = vadd.f32 %v2671, %v2707
  %v2740 = vadd.f32 %v2672, %v2708
  %v2741 = vadd.f32 %v2673, %v2709
  %v2742 = vadd.f32 %v2674, %v2710
  %v2743 = vadd.f32 %v2675, %v2711
  %v2744 = vadd.f32 %v2676, %v2712
  %v2745 = vadd.f32 %v2677, %v2713
  %v2746 = vlaneseq
  %v2747 = vshrl.u32 %v2746, 7
  %v2748 = vsub.s32 6, %v2747
  %v2749 = vrot.slane %v23, %v2748
  %v2750 = vmul.f32 %v2122, %v2749
  %v2751 = vmul.f32 %v2123, %v2749
  %v2752 = vmul.f32 %v2124, %v2749
  %v2753 = vmul.f32 %v2125, %v2749
  %v2754 = vmul.f32 %v2126, %v2749
  %v2755 = vmul.f32 %v2127, %v2749
  %v2756 = vmul.f32 %v2128, %v2749
  %v2757 = vmul.f32 %v2129, %v2749
  %v2758 = vmul.f32 %v2130, %v2749
  %v2759 = vmul.f32 %v2131, %v2749
  %v2760 = vmul.f32 %v2132, %v2749
  %v2761 = vmul.f32 %v2133, %v2749
  %v2762 = vmul.f32 %v2134, %v2749
  %v2763 = vmul.f32 %v2135, %v2749
  %v2764 = vmul.f32 %v2136, %v2749
  %v2765 = vmul.f32 %v2137, %v2749
  %v2766 = vmul.f32 %v2138, %v2749
  %v2767 = vmul.f32 %v2139, %v2749
  %v2768 = vmul.f32 %v2140, %v2749
  %v2769 = vmul.f32 %v2141, %v2749
  %v2770 = vmul.f32 %v2142, %v2749
  %v2771 = vmul.f32 %v2143, %v2749
  %v2772 = vmul.f32 %v2144, %v2749
  %v2773 = vmul.f32 %v2145, %v2749
  %v2774 = vmul.f32 %v2146, %v2749
  %v2775 = vmul.f32 %v2147, %v2749
  %v2776 = vmul.f32 %v2148, %v2749
  %v2777 = vmul.f32 %v2149, %v2749
  %v2778 = vmul.f32 %v2150, %v2749
  %v2779 = vmul.f32 %v2151, %v2749
  %v2780 = vmul.f32 %v2152, %v2749
  %v2781 = vmul.f32 %v2153, %v2749
  %v2782 = vadd.f32 %v2714, %v2750
  %v2783 = vadd.f32 %v2715, %v2751
  %v2784 = vadd.f32 %v2716, %v2752
  %v2785 = vadd.f32 %v2717, %v2753
  %v2786 = vadd.f32 %v2718, %v2754
  %v2787 = vadd.f32 %v2719, %v2755
  %v2788 = vadd.f32 %v2720, %v2756
  %v2789 = vadd.f32 %v2721, %v2757
  %v2790 = vadd.f32 %v2722, %v2758
  %v2791 = vadd.f32 %v2723, %v2759
  %v2792 = vadd.f32 %v2724, %v2760
  %v2793 = vadd.f32 %v2725, %v2761
  %v2794 = vadd.f32 %v2726, %v2762
  %v2795 = vadd.f32 %v2727, %v2763
  %v2796 = vadd.f32 %v2728, %v2764
  %v2797 = vadd.f32 %v2729, %v2765
  %v2798 = vadd.f32 %v2730, %v2766
  %v2799 = vadd.f32 %v2731, %v2767
  %v2800 = vadd.f32 %v2732, %v2768
  %v2801 = vadd.f32 %v2733, %v2769
  %v2802 = vadd.f32 %v2734, %v2770
  %v2803 = vadd.f32 %v2735, %v2771
  %v2804 = vadd.f32 %v2736, %v2772
  %v2805 = vadd.f32 %v2737, %v2773
  %v2806 = vadd.f32 %v2738, %v2774
  %v2807 = vadd.f32 %v2739, %v2775
  %v2808 = vadd.f32 %v2740, %v2776
  %v2809 = vadd.f32 %v2741, %v2777
  %v2810 = vadd.f32 %v2742, %v2778
  %v2811 = vadd.f32 %v2743, %v2779
  %v2812 = vadd.f32 %v2744, %v2780
  %v2813 = vadd.f32 %v2745, %v2781
  %v2814 = vlaneseq
  %v2815 = vshrl.u32 %v2814, 7
  %v2816 = vsub.s32 6, %v2815
  %v2817 = vrot.slane %v30, %v2816
  %v2818 = vmul.f32 %v2166, %v2817
  %v2819 = vmul.f32 %v2167, %v2817
  %v2820 = vmul.f32 %v2168, %v2817
  %v2821 = vmul.f32 %v2169, %v2817
  %v2822 = vmul.f32 %v2170, %v2817
  %v2823 = vmul.f32 %v2171, %v2817
  %v2824 = vmul.f32 %v2172, %v2817
  %v2825 = vmul.f32 %v2173, %v2817
  %v2826 = vmul.f32 %v2174, %v2817
  %v2827 = vmul.f32 %v2175, %v2817
  %v2828 = vmul.f32 %v2176, %v2817
  %v2829 = vmul.f32 %v2177, %v2817
  %v2830 = vmul.f32 %v2178, %v2817
  %v2831 = vmul.f32 %v2179, %v2817
  %v2832 = vmul.f32 %v2180, %v2817
  %v2833 = vmul.f32 %v2181, %v2817
  %v2834 = vmul.f32 %v2182, %v2817
  %v2835 = vmul.f32 %v2183, %v2817
  %v2836 = vmul.f32 %v2184, %v2817
  %v2837 = vmul.f32 %v2185, %v2817
  %v2838 = vmul.f32 %v2186, %v2817
  %v2839 = vmul.f32 %v2187, %v2817
  %v2840 = vmul.f32 %v2188, %v2817
  %v2841 = vmul.f32 %v2189, %v2817
  %v2842 = vmul.f32 %v2190, %v2817
  %v2843 = vmul.f32 %v2191, %v2817
  %v2844 = vmul.f32 %v2192, %v2817
  %v2845 = vmul.f32 %v2193, %v2817
  %v2846 = vmul.f32 %v2194, %v2817
  %v2847 = vmul.f32 %v2195, %v2817
  %v2848 = vmul.f32 %v2196, %v2817
  %v2849 = vmul.f32 %v2197, %v2817
  %v2850 = vadd.f32 %v2782, %v2818
  %v2851 = vadd.f32 %v2783, %v2819
  %v2852 = vadd.f32 %v2784, %v2820
  %v2853 = vadd.f32 %v2785, %v2821
  %v2854 = vadd.f32 %v2786, %v2822
  %v2855 = vadd.f32 %v2787, %v2823
  %v2856 = vadd.f32 %v2788, %v2824
  %v2857 = vadd.f32 %v2789, %v2825
  %v2858 = vadd.f32 %v2790, %v2826
  %v2859 = vadd.f32 %v2791, %v2827
  %v2860 = vadd.f32 %v2792, %v2828
  %v2861 = vadd.f32 %v2793, %v2829
  %v2862 = vadd.f32 %v2794, %v2830
  %v2863 = vadd.f32 %v2795, %v2831
  %v2864 = vadd.f32 %v2796, %v2832
  %v2865 = vadd.f32 %v2797, %v2833
  %v2866 = vadd.f32 %v2798, %v2834
  %v2867 = vadd.f32 %v2799, %v2835
  %v2868 = vadd.f32 %v2800, %v2836
  %v2869 = vadd.f32 %v2801, %v2837
  %v2870 = vadd.f32 %v2802, %v2838
  %v2871 = vadd.f32 %v2803, %v2839
  %v2872 = vadd.f32 %v2804, %v2840
  %v2873 = vadd.f32 %v2805, %v2841
  %v2874 = vadd.f32 %v2806, %v2842
  %v2875 = vadd.f32 %v2807, %v2843
  %v2876 = vadd.f32 %v2808, %v2844
  %v2877 = vadd.f32 %v2809, %v2845
  %v2878 = vadd.f32 %v2810, %v2846
  %v2879 = vadd.f32 %v2811, %v2847
  %v2880 = vadd.f32 %v2812, %v2848
  %v2881 = vadd.f32 %v2813, %v2849
  %v2882 = vlaneseq
  %v2883 = vshrl.u32 %v2882, 7
  %v2884 = vsub.s32 5, %v2883
  %v2885 = vrot.slane %v24, %v2884
  %v2886 = vmul.f32 %v2124, %v2885
  %v2887 = vmul.f32 %v2125, %v2885
  %v2888 = vmul.f32 %v2126, %v2885
  %v2889 = vmul.f32 %v2127, %v2885
  %v2890 = vmul.f32 %v2128, %v2885
  %v2891 = vmul.f32 %v2129, %v2885
  %v2892 = vmul.f32 %v2130, %v2885
  %v2893 = vmul.f32 %v2131, %v2885
  %v2894 = vmul.f32 %v2132, %v2885
  %v2895 = vmul.f32 %v2133, %v2885
  %v2896 = vmul.f32 %v2134, %v2885
  %v2897 = vmul.f32 %v2135, %v2885
  %v2898 = vmul.f32 %v2136, %v2885
  %v2899 = vmul.f32 %v2137, %v2885
  %v2900 = vmul.f32 %v2138, %v2885
  %v2901 = vmul.f32 %v2139, %v2885
  %v2902 = vmul.f32 %v2140, %v2885
  %v2903 = vmul.f32 %v2141, %v2885
  %v2904 = vmul.f32 %v2142, %v2885
  %v2905 = vmul.f32 %v2143, %v2885
  %v2906 = vmul.f32 %v2144, %v2885
  %v2907 = vmul.f32 %v2145, %v2885
  %v2908 = vmul.f32 %v2146, %v2885
  %v2909 = vmul.f32 %v2147, %v2885
  %v2910 = vmul.f32 %v2148, %v2885
  %v2911 = vmul.f32 %v2149, %v2885
  %v2912 = vmul.f32 %v2150, %v2885
  %v2913 = vmul.f32 %v2151, %v2885
  %v2914 = vmul.f32 %v2152, %v2885
  %v2915 = vmul.f32 %v2153, %v2885
  %v2916 = vmul.f32 %v2154, %v2885
  %v2917 = vmul.f32 %v2155, %v2885
  %v2918 = vadd.f32 %v2850, %v2886
  %v2919 = vadd.f32 %v2851, %v2887
  %v2920 = vadd.f32 %v2852, %v2888
  %v2921 = vadd.f32 %v2853, %v2889
  %v2922 = vadd.f32 %v2854, %v2890
  %v2923 = vadd.f32 %v2855, %v2891
  %v2924 = vadd.f32 %v2856, %v2892
  %v2925 = vadd.f32 %v2857, %v2893
  %v2926 = vadd.f32 %v2858, %v2894
  %v2927 = vadd.f32 %v2859, %v2895
  %v2928 = vadd.f32 %v2860, %v2896
  %v2929 = vadd.f32 %v2861, %v2897
  %v2930 = vadd.f32 %v2862, %v2898
  %v2931 = vadd.f32 %v2863, %v2899
  %v2932 = vadd.f32 %v2864, %v2900
  %v2933 = vadd.f32 %v2865, %v2901
  %v2934 = vadd.f32 %v2866, %v2902
  %v2935 = vadd.f32 %v2867, %v2903
  %v2936 = vadd.f32 %v2868, %v2904
  %v2937 = vadd.f32 %v2869, %v2905
  %v2938 = vadd.f32 %v2870, %v2906
  %v2939 = vadd.f32 %v2871, %v2907
  %v2940 = vadd.f32 %v2872, %v2908
  %v2941 = vadd.f32 %v2873, %v2909
  %v2942 = vadd.f32 %v2874, %v2910
  %v2943 = vadd.f32 %v2875, %v2911
  %v2944 = vadd.f32 %v2876, %v2912
  %v2945 = vadd.f32 %v2877, %v2913
  %v2946 = vadd.f32 %v2878, %v2914
  %v2947 = vadd.f32 %v2879, %v2915
  %v2948 = vadd.f32 %v2880, %v2916
  %v2949 = vadd.f32 %v2881, %v2917
  %v2950 = vlaneseq
  %v2951 = vshrl.u32 %v2950, 7
  %v2952 = vsub.s32 5, %v2951
  %v2953 = vrot.slane %v31, %v2952
  %v2954 = vmul.f32 %v2168, %v2953
  %v2955 = vmul.f32 %v2169, %v2953
  %v2956 = vmul.f32 %v2170, %v2953
  %v2957 = vmul.f32 %v2171, %v2953
  %v2958 = vmul.f32 %v2172, %v2953
  %v2959 = vmul.f32 %v2173, %v2953
  %v2960 = vmul.f32 %v2174, %v2953
  %v2961 = vmul.f32 %v2175, %v2953
  %v2962 = vmul.f32 %v2176, %v2953
  %v2963 = vmul.f32 %v2177, %v2953
  %v2964 = vmul.f32 %v2178, %v2953
  %v2965 = vmul.f32 %v2179, %v2953
  %v2966 = vmul.f32 %v2180, %v2953
  %v2967 = vmul.f32 %v2181, %v2953
  %v2968 = vmul.f32 %v2182, %v2953
  %v2969 = vmul.f32 %v2183, %v2953
  %v2970 = vmul.f32 %v2184, %v2953
  %v2971 = vmul.f32 %v2185, %v2953
  %v2972 = vmul.f32 %v2186, %v2953
  %v2973 = vmul.f32 %v2187, %v2953
  %v2974 = vmul.f32 %v2188, %v2953
  %v2975 = vmul.f32 %v2189, %v2953
  %v2976 = vmul.f32 %v2190, %v2953
  %v2977 = vmul.f32 %v2191, %v2953
  %v2978 = vmul.f32 %v2192, %v2953
  %v2979 = vmul.f32 %v2193, %v2953
  %v2980 = vmul.f32 %v2194, %v2953
  %v2981 = vmul.f32 %v2195, %v2953
  %v2982 = vmul.f32 %v2196, %v2953
  %v2983 = vmul.f32 %v2197, %v2953
  %v2984 = vmul.f32 %v2198, %v2953
  %v2985 = vmul.f32 %v2199, %v2953
  %v2986 = vadd.f32 %v2918, %v2954
  %v2987 = vadd.f32 %v2919, %v2955
  %v2988 = vadd.f32 %v2920, %v2956
  %v2989 = vadd.f32 %v2921, %v2957
  %v2990 = vadd.f32 %v2922, %v2958
  %v2991 = vadd.f32 %v2923, %v2959
  %v2992 = vadd.f32 %v2924, %v2960
  %v2993 = vadd.f32 %v2925, %v2961
  %v2994 = vadd.f32 %v2926, %v2962
  %v2995 = vadd.f32 %v2927, %v2963
  %v2996 = vadd.f32 %v2928, %v2964
  %v2997 = vadd.f32 %v2929, %v2965
  %v2998 = vadd.f32 %v2930, %v2966
  %v2999 = vadd.f32 %v2931, %v2967
  %v3000 = vadd.f32 %v2932, %v2968
  %v3001 = vadd.f32 %v2933, %v2969
  %v3002 = vadd.f32 %v2934, %v2970
  %v3003 = vadd.f32 %v2935, %v2971
  %v3004 = vadd.f32 %v2936, %v2972
  %v3005 = vadd.f32 %v2937, %v2973
  %v3006 = vadd.f32 %v2938, %v2974
  %v3007 = vadd.f32 %v2939, %v2975
  %v3008 = vadd.f32 %v2940, %v2976
  %v3009 = vadd.f32 %v2941, %v2977
  %v3010 = vadd.f32 %v2942, %v2978
  %v3011 = vadd.f32 %v2943, %v2979
  %v3012 = vadd.f32 %v2944, %v2980
  %v3013 = vadd.f32 %v2945, %v2981
  %v3014 = vadd.f32 %v2946, %v2982
  %v3015 = vadd.f32 %v2947, %v2983
  %v3016 = vadd.f32 %v2948, %v2984
  %v3017 = vadd.f32 %v2949, %v2985
  %v3018 = vlaneseq
  %v3019 = vshrl.u32 %v3018, 7
  %v3020 = vsub.s32 4, %v3019
  %v3021 = vrot.slane %v25, %v3020
  %v3022 = vmul.f32 %v2126, %v3021
  %v3023 = vmul.f32 %v2127, %v3021
  %v3024 = vmul.f32 %v2128, %v3021
  %v3025 = vmul.f32 %v2129, %v3021
  %v3026 = vmul.f32 %v2130, %v3021
  %v3027 = vmul.f32 %v2131, %v3021
  %v3028 = vmul.f32 %v2132, %v3021
  %v3029 = vmul.f32 %v2133, %v3021
  %v3030 = vmul.f32 %v2134, %v3021
  %v3031 = vmul.f32 %v2135, %v3021
  %v3032 = vmul.f32 %v2136, %v3021
  %v3033 = vmul.f32 %v2137, %v3021
  %v3034 = vmul.f32 %v2138, %v3021
  %v3035 = vmul.f32 %v2139, %v3021
  %v3036 = vmul.f32 %v2140, %v3021
  %v3037 = vmul.f32 %v2141, %v3021
  %v3038 = vmul.f32 %v2142, %v3021
  %v3039 = vmul.f32 %v2143, %v3021
  %v3040 = vmul.f32 %v2144, %v3021
  %v3041 = vmul.f32 %v2145, %v3021
  %v3042 = vmul.f32 %v2146, %v3021
  %v3043 = vmul.f32 %v2147, %v3021
  %v3044 = vmul.f32 %v2148, %v3021
  %v3045 = vmul.f32 %v2149, %v3021
  %v3046 = vmul.f32 %v2150, %v3021
  %v3047 = vmul.f32 %v2151, %v3021
  %v3048 = vmul.f32 %v2152, %v3021
  %v3049 = vmul.f32 %v2153, %v3021
  %v3050 = vmul.f32 %v2154, %v3021
  %v3051 = vmul.f32 %v2155, %v3021
  %v3052 = vmul.f32 %v2156, %v3021
  %v3053 = vmul.f32 %v2157, %v3021
  %v3054 = vadd.f32 %v2986, %v3022
  %v3055 = vadd.f32 %v2987, %v3023
  %v3056 = vadd.f32 %v2988, %v3024
  %v3057 = vadd.f32 %v2989, %v3025
  %v3058 = vadd.f32 %v2990, %v3026
  %v3059 = vadd.f32 %v2991, %v3027
  %v3060 = vadd.f32 %v2992, %v3028
  %v3061 = vadd.f32 %v2993, %v3029
  %v3062 = vadd.f32 %v2994, %v3030
  %v3063 = vadd.f32 %v2995, %v3031
  %v3064 = vadd.f32 %v2996, %v3032
  %v3065 = vadd.f32 %v2997, %v3033
  %v3066 = vadd.f32 %v2998, %v3034
  %v3067 = vadd.f32 %v2999, %v3035
  %v3068 = vadd.f32 %v3000, %v3036
  %v3069 = vadd.f32 %v3001, %v3037
  %v3070 = vadd.f32 %v3002, %v3038
  %v3071 = vadd.f32 %v3003, %v3039
  %v3072 = vadd.f32 %v3004, %v3040
  %v3073 = vadd.f32 %v3005, %v3041
  %v3074 = vadd.f32 %v3006, %v3042
  %v3075 = vadd.f32 %v3007, %v3043
  %v3076 = vadd.f32 %v3008, %v3044
  %v3077 = vadd.f32 %v3009, %v3045
  %v3078 = vadd.f32 %v3010, %v3046
  %v3079 = vadd.f32 %v3011, %v3047
  %v3080 = vadd.f32 %v3012, %v3048
  %v3081 = vadd.f32 %v3013, %v3049
  %v3082 = vadd.f32 %v3014, %v3050
  %v3083 = vadd.f32 %v3015, %v3051
  %v3084 = vadd.f32 %v3016, %v3052
  %v3085 = vadd.f32 %v3017, %v3053
  %v3086 = vlaneseq
  %v3087 = vshrl.u32 %v3086, 7
  %v3088 = vsub.s32 4, %v3087
  %v3089 = vrot.slane %v32, %v3088
  %v3090 = vmul.f32 %v2170, %v3089
  %v3091 = vmul.f32 %v2171, %v3089
  %v3092 = vmul.f32 %v2172, %v3089
  %v3093 = vmul.f32 %v2173, %v3089
  %v3094 = vmul.f32 %v2174, %v3089
  %v3095 = vmul.f32 %v2175, %v3089
  %v3096 = vmul.f32 %v2176, %v3089
  %v3097 = vmul.f32 %v2177, %v3089
  %v3098 = vmul.f32 %v2178, %v3089
  %v3099 = vmul.f32 %v2179, %v3089
  %v3100 = vmul.f32 %v2180, %v3089
  %v3101 = vmul.f32 %v2181, %v3089
  %v3102 = vmul.f32 %v2182, %v3089
  %v3103 = vmul.f32 %v2183, %v3089
  %v3104 = vmul.f32 %v2184, %v3089
  %v3105 = vmul.f32 %v2185, %v3089
  %v3106 = vmul.f32 %v2186, %v3089
  %v3107 = vmul.f32 %v2187, %v3089
  %v3108 = vmul.f32 %v2188, %v3089
  %v3109 = vmul.f32 %v2189, %v3089
  %v3110 = vmul.f32 %v2190, %v3089
  %v3111 = vmul.f32 %v2191, %v3089
  %v3112 = vmul.f32 %v2192, %v3089
  %v3113 = vmul.f32 %v2193, %v3089
  %v3114 = vmul.f32 %v2194, %v3089
  %v3115 = vmul.f32 %v2195, %v3089
  %v3116 = vmul.f32 %v2196, %v3089
  %v3117 = vmul.f32 %v2197, %v3089
  %v3118 = vmul.f32 %v2198, %v3089
  %v3119 = vmul.f32 %v2199, %v3089
  %v3120 = vmul.f32 %v2200, %v3089
  %v3121 = vmul.f32 %v2201, %v3089
  %v3122 = vadd.f32 %v3054, %v3090
  %v3123 = vadd.f32 %v3055, %v3091
  %v3124 = vadd.f32 %v3056, %v3092
  %v3125 = vadd.f32 %v3057, %v3093
  %v3126 = vadd.f32 %v3058, %v3094
  %v3127 = vadd.f32 %v3059, %v3095
  %v3128 = vadd.f32 %v3060, %v3096
  %v3129 = vadd.f32 %v3061, %v3097
  %v3130 = vadd.f32 %v3062, %v3098
  %v3131 = vadd.f32 %v3063, %v3099
  %v3132 = vadd.f32 %v3064, %v3100
  %v3133 = vadd.f32 %v3065, %v3101
  %v3134 = vadd.f32 %v3066, %v3102
  %v3135 = vadd.f32 %v3067, %v3103
  %v3136 = vadd.f32 %v3068, %v3104
  %v3137 = vadd.f32 %v3069, %v3105
  %v3138 = vadd.f32 %v3070, %v3106
  %v3139 = vadd.f32 %v3071, %v3107
  %v3140 = vadd.f32 %v3072, %v3108
  %v3141 = vadd.f32 %v3073, %v3109
  %v3142 = vadd.f32 %v3074, %v3110
  %v3143 = vadd.f32 %v3075, %v3111
  %v3144 = vadd.f32 %v3076, %v3112
  %v3145 = vadd.f32 %v3077, %v3113
  %v3146 = vadd.f32 %v3078, %v3114
  %v3147 = vadd.f32 %v3079, %v3115
  %v3148 = vadd.f32 %v3080, %v3116
  %v3149 = vadd.f32 %v3081, %v3117
  %v3150 = vadd.f32 %v3082, %v3118
  %v3151 = vadd.f32 %v3083, %v3119
  %v3152 = vadd.f32 %v3084, %v3120
  %v3153 = vadd.f32 %v3085, %v3121
  %v3154 = vld [vmem:[%s0 + $0x3] sm:$0xff]
  %v3155 = vld [vmem:[%s0 + $0xb] sm:$0xff]
  %v3156 = vld [vmem:[%s0 + $0x1b] sm:$0xff]
  %v3157 = vld [vmem:[%s0 + $0x23] sm:$0xff]
  %v3158 = vld [vmem:[%s0 + $0x33] sm:$0xff]
  %v3159 = vld [vmem:[%s0 + $0x3b] sm:$0xff]
  %v3160 = vld [vmem:[%s0 + $0x4b] sm:$0xff]
  %v3161 = vld [vmem:[%s0 + $0x53] sm:$0xff]
  %v3162 = vld [vmem:[%s0 + $0x63] sm:$0xff]
  %v3163 = vld [vmem:[%s0 + $0x6b] sm:$0xff]
  %v3164 = vld [vmem:[%s0 + $0x7b] sm:$0xff]
  %v3165 = vld [vmem:[%s0 + $0x83] sm:$0xff]
  %v3166 = vld [vmem:[%s0 + $0x93] sm:$0xff]
  %v3167 = vld [vmem:[%s0 + $0x9b] sm:$0xff]
  %v3168 = vld [vmem:[%s0 + $0xab] sm:$0xff]
  %v3169 = vld [vmem:[%s0 + $0xb3] sm:$0xff]
  %v3170 = vld [vmem:[%s0 + $0xc3] sm:$0xff]
  %v3171 = vld [vmem:[%s0 + $0xcb] sm:$0xff]
  %v3172 = vld [vmem:[%s0 + $0xdb] sm:$0xff]
  %v3173 = vld [vmem:[%s0 + $0xe3] sm:$0xff]
  %v3174 = vld [vmem:[%s0 + $0xf3] sm:$0xff]
  %v3175 = vld [vmem:[%s0 + $0xfb] sm:$0xff]
  %v3176 = vld [vmem:[%s0 + $0x10b] sm:$0xff]
  %v3177 = vld [vmem:[%s0 + $0x113] sm:$0xff]
  %v3178 = vld [vmem:[%s0 + $0x123] sm:$0xff]
  %v3179 = vld [vmem:[%s0 + $0x12b] sm:$0xff]
  %v3180 = vld [vmem:[%s0 + $0x13b] sm:$0xff]
  %v3181 = vld [vmem:[%s0 + $0x143] sm:$0xff]
  %v3182 = vld [vmem:[%s0 + $0x153] sm:$0xff]
  %v3183 = vld [vmem:[%s0 + $0x15b] sm:$0xff]
  %v3184 = vld [vmem:[%s0 + $0x16b] sm:$0xff]
  %v3185 = vld [vmem:[%s0 + $0x173] sm:$0xff]
  %v3186 = vld [vmem:[%s0 + $0x183] sm:$0xff]
  %v3187 = vld [vmem:[%s0 + $0x18b] sm:$0xff]
  %v3188 = vld [vmem:[%s0 + $0x19b] sm:$0xff]
  %v3189 = vld [vmem:[%s0 + $0x1a3] sm:$0xff]
  %v3190 = vld [vmem:[%s0 + $0x1b3] sm:$0xff]
  %v3191 = vld [vmem:[%s0 + $0x1bb] sm:$0xff]
  %v3192 = vld [vmem:[%s0 + $0x1cb] sm:$0xff]
  %v3193 = vld [vmem:[%s0 + $0x1d3] sm:$0xff]
  %v3194 = vld [vmem:[%s0 + $0x1e3] sm:$0xff]
  %v3195 = vld [vmem:[%s0 + $0x1eb] sm:$0xff]
  %v3196 = vld [vmem:[%s0 + $0x1fb] sm:$0xff]
  %v3197 = vld [vmem:[%s0 + $0x203] sm:$0xff]
  %v3198 = vld [vmem:[%s1 + $0x3] sm:$0xff]
  %v3199 = vld [vmem:[%s1 + $0xb] sm:$0xff]
  %v3200 = vld [vmem:[%s1 + $0x1b] sm:$0xff]
  %v3201 = vld [vmem:[%s1 + $0x23] sm:$0xff]
  %v3202 = vld [vmem:[%s1 + $0x33] sm:$0xff]
  %v3203 = vld [vmem:[%s1 + $0x3b] sm:$0xff]
  %v3204 = vld [vmem:[%s1 + $0x4b] sm:$0xff]
  %v3205 = vld [vmem:[%s1 + $0x53] sm:$0xff]
  %v3206 = vld [vmem:[%s1 + $0x63] sm:$0xff]
  %v3207 = vld [vmem:[%s1 + $0x6b] sm:$0xff]
  %v3208 = vld [vmem:[%s1 + $0x7b] sm:$0xff]
  %v3209 = vld [vmem:[%s1 + $0x83] sm:$0xff]
  %v3210 = vld [vmem:[%s1 + $0x93] sm:$0xff]
  %v3211 = vld [vmem:[%s1 + $0x9b] sm:$0xff]
  %v3212 = vld [vmem:[%s1 + $0xab] sm:$0xff]
  %v3213 = vld [vmem:[%s1 + $0xb3] sm:$0xff]
  %v3214 = vld [vmem:[%s1 + $0xc3] sm:$0xff]
  %v3215 = vld [vmem:[%s1 + $0xcb] sm:$0xff]
  %v3216 = vld [vmem:[%s1 + $0xdb] sm:$0xff]
  %v3217 = vld [vmem:[%s1 + $0xe3] sm:$0xff]
  %v3218 = vld [vmem:[%s1 + $0xf3] sm:$0xff]
  %v3219 = vld [vmem:[%s1 + $0xfb] sm:$0xff]
  %v3220 = vld [vmem:[%s1 + $0x10b] sm:$0xff]
  %v3221 = vld [vmem:[%s1 + $0x113] sm:$0xff]
  %v3222 = vld [vmem:[%s1 + $0x123] sm:$0xff]
  %v3223 = vld [vmem:[%s1 + $0x12b] sm:$0xff]
  %v3224 = vld [vmem:[%s1 + $0x13b] sm:$0xff]
  %v3225 = vld [vmem:[%s1 + $0x143] sm:$0xff]
  %v3226 = vld [vmem:[%s1 + $0x153] sm:$0xff]
  %v3227 = vld [vmem:[%s1 + $0x15b] sm:$0xff]
  %v3228 = vld [vmem:[%s1 + $0x16b] sm:$0xff]
  %v3229 = vld [vmem:[%s1 + $0x173] sm:$0xff]
  %v3230 = vld [vmem:[%s1 + $0x183] sm:$0xff]
  %v3231 = vld [vmem:[%s1 + $0x18b] sm:$0xff]
  %v3232 = vld [vmem:[%s1 + $0x19b] sm:$0xff]
  %v3233 = vld [vmem:[%s1 + $0x1a3] sm:$0xff]
  %v3234 = vld [vmem:[%s1 + $0x1b3] sm:$0xff]
  %v3235 = vld [vmem:[%s1 + $0x1bb] sm:$0xff]
  %v3236 = vld [vmem:[%s1 + $0x1cb] sm:$0xff]
  %v3237 = vld [vmem:[%s1 + $0x1d3] sm:$0xff]
  %v3238 = vld [vmem:[%s1 + $0x1e3] sm:$0xff]
  %v3239 = vld [vmem:[%s1 + $0x1eb] sm:$0xff]
  %v3240 = vld [vmem:[%s1 + $0x1fb] sm:$0xff]
  %v3241 = vld [vmem:[%s1 + $0x203] sm:$0xff]
  %v3242 = vlaneseq
  %v3243 = vshrl.u32 %v3242, 7
  %v3244 = vsub.s32 3, %v3243
  %v3245 = vrot.slane %v20, %v3244
  %v3246 = vmul.f32 %v3154, %v3245
  %v3247 = vmul.f32 %v3155, %v3245
  %v3248 = vmul.f32 %v3156, %v3245
  %v3249 = vmul.f32 %v3157, %v3245
  %v3250 = vmul.f32 %v3158, %v3245
  %v3251 = vmul.f32 %v3159, %v3245
  %v3252 = vmul.f32 %v3160, %v3245
  %v3253 = vmul.f32 %v3161, %v3245
  %v3254 = vmul.f32 %v3162, %v3245
  %v3255 = vmul.f32 %v3163, %v3245
  %v3256 = vmul.f32 %v3164, %v3245
  %v3257 = vmul.f32 %v3165, %v3245
  %v3258 = vmul.f32 %v3166, %v3245
  %v3259 = vmul.f32 %v3167, %v3245
  %v3260 = vmul.f32 %v3168, %v3245
  %v3261 = vmul.f32 %v3169, %v3245
  %v3262 = vmul.f32 %v3170, %v3245
  %v3263 = vmul.f32 %v3171, %v3245
  %v3264 = vmul.f32 %v3172, %v3245
  %v3265 = vmul.f32 %v3173, %v3245
  %v3266 = vmul.f32 %v3174, %v3245
  %v3267 = vmul.f32 %v3175, %v3245
  %v3268 = vmul.f32 %v3176, %v3245
  %v3269 = vmul.f32 %v3177, %v3245
  %v3270 = vmul.f32 %v3178, %v3245
  %v3271 = vmul.f32 %v3179, %v3245
  %v3272 = vmul.f32 %v3180, %v3245
  %v3273 = vmul.f32 %v3181, %v3245
  %v3274 = vmul.f32 %v3182, %v3245
  %v3275 = vmul.f32 %v3183, %v3245
  %v3276 = vmul.f32 %v3184, %v3245
  %v3277 = vmul.f32 %v3185, %v3245
  %v3278 = vadd.f32 %v3122, %v3246
  %v3279 = vadd.f32 %v3123, %v3247
  %v3280 = vadd.f32 %v3124, %v3248
  %v3281 = vadd.f32 %v3125, %v3249
  %v3282 = vadd.f32 %v3126, %v3250
  %v3283 = vadd.f32 %v3127, %v3251
  %v3284 = vadd.f32 %v3128, %v3252
  %v3285 = vadd.f32 %v3129, %v3253
  %v3286 = vadd.f32 %v3130, %v3254
  %v3287 = vadd.f32 %v3131, %v3255
  %v3288 = vadd.f32 %v3132, %v3256
  %v3289 = vadd.f32 %v3133, %v3257
  %v3290 = vadd.f32 %v3134, %v3258
  %v3291 = vadd.f32 %v3135, %v3259
  %v3292 = vadd.f32 %v3136, %v3260
  %v3293 = vadd.f32 %v3137, %v3261
  %v3294 = vadd.f32 %v3138, %v3262
  %v3295 = vadd.f32 %v3139, %v3263
  %v3296 = vadd.f32 %v3140, %v3264
  %v3297 = vadd.f32 %v3141, %v3265
  %v3298 = vadd.f32 %v3142, %v3266
  %v3299 = vadd.f32 %v3143, %v3267
  %v3300 = vadd.f32 %v3144, %v3268
  %v3301 = vadd.f32 %v3145, %v3269
  %v3302 = vadd.f32 %v3146, %v3270
  %v3303 = vadd.f32 %v3147, %v3271
  %v3304 = vadd.f32 %v3148, %v3272
  %v3305 = vadd.f32 %v3149, %v3273
  %v3306 = vadd.f32 %v3150, %v3274
  %v3307 = vadd.f32 %v3151, %v3275
  %v3308 = vadd.f32 %v3152, %v3276
  %v3309 = vadd.f32 %v3153, %v3277
  %v3310 = vlaneseq
  %v3311 = vshrl.u32 %v3310, 7
  %v3312 = vsub.s32 3, %v3311
  %v3313 = vrot.slane %v27, %v3312
  %v3314 = vmul.f32 %v3198, %v3313
  %v3315 = vmul.f32 %v3199, %v3313
  %v3316 = vmul.f32 %v3200, %v3313
  %v3317 = vmul.f32 %v3201, %v3313
  %v3318 = vmul.f32 %v3202, %v3313
  %v3319 = vmul.f32 %v3203, %v3313
  %v3320 = vmul.f32 %v3204, %v3313
  %v3321 = vmul.f32 %v3205, %v3313
  %v3322 = vmul.f32 %v3206, %v3313
  %v3323 = vmul.f32 %v3207, %v3313
  %v3324 = vmul.f32 %v3208, %v3313
  %v3325 = vmul.f32 %v3209, %v3313
  %v3326 = vmul.f32 %v3210, %v3313
  %v3327 = vmul.f32 %v3211, %v3313
  %v3328 = vmul.f32 %v3212, %v3313
  %v3329 = vmul.f32 %v3213, %v3313
  %v3330 = vmul.f32 %v3214, %v3313
  %v3331 = vmul.f32 %v3215, %v3313
  %v3332 = vmul.f32 %v3216, %v3313
  %v3333 = vmul.f32 %v3217, %v3313
  %v3334 = vmul.f32 %v3218, %v3313
  %v3335 = vmul.f32 %v3219, %v3313
  %v3336 = vmul.f32 %v3220, %v3313
  %v3337 = vmul.f32 %v3221, %v3313
  %v3338 = vmul.f32 %v3222, %v3313
  %v3339 = vmul.f32 %v3223, %v3313
  %v3340 = vmul.f32 %v3224, %v3313
  %v3341 = vmul.f32 %v3225, %v3313
  %v3342 = vmul.f32 %v3226, %v3313
  %v3343 = vmul.f32 %v3227, %v3313
  %v3344 = vmul.f32 %v3228, %v3313
  %v3345 = vmul.f32 %v3229, %v3313
  %v3346 = vadd.f32 %v3278, %v3314
  %v3347 = vadd.f32 %v3279, %v3315
  %v3348 = vadd.f32 %v3280, %v3316
  %v3349 = vadd.f32 %v3281, %v3317
  %v3350 = vadd.f32 %v3282, %v3318
  %v3351 = vadd.f32 %v3283, %v3319
  %v3352 = vadd.f32 %v3284, %v3320
  %v3353 = vadd.f32 %v3285, %v3321
  %v3354 = vadd.f32 %v3286, %v3322
  %v3355 = vadd.f32 %v3287, %v3323
  %v3356 = vadd.f32 %v3288, %v3324
  %v3357 = vadd.f32 %v3289, %v3325
  %v3358 = vadd.f32 %v3290, %v3326
  %v3359 = vadd.f32 %v3291, %v3327
  %v3360 = vadd.f32 %v3292, %v3328
  %v3361 = vadd.f32 %v3293, %v3329
  %v3362 = vadd.f32 %v3294, %v3330
  %v3363 = vadd.f32 %v3295, %v3331
  %v3364 = vadd.f32 %v3296, %v3332
  %v3365 = vadd.f32 %v3297, %v3333
  %v3366 = vadd.f32 %v3298, %v3334
  %v3367 = vadd.f32 %v3299, %v3335
  %v3368 = vadd.f32 %v3300, %v3336
  %v3369 = vadd.f32 %v3301, %v3337
  %v3370 = vadd.f32 %v3302, %v3338
  %v3371 = vadd.f32 %v3303, %v3339
  %v3372 = vadd.f32 %v3304, %v3340
  %v3373 = vadd.f32 %v3305, %v3341
  %v3374 = vadd.f32 %v3306, %v3342
  %v3375 = vadd.f32 %v3307, %v3343
  %v3376 = vadd.f32 %v3308, %v3344
  %v3377 = vadd.f32 %v3309, %v3345
  %v3378 = vlaneseq
  %v3379 = vshrl.u32 %v3378, 7
  %v3380 = vsub.s32 2, %v3379
  %v3381 = vrot.slane %v21, %v3380
  %v3382 = vmul.f32 %v3156, %v3381
  %v3383 = vmul.f32 %v3157, %v3381
  %v3384 = vmul.f32 %v3158, %v3381
  %v3385 = vmul.f32 %v3159, %v3381
  %v3386 = vmul.f32 %v3160, %v3381
  %v3387 = vmul.f32 %v3161, %v3381
  %v3388 = vmul.f32 %v3162, %v3381
  %v3389 = vmul.f32 %v3163, %v3381
  %v3390 = vmul.f32 %v3164, %v3381
  %v3391 = vmul.f32 %v3165, %v3381
  %v3392 = vmul.f32 %v3166, %v3381
  %v3393 = vmul.f32 %v3167, %v3381
  %v3394 = vmul.f32 %v3168, %v3381
  %v3395 = vmul.f32 %v3169, %v3381
  %v3396 = vmul.f32 %v3170, %v3381
  %v3397 = vmul.f32 %v3171, %v3381
  %v3398 = vmul.f32 %v3172, %v3381
  %v3399 = vmul.f32 %v3173, %v3381
  %v3400 = vmul.f32 %v3174, %v3381
  %v3401 = vmul.f32 %v3175, %v3381
  %v3402 = vmul.f32 %v3176, %v3381
  %v3403 = vmul.f32 %v3177, %v3381
  %v3404 = vmul.f32 %v3178, %v3381
  %v3405 = vmul.f32 %v3179, %v3381
  %v3406 = vmul.f32 %v3180, %v3381
  %v3407 = vmul.f32 %v3181, %v3381
  %v3408 = vmul.f32 %v3182, %v3381
  %v3409 = vmul.f32 %v3183, %v3381
  %v3410 = vmul.f32 %v3184, %v3381
  %v3411 = vmul.f32 %v3185, %v3381
  %v3412 = vmul.f32 %v3186, %v3381
  %v3413 = vmul.f32 %v3187, %v3381
  %v3414 = vadd.f32 %v3346, %v3382
  %v3415 = vadd.f32 %v3347, %v3383
  %v3416 = vadd.f32 %v3348, %v3384
  %v3417 = vadd.f32 %v3349, %v3385
  %v3418 = vadd.f32 %v3350, %v3386
  %v3419 = vadd.f32 %v3351, %v3387
  %v3420 = vadd.f32 %v3352, %v3388
  %v3421 = vadd.f32 %v3353, %v3389
  %v3422 = vadd.f32 %v3354, %v3390
  %v3423 = vadd.f32 %v3355, %v3391
  %v3424 = vadd.f32 %v3356, %v3392
  %v3425 = vadd.f32 %v3357, %v3393
  %v3426 = vadd.f32 %v3358, %v3394
  %v3427 = vadd.f32 %v3359, %v3395
  %v3428 = vadd.f32 %v3360, %v3396
  %v3429 = vadd.f32 %v3361, %v3397
  %v3430 = vadd.f32 %v3362, %v3398
  %v3431 = vadd.f32 %v3363, %v3399
  %v3432 = vadd.f32 %v3364, %v3400
  %v3433 = vadd.f32 %v3365, %v3401
  %v3434 = vadd.f32 %v3366, %v3402
  %v3435 = vadd.f32 %v3367, %v3403
  %v3436 = vadd.f32 %v3368, %v3404
  %v3437 = vadd.f32 %v3369, %v3405
  %v3438 = vadd.f32 %v3370, %v3406
  %v3439 = vadd.f32 %v3371, %v3407
  %v3440 = vadd.f32 %v3372, %v3408
  %v3441 = vadd.f32 %v3373, %v3409
  %v3442 = vadd.f32 %v3374, %v3410
  %v3443 = vadd.f32 %v3375, %v3411
  %v3444 = vadd.f32 %v3376, %v3412
  %v3445 = vadd.f32 %v3377, %v3413
  %v3446 = vlaneseq
  %v3447 = vshrl.u32 %v3446, 7
  %v3448 = vsub.s32 2, %v3447
  %v3449 = vrot.slane %v28, %v3448
  %v3450 = vmul.f32 %v3200, %v3449
  %v3451 = vmul.f32 %v3201, %v3449
  %v3452 = vmul.f32 %v3202, %v3449
  %v3453 = vmul.f32 %v3203, %v3449
  %v3454 = vmul.f32 %v3204, %v3449
  %v3455 = vmul.f32 %v3205, %v3449
  %v3456 = vmul.f32 %v3206, %v3449
  %v3457 = vmul.f32 %v3207, %v3449
  %v3458 = vmul.f32 %v3208, %v3449
  %v3459 = vmul.f32 %v3209, %v3449
  %v3460 = vmul.f32 %v3210, %v3449
  %v3461 = vmul.f32 %v3211, %v3449
  %v3462 = vmul.f32 %v3212, %v3449
  %v3463 = vmul.f32 %v3213, %v3449
  %v3464 = vmul.f32 %v3214, %v3449
  %v3465 = vmul.f32 %v3215, %v3449
  %v3466 = vmul.f32 %v3216, %v3449
  %v3467 = vmul.f32 %v3217, %v3449
  %v3468 = vmul.f32 %v3218, %v3449
  %v3469 = vmul.f32 %v3219, %v3449
  %v3470 = vmul.f32 %v3220, %v3449
  %v3471 = vmul.f32 %v3221, %v3449
  %v3472 = vmul.f32 %v3222, %v3449
  %v3473 = vmul.f32 %v3223, %v3449
  %v3474 = vmul.f32 %v3224, %v3449
  %v3475 = vmul.f32 %v3225, %v3449
  %v3476 = vmul.f32 %v3226, %v3449
  %v3477 = vmul.f32 %v3227, %v3449
  %v3478 = vmul.f32 %v3228, %v3449
  %v3479 = vmul.f32 %v3229, %v3449
  %v3480 = vmul.f32 %v3230, %v3449
  %v3481 = vmul.f32 %v3231, %v3449
  %v3482 = vadd.f32 %v3414, %v3450
  %v3483 = vadd.f32 %v3415, %v3451
  %v3484 = vadd.f32 %v3416, %v3452
  %v3485 = vadd.f32 %v3417, %v3453
  %v3486 = vadd.f32 %v3418, %v3454
  %v3487 = vadd.f32 %v3419, %v3455
  %v3488 = vadd.f32 %v3420, %v3456
  %v3489 = vadd.f32 %v3421, %v3457
  %v3490 = vadd.f32 %v3422, %v3458
  %v3491 = vadd.f32 %v3423, %v3459
  %v3492 = vadd.f32 %v3424, %v3460
  %v3493 = vadd.f32 %v3425, %v3461
  %v3494 = vadd.f32 %v3426, %v3462
  %v3495 = vadd.f32 %v3427, %v3463
  %v3496 = vadd.f32 %v3428, %v3464
  %v3497 = vadd.f32 %v3429, %v3465
  %v3498 = vadd.f32 %v3430, %v3466
  %v3499 = vadd.f32 %v3431, %v3467
  %v3500 = vadd.f32 %v3432, %v3468
  %v3501 = vadd.f32 %v3433, %v3469
  %v3502 = vadd.f32 %v3434, %v3470
  %v3503 = vadd.f32 %v3435, %v3471
  %v3504 = vadd.f32 %v3436, %v3472
  %v3505 = vadd.f32 %v3437, %v3473
  %v3506 = vadd.f32 %v3438, %v3474
  %v3507 = vadd.f32 %v3439, %v3475
  %v3508 = vadd.f32 %v3440, %v3476
  %v3509 = vadd.f32 %v3441, %v3477
  %v3510 = vadd.f32 %v3442, %v3478
  %v3511 = vadd.f32 %v3443, %v3479
  %v3512 = vadd.f32 %v3444, %v3480
  %v3513 = vadd.f32 %v3445, %v3481
  %v3514 = vlaneseq
  %v3515 = vshrl.u32 %v3514, 7
  %v3516 = vsub.s32 1, %v3515
  %v3517 = vrot.slane %v22, %v3516
  %v3518 = vmul.f32 %v3158, %v3517
  %v3519 = vmul.f32 %v3159, %v3517
  %v3520 = vmul.f32 %v3160, %v3517
  %v3521 = vmul.f32 %v3161, %v3517
  %v3522 = vmul.f32 %v3162, %v3517
  %v3523 = vmul.f32 %v3163, %v3517
  %v3524 = vmul.f32 %v3164, %v3517
  %v3525 = vmul.f32 %v3165, %v3517
  %v3526 = vmul.f32 %v3166, %v3517
  %v3527 = vmul.f32 %v3167, %v3517
  %v3528 = vmul.f32 %v3168, %v3517
  %v3529 = vmul.f32 %v3169, %v3517
  %v3530 = vmul.f32 %v3170, %v3517
  %v3531 = vmul.f32 %v3171, %v3517
  %v3532 = vmul.f32 %v3172, %v3517
  %v3533 = vmul.f32 %v3173, %v3517
  %v3534 = vmul.f32 %v3174, %v3517
  %v3535 = vmul.f32 %v3175, %v3517
  %v3536 = vmul.f32 %v3176, %v3517
  %v3537 = vmul.f32 %v3177, %v3517
  %v3538 = vmul.f32 %v3178, %v3517
  %v3539 = vmul.f32 %v3179, %v3517
  %v3540 = vmul.f32 %v3180, %v3517
  %v3541 = vmul.f32 %v3181, %v3517
  %v3542 = vmul.f32 %v3182, %v3517
  %v3543 = vmul.f32 %v3183, %v3517
  %v3544 = vmul.f32 %v3184, %v3517
  %v3545 = vmul.f32 %v3185, %v3517
  %v3546 = vmul.f32 %v3186, %v3517
  %v3547 = vmul.f32 %v3187, %v3517
  %v3548 = vmul.f32 %v3188, %v3517
  %v3549 = vmul.f32 %v3189, %v3517
  %v3550 = vadd.f32 %v3482, %v3518
  %v3551 = vadd.f32 %v3483, %v3519
  %v3552 = vadd.f32 %v3484, %v3520
  %v3553 = vadd.f32 %v3485, %v3521
  %v3554 = vadd.f32 %v3486, %v3522
  %v3555 = vadd.f32 %v3487, %v3523
  %v3556 = vadd.f32 %v3488, %v3524
  %v3557 = vadd.f32 %v3489, %v3525
  %v3558 = vadd.f32 %v3490, %v3526
  %v3559 = vadd.f32 %v3491, %v3527
  %v3560 = vadd.f32 %v3492, %v3528
  %v3561 = vadd.f32 %v3493, %v3529
  %v3562 = vadd.f32 %v3494, %v3530
  %v3563 = vadd.f32 %v3495, %v3531
  %v3564 = vadd.f32 %v3496, %v3532
  %v3565 = vadd.f32 %v3497, %v3533
  %v3566 = vadd.f32 %v3498, %v3534
  %v3567 = vadd.f32 %v3499, %v3535
  %v3568 = vadd.f32 %v3500, %v3536
  %v3569 = vadd.f32 %v3501, %v3537
  %v3570 = vadd.f32 %v3502, %v3538
  %v3571 = vadd.f32 %v3503, %v3539
  %v3572 = vadd.f32 %v3504, %v3540
  %v3573 = vadd.f32 %v3505, %v3541
  %v3574 = vadd.f32 %v3506, %v3542
  %v3575 = vadd.f32 %v3507, %v3543
  %v3576 = vadd.f32 %v3508, %v3544
  %v3577 = vadd.f32 %v3509, %v3545
  %v3578 = vadd.f32 %v3510, %v3546
  %v3579 = vadd.f32 %v3511, %v3547
  %v3580 = vadd.f32 %v3512, %v3548
  %v3581 = vadd.f32 %v3513, %v3549
  %v3582 = vlaneseq
  %v3583 = vshrl.u32 %v3582, 7
  %v3584 = vsub.s32 1, %v3583
  %v3585 = vrot.slane %v29, %v3584
  %v3586 = vmul.f32 %v3202, %v3585
  %v3587 = vmul.f32 %v3203, %v3585
  %v3588 = vmul.f32 %v3204, %v3585
  %v3589 = vmul.f32 %v3205, %v3585
  %v3590 = vmul.f32 %v3206, %v3585
  %v3591 = vmul.f32 %v3207, %v3585
  %v3592 = vmul.f32 %v3208, %v3585
  %v3593 = vmul.f32 %v3209, %v3585
  %v3594 = vmul.f32 %v3210, %v3585
  %v3595 = vmul.f32 %v3211, %v3585
  %v3596 = vmul.f32 %v3212, %v3585
  %v3597 = vmul.f32 %v3213, %v3585
  %v3598 = vmul.f32 %v3214, %v3585
  %v3599 = vmul.f32 %v3215, %v3585
  %v3600 = vmul.f32 %v3216, %v3585
  %v3601 = vmul.f32 %v3217, %v3585
  %v3602 = vmul.f32 %v3218, %v3585
  %v3603 = vmul.f32 %v3219, %v3585
  %v3604 = vmul.f32 %v3220, %v3585
  %v3605 = vmul.f32 %v3221, %v3585
  %v3606 = vmul.f32 %v3222, %v3585
  %v3607 = vmul.f32 %v3223, %v3585
  %v3608 = vmul.f32 %v3224, %v3585
  %v3609 = vmul.f32 %v3225, %v3585
  %v3610 = vmul.f32 %v3226, %v3585
  %v3611 = vmul.f32 %v3227, %v3585
  %v3612 = vmul.f32 %v3228, %v3585
  %v3613 = vmul.f32 %v3229, %v3585
  %v3614 = vmul.f32 %v3230, %v3585
  %v3615 = vmul.f32 %v3231, %v3585
  %v3616 = vmul.f32 %v3232, %v3585
  %v3617 = vmul.f32 %v3233, %v3585
  %v3618 = vadd.f32 %v3550, %v3586
  %v3619 = vadd.f32 %v3551, %v3587
  %v3620 = vadd.f32 %v3552, %v3588
  %v3621 = vadd.f32 %v3553, %v3589
  %v3622 = vadd.f32 %v3554, %v3590
  %v3623 = vadd.f32 %v3555, %v3591
  %v3624 = vadd.f32 %v3556, %v3592
  %v3625 = vadd.f32 %v3557, %v3593
  %v3626 = vadd.f32 %v3558, %v3594
  %v3627 = vadd.f32 %v3559, %v3595
  %v3628 = vadd.f32 %v3560, %v3596
  %v3629 = vadd.f32 %v3561, %v3597
  %v3630 = vadd.f32 %v3562, %v3598
  %v3631 = vadd.f32 %v3563, %v3599
  %v3632 = vadd.f32 %v3564, %v3600
  %v3633 = vadd.f32 %v3565, %v3601
  %v3634 = vadd.f32 %v3566, %v3602
  %v3635 = vadd.f32 %v3567, %v3603
  %v3636 = vadd.f32 %v3568, %v3604
  %v3637 = vadd.f32 %v3569, %v3605
  %v3638 = vadd.f32 %v3570, %v3606
  %v3639 = vadd.f32 %v3571, %v3607
  %v3640 = vadd.f32 %v3572, %v3608
  %v3641 = vadd.f32 %v3573, %v3609
  %v3642 = vadd.f32 %v3574, %v3610
  %v3643 = vadd.f32 %v3575, %v3611
  %v3644 = vadd.f32 %v3576, %v3612
  %v3645 = vadd.f32 %v3577, %v3613
  %v3646 = vadd.f32 %v3578, %v3614
  %v3647 = vadd.f32 %v3579, %v3615
  %v3648 = vadd.f32 %v3580, %v3616
  %v3649 = vadd.f32 %v3581, %v3617
  %v3650 = vlaneseq
  %v3651 = vshrl.u32 %v3650, 7
  %v3652 = vsub.s32 0, %v3651
  %v3653 = vrot.slane %v23, %v3652
  %v3654 = vmul.f32 %v3160, %v3653
  %v3655 = vmul.f32 %v3161, %v3653
  %v3656 = vmul.f32 %v3162, %v3653
  %v3657 = vmul.f32 %v3163, %v3653
  %v3658 = vmul.f32 %v3164, %v3653
  %v3659 = vmul.f32 %v3165, %v3653
  %v3660 = vmul.f32 %v3166, %v3653
  %v3661 = vmul.f32 %v3167, %v3653
  %v3662 = vmul.f32 %v3168, %v3653
  %v3663 = vmul.f32 %v3169, %v3653
  %v3664 = vmul.f32 %v3170, %v3653
  %v3665 = vmul.f32 %v3171, %v3653
  %v3666 = vmul.f32 %v3172, %v3653
  %v3667 = vmul.f32 %v3173, %v3653
  %v3668 = vmul.f32 %v3174, %v3653
  %v3669 = vmul.f32 %v3175, %v3653
  %v3670 = vmul.f32 %v3176, %v3653
  %v3671 = vmul.f32 %v3177, %v3653
  %v3672 = vmul.f32 %v3178, %v3653
  %v3673 = vmul.f32 %v3179, %v3653
  %v3674 = vmul.f32 %v3180, %v3653
  %v3675 = vmul.f32 %v3181, %v3653
  %v3676 = vmul.f32 %v3182, %v3653
  %v3677 = vmul.f32 %v3183, %v3653
  %v3678 = vmul.f32 %v3184, %v3653
  %v3679 = vmul.f32 %v3185, %v3653
  %v3680 = vmul.f32 %v3186, %v3653
  %v3681 = vmul.f32 %v3187, %v3653
  %v3682 = vmul.f32 %v3188, %v3653
  %v3683 = vmul.f32 %v3189, %v3653
  %v3684 = vmul.f32 %v3190, %v3653
  %v3685 = vmul.f32 %v3191, %v3653
  %v3686 = vadd.f32 %v3618, %v3654
  %v3687 = vadd.f32 %v3619, %v3655
  %v3688 = vadd.f32 %v3620, %v3656
  %v3689 = vadd.f32 %v3621, %v3657
  %v3690 = vadd.f32 %v3622, %v3658
  %v3691 = vadd.f32 %v3623, %v3659
  %v3692 = vadd.f32 %v3624, %v3660
  %v3693 = vadd.f32 %v3625, %v3661
  %v3694 = vadd.f32 %v3626, %v3662
  %v3695 = vadd.f32 %v3627, %v3663
  %v3696 = vadd.f32 %v3628, %v3664
  %v3697 = vadd.f32 %v3629, %v3665
  %v3698 = vadd.f32 %v3630, %v3666
  %v3699 = vadd.f32 %v3631, %v3667
  %v3700 = vadd.f32 %v3632, %v3668
  %v3701 = vadd.f32 %v3633, %v3669
  %v3702 = vadd.f32 %v3634, %v3670
  %v3703 = vadd.f32 %v3635, %v3671
  %v3704 = vadd.f32 %v3636, %v3672
  %v3705 = vadd.f32 %v3637, %v3673
  %v3706 = vadd.f32 %v3638, %v3674
  %v3707 = vadd.f32 %v3639, %v3675
  %v3708 = vadd.f32 %v3640, %v3676
  %v3709 = vadd.f32 %v3641, %v3677
  %v3710 = vadd.f32 %v3642, %v3678
  %v3711 = vadd.f32 %v3643, %v3679
  %v3712 = vadd.f32 %v3644, %v3680
  %v3713 = vadd.f32 %v3645, %v3681
  %v3714 = vadd.f32 %v3646, %v3682
  %v3715 = vadd.f32 %v3647, %v3683
  %v3716 = vadd.f32 %v3648, %v3684
  %v3717 = vadd.f32 %v3649, %v3685
  %v3718 = vlaneseq
  %v3719 = vshrl.u32 %v3718, 7
  %v3720 = vsub.s32 0, %v3719
  %v3721 = vrot.slane %v30, %v3720
  %v3722 = vmul.f32 %v3204, %v3721
  %v3723 = vmul.f32 %v3205, %v3721
  %v3724 = vmul.f32 %v3206, %v3721
  %v3725 = vmul.f32 %v3207, %v3721
  %v3726 = vmul.f32 %v3208, %v3721
  %v3727 = vmul.f32 %v3209, %v3721
  %v3728 = vmul.f32 %v3210, %v3721
  %v3729 = vmul.f32 %v3211, %v3721
  %v3730 = vmul.f32 %v3212, %v3721
  %v3731 = vmul.f32 %v3213, %v3721
  %v3732 = vmul.f32 %v3214, %v3721
  %v3733 = vmul.f32 %v3215, %v3721
  %v3734 = vmul.f32 %v3216, %v3721
  %v3735 = vmul.f32 %v3217, %v3721
  %v3736 = vmul.f32 %v3218, %v3721
  %v3737 = vmul.f32 %v3219, %v3721
  %v3738 = vmul.f32 %v3220, %v3721
  %v3739 = vmul.f32 %v3221, %v3721
  %v3740 = vmul.f32 %v3222, %v3721
  %v3741 = vmul.f32 %v3223, %v3721
  %v3742 = vmul.f32 %v3224, %v3721
  %v3743 = vmul.f32 %v3225, %v3721
  %v3744 = vmul.f32 %v3226, %v3721
  %v3745 = vmul.f32 %v3227, %v3721
  %v3746 = vmul.f32 %v3228, %v3721
  %v3747 = vmul.f32 %v3229, %v3721
  %v3748 = vmul.f32 %v3230, %v3721
  %v3749 = vmul.f32 %v3231, %v3721
  %v3750 = vmul.f32 %v3232, %v3721
  %v3751 = vmul.f32 %v3233, %v3721
  %v3752 = vmul.f32 %v3234, %v3721
  %v3753 = vmul.f32 %v3235, %v3721
  %v3754 = vadd.f32 %v3686, %v3722
  %v3755 = vadd.f32 %v3687, %v3723
  %v3756 = vadd.f32 %v3688, %v3724
  %v3757 = vadd.f32 %v3689, %v3725
  %v3758 = vadd.f32 %v3690, %v3726
  %v3759 = vadd.f32 %v3691, %v3727
  %v3760 = vadd.f32 %v3692, %v3728
  %v3761 = vadd.f32 %v3693, %v3729
  %v3762 = vadd.f32 %v3694, %v3730
  %v3763 = vadd.f32 %v3695, %v3731
  %v3764 = vadd.f32 %v3696, %v3732
  %v3765 = vadd.f32 %v3697, %v3733
  %v3766 = vadd.f32 %v3698, %v3734
  %v3767 = vadd.f32 %v3699, %v3735
  %v3768 = vadd.f32 %v3700, %v3736
  %v3769 = vadd.f32 %v3701, %v3737
  %v3770 = vadd.f32 %v3702, %v3738
  %v3771 = vadd.f32 %v3703, %v3739
  %v3772 = vadd.f32 %v3704, %v3740
  %v3773 = vadd.f32 %v3705, %v3741
  %v3774 = vadd.f32 %v3706, %v3742
  %v3775 = vadd.f32 %v3707, %v3743
  %v3776 = vadd.f32 %v3708, %v3744
  %v3777 = vadd.f32 %v3709, %v3745
  %v3778 = vadd.f32 %v3710, %v3746
  %v3779 = vadd.f32 %v3711, %v3747
  %v3780 = vadd.f32 %v3712, %v3748
  %v3781 = vadd.f32 %v3713, %v3749
  %v3782 = vadd.f32 %v3714, %v3750
  %v3783 = vadd.f32 %v3715, %v3751
  %v3784 = vadd.f32 %v3716, %v3752
  %v3785 = vadd.f32 %v3717, %v3753
  %v3786 = vlaneseq
  %v3787 = vshrl.u32 %v3786, 7
  %v3788 = vsub.s32 7, %v3787
  %v3789 = vrot.slane %v23, %v3788
  %v3790 = vmul.f32 %v3162, %v3789
  %v3791 = vmul.f32 %v3163, %v3789
  %v3792 = vmul.f32 %v3164, %v3789
  %v3793 = vmul.f32 %v3165, %v3789
  %v3794 = vmul.f32 %v3166, %v3789
  %v3795 = vmul.f32 %v3167, %v3789
  %v3796 = vmul.f32 %v3168, %v3789
  %v3797 = vmul.f32 %v3169, %v3789
  %v3798 = vmul.f32 %v3170, %v3789
  %v3799 = vmul.f32 %v3171, %v3789
  %v3800 = vmul.f32 %v3172, %v3789
  %v3801 = vmul.f32 %v3173, %v3789
  %v3802 = vmul.f32 %v3174, %v3789
  %v3803 = vmul.f32 %v3175, %v3789
  %v3804 = vmul.f32 %v3176, %v3789
  %v3805 = vmul.f32 %v3177, %v3789
  %v3806 = vmul.f32 %v3178, %v3789
  %v3807 = vmul.f32 %v3179, %v3789
  %v3808 = vmul.f32 %v3180, %v3789
  %v3809 = vmul.f32 %v3181, %v3789
  %v3810 = vmul.f32 %v3182, %v3789
  %v3811 = vmul.f32 %v3183, %v3789
  %v3812 = vmul.f32 %v3184, %v3789
  %v3813 = vmul.f32 %v3185, %v3789
  %v3814 = vmul.f32 %v3186, %v3789
  %v3815 = vmul.f32 %v3187, %v3789
  %v3816 = vmul.f32 %v3188, %v3789
  %v3817 = vmul.f32 %v3189, %v3789
  %v3818 = vmul.f32 %v3190, %v3789
  %v3819 = vmul.f32 %v3191, %v3789
  %v3820 = vmul.f32 %v3192, %v3789
  %v3821 = vmul.f32 %v3193, %v3789
  %v3822 = vadd.f32 %v3754, %v3790
  %v3823 = vadd.f32 %v3755, %v3791
  %v3824 = vadd.f32 %v3756, %v3792
  %v3825 = vadd.f32 %v3757, %v3793
  %v3826 = vadd.f32 %v3758, %v3794
  %v3827 = vadd.f32 %v3759, %v3795
  %v3828 = vadd.f32 %v3760, %v3796
  %v3829 = vadd.f32 %v3761, %v3797
  %v3830 = vadd.f32 %v3762, %v3798
  %v3831 = vadd.f32 %v3763, %v3799
  %v3832 = vadd.f32 %v3764, %v3800
  %v3833 = vadd.f32 %v3765, %v3801
  %v3834 = vadd.f32 %v3766, %v3802
  %v3835 = vadd.f32 %v3767, %v3803
  %v3836 = vadd.f32 %v3768, %v3804
  %v3837 = vadd.f32 %v3769, %v3805
  %v3838 = vadd.f32 %v3770, %v3806
  %v3839 = vadd.f32 %v3771, %v3807
  %v3840 = vadd.f32 %v3772, %v3808
  %v3841 = vadd.f32 %v3773, %v3809
  %v3842 = vadd.f32 %v3774, %v3810
  %v3843 = vadd.f32 %v3775, %v3811
  %v3844 = vadd.f32 %v3776, %v3812
  %v3845 = vadd.f32 %v3777, %v3813
  %v3846 = vadd.f32 %v3778, %v3814
  %v3847 = vadd.f32 %v3779, %v3815
  %v3848 = vadd.f32 %v3780, %v3816
  %v3849 = vadd.f32 %v3781, %v3817
  %v3850 = vadd.f32 %v3782, %v3818
  %v3851 = vadd.f32 %v3783, %v3819
  %v3852 = vadd.f32 %v3784, %v3820
  %v3853 = vadd.f32 %v3785, %v3821
  %v3854 = vlaneseq
  %v3855 = vshrl.u32 %v3854, 7
  %v3856 = vsub.s32 7, %v3855
  %v3857 = vrot.slane %v30, %v3856
  %v3858 = vmul.f32 %v3206, %v3857
  %v3859 = vmul.f32 %v3207, %v3857
  %v3860 = vmul.f32 %v3208, %v3857
  %v3861 = vmul.f32 %v3209, %v3857
  %v3862 = vmul.f32 %v3210, %v3857
  %v3863 = vmul.f32 %v3211, %v3857
  %v3864 = vmul.f32 %v3212, %v3857
  %v3865 = vmul.f32 %v3213, %v3857
  %v3866 = vmul.f32 %v3214, %v3857
  %v3867 = vmul.f32 %v3215, %v3857
  %v3868 = vmul.f32 %v3216, %v3857
  %v3869 = vmul.f32 %v3217, %v3857
  %v3870 = vmul.f32 %v3218, %v3857
  %v3871 = vmul.f32 %v3219, %v3857
  %v3872 = vmul.f32 %v3220, %v3857
  %v3873 = vmul.f32 %v3221, %v3857
  %v3874 = vmul.f32 %v3222, %v3857
  %v3875 = vmul.f32 %v3223, %v3857
  %v3876 = vmul.f32 %v3224, %v3857
  %v3877 = vmul.f32 %v3225, %v3857
  %v3878 = vmul.f32 %v3226, %v3857
  %v3879 = vmul.f32 %v3227, %v3857
  %v3880 = vmul.f32 %v3228, %v3857
  %v3881 = vmul.f32 %v3229, %v3857
  %v3882 = vmul.f32 %v3230, %v3857
  %v3883 = vmul.f32 %v3231, %v3857
  %v3884 = vmul.f32 %v3232, %v3857
  %v3885 = vmul.f32 %v3233, %v3857
  %v3886 = vmul.f32 %v3234, %v3857
  %v3887 = vmul.f32 %v3235, %v3857
  %v3888 = vmul.f32 %v3236, %v3857
  %v3889 = vmul.f32 %v3237, %v3857
  %v3890 = vadd.f32 %v3822, %v3858
  %v3891 = vadd.f32 %v3823, %v3859
  %v3892 = vadd.f32 %v3824, %v3860
  %v3893 = vadd.f32 %v3825, %v3861
  %v3894 = vadd.f32 %v3826, %v3862
  %v3895 = vadd.f32 %v3827, %v3863
  %v3896 = vadd.f32 %v3828, %v3864
  %v3897 = vadd.f32 %v3829, %v3865
  %v3898 = vadd.f32 %v3830, %v3866
  %v3899 = vadd.f32 %v3831, %v3867
  %v3900 = vadd.f32 %v3832, %v3868
  %v3901 = vadd.f32 %v3833, %v3869
  %v3902 = vadd.f32 %v3834, %v3870
  %v3903 = vadd.f32 %v3835, %v3871
  %v3904 = vadd.f32 %v3836, %v3872
  %v3905 = vadd.f32 %v3837, %v3873
  %v3906 = vadd.f32 %v3838, %v3874
  %v3907 = vadd.f32 %v3839, %v3875
  %v3908 = vadd.f32 %v3840, %v3876
  %v3909 = vadd.f32 %v3841, %v3877
  %v3910 = vadd.f32 %v3842, %v3878
  %v3911 = vadd.f32 %v3843, %v3879
  %v3912 = vadd.f32 %v3844, %v3880
  %v3913 = vadd.f32 %v3845, %v3881
  %v3914 = vadd.f32 %v3846, %v3882
  %v3915 = vadd.f32 %v3847, %v3883
  %v3916 = vadd.f32 %v3848, %v3884
  %v3917 = vadd.f32 %v3849, %v3885
  %v3918 = vadd.f32 %v3850, %v3886
  %v3919 = vadd.f32 %v3851, %v3887
  %v3920 = vadd.f32 %v3852, %v3888
  %v3921 = vadd.f32 %v3853, %v3889
  %v3922 = vlaneseq
  %v3923 = vshrl.u32 %v3922, 7
  %v3924 = vsub.s32 6, %v3923
  %v3925 = vrot.slane %v24, %v3924
  %v3926 = vmul.f32 %v3164, %v3925
  %v3927 = vmul.f32 %v3165, %v3925
  %v3928 = vmul.f32 %v3166, %v3925
  %v3929 = vmul.f32 %v3167, %v3925
  %v3930 = vmul.f32 %v3168, %v3925
  %v3931 = vmul.f32 %v3169, %v3925
  %v3932 = vmul.f32 %v3170, %v3925
  %v3933 = vmul.f32 %v3171, %v3925
  %v3934 = vmul.f32 %v3172, %v3925
  %v3935 = vmul.f32 %v3173, %v3925
  %v3936 = vmul.f32 %v3174, %v3925
  %v3937 = vmul.f32 %v3175, %v3925
  %v3938 = vmul.f32 %v3176, %v3925
  %v3939 = vmul.f32 %v3177, %v3925
  %v3940 = vmul.f32 %v3178, %v3925
  %v3941 = vmul.f32 %v3179, %v3925
  %v3942 = vmul.f32 %v3180, %v3925
  %v3943 = vmul.f32 %v3181, %v3925
  %v3944 = vmul.f32 %v3182, %v3925
  %v3945 = vmul.f32 %v3183, %v3925
  %v3946 = vmul.f32 %v3184, %v3925
  %v3947 = vmul.f32 %v3185, %v3925
  %v3948 = vmul.f32 %v3186, %v3925
  %v3949 = vmul.f32 %v3187, %v3925
  %v3950 = vmul.f32 %v3188, %v3925
  %v3951 = vmul.f32 %v3189, %v3925
  %v3952 = vmul.f32 %v3190, %v3925
  %v3953 = vmul.f32 %v3191, %v3925
  %v3954 = vmul.f32 %v3192, %v3925
  %v3955 = vmul.f32 %v3193, %v3925
  %v3956 = vmul.f32 %v3194, %v3925
  %v3957 = vmul.f32 %v3195, %v3925
  %v3958 = vadd.f32 %v3890, %v3926
  %v3959 = vadd.f32 %v3891, %v3927
  %v3960 = vadd.f32 %v3892, %v3928
  %v3961 = vadd.f32 %v3893, %v3929
  %v3962 = vadd.f32 %v3894, %v3930
  %v3963 = vadd.f32 %v3895, %v3931
  %v3964 = vadd.f32 %v3896, %v3932
  %v3965 = vadd.f32 %v3897, %v3933
  %v3966 = vadd.f32 %v3898, %v3934
  %v3967 = vadd.f32 %v3899, %v3935
  %v3968 = vadd.f32 %v3900, %v3936
  %v3969 = vadd.f32 %v3901, %v3937
  %v3970 = vadd.f32 %v3902, %v3938
  %v3971 = vadd.f32 %v3903, %v3939
  %v3972 = vadd.f32 %v3904, %v3940
  %v3973 = vadd.f32 %v3905, %v3941
  %v3974 = vadd.f32 %v3906, %v3942
  %v3975 = vadd.f32 %v3907, %v3943
  %v3976 = vadd.f32 %v3908, %v3944
  %v3977 = vadd.f32 %v3909, %v3945
  %v3978 = vadd.f32 %v3910, %v3946
  %v3979 = vadd.f32 %v3911, %v3947
  %v3980 = vadd.f32 %v3912, %v3948
  %v3981 = vadd.f32 %v3913, %v3949
  %v3982 = vadd.f32 %v3914, %v3950
  %v3983 = vadd.f32 %v3915, %v3951
  %v3984 = vadd.f32 %v3916, %v3952
  %v3985 = vadd.f32 %v3917, %v3953
  %v3986 = vadd.f32 %v3918, %v3954
  %v3987 = vadd.f32 %v3919, %v3955
  %v3988 = vadd.f32 %v3920, %v3956
  %v3989 = vadd.f32 %v3921, %v3957
  %v3990 = vlaneseq
  %v3991 = vshrl.u32 %v3990, 7
  %v3992 = vsub.s32 6, %v3991
  %v3993 = vrot.slane %v31, %v3992
  %v3994 = vmul.f32 %v3208, %v3993
  %v3995 = vmul.f32 %v3209, %v3993
  %v3996 = vmul.f32 %v3210, %v3993
  %v3997 = vmul.f32 %v3211, %v3993
  %v3998 = vmul.f32 %v3212, %v3993
  %v3999 = vmul.f32 %v3213, %v3993
  %v4000 = vmul.f32 %v3214, %v3993
  %v4001 = vmul.f32 %v3215, %v3993
  %v4002 = vmul.f32 %v3216, %v3993
  %v4003 = vmul.f32 %v3217, %v3993
  %v4004 = vmul.f32 %v3218, %v3993
  %v4005 = vmul.f32 %v3219, %v3993
  %v4006 = vmul.f32 %v3220, %v3993
  %v4007 = vmul.f32 %v3221, %v3993
  %v4008 = vmul.f32 %v3222, %v3993
  %v4009 = vmul.f32 %v3223, %v3993
  %v4010 = vmul.f32 %v3224, %v3993
  %v4011 = vmul.f32 %v3225, %v3993
  %v4012 = vmul.f32 %v3226, %v3993
  %v4013 = vmul.f32 %v3227, %v3993
  %v4014 = vmul.f32 %v3228, %v3993
  %v4015 = vmul.f32 %v3229, %v3993
  %v4016 = vmul.f32 %v3230, %v3993
  %v4017 = vmul.f32 %v3231, %v3993
  %v4018 = vmul.f32 %v3232, %v3993
  %v4019 = vmul.f32 %v3233, %v3993
  %v4020 = vmul.f32 %v3234, %v3993
  %v4021 = vmul.f32 %v3235, %v3993
  %v4022 = vmul.f32 %v3236, %v3993
  %v4023 = vmul.f32 %v3237, %v3993
  %v4024 = vmul.f32 %v3238, %v3993
  %v4025 = vmul.f32 %v3239, %v3993
  %v4026 = vadd.f32 %v3958, %v3994
  %v4027 = vadd.f32 %v3959, %v3995
  %v4028 = vadd.f32 %v3960, %v3996
  %v4029 = vadd.f32 %v3961, %v3997
  %v4030 = vadd.f32 %v3962, %v3998
  %v4031 = vadd.f32 %v3963, %v3999
  %v4032 = vadd.f32 %v3964, %v4000
  %v4033 = vadd.f32 %v3965, %v4001
  %v4034 = vadd.f32 %v3966, %v4002
  %v4035 = vadd.f32 %v3967, %v4003
  %v4036 = vadd.f32 %v3968, %v4004
  %v4037 = vadd.f32 %v3969, %v4005
  %v4038 = vadd.f32 %v3970, %v4006
  %v4039 = vadd.f32 %v3971, %v4007
  %v4040 = vadd.f32 %v3972, %v4008
  %v4041 = vadd.f32 %v3973, %v4009
  %v4042 = vadd.f32 %v3974, %v4010
  %v4043 = vadd.f32 %v3975, %v4011
  %v4044 = vadd.f32 %v3976, %v4012
  %v4045 = vadd.f32 %v3977, %v4013
  %v4046 = vadd.f32 %v3978, %v4014
  %v4047 = vadd.f32 %v3979, %v4015
  %v4048 = vadd.f32 %v3980, %v4016
  %v4049 = vadd.f32 %v3981, %v4017
  %v4050 = vadd.f32 %v3982, %v4018
  %v4051 = vadd.f32 %v3983, %v4019
  %v4052 = vadd.f32 %v3984, %v4020
  %v4053 = vadd.f32 %v3985, %v4021
  %v4054 = vadd.f32 %v3986, %v4022
  %v4055 = vadd.f32 %v3987, %v4023
  %v4056 = vadd.f32 %v3988, %v4024
  %v4057 = vadd.f32 %v3989, %v4025
  %v4058 = vlaneseq
  %v4059 = vshrl.u32 %v4058, 7
  %v4060 = vsub.s32 5, %v4059
  %v4061 = vrot.slane %v25, %v4060
  %v4062 = vmul.f32 %v3166, %v4061
  %v4063 = vmul.f32 %v3167, %v4061
  %v4064 = vmul.f32 %v3168, %v4061
  %v4065 = vmul.f32 %v3169, %v4061
  %v4066 = vmul.f32 %v3170, %v4061
  %v4067 = vmul.f32 %v3171, %v4061
  %v4068 = vmul.f32 %v3172, %v4061
  %v4069 = vmul.f32 %v3173, %v4061
  %v4070 = vmul.f32 %v3174, %v4061
  %v4071 = vmul.f32 %v3175, %v4061
  %v4072 = vmul.f32 %v3176, %v4061
  %v4073 = vmul.f32 %v3177, %v4061
  %v4074 = vmul.f32 %v3178, %v4061
  %v4075 = vmul.f32 %v3179, %v4061
  %v4076 = vmul.f32 %v3180, %v4061
  %v4077 = vmul.f32 %v3181, %v4061
  %v4078 = vmul.f32 %v3182, %v4061
  %v4079 = vmul.f32 %v3183, %v4061
  %v4080 = vmul.f32 %v3184, %v4061
  %v4081 = vmul.f32 %v3185, %v4061
  %v4082 = vmul.f32 %v3186, %v4061
  %v4083 = vmul.f32 %v3187, %v4061
  %v4084 = vmul.f32 %v3188, %v4061
  %v4085 = vmul.f32 %v3189, %v4061
  %v4086 = vmul.f32 %v3190, %v4061
  %v4087 = vmul.f32 %v3191, %v4061
  %v4088 = vmul.f32 %v3192, %v4061
  %v4089 = vmul.f32 %v3193, %v4061
  %v4090 = vmul.f32 %v3194, %v4061
  %v4091 = vmul.f32 %v3195, %v4061
  %v4092 = vmul.f32 %v3196, %v4061
  %v4093 = vmul.f32 %v3197, %v4061
  %v4094 = vadd.f32 %v4026, %v4062
  %v4095 = vadd.f32 %v4027, %v4063
  %v4096 = vadd.f32 %v4028, %v4064
  %v4097 = vadd.f32 %v4029, %v4065
  %v4098 = vadd.f32 %v4030, %v4066
  %v4099 = vadd.f32 %v4031, %v4067
  %v4100 = vadd.f32 %v4032, %v4068
  %v4101 = vadd.f32 %v4033, %v4069
  %v4102 = vadd.f32 %v4034, %v4070
  %v4103 = vadd.f32 %v4035, %v4071
  %v4104 = vadd.f32 %v4036, %v4072
  %v4105 = vadd.f32 %v4037, %v4073
  %v4106 = vadd.f32 %v4038, %v4074
  %v4107 = vadd.f32 %v4039, %v4075
  %v4108 = vadd.f32 %v4040, %v4076
  %v4109 = vadd.f32 %v4041, %v4077
  %v4110 = vadd.f32 %v4042, %v4078
  %v4111 = vadd.f32 %v4043, %v4079
  %v4112 = vadd.f32 %v4044, %v4080
  %v4113 = vadd.f32 %v4045, %v4081
  %v4114 = vadd.f32 %v4046, %v4082
  %v4115 = vadd.f32 %v4047, %v4083
  %v4116 = vadd.f32 %v4048, %v4084
  %v4117 = vadd.f32 %v4049, %v4085
  %v4118 = vadd.f32 %v4050, %v4086
  %v4119 = vadd.f32 %v4051, %v4087
  %v4120 = vadd.f32 %v4052, %v4088
  %v4121 = vadd.f32 %v4053, %v4089
  %v4122 = vadd.f32 %v4054, %v4090
  %v4123 = vadd.f32 %v4055, %v4091
  %v4124 = vadd.f32 %v4056, %v4092
  %v4125 = vadd.f32 %v4057, %v4093
  %v4126 = vlaneseq
  %v4127 = vshrl.u32 %v4126, 7
  %v4128 = vsub.s32 5, %v4127
  %v4129 = vrot.slane %v32, %v4128
  %v4130 = vmul.f32 %v3210, %v4129
  %v4131 = vmul.f32 %v3211, %v4129
  %v4132 = vmul.f32 %v3212, %v4129
  %v4133 = vmul.f32 %v3213, %v4129
  %v4134 = vmul.f32 %v3214, %v4129
  %v4135 = vmul.f32 %v3215, %v4129
  %v4136 = vmul.f32 %v3216, %v4129
  %v4137 = vmul.f32 %v3217, %v4129
  %v4138 = vmul.f32 %v3218, %v4129
  %v4139 = vmul.f32 %v3219, %v4129
  %v4140 = vmul.f32 %v3220, %v4129
  %v4141 = vmul.f32 %v3221, %v4129
  %v4142 = vmul.f32 %v3222, %v4129
  %v4143 = vmul.f32 %v3223, %v4129
  %v4144 = vmul.f32 %v3224, %v4129
  %v4145 = vmul.f32 %v3225, %v4129
  %v4146 = vmul.f32 %v3226, %v4129
  %v4147 = vmul.f32 %v3227, %v4129
  %v4148 = vmul.f32 %v3228, %v4129
  %v4149 = vmul.f32 %v3229, %v4129
  %v4150 = vmul.f32 %v3230, %v4129
  %v4151 = vmul.f32 %v3231, %v4129
  %v4152 = vmul.f32 %v3232, %v4129
  %v4153 = vmul.f32 %v3233, %v4129
  %v4154 = vmul.f32 %v3234, %v4129
  %v4155 = vmul.f32 %v3235, %v4129
  %v4156 = vmul.f32 %v3236, %v4129
  %v4157 = vmul.f32 %v3237, %v4129
  %v4158 = vmul.f32 %v3238, %v4129
  %v4159 = vmul.f32 %v3239, %v4129
  %v4160 = vmul.f32 %v3240, %v4129
  %v4161 = vmul.f32 %v3241, %v4129
  %v4162 = vadd.f32 %v4094, %v4130
  %v4163 = vadd.f32 %v4095, %v4131
  %v4164 = vadd.f32 %v4096, %v4132
  %v4165 = vadd.f32 %v4097, %v4133
  %v4166 = vadd.f32 %v4098, %v4134
  %v4167 = vadd.f32 %v4099, %v4135
  %v4168 = vadd.f32 %v4100, %v4136
  %v4169 = vadd.f32 %v4101, %v4137
  %v4170 = vadd.f32 %v4102, %v4138
  %v4171 = vadd.f32 %v4103, %v4139
  %v4172 = vadd.f32 %v4104, %v4140
  %v4173 = vadd.f32 %v4105, %v4141
  %v4174 = vadd.f32 %v4106, %v4142
  %v4175 = vadd.f32 %v4107, %v4143
  %v4176 = vadd.f32 %v4108, %v4144
  %v4177 = vadd.f32 %v4109, %v4145
  %v4178 = vadd.f32 %v4110, %v4146
  %v4179 = vadd.f32 %v4111, %v4147
  %v4180 = vadd.f32 %v4112, %v4148
  %v4181 = vadd.f32 %v4113, %v4149
  %v4182 = vadd.f32 %v4114, %v4150
  %v4183 = vadd.f32 %v4115, %v4151
  %v4184 = vadd.f32 %v4116, %v4152
  %v4185 = vadd.f32 %v4117, %v4153
  %v4186 = vadd.f32 %v4118, %v4154
  %v4187 = vadd.f32 %v4119, %v4155
  %v4188 = vadd.f32 %v4120, %v4156
  %v4189 = vadd.f32 %v4121, %v4157
  %v4190 = vadd.f32 %v4122, %v4158
  %v4191 = vadd.f32 %v4123, %v4159
  %v4192 = vadd.f32 %v4124, %v4160
  %v4193 = vadd.f32 %v4125, %v4161
  %v4194 = vld [vmem:[%s0 + $0x4] sm:$0xff]
  %v4195 = vld [vmem:[%s0 + $0xc] sm:$0xff]
  %v4196 = vld [vmem:[%s0 + $0x1c] sm:$0xff]
  %v4197 = vld [vmem:[%s0 + $0x24] sm:$0xff]
  %v4198 = vld [vmem:[%s0 + $0x34] sm:$0xff]
  %v4199 = vld [vmem:[%s0 + $0x3c] sm:$0xff]
  %v4200 = vld [vmem:[%s0 + $0x4c] sm:$0xff]
  %v4201 = vld [vmem:[%s0 + $0x54] sm:$0xff]
  %v4202 = vld [vmem:[%s0 + $0x64] sm:$0xff]
  %v4203 = vld [vmem:[%s0 + $0x6c] sm:$0xff]
  %v4204 = vld [vmem:[%s0 + $0x7c] sm:$0xff]
  %v4205 = vld [vmem:[%s0 + $0x84] sm:$0xff]
  %v4206 = vld [vmem:[%s0 + $0x94] sm:$0xff]
  %v4207 = vld [vmem:[%s0 + $0x9c] sm:$0xff]
  %v4208 = vld [vmem:[%s0 + $0xac] sm:$0xff]
  %v4209 = vld [vmem:[%s0 + $0xb4] sm:$0xff]
  %v4210 = vld [vmem:[%s0 + $0xc4] sm:$0xff]
  %v4211 = vld [vmem:[%s0 + $0xcc] sm:$0xff]
  %v4212 = vld [vmem:[%s0 + $0xdc] sm:$0xff]
  %v4213 = vld [vmem:[%s0 + $0xe4] sm:$0xff]
  %v4214 = vld [vmem:[%s0 + $0xf4] sm:$0xff]
  %v4215 = vld [vmem:[%s0 + $0xfc] sm:$0xff]
  %v4216 = vld [vmem:[%s0 + $0x10c] sm:$0xff]
  %v4217 = vld [vmem:[%s0 + $0x114] sm:$0xff]
  %v4218 = vld [vmem:[%s0 + $0x124] sm:$0xff]
  %v4219 = vld [vmem:[%s0 + $0x12c] sm:$0xff]
  %v4220 = vld [vmem:[%s0 + $0x13c] sm:$0xff]
  %v4221 = vld [vmem:[%s0 + $0x144] sm:$0xff]
  %v4222 = vld [vmem:[%s0 + $0x154] sm:$0xff]
  %v4223 = vld [vmem:[%s0 + $0x15c] sm:$0xff]
  %v4224 = vld [vmem:[%s0 + $0x16c] sm:$0xff]
  %v4225 = vld [vmem:[%s0 + $0x174] sm:$0xff]
  %v4226 = vld [vmem:[%s0 + $0x184] sm:$0xff]
  %v4227 = vld [vmem:[%s0 + $0x18c] sm:$0xff]
  %v4228 = vld [vmem:[%s0 + $0x19c] sm:$0xff]
  %v4229 = vld [vmem:[%s0 + $0x1a4] sm:$0xff]
  %v4230 = vld [vmem:[%s0 + $0x1b4] sm:$0xff]
  %v4231 = vld [vmem:[%s0 + $0x1bc] sm:$0xff]
  %v4232 = vld [vmem:[%s0 + $0x1cc] sm:$0xff]
  %v4233 = vld [vmem:[%s0 + $0x1d4] sm:$0xff]
  %v4234 = vld [vmem:[%s0 + $0x1e4] sm:$0xff]
  %v4235 = vld [vmem:[%s0 + $0x1ec] sm:$0xff]
  %v4236 = vld [vmem:[%s0 + $0x1fc] sm:$0xff]
  %v4237 = vld [vmem:[%s0 + $0x204] sm:$0xff]
  %v4238 = vld [vmem:[%s1 + $0x4] sm:$0xff]
  %v4239 = vld [vmem:[%s1 + $0xc] sm:$0xff]
  %v4240 = vld [vmem:[%s1 + $0x1c] sm:$0xff]
  %v4241 = vld [vmem:[%s1 + $0x24] sm:$0xff]
  %v4242 = vld [vmem:[%s1 + $0x34] sm:$0xff]
  %v4243 = vld [vmem:[%s1 + $0x3c] sm:$0xff]
  %v4244 = vld [vmem:[%s1 + $0x4c] sm:$0xff]
  %v4245 = vld [vmem:[%s1 + $0x54] sm:$0xff]
  %v4246 = vld [vmem:[%s1 + $0x64] sm:$0xff]
  %v4247 = vld [vmem:[%s1 + $0x6c] sm:$0xff]
  %v4248 = vld [vmem:[%s1 + $0x7c] sm:$0xff]
  %v4249 = vld [vmem:[%s1 + $0x84] sm:$0xff]
  %v4250 = vld [vmem:[%s1 + $0x94] sm:$0xff]
  %v4251 = vld [vmem:[%s1 + $0x9c] sm:$0xff]
  %v4252 = vld [vmem:[%s1 + $0xac] sm:$0xff]
  %v4253 = vld [vmem:[%s1 + $0xb4] sm:$0xff]
  %v4254 = vld [vmem:[%s1 + $0xc4] sm:$0xff]
  %v4255 = vld [vmem:[%s1 + $0xcc] sm:$0xff]
  %v4256 = vld [vmem:[%s1 + $0xdc] sm:$0xff]
  %v4257 = vld [vmem:[%s1 + $0xe4] sm:$0xff]
  %v4258 = vld [vmem:[%s1 + $0xf4] sm:$0xff]
  %v4259 = vld [vmem:[%s1 + $0xfc] sm:$0xff]
  %v4260 = vld [vmem:[%s1 + $0x10c] sm:$0xff]
  %v4261 = vld [vmem:[%s1 + $0x114] sm:$0xff]
  %v4262 = vld [vmem:[%s1 + $0x124] sm:$0xff]
  %v4263 = vld [vmem:[%s1 + $0x12c] sm:$0xff]
  %v4264 = vld [vmem:[%s1 + $0x13c] sm:$0xff]
  %v4265 = vld [vmem:[%s1 + $0x144] sm:$0xff]
  %v4266 = vld [vmem:[%s1 + $0x154] sm:$0xff]
  %v4267 = vld [vmem:[%s1 + $0x15c] sm:$0xff]
  %v4268 = vld [vmem:[%s1 + $0x16c] sm:$0xff]
  %v4269 = vld [vmem:[%s1 + $0x174] sm:$0xff]
  %v4270 = vld [vmem:[%s1 + $0x184] sm:$0xff]
  %v4271 = vld [vmem:[%s1 + $0x18c] sm:$0xff]
  %v4272 = vld [vmem:[%s1 + $0x19c] sm:$0xff]
  %v4273 = vld [vmem:[%s1 + $0x1a4] sm:$0xff]
  %v4274 = vld [vmem:[%s1 + $0x1b4] sm:$0xff]
  %v4275 = vld [vmem:[%s1 + $0x1bc] sm:$0xff]
  %v4276 = vld [vmem:[%s1 + $0x1cc] sm:$0xff]
  %v4277 = vld [vmem:[%s1 + $0x1d4] sm:$0xff]
  %v4278 = vld [vmem:[%s1 + $0x1e4] sm:$0xff]
  %v4279 = vld [vmem:[%s1 + $0x1ec] sm:$0xff]
  %v4280 = vld [vmem:[%s1 + $0x1fc] sm:$0xff]
  %v4281 = vld [vmem:[%s1 + $0x204] sm:$0xff]
  %v4282 = vlaneseq
  %v4283 = vshrl.u32 %v4282, 7
  %v4284 = vsub.s32 4, %v4283
  %v4285 = vrot.slane %v20, %v4284
  %v4286 = vmul.f32 %v4194, %v4285
  %v4287 = vmul.f32 %v4195, %v4285
  %v4288 = vmul.f32 %v4196, %v4285
  %v4289 = vmul.f32 %v4197, %v4285
  %v4290 = vmul.f32 %v4198, %v4285
  %v4291 = vmul.f32 %v4199, %v4285
  %v4292 = vmul.f32 %v4200, %v4285
  %v4293 = vmul.f32 %v4201, %v4285
  %v4294 = vmul.f32 %v4202, %v4285
  %v4295 = vmul.f32 %v4203, %v4285
  %v4296 = vmul.f32 %v4204, %v4285
  %v4297 = vmul.f32 %v4205, %v4285
  %v4298 = vmul.f32 %v4206, %v4285
  %v4299 = vmul.f32 %v4207, %v4285
  %v4300 = vmul.f32 %v4208, %v4285
  %v4301 = vmul.f32 %v4209, %v4285
  %v4302 = vmul.f32 %v4210, %v4285
  %v4303 = vmul.f32 %v4211, %v4285
  %v4304 = vmul.f32 %v4212, %v4285
  %v4305 = vmul.f32 %v4213, %v4285
  %v4306 = vmul.f32 %v4214, %v4285
  %v4307 = vmul.f32 %v4215, %v4285
  %v4308 = vmul.f32 %v4216, %v4285
  %v4309 = vmul.f32 %v4217, %v4285
  %v4310 = vmul.f32 %v4218, %v4285
  %v4311 = vmul.f32 %v4219, %v4285
  %v4312 = vmul.f32 %v4220, %v4285
  %v4313 = vmul.f32 %v4221, %v4285
  %v4314 = vmul.f32 %v4222, %v4285
  %v4315 = vmul.f32 %v4223, %v4285
  %v4316 = vmul.f32 %v4224, %v4285
  %v4317 = vmul.f32 %v4225, %v4285
  %v4318 = vadd.f32 %v4162, %v4286
  %v4319 = vadd.f32 %v4163, %v4287
  %v4320 = vadd.f32 %v4164, %v4288
  %v4321 = vadd.f32 %v4165, %v4289
  %v4322 = vadd.f32 %v4166, %v4290
  %v4323 = vadd.f32 %v4167, %v4291
  %v4324 = vadd.f32 %v4168, %v4292
  %v4325 = vadd.f32 %v4169, %v4293
  %v4326 = vadd.f32 %v4170, %v4294
  %v4327 = vadd.f32 %v4171, %v4295
  %v4328 = vadd.f32 %v4172, %v4296
  %v4329 = vadd.f32 %v4173, %v4297
  %v4330 = vadd.f32 %v4174, %v4298
  %v4331 = vadd.f32 %v4175, %v4299
  %v4332 = vadd.f32 %v4176, %v4300
  %v4333 = vadd.f32 %v4177, %v4301
  %v4334 = vadd.f32 %v4178, %v4302
  %v4335 = vadd.f32 %v4179, %v4303
  %v4336 = vadd.f32 %v4180, %v4304
  %v4337 = vadd.f32 %v4181, %v4305
  %v4338 = vadd.f32 %v4182, %v4306
  %v4339 = vadd.f32 %v4183, %v4307
  %v4340 = vadd.f32 %v4184, %v4308
  %v4341 = vadd.f32 %v4185, %v4309
  %v4342 = vadd.f32 %v4186, %v4310
  %v4343 = vadd.f32 %v4187, %v4311
  %v4344 = vadd.f32 %v4188, %v4312
  %v4345 = vadd.f32 %v4189, %v4313
  %v4346 = vadd.f32 %v4190, %v4314
  %v4347 = vadd.f32 %v4191, %v4315
  %v4348 = vadd.f32 %v4192, %v4316
  %v4349 = vadd.f32 %v4193, %v4317
  %v4350 = vlaneseq
  %v4351 = vshrl.u32 %v4350, 7
  %v4352 = vsub.s32 4, %v4351
  %v4353 = vrot.slane %v27, %v4352
  %v4354 = vmul.f32 %v4238, %v4353
  %v4355 = vmul.f32 %v4239, %v4353
  %v4356 = vmul.f32 %v4240, %v4353
  %v4357 = vmul.f32 %v4241, %v4353
  %v4358 = vmul.f32 %v4242, %v4353
  %v4359 = vmul.f32 %v4243, %v4353
  %v4360 = vmul.f32 %v4244, %v4353
  %v4361 = vmul.f32 %v4245, %v4353
  %v4362 = vmul.f32 %v4246, %v4353
  %v4363 = vmul.f32 %v4247, %v4353
  %v4364 = vmul.f32 %v4248, %v4353
  %v4365 = vmul.f32 %v4249, %v4353
  %v4366 = vmul.f32 %v4250, %v4353
  %v4367 = vmul.f32 %v4251, %v4353
  %v4368 = vmul.f32 %v4252, %v4353
  %v4369 = vmul.f32 %v4253, %v4353
  %v4370 = vmul.f32 %v4254, %v4353
  %v4371 = vmul.f32 %v4255, %v4353
  %v4372 = vmul.f32 %v4256, %v4353
  %v4373 = vmul.f32 %v4257, %v4353
  %v4374 = vmul.f32 %v4258, %v4353
  %v4375 = vmul.f32 %v4259, %v4353
  %v4376 = vmul.f32 %v4260, %v4353
  %v4377 = vmul.f32 %v4261, %v4353
  %v4378 = vmul.f32 %v4262, %v4353
  %v4379 = vmul.f32 %v4263, %v4353
  %v4380 = vmul.f32 %v4264, %v4353
  %v4381 = vmul.f32 %v4265, %v4353
  %v4382 = vmul.f32 %v4266, %v4353
  %v4383 = vmul.f32 %v4267, %v4353
  %v4384 = vmul.f32 %v4268, %v4353
  %v4385 = vmul.f32 %v4269, %v4353
  %v4386 = vadd.f32 %v4318, %v4354
  %v4387 = vadd.f32 %v4319, %v4355
  %v4388 = vadd.f32 %v4320, %v4356
  %v4389 = vadd.f32 %v4321, %v4357
  %v4390 = vadd.f32 %v4322, %v4358
  %v4391 = vadd.f32 %v4323, %v4359
  %v4392 = vadd.f32 %v4324, %v4360
  %v4393 = vadd.f32 %v4325, %v4361
  %v4394 = vadd.f32 %v4326, %v4362
  %v4395 = vadd.f32 %v4327, %v4363
  %v4396 = vadd.f32 %v4328, %v4364
  %v4397 = vadd.f32 %v4329, %v4365
  %v4398 = vadd.f32 %v4330, %v4366
  %v4399 = vadd.f32 %v4331, %v4367
  %v4400 = vadd.f32 %v4332, %v4368
  %v4401 = vadd.f32 %v4333, %v4369
  %v4402 = vadd.f32 %v4334, %v4370
  %v4403 = vadd.f32 %v4335, %v4371
  %v4404 = vadd.f32 %v4336, %v4372
  %v4405 = vadd.f32 %v4337, %v4373
  %v4406 = vadd.f32 %v4338, %v4374
  %v4407 = vadd.f32 %v4339, %v4375
  %v4408 = vadd.f32 %v4340, %v4376
  %v4409 = vadd.f32 %v4341, %v4377
  %v4410 = vadd.f32 %v4342, %v4378
  %v4411 = vadd.f32 %v4343, %v4379
  %v4412 = vadd.f32 %v4344, %v4380
  %v4413 = vadd.f32 %v4345, %v4381
  %v4414 = vadd.f32 %v4346, %v4382
  %v4415 = vadd.f32 %v4347, %v4383
  %v4416 = vadd.f32 %v4348, %v4384
  %v4417 = vadd.f32 %v4349, %v4385
  %v4418 = vlaneseq
  %v4419 = vshrl.u32 %v4418, 7
  %v4420 = vsub.s32 3, %v4419
  %v4421 = vrot.slane %v21, %v4420
  %v4422 = vmul.f32 %v4196, %v4421
  %v4423 = vmul.f32 %v4197, %v4421
  %v4424 = vmul.f32 %v4198, %v4421
  %v4425 = vmul.f32 %v4199, %v4421
  %v4426 = vmul.f32 %v4200, %v4421
  %v4427 = vmul.f32 %v4201, %v4421
  %v4428 = vmul.f32 %v4202, %v4421
  %v4429 = vmul.f32 %v4203, %v4421
  %v4430 = vmul.f32 %v4204, %v4421
  %v4431 = vmul.f32 %v4205, %v4421
  %v4432 = vmul.f32 %v4206, %v4421
  %v4433 = vmul.f32 %v4207, %v4421
  %v4434 = vmul.f32 %v4208, %v4421
  %v4435 = vmul.f32 %v4209, %v4421
  %v4436 = vmul.f32 %v4210, %v4421
  %v4437 = vmul.f32 %v4211, %v4421
  %v4438 = vmul.f32 %v4212, %v4421
  %v4439 = vmul.f32 %v4213, %v4421
  %v4440 = vmul.f32 %v4214, %v4421
  %v4441 = vmul.f32 %v4215, %v4421
  %v4442 = vmul.f32 %v4216, %v4421
  %v4443 = vmul.f32 %v4217, %v4421
  %v4444 = vmul.f32 %v4218, %v4421
  %v4445 = vmul.f32 %v4219, %v4421
  %v4446 = vmul.f32 %v4220, %v4421
  %v4447 = vmul.f32 %v4221, %v4421
  %v4448 = vmul.f32 %v4222, %v4421
  %v4449 = vmul.f32 %v4223, %v4421
  %v4450 = vmul.f32 %v4224, %v4421
  %v4451 = vmul.f32 %v4225, %v4421
  %v4452 = vmul.f32 %v4226, %v4421
  %v4453 = vmul.f32 %v4227, %v4421
  %v4454 = vadd.f32 %v4386, %v4422
  %v4455 = vadd.f32 %v4387, %v4423
  %v4456 = vadd.f32 %v4388, %v4424
  %v4457 = vadd.f32 %v4389, %v4425
  %v4458 = vadd.f32 %v4390, %v4426
  %v4459 = vadd.f32 %v4391, %v4427
  %v4460 = vadd.f32 %v4392, %v4428
  %v4461 = vadd.f32 %v4393, %v4429
  %v4462 = vadd.f32 %v4394, %v4430
  %v4463 = vadd.f32 %v4395, %v4431
  %v4464 = vadd.f32 %v4396, %v4432
  %v4465 = vadd.f32 %v4397, %v4433
  %v4466 = vadd.f32 %v4398, %v4434
  %v4467 = vadd.f32 %v4399, %v4435
  %v4468 = vadd.f32 %v4400, %v4436
  %v4469 = vadd.f32 %v4401, %v4437
  %v4470 = vadd.f32 %v4402, %v4438
  %v4471 = vadd.f32 %v4403, %v4439
  %v4472 = vadd.f32 %v4404, %v4440
  %v4473 = vadd.f32 %v4405, %v4441
  %v4474 = vadd.f32 %v4406, %v4442
  %v4475 = vadd.f32 %v4407, %v4443
  %v4476 = vadd.f32 %v4408, %v4444
  %v4477 = vadd.f32 %v4409, %v4445
  %v4478 = vadd.f32 %v4410, %v4446
  %v4479 = vadd.f32 %v4411, %v4447
  %v4480 = vadd.f32 %v4412, %v4448
  %v4481 = vadd.f32 %v4413, %v4449
  %v4482 = vadd.f32 %v4414, %v4450
  %v4483 = vadd.f32 %v4415, %v4451
  %v4484 = vadd.f32 %v4416, %v4452
  %v4485 = vadd.f32 %v4417, %v4453
  %v4486 = vlaneseq
  %v4487 = vshrl.u32 %v4486, 7
  %v4488 = vsub.s32 3, %v4487
  %v4489 = vrot.slane %v28, %v4488
  %v4490 = vmul.f32 %v4240, %v4489
  %v4491 = vmul.f32 %v4241, %v4489
  %v4492 = vmul.f32 %v4242, %v4489
  %v4493 = vmul.f32 %v4243, %v4489
  %v4494 = vmul.f32 %v4244, %v4489
  %v4495 = vmul.f32 %v4245, %v4489
  %v4496 = vmul.f32 %v4246, %v4489
  %v4497 = vmul.f32 %v4247, %v4489
  %v4498 = vmul.f32 %v4248, %v4489
  %v4499 = vmul.f32 %v4249, %v4489
  %v4500 = vmul.f32 %v4250, %v4489
  %v4501 = vmul.f32 %v4251, %v4489
  %v4502 = vmul.f32 %v4252, %v4489
  %v4503 = vmul.f32 %v4253, %v4489
  %v4504 = vmul.f32 %v4254, %v4489
  %v4505 = vmul.f32 %v4255, %v4489
  %v4506 = vmul.f32 %v4256, %v4489
  %v4507 = vmul.f32 %v4257, %v4489
  %v4508 = vmul.f32 %v4258, %v4489
  %v4509 = vmul.f32 %v4259, %v4489
  %v4510 = vmul.f32 %v4260, %v4489
  %v4511 = vmul.f32 %v4261, %v4489
  %v4512 = vmul.f32 %v4262, %v4489
  %v4513 = vmul.f32 %v4263, %v4489
  %v4514 = vmul.f32 %v4264, %v4489
  %v4515 = vmul.f32 %v4265, %v4489
  %v4516 = vmul.f32 %v4266, %v4489
  %v4517 = vmul.f32 %v4267, %v4489
  %v4518 = vmul.f32 %v4268, %v4489
  %v4519 = vmul.f32 %v4269, %v4489
  %v4520 = vmul.f32 %v4270, %v4489
  %v4521 = vmul.f32 %v4271, %v4489
  %v4522 = vadd.f32 %v4454, %v4490
  %v4523 = vadd.f32 %v4455, %v4491
  %v4524 = vadd.f32 %v4456, %v4492
  %v4525 = vadd.f32 %v4457, %v4493
  %v4526 = vadd.f32 %v4458, %v4494
  %v4527 = vadd.f32 %v4459, %v4495
  %v4528 = vadd.f32 %v4460, %v4496
  %v4529 = vadd.f32 %v4461, %v4497
  %v4530 = vadd.f32 %v4462, %v4498
  %v4531 = vadd.f32 %v4463, %v4499
  %v4532 = vadd.f32 %v4464, %v4500
  %v4533 = vadd.f32 %v4465, %v4501
  %v4534 = vadd.f32 %v4466, %v4502
  %v4535 = vadd.f32 %v4467, %v4503
  %v4536 = vadd.f32 %v4468, %v4504
  %v4537 = vadd.f32 %v4469, %v4505
  %v4538 = vadd.f32 %v4470, %v4506
  %v4539 = vadd.f32 %v4471, %v4507
  %v4540 = vadd.f32 %v4472, %v4508
  %v4541 = vadd.f32 %v4473, %v4509
  %v4542 = vadd.f32 %v4474, %v4510
  %v4543 = vadd.f32 %v4475, %v4511
  %v4544 = vadd.f32 %v4476, %v4512
  %v4545 = vadd.f32 %v4477, %v4513
  %v4546 = vadd.f32 %v4478, %v4514
  %v4547 = vadd.f32 %v4479, %v4515
  %v4548 = vadd.f32 %v4480, %v4516
  %v4549 = vadd.f32 %v4481, %v4517
  %v4550 = vadd.f32 %v4482, %v4518
  %v4551 = vadd.f32 %v4483, %v4519
  %v4552 = vadd.f32 %v4484, %v4520
  %v4553 = vadd.f32 %v4485, %v4521
  %v4554 = vlaneseq
  %v4555 = vshrl.u32 %v4554, 7
  %v4556 = vsub.s32 2, %v4555
  %v4557 = vrot.slane %v22, %v4556
  %v4558 = vmul.f32 %v4198, %v4557
  %v4559 = vmul.f32 %v4199, %v4557
  %v4560 = vmul.f32 %v4200, %v4557
  %v4561 = vmul.f32 %v4201, %v4557
  %v4562 = vmul.f32 %v4202, %v4557
  %v4563 = vmul.f32 %v4203, %v4557
  %v4564 = vmul.f32 %v4204, %v4557
  %v4565 = vmul.f32 %v4205, %v4557
  %v4566 = vmul.f32 %v4206, %v4557
  %v4567 = vmul.f32 %v4207, %v4557
  %v4568 = vmul.f32 %v4208, %v4557
  %v4569 = vmul.f32 %v4209, %v4557
  %v4570 = vmul.f32 %v4210, %v4557
  %v4571 = vmul.f32 %v4211, %v4557
  %v4572 = vmul.f32 %v4212, %v4557
  %v4573 = vmul.f32 %v4213, %v4557
  %v4574 = vmul.f32 %v4214, %v4557
  %v4575 = vmul.f32 %v4215, %v4557
  %v4576 = vmul.f32 %v4216, %v4557
  %v4577 = vmul.f32 %v4217, %v4557
  %v4578 = vmul.f32 %v4218, %v4557
  %v4579 = vmul.f32 %v4219, %v4557
  %v4580 = vmul.f32 %v4220, %v4557
  %v4581 = vmul.f32 %v4221, %v4557
  %v4582 = vmul.f32 %v4222, %v4557
  %v4583 = vmul.f32 %v4223, %v4557
  %v4584 = vmul.f32 %v4224, %v4557
  %v4585 = vmul.f32 %v4225, %v4557
  %v4586 = vmul.f32 %v4226, %v4557
  %v4587 = vmul.f32 %v4227, %v4557
  %v4588 = vmul.f32 %v4228, %v4557
  %v4589 = vmul.f32 %v4229, %v4557
  %v4590 = vadd.f32 %v4522, %v4558
  %v4591 = vadd.f32 %v4523, %v4559
  %v4592 = vadd.f32 %v4524, %v4560
  %v4593 = vadd.f32 %v4525, %v4561
  %v4594 = vadd.f32 %v4526, %v4562
  %v4595 = vadd.f32 %v4527, %v4563
  %v4596 = vadd.f32 %v4528, %v4564
  %v4597 = vadd.f32 %v4529, %v4565
  %v4598 = vadd.f32 %v4530, %v4566
  %v4599 = vadd.f32 %v4531, %v4567
  %v4600 = vadd.f32 %v4532, %v4568
  %v4601 = vadd.f32 %v4533, %v4569
  %v4602 = vadd.f32 %v4534, %v4570
  %v4603 = vadd.f32 %v4535, %v4571
  %v4604 = vadd.f32 %v4536, %v4572
  %v4605 = vadd.f32 %v4537, %v4573
  %v4606 = vadd.f32 %v4538, %v4574
  %v4607 = vadd.f32 %v4539, %v4575
  %v4608 = vadd.f32 %v4540, %v4576
  %v4609 = vadd.f32 %v4541, %v4577
  %v4610 = vadd.f32 %v4542, %v4578
  %v4611 = vadd.f32 %v4543, %v4579
  %v4612 = vadd.f32 %v4544, %v4580
  %v4613 = vadd.f32 %v4545, %v4581
  %v4614 = vadd.f32 %v4546, %v4582
  %v4615 = vadd.f32 %v4547, %v4583
  %v4616 = vadd.f32 %v4548, %v4584
  %v4617 = vadd.f32 %v4549, %v4585
  %v4618 = vadd.f32 %v4550, %v4586
  %v4619 = vadd.f32 %v4551, %v4587
  %v4620 = vadd.f32 %v4552, %v4588
  %v4621 = vadd.f32 %v4553, %v4589
  %v4622 = vlaneseq
  %v4623 = vshrl.u32 %v4622, 7
  %v4624 = vsub.s32 2, %v4623
  %v4625 = vrot.slane %v29, %v4624
  %v4626 = vmul.f32 %v4242, %v4625
  %v4627 = vmul.f32 %v4243, %v4625
  %v4628 = vmul.f32 %v4244, %v4625
  %v4629 = vmul.f32 %v4245, %v4625
  %v4630 = vmul.f32 %v4246, %v4625
  %v4631 = vmul.f32 %v4247, %v4625
  %v4632 = vmul.f32 %v4248, %v4625
  %v4633 = vmul.f32 %v4249, %v4625
  %v4634 = vmul.f32 %v4250, %v4625
  %v4635 = vmul.f32 %v4251, %v4625
  %v4636 = vmul.f32 %v4252, %v4625
  %v4637 = vmul.f32 %v4253, %v4625
  %v4638 = vmul.f32 %v4254, %v4625
  %v4639 = vmul.f32 %v4255, %v4625
  %v4640 = vmul.f32 %v4256, %v4625
  %v4641 = vmul.f32 %v4257, %v4625
  %v4642 = vmul.f32 %v4258, %v4625
  %v4643 = vmul.f32 %v4259, %v4625
  %v4644 = vmul.f32 %v4260, %v4625
  %v4645 = vmul.f32 %v4261, %v4625
  %v4646 = vmul.f32 %v4262, %v4625
  %v4647 = vmul.f32 %v4263, %v4625
  %v4648 = vmul.f32 %v4264, %v4625
  %v4649 = vmul.f32 %v4265, %v4625
  %v4650 = vmul.f32 %v4266, %v4625
  %v4651 = vmul.f32 %v4267, %v4625
  %v4652 = vmul.f32 %v4268, %v4625
  %v4653 = vmul.f32 %v4269, %v4625
  %v4654 = vmul.f32 %v4270, %v4625
  %v4655 = vmul.f32 %v4271, %v4625
  %v4656 = vmul.f32 %v4272, %v4625
  %v4657 = vmul.f32 %v4273, %v4625
  %v4658 = vadd.f32 %v4590, %v4626
  %v4659 = vadd.f32 %v4591, %v4627
  %v4660 = vadd.f32 %v4592, %v4628
  %v4661 = vadd.f32 %v4593, %v4629
  %v4662 = vadd.f32 %v4594, %v4630
  %v4663 = vadd.f32 %v4595, %v4631
  %v4664 = vadd.f32 %v4596, %v4632
  %v4665 = vadd.f32 %v4597, %v4633
  %v4666 = vadd.f32 %v4598, %v4634
  %v4667 = vadd.f32 %v4599, %v4635
  %v4668 = vadd.f32 %v4600, %v4636
  %v4669 = vadd.f32 %v4601, %v4637
  %v4670 = vadd.f32 %v4602, %v4638
  %v4671 = vadd.f32 %v4603, %v4639
  %v4672 = vadd.f32 %v4604, %v4640
  %v4673 = vadd.f32 %v4605, %v4641
  %v4674 = vadd.f32 %v4606, %v4642
  %v4675 = vadd.f32 %v4607, %v4643
  %v4676 = vadd.f32 %v4608, %v4644
  %v4677 = vadd.f32 %v4609, %v4645
  %v4678 = vadd.f32 %v4610, %v4646
  %v4679 = vadd.f32 %v4611, %v4647
  %v4680 = vadd.f32 %v4612, %v4648
  %v4681 = vadd.f32 %v4613, %v4649
  %v4682 = vadd.f32 %v4614, %v4650
  %v4683 = vadd.f32 %v4615, %v4651
  %v4684 = vadd.f32 %v4616, %v4652
  %v4685 = vadd.f32 %v4617, %v4653
  %v4686 = vadd.f32 %v4618, %v4654
  %v4687 = vadd.f32 %v4619, %v4655
  %v4688 = vadd.f32 %v4620, %v4656
  %v4689 = vadd.f32 %v4621, %v4657
  %v4690 = vlaneseq
  %v4691 = vshrl.u32 %v4690, 7
  %v4692 = vsub.s32 1, %v4691
  %v4693 = vrot.slane %v23, %v4692
  %v4694 = vmul.f32 %v4200, %v4693
  %v4695 = vmul.f32 %v4201, %v4693
  %v4696 = vmul.f32 %v4202, %v4693
  %v4697 = vmul.f32 %v4203, %v4693
  %v4698 = vmul.f32 %v4204, %v4693
  %v4699 = vmul.f32 %v4205, %v4693
  %v4700 = vmul.f32 %v4206, %v4693
  %v4701 = vmul.f32 %v4207, %v4693
  %v4702 = vmul.f32 %v4208, %v4693
  %v4703 = vmul.f32 %v4209, %v4693
  %v4704 = vmul.f32 %v4210, %v4693
  %v4705 = vmul.f32 %v4211, %v4693
  %v4706 = vmul.f32 %v4212, %v4693
  %v4707 = vmul.f32 %v4213, %v4693
  %v4708 = vmul.f32 %v4214, %v4693
  %v4709 = vmul.f32 %v4215, %v4693
  %v4710 = vmul.f32 %v4216, %v4693
  %v4711 = vmul.f32 %v4217, %v4693
  %v4712 = vmul.f32 %v4218, %v4693
  %v4713 = vmul.f32 %v4219, %v4693
  %v4714 = vmul.f32 %v4220, %v4693
  %v4715 = vmul.f32 %v4221, %v4693
  %v4716 = vmul.f32 %v4222, %v4693
  %v4717 = vmul.f32 %v4223, %v4693
  %v4718 = vmul.f32 %v4224, %v4693
  %v4719 = vmul.f32 %v4225, %v4693
  %v4720 = vmul.f32 %v4226, %v4693
  %v4721 = vmul.f32 %v4227, %v4693
  %v4722 = vmul.f32 %v4228, %v4693
  %v4723 = vmul.f32 %v4229, %v4693
  %v4724 = vmul.f32 %v4230, %v4693
  %v4725 = vmul.f32 %v4231, %v4693
  %v4726 = vadd.f32 %v4658, %v4694
  %v4727 = vadd.f32 %v4659, %v4695
  %v4728 = vadd.f32 %v4660, %v4696
  %v4729 = vadd.f32 %v4661, %v4697
  %v4730 = vadd.f32 %v4662, %v4698
  %v4731 = vadd.f32 %v4663, %v4699
  %v4732 = vadd.f32 %v4664, %v4700
  %v4733 = vadd.f32 %v4665, %v4701
  %v4734 = vadd.f32 %v4666, %v4702
  %v4735 = vadd.f32 %v4667, %v4703
  %v4736 = vadd.f32 %v4668, %v4704
  %v4737 = vadd.f32 %v4669, %v4705
  %v4738 = vadd.f32 %v4670, %v4706
  %v4739 = vadd.f32 %v4671, %v4707
  %v4740 = vadd.f32 %v4672, %v4708
  %v4741 = vadd.f32 %v4673, %v4709
  %v4742 = vadd.f32 %v4674, %v4710
  %v4743 = vadd.f32 %v4675, %v4711
  %v4744 = vadd.f32 %v4676, %v4712
  %v4745 = vadd.f32 %v4677, %v4713
  %v4746 = vadd.f32 %v4678, %v4714
  %v4747 = vadd.f32 %v4679, %v4715
  %v4748 = vadd.f32 %v4680, %v4716
  %v4749 = vadd.f32 %v4681, %v4717
  %v4750 = vadd.f32 %v4682, %v4718
  %v4751 = vadd.f32 %v4683, %v4719
  %v4752 = vadd.f32 %v4684, %v4720
  %v4753 = vadd.f32 %v4685, %v4721
  %v4754 = vadd.f32 %v4686, %v4722
  %v4755 = vadd.f32 %v4687, %v4723
  %v4756 = vadd.f32 %v4688, %v4724
  %v4757 = vadd.f32 %v4689, %v4725
  %v4758 = vlaneseq
  %v4759 = vshrl.u32 %v4758, 7
  %v4760 = vsub.s32 1, %v4759
  %v4761 = vrot.slane %v30, %v4760
  %v4762 = vmul.f32 %v4244, %v4761
  %v4763 = vmul.f32 %v4245, %v4761
  %v4764 = vmul.f32 %v4246, %v4761
  %v4765 = vmul.f32 %v4247, %v4761
  %v4766 = vmul.f32 %v4248, %v4761
  %v4767 = vmul.f32 %v4249, %v4761
  %v4768 = vmul.f32 %v4250, %v4761
  %v4769 = vmul.f32 %v4251, %v4761
  %v4770 = vmul.f32 %v4252, %v4761
  %v4771 = vmul.f32 %v4253, %v4761
  %v4772 = vmul.f32 %v4254, %v4761
  %v4773 = vmul.f32 %v4255, %v4761
  %v4774 = vmul.f32 %v4256, %v4761
  %v4775 = vmul.f32 %v4257, %v4761
  %v4776 = vmul.f32 %v4258, %v4761
  %v4777 = vmul.f32 %v4259, %v4761
  %v4778 = vmul.f32 %v4260, %v4761
  %v4779 = vmul.f32 %v4261, %v4761
  %v4780 = vmul.f32 %v4262, %v4761
  %v4781 = vmul.f32 %v4263, %v4761
  %v4782 = vmul.f32 %v4264, %v4761
  %v4783 = vmul.f32 %v4265, %v4761
  %v4784 = vmul.f32 %v4266, %v4761
  %v4785 = vmul.f32 %v4267, %v4761
  %v4786 = vmul.f32 %v4268, %v4761
  %v4787 = vmul.f32 %v4269, %v4761
  %v4788 = vmul.f32 %v4270, %v4761
  %v4789 = vmul.f32 %v4271, %v4761
  %v4790 = vmul.f32 %v4272, %v4761
  %v4791 = vmul.f32 %v4273, %v4761
  %v4792 = vmul.f32 %v4274, %v4761
  %v4793 = vmul.f32 %v4275, %v4761
  %v4794 = vadd.f32 %v4726, %v4762
  %v4795 = vadd.f32 %v4727, %v4763
  %v4796 = vadd.f32 %v4728, %v4764
  %v4797 = vadd.f32 %v4729, %v4765
  %v4798 = vadd.f32 %v4730, %v4766
  %v4799 = vadd.f32 %v4731, %v4767
  %v4800 = vadd.f32 %v4732, %v4768
  %v4801 = vadd.f32 %v4733, %v4769
  %v4802 = vadd.f32 %v4734, %v4770
  %v4803 = vadd.f32 %v4735, %v4771
  %v4804 = vadd.f32 %v4736, %v4772
  %v4805 = vadd.f32 %v4737, %v4773
  %v4806 = vadd.f32 %v4738, %v4774
  %v4807 = vadd.f32 %v4739, %v4775
  %v4808 = vadd.f32 %v4740, %v4776
  %v4809 = vadd.f32 %v4741, %v4777
  %v4810 = vadd.f32 %v4742, %v4778
  %v4811 = vadd.f32 %v4743, %v4779
  %v4812 = vadd.f32 %v4744, %v4780
  %v4813 = vadd.f32 %v4745, %v4781
  %v4814 = vadd.f32 %v4746, %v4782
  %v4815 = vadd.f32 %v4747, %v4783
  %v4816 = vadd.f32 %v4748, %v4784
  %v4817 = vadd.f32 %v4749, %v4785
  %v4818 = vadd.f32 %v4750, %v4786
  %v4819 = vadd.f32 %v4751, %v4787
  %v4820 = vadd.f32 %v4752, %v4788
  %v4821 = vadd.f32 %v4753, %v4789
  %v4822 = vadd.f32 %v4754, %v4790
  %v4823 = vadd.f32 %v4755, %v4791
  %v4824 = vadd.f32 %v4756, %v4792
  %v4825 = vadd.f32 %v4757, %v4793
  %v4826 = vlaneseq
  %v4827 = vshrl.u32 %v4826, 7
  %v4828 = vsub.s32 0, %v4827
  %v4829 = vrot.slane %v24, %v4828
  %v4830 = vmul.f32 %v4202, %v4829
  %v4831 = vmul.f32 %v4203, %v4829
  %v4832 = vmul.f32 %v4204, %v4829
  %v4833 = vmul.f32 %v4205, %v4829
  %v4834 = vmul.f32 %v4206, %v4829
  %v4835 = vmul.f32 %v4207, %v4829
  %v4836 = vmul.f32 %v4208, %v4829
  %v4837 = vmul.f32 %v4209, %v4829
  %v4838 = vmul.f32 %v4210, %v4829
  %v4839 = vmul.f32 %v4211, %v4829
  %v4840 = vmul.f32 %v4212, %v4829
  %v4841 = vmul.f32 %v4213, %v4829
  %v4842 = vmul.f32 %v4214, %v4829
  %v4843 = vmul.f32 %v4215, %v4829
  %v4844 = vmul.f32 %v4216, %v4829
  %v4845 = vmul.f32 %v4217, %v4829
  %v4846 = vmul.f32 %v4218, %v4829
  %v4847 = vmul.f32 %v4219, %v4829
  %v4848 = vmul.f32 %v4220, %v4829
  %v4849 = vmul.f32 %v4221, %v4829
  %v4850 = vmul.f32 %v4222, %v4829
  %v4851 = vmul.f32 %v4223, %v4829
  %v4852 = vmul.f32 %v4224, %v4829
  %v4853 = vmul.f32 %v4225, %v4829
  %v4854 = vmul.f32 %v4226, %v4829
  %v4855 = vmul.f32 %v4227, %v4829
  %v4856 = vmul.f32 %v4228, %v4829
  %v4857 = vmul.f32 %v4229, %v4829
  %v4858 = vmul.f32 %v4230, %v4829
  %v4859 = vmul.f32 %v4231, %v4829
  %v4860 = vmul.f32 %v4232, %v4829
  %v4861 = vmul.f32 %v4233, %v4829
  %v4862 = vadd.f32 %v4794, %v4830
  %v4863 = vadd.f32 %v4795, %v4831
  %v4864 = vadd.f32 %v4796, %v4832
  %v4865 = vadd.f32 %v4797, %v4833
  %v4866 = vadd.f32 %v4798, %v4834
  %v4867 = vadd.f32 %v4799, %v4835
  %v4868 = vadd.f32 %v4800, %v4836
  %v4869 = vadd.f32 %v4801, %v4837
  %v4870 = vadd.f32 %v4802, %v4838
  %v4871 = vadd.f32 %v4803, %v4839
  %v4872 = vadd.f32 %v4804, %v4840
  %v4873 = vadd.f32 %v4805, %v4841
  %v4874 = vadd.f32 %v4806, %v4842
  %v4875 = vadd.f32 %v4807, %v4843
  %v4876 = vadd.f32 %v4808, %v4844
  %v4877 = vadd.f32 %v4809, %v4845
  %v4878 = vadd.f32 %v4810, %v4846
  %v4879 = vadd.f32 %v4811, %v4847
  %v4880 = vadd.f32 %v4812, %v4848
  %v4881 = vadd.f32 %v4813, %v4849
  %v4882 = vadd.f32 %v4814, %v4850
  %v4883 = vadd.f32 %v4815, %v4851
  %v4884 = vadd.f32 %v4816, %v4852
  %v4885 = vadd.f32 %v4817, %v4853
  %v4886 = vadd.f32 %v4818, %v4854
  %v4887 = vadd.f32 %v4819, %v4855
  %v4888 = vadd.f32 %v4820, %v4856
  %v4889 = vadd.f32 %v4821, %v4857
  %v4890 = vadd.f32 %v4822, %v4858
  %v4891 = vadd.f32 %v4823, %v4859
  %v4892 = vadd.f32 %v4824, %v4860
  %v4893 = vadd.f32 %v4825, %v4861
  %v4894 = vlaneseq
  %v4895 = vshrl.u32 %v4894, 7
  %v4896 = vsub.s32 0, %v4895
  %v4897 = vrot.slane %v31, %v4896
  %v4898 = vmul.f32 %v4246, %v4897
  %v4899 = vmul.f32 %v4247, %v4897
  %v4900 = vmul.f32 %v4248, %v4897
  %v4901 = vmul.f32 %v4249, %v4897
  %v4902 = vmul.f32 %v4250, %v4897
  %v4903 = vmul.f32 %v4251, %v4897
  %v4904 = vmul.f32 %v4252, %v4897
  %v4905 = vmul.f32 %v4253, %v4897
  %v4906 = vmul.f32 %v4254, %v4897
  %v4907 = vmul.f32 %v4255, %v4897
  %v4908 = vmul.f32 %v4256, %v4897
  %v4909 = vmul.f32 %v4257, %v4897
  %v4910 = vmul.f32 %v4258, %v4897
  %v4911 = vmul.f32 %v4259, %v4897
  %v4912 = vmul.f32 %v4260, %v4897
  %v4913 = vmul.f32 %v4261, %v4897
  %v4914 = vmul.f32 %v4262, %v4897
  %v4915 = vmul.f32 %v4263, %v4897
  %v4916 = vmul.f32 %v4264, %v4897
  %v4917 = vmul.f32 %v4265, %v4897
  %v4918 = vmul.f32 %v4266, %v4897
  %v4919 = vmul.f32 %v4267, %v4897
  %v4920 = vmul.f32 %v4268, %v4897
  %v4921 = vmul.f32 %v4269, %v4897
  %v4922 = vmul.f32 %v4270, %v4897
  %v4923 = vmul.f32 %v4271, %v4897
  %v4924 = vmul.f32 %v4272, %v4897
  %v4925 = vmul.f32 %v4273, %v4897
  %v4926 = vmul.f32 %v4274, %v4897
  %v4927 = vmul.f32 %v4275, %v4897
  %v4928 = vmul.f32 %v4276, %v4897
  %v4929 = vmul.f32 %v4277, %v4897
  %v4930 = vadd.f32 %v4862, %v4898
  %v4931 = vadd.f32 %v4863, %v4899
  %v4932 = vadd.f32 %v4864, %v4900
  %v4933 = vadd.f32 %v4865, %v4901
  %v4934 = vadd.f32 %v4866, %v4902
  %v4935 = vadd.f32 %v4867, %v4903
  %v4936 = vadd.f32 %v4868, %v4904
  %v4937 = vadd.f32 %v4869, %v4905
  %v4938 = vadd.f32 %v4870, %v4906
  %v4939 = vadd.f32 %v4871, %v4907
  %v4940 = vadd.f32 %v4872, %v4908
  %v4941 = vadd.f32 %v4873, %v4909
  %v4942 = vadd.f32 %v4874, %v4910
  %v4943 = vadd.f32 %v4875, %v4911
  %v4944 = vadd.f32 %v4876, %v4912
  %v4945 = vadd.f32 %v4877, %v4913
  %v4946 = vadd.f32 %v4878, %v4914
  %v4947 = vadd.f32 %v4879, %v4915
  %v4948 = vadd.f32 %v4880, %v4916
  %v4949 = vadd.f32 %v4881, %v4917
  %v4950 = vadd.f32 %v4882, %v4918
  %v4951 = vadd.f32 %v4883, %v4919
  %v4952 = vadd.f32 %v4884, %v4920
  %v4953 = vadd.f32 %v4885, %v4921
  %v4954 = vadd.f32 %v4886, %v4922
  %v4955 = vadd.f32 %v4887, %v4923
  %v4956 = vadd.f32 %v4888, %v4924
  %v4957 = vadd.f32 %v4889, %v4925
  %v4958 = vadd.f32 %v4890, %v4926
  %v4959 = vadd.f32 %v4891, %v4927
  %v4960 = vadd.f32 %v4892, %v4928
  %v4961 = vadd.f32 %v4893, %v4929
  %v4962 = vlaneseq
  %v4963 = vshrl.u32 %v4962, 7
  %v4964 = vsub.s32 7, %v4963
  %v4965 = vrot.slane %v24, %v4964
  %v4966 = vmul.f32 %v4204, %v4965
  %v4967 = vmul.f32 %v4205, %v4965
  %v4968 = vmul.f32 %v4206, %v4965
  %v4969 = vmul.f32 %v4207, %v4965
  %v4970 = vmul.f32 %v4208, %v4965
  %v4971 = vmul.f32 %v4209, %v4965
  %v4972 = vmul.f32 %v4210, %v4965
  %v4973 = vmul.f32 %v4211, %v4965
  %v4974 = vmul.f32 %v4212, %v4965
  %v4975 = vmul.f32 %v4213, %v4965
  %v4976 = vmul.f32 %v4214, %v4965
  %v4977 = vmul.f32 %v4215, %v4965
  %v4978 = vmul.f32 %v4216, %v4965
  %v4979 = vmul.f32 %v4217, %v4965
  %v4980 = vmul.f32 %v4218, %v4965
  %v4981 = vmul.f32 %v4219, %v4965
  %v4982 = vmul.f32 %v4220, %v4965
  %v4983 = vmul.f32 %v4221, %v4965
  %v4984 = vmul.f32 %v4222, %v4965
  %v4985 = vmul.f32 %v4223, %v4965
  %v4986 = vmul.f32 %v4224, %v4965
  %v4987 = vmul.f32 %v4225, %v4965
  %v4988 = vmul.f32 %v4226, %v4965
  %v4989 = vmul.f32 %v4227, %v4965
  %v4990 = vmul.f32 %v4228, %v4965
  %v4991 = vmul.f32 %v4229, %v4965
  %v4992 = vmul.f32 %v4230, %v4965
  %v4993 = vmul.f32 %v4231, %v4965
  %v4994 = vmul.f32 %v4232, %v4965
  %v4995 = vmul.f32 %v4233, %v4965
  %v4996 = vmul.f32 %v4234, %v4965
  %v4997 = vmul.f32 %v4235, %v4965
  %v4998 = vadd.f32 %v4930, %v4966
  %v4999 = vadd.f32 %v4931, %v4967
  %v5000 = vadd.f32 %v4932, %v4968
  %v5001 = vadd.f32 %v4933, %v4969
  %v5002 = vadd.f32 %v4934, %v4970
  %v5003 = vadd.f32 %v4935, %v4971
  %v5004 = vadd.f32 %v4936, %v4972
  %v5005 = vadd.f32 %v4937, %v4973
  %v5006 = vadd.f32 %v4938, %v4974
  %v5007 = vadd.f32 %v4939, %v4975
  %v5008 = vadd.f32 %v4940, %v4976
  %v5009 = vadd.f32 %v4941, %v4977
  %v5010 = vadd.f32 %v4942, %v4978
  %v5011 = vadd.f32 %v4943, %v4979
  %v5012 = vadd.f32 %v4944, %v4980
  %v5013 = vadd.f32 %v4945, %v4981
  %v5014 = vadd.f32 %v4946, %v4982
  %v5015 = vadd.f32 %v4947, %v4983
  %v5016 = vadd.f32 %v4948, %v4984
  %v5017 = vadd.f32 %v4949, %v4985
  %v5018 = vadd.f32 %v4950, %v4986
  %v5019 = vadd.f32 %v4951, %v4987
  %v5020 = vadd.f32 %v4952, %v4988
  %v5021 = vadd.f32 %v4953, %v4989
  %v5022 = vadd.f32 %v4954, %v4990
  %v5023 = vadd.f32 %v4955, %v4991
  %v5024 = vadd.f32 %v4956, %v4992
  %v5025 = vadd.f32 %v4957, %v4993
  %v5026 = vadd.f32 %v4958, %v4994
  %v5027 = vadd.f32 %v4959, %v4995
  %v5028 = vadd.f32 %v4960, %v4996
  %v5029 = vadd.f32 %v4961, %v4997
  %v5030 = vlaneseq
  %v5031 = vshrl.u32 %v5030, 7
  %v5032 = vsub.s32 7, %v5031
  %v5033 = vrot.slane %v31, %v5032
  %v5034 = vmul.f32 %v4248, %v5033
  %v5035 = vmul.f32 %v4249, %v5033
  %v5036 = vmul.f32 %v4250, %v5033
  %v5037 = vmul.f32 %v4251, %v5033
  %v5038 = vmul.f32 %v4252, %v5033
  %v5039 = vmul.f32 %v4253, %v5033
  %v5040 = vmul.f32 %v4254, %v5033
  %v5041 = vmul.f32 %v4255, %v5033
  %v5042 = vmul.f32 %v4256, %v5033
  %v5043 = vmul.f32 %v4257, %v5033
  %v5044 = vmul.f32 %v4258, %v5033
  %v5045 = vmul.f32 %v4259, %v5033
  %v5046 = vmul.f32 %v4260, %v5033
  %v5047 = vmul.f32 %v4261, %v5033
  %v5048 = vmul.f32 %v4262, %v5033
  %v5049 = vmul.f32 %v4263, %v5033
  %v5050 = vmul.f32 %v4264, %v5033
  %v5051 = vmul.f32 %v4265, %v5033
  %v5052 = vmul.f32 %v4266, %v5033
  %v5053 = vmul.f32 %v4267, %v5033
  %v5054 = vmul.f32 %v4268, %v5033
  %v5055 = vmul.f32 %v4269, %v5033
  %v5056 = vmul.f32 %v4270, %v5033
  %v5057 = vmul.f32 %v4271, %v5033
  %v5058 = vmul.f32 %v4272, %v5033
  %v5059 = vmul.f32 %v4273, %v5033
  %v5060 = vmul.f32 %v4274, %v5033
  %v5061 = vmul.f32 %v4275, %v5033
  %v5062 = vmul.f32 %v4276, %v5033
  %v5063 = vmul.f32 %v4277, %v5033
  %v5064 = vmul.f32 %v4278, %v5033
  %v5065 = vmul.f32 %v4279, %v5033
  %v5066 = vadd.f32 %v4998, %v5034
  %v5067 = vadd.f32 %v4999, %v5035
  %v5068 = vadd.f32 %v5000, %v5036
  %v5069 = vadd.f32 %v5001, %v5037
  %v5070 = vadd.f32 %v5002, %v5038
  %v5071 = vadd.f32 %v5003, %v5039
  %v5072 = vadd.f32 %v5004, %v5040
  %v5073 = vadd.f32 %v5005, %v5041
  %v5074 = vadd.f32 %v5006, %v5042
  %v5075 = vadd.f32 %v5007, %v5043
  %v5076 = vadd.f32 %v5008, %v5044
  %v5077 = vadd.f32 %v5009, %v5045
  %v5078 = vadd.f32 %v5010, %v5046
  %v5079 = vadd.f32 %v5011, %v5047
  %v5080 = vadd.f32 %v5012, %v5048
  %v5081 = vadd.f32 %v5013, %v5049
  %v5082 = vadd.f32 %v5014, %v5050
  %v5083 = vadd.f32 %v5015, %v5051
  %v5084 = vadd.f32 %v5016, %v5052
  %v5085 = vadd.f32 %v5017, %v5053
  %v5086 = vadd.f32 %v5018, %v5054
  %v5087 = vadd.f32 %v5019, %v5055
  %v5088 = vadd.f32 %v5020, %v5056
  %v5089 = vadd.f32 %v5021, %v5057
  %v5090 = vadd.f32 %v5022, %v5058
  %v5091 = vadd.f32 %v5023, %v5059
  %v5092 = vadd.f32 %v5024, %v5060
  %v5093 = vadd.f32 %v5025, %v5061
  %v5094 = vadd.f32 %v5026, %v5062
  %v5095 = vadd.f32 %v5027, %v5063
  %v5096 = vadd.f32 %v5028, %v5064
  %v5097 = vadd.f32 %v5029, %v5065
  %v5098 = vlaneseq
  %v5099 = vshrl.u32 %v5098, 7
  %v5100 = vsub.s32 6, %v5099
  %v5101 = vrot.slane %v25, %v5100
  %v5102 = vmul.f32 %v4206, %v5101
  %v5103 = vmul.f32 %v4207, %v5101
  %v5104 = vmul.f32 %v4208, %v5101
  %v5105 = vmul.f32 %v4209, %v5101
  %v5106 = vmul.f32 %v4210, %v5101
  %v5107 = vmul.f32 %v4211, %v5101
  %v5108 = vmul.f32 %v4212, %v5101
  %v5109 = vmul.f32 %v4213, %v5101
  %v5110 = vmul.f32 %v4214, %v5101
  %v5111 = vmul.f32 %v4215, %v5101
  %v5112 = vmul.f32 %v4216, %v5101
  %v5113 = vmul.f32 %v4217, %v5101
  %v5114 = vmul.f32 %v4218, %v5101
  %v5115 = vmul.f32 %v4219, %v5101
  %v5116 = vmul.f32 %v4220, %v5101
  %v5117 = vmul.f32 %v4221, %v5101
  %v5118 = vmul.f32 %v4222, %v5101
  %v5119 = vmul.f32 %v4223, %v5101
  %v5120 = vmul.f32 %v4224, %v5101
  %v5121 = vmul.f32 %v4225, %v5101
  %v5122 = vmul.f32 %v4226, %v5101
  %v5123 = vmul.f32 %v4227, %v5101
  %v5124 = vmul.f32 %v4228, %v5101
  %v5125 = vmul.f32 %v4229, %v5101
  %v5126 = vmul.f32 %v4230, %v5101
  %v5127 = vmul.f32 %v4231, %v5101
  %v5128 = vmul.f32 %v4232, %v5101
  %v5129 = vmul.f32 %v4233, %v5101
  %v5130 = vmul.f32 %v4234, %v5101
  %v5131 = vmul.f32 %v4235, %v5101
  %v5132 = vmul.f32 %v4236, %v5101
  %v5133 = vmul.f32 %v4237, %v5101
  %v5134 = vadd.f32 %v5066, %v5102
  %v5135 = vadd.f32 %v5067, %v5103
  %v5136 = vadd.f32 %v5068, %v5104
  %v5137 = vadd.f32 %v5069, %v5105
  %v5138 = vadd.f32 %v5070, %v5106
  %v5139 = vadd.f32 %v5071, %v5107
  %v5140 = vadd.f32 %v5072, %v5108
  %v5141 = vadd.f32 %v5073, %v5109
  %v5142 = vadd.f32 %v5074, %v5110
  %v5143 = vadd.f32 %v5075, %v5111
  %v5144 = vadd.f32 %v5076, %v5112
  %v5145 = vadd.f32 %v5077, %v5113
  %v5146 = vadd.f32 %v5078, %v5114
  %v5147 = vadd.f32 %v5079, %v5115
  %v5148 = vadd.f32 %v5080, %v5116
  %v5149 = vadd.f32 %v5081, %v5117
  %v5150 = vadd.f32 %v5082, %v5118
  %v5151 = vadd.f32 %v5083, %v5119
  %v5152 = vadd.f32 %v5084, %v5120
  %v5153 = vadd.f32 %v5085, %v5121
  %v5154 = vadd.f32 %v5086, %v5122
  %v5155 = vadd.f32 %v5087, %v5123
  %v5156 = vadd.f32 %v5088, %v5124
  %v5157 = vadd.f32 %v5089, %v5125
  %v5158 = vadd.f32 %v5090, %v5126
  %v5159 = vadd.f32 %v5091, %v5127
  %v5160 = vadd.f32 %v5092, %v5128
  %v5161 = vadd.f32 %v5093, %v5129
  %v5162 = vadd.f32 %v5094, %v5130
  %v5163 = vadd.f32 %v5095, %v5131
  %v5164 = vadd.f32 %v5096, %v5132
  %v5165 = vadd.f32 %v5097, %v5133
  %v5166 = vlaneseq
  %v5167 = vshrl.u32 %v5166, 7
  %v5168 = vsub.s32 6, %v5167
  %v5169 = vrot.slane %v32, %v5168
  %v5170 = vmul.f32 %v4250, %v5169
  %v5171 = vmul.f32 %v4251, %v5169
  %v5172 = vmul.f32 %v4252, %v5169
  %v5173 = vmul.f32 %v4253, %v5169
  %v5174 = vmul.f32 %v4254, %v5169
  %v5175 = vmul.f32 %v4255, %v5169
  %v5176 = vmul.f32 %v4256, %v5169
  %v5177 = vmul.f32 %v4257, %v5169
  %v5178 = vmul.f32 %v4258, %v5169
  %v5179 = vmul.f32 %v4259, %v5169
  %v5180 = vmul.f32 %v4260, %v5169
  %v5181 = vmul.f32 %v4261, %v5169
  %v5182 = vmul.f32 %v4262, %v5169
  %v5183 = vmul.f32 %v4263, %v5169
  %v5184 = vmul.f32 %v4264, %v5169
  %v5185 = vmul.f32 %v4265, %v5169
  %v5186 = vmul.f32 %v4266, %v5169
  %v5187 = vmul.f32 %v4267, %v5169
  %v5188 = vmul.f32 %v4268, %v5169
  %v5189 = vmul.f32 %v4269, %v5169
  %v5190 = vmul.f32 %v4270, %v5169
  %v5191 = vmul.f32 %v4271, %v5169
  %v5192 = vmul.f32 %v4272, %v5169
  %v5193 = vmul.f32 %v4273, %v5169
  %v5194 = vmul.f32 %v4274, %v5169
  %v5195 = vmul.f32 %v4275, %v5169
  %v5196 = vmul.f32 %v4276, %v5169
  %v5197 = vmul.f32 %v4277, %v5169
  %v5198 = vmul.f32 %v4278, %v5169
  %v5199 = vmul.f32 %v4279, %v5169
  %v5200 = vmul.f32 %v4280, %v5169
  %v5201 = vmul.f32 %v4281, %v5169
  %v5202 = vadd.f32 %v5134, %v5170
  %v5203 = vadd.f32 %v5135, %v5171
  %v5204 = vadd.f32 %v5136, %v5172
  %v5205 = vadd.f32 %v5137, %v5173
  %v5206 = vadd.f32 %v5138, %v5174
  %v5207 = vadd.f32 %v5139, %v5175
  %v5208 = vadd.f32 %v5140, %v5176
  %v5209 = vadd.f32 %v5141, %v5177
  %v5210 = vadd.f32 %v5142, %v5178
  %v5211 = vadd.f32 %v5143, %v5179
  %v5212 = vadd.f32 %v5144, %v5180
  %v5213 = vadd.f32 %v5145, %v5181
  %v5214 = vadd.f32 %v5146, %v5182
  %v5215 = vadd.f32 %v5147, %v5183
  %v5216 = vadd.f32 %v5148, %v5184
  %v5217 = vadd.f32 %v5149, %v5185
  %v5218 = vadd.f32 %v5150, %v5186
  %v5219 = vadd.f32 %v5151, %v5187
  %v5220 = vadd.f32 %v5152, %v5188
  %v5221 = vadd.f32 %v5153, %v5189
  %v5222 = vadd.f32 %v5154, %v5190
  %v5223 = vadd.f32 %v5155, %v5191
  %v5224 = vadd.f32 %v5156, %v5192
  %v5225 = vadd.f32 %v5157, %v5193
  %v5226 = vadd.f32 %v5158, %v5194
  %v5227 = vadd.f32 %v5159, %v5195
  %v5228 = vadd.f32 %v5160, %v5196
  %v5229 = vadd.f32 %v5161, %v5197
  %v5230 = vadd.f32 %v5162, %v5198
  %v5231 = vadd.f32 %v5163, %v5199
  %v5232 = vadd.f32 %v5164, %v5200
  %v5233 = vadd.f32 %v5165, %v5201
  %v5234 = vld [vmem:[%s0 + $0x5] sm:$0xff]
  %v5235 = vld [vmem:[%s0 + $0xd] sm:$0xff]
  %v5236 = vld [vmem:[%s0 + $0x1d] sm:$0xff]
  %v5237 = vld [vmem:[%s0 + $0x25] sm:$0xff]
  %v5238 = vld [vmem:[%s0 + $0x35] sm:$0xff]
  %v5239 = vld [vmem:[%s0 + $0x3d] sm:$0xff]
  %v5240 = vld [vmem:[%s0 + $0x4d] sm:$0xff]
  %v5241 = vld [vmem:[%s0 + $0x55] sm:$0xff]
  %v5242 = vld [vmem:[%s0 + $0x65] sm:$0xff]
  %v5243 = vld [vmem:[%s0 + $0x6d] sm:$0xff]
  %v5244 = vld [vmem:[%s0 + $0x7d] sm:$0xff]
  %v5245 = vld [vmem:[%s0 + $0x85] sm:$0xff]
  %v5246 = vld [vmem:[%s0 + $0x95] sm:$0xff]
  %v5247 = vld [vmem:[%s0 + $0x9d] sm:$0xff]
  %v5248 = vld [vmem:[%s0 + $0xad] sm:$0xff]
  %v5249 = vld [vmem:[%s0 + $0xb5] sm:$0xff]
  %v5250 = vld [vmem:[%s0 + $0xc5] sm:$0xff]
  %v5251 = vld [vmem:[%s0 + $0xcd] sm:$0xff]
  %v5252 = vld [vmem:[%s0 + $0xdd] sm:$0xff]
  %v5253 = vld [vmem:[%s0 + $0xe5] sm:$0xff]
  %v5254 = vld [vmem:[%s0 + $0xf5] sm:$0xff]
  %v5255 = vld [vmem:[%s0 + $0xfd] sm:$0xff]
  %v5256 = vld [vmem:[%s0 + $0x10d] sm:$0xff]
  %v5257 = vld [vmem:[%s0 + $0x115] sm:$0xff]
  %v5258 = vld [vmem:[%s0 + $0x125] sm:$0xff]
  %v5259 = vld [vmem:[%s0 + $0x12d] sm:$0xff]
  %v5260 = vld [vmem:[%s0 + $0x13d] sm:$0xff]
  %v5261 = vld [vmem:[%s0 + $0x145] sm:$0xff]
  %v5262 = vld [vmem:[%s0 + $0x155] sm:$0xff]
  %v5263 = vld [vmem:[%s0 + $0x15d] sm:$0xff]
  %v5264 = vld [vmem:[%s0 + $0x16d] sm:$0xff]
  %v5265 = vld [vmem:[%s0 + $0x175] sm:$0xff]
  %v5266 = vld [vmem:[%s0 + $0x185] sm:$0xff]
  %v5267 = vld [vmem:[%s0 + $0x18d] sm:$0xff]
  %v5268 = vld [vmem:[%s0 + $0x19d] sm:$0xff]
  %v5269 = vld [vmem:[%s0 + $0x1a5] sm:$0xff]
  %v5270 = vld [vmem:[%s0 + $0x1b5] sm:$0xff]
  %v5271 = vld [vmem:[%s0 + $0x1bd] sm:$0xff]
  %v5272 = vld [vmem:[%s0 + $0x1cd] sm:$0xff]
  %v5273 = vld [vmem:[%s0 + $0x1d5] sm:$0xff]
  %v5274 = vld [vmem:[%s0 + $0x1e5] sm:$0xff]
  %v5275 = vld [vmem:[%s0 + $0x1ed] sm:$0xff]
  %v5276 = vld [vmem:[%s0 + $0x1fd] sm:$0xff]
  %v5277 = vld [vmem:[%s0 + $0x205] sm:$0xff]
  %v5278 = vld [vmem:[%s1 + $0x5] sm:$0xff]
  %v5279 = vld [vmem:[%s1 + $0xd] sm:$0xff]
  %v5280 = vld [vmem:[%s1 + $0x1d] sm:$0xff]
  %v5281 = vld [vmem:[%s1 + $0x25] sm:$0xff]
  %v5282 = vld [vmem:[%s1 + $0x35] sm:$0xff]
  %v5283 = vld [vmem:[%s1 + $0x3d] sm:$0xff]
  %v5284 = vld [vmem:[%s1 + $0x4d] sm:$0xff]
  %v5285 = vld [vmem:[%s1 + $0x55] sm:$0xff]
  %v5286 = vld [vmem:[%s1 + $0x65] sm:$0xff]
  %v5287 = vld [vmem:[%s1 + $0x6d] sm:$0xff]
  %v5288 = vld [vmem:[%s1 + $0x7d] sm:$0xff]
  %v5289 = vld [vmem:[%s1 + $0x85] sm:$0xff]
  %v5290 = vld [vmem:[%s1 + $0x95] sm:$0xff]
  %v5291 = vld [vmem:[%s1 + $0x9d] sm:$0xff]
  %v5292 = vld [vmem:[%s1 + $0xad] sm:$0xff]
  %v5293 = vld [vmem:[%s1 + $0xb5] sm:$0xff]
  %v5294 = vld [vmem:[%s1 + $0xc5] sm:$0xff]
  %v5295 = vld [vmem:[%s1 + $0xcd] sm:$0xff]
  %v5296 = vld [vmem:[%s1 + $0xdd] sm:$0xff]
  %v5297 = vld [vmem:[%s1 + $0xe5] sm:$0xff]
  %v5298 = vld [vmem:[%s1 + $0xf5] sm:$0xff]
  %v5299 = vld [vmem:[%s1 + $0xfd] sm:$0xff]
  %v5300 = vld [vmem:[%s1 + $0x10d] sm:$0xff]
  %v5301 = vld [vmem:[%s1 + $0x115] sm:$0xff]
  %v5302 = vld [vmem:[%s1 + $0x125] sm:$0xff]
  %v5303 = vld [vmem:[%s1 + $0x12d] sm:$0xff]
  %v5304 = vld [vmem:[%s1 + $0x13d] sm:$0xff]
  %v5305 = vld [vmem:[%s1 + $0x145] sm:$0xff]
  %v5306 = vld [vmem:[%s1 + $0x155] sm:$0xff]
  %v5307 = vld [vmem:[%s1 + $0x15d] sm:$0xff]
  %v5308 = vld [vmem:[%s1 + $0x16d] sm:$0xff]
  %v5309 = vld [vmem:[%s1 + $0x175] sm:$0xff]
  %v5310 = vld [vmem:[%s1 + $0x185] sm:$0xff]
  %v5311 = vld [vmem:[%s1 + $0x18d] sm:$0xff]
  %v5312 = vld [vmem:[%s1 + $0x19d] sm:$0xff]
  %v5313 = vld [vmem:[%s1 + $0x1a5] sm:$0xff]
  %v5314 = vld [vmem:[%s1 + $0x1b5] sm:$0xff]
  %v5315 = vld [vmem:[%s1 + $0x1bd] sm:$0xff]
  %v5316 = vld [vmem:[%s1 + $0x1cd] sm:$0xff]
  %v5317 = vld [vmem:[%s1 + $0x1d5] sm:$0xff]
  %v5318 = vld [vmem:[%s1 + $0x1e5] sm:$0xff]
  %v5319 = vld [vmem:[%s1 + $0x1ed] sm:$0xff]
  %v5320 = vld [vmem:[%s1 + $0x1fd] sm:$0xff]
  %v5321 = vld [vmem:[%s1 + $0x205] sm:$0xff]
  %v5322 = vlaneseq
  %v5323 = vshrl.u32 %v5322, 7
  %v5324 = vsub.s32 5, %v5323
  %v5325 = vrot.slane %v20, %v5324
  %v5326 = vmul.f32 %v5234, %v5325
  %v5327 = vmul.f32 %v5235, %v5325
  %v5328 = vmul.f32 %v5236, %v5325
  %v5329 = vmul.f32 %v5237, %v5325
  %v5330 = vmul.f32 %v5238, %v5325
  %v5331 = vmul.f32 %v5239, %v5325
  %v5332 = vmul.f32 %v5240, %v5325
  %v5333 = vmul.f32 %v5241, %v5325
  %v5334 = vmul.f32 %v5242, %v5325
  %v5335 = vmul.f32 %v5243, %v5325
  %v5336 = vmul.f32 %v5244, %v5325
  %v5337 = vmul.f32 %v5245, %v5325
  %v5338 = vmul.f32 %v5246, %v5325
  %v5339 = vmul.f32 %v5247, %v5325
  %v5340 = vmul.f32 %v5248, %v5325
  %v5341 = vmul.f32 %v5249, %v5325
  %v5342 = vmul.f32 %v5250, %v5325
  %v5343 = vmul.f32 %v5251, %v5325
  %v5344 = vmul.f32 %v5252, %v5325
  %v5345 = vmul.f32 %v5253, %v5325
  %v5346 = vmul.f32 %v5254, %v5325
  %v5347 = vmul.f32 %v5255, %v5325
  %v5348 = vmul.f32 %v5256, %v5325
  %v5349 = vmul.f32 %v5257, %v5325
  %v5350 = vmul.f32 %v5258, %v5325
  %v5351 = vmul.f32 %v5259, %v5325
  %v5352 = vmul.f32 %v5260, %v5325
  %v5353 = vmul.f32 %v5261, %v5325
  %v5354 = vmul.f32 %v5262, %v5325
  %v5355 = vmul.f32 %v5263, %v5325
  %v5356 = vmul.f32 %v5264, %v5325
  %v5357 = vmul.f32 %v5265, %v5325
  %v5358 = vadd.f32 %v5202, %v5326
  %v5359 = vadd.f32 %v5203, %v5327
  %v5360 = vadd.f32 %v5204, %v5328
  %v5361 = vadd.f32 %v5205, %v5329
  %v5362 = vadd.f32 %v5206, %v5330
  %v5363 = vadd.f32 %v5207, %v5331
  %v5364 = vadd.f32 %v5208, %v5332
  %v5365 = vadd.f32 %v5209, %v5333
  %v5366 = vadd.f32 %v5210, %v5334
  %v5367 = vadd.f32 %v5211, %v5335
  %v5368 = vadd.f32 %v5212, %v5336
  %v5369 = vadd.f32 %v5213, %v5337
  %v5370 = vadd.f32 %v5214, %v5338
  %v5371 = vadd.f32 %v5215, %v5339
  %v5372 = vadd.f32 %v5216, %v5340
  %v5373 = vadd.f32 %v5217, %v5341
  %v5374 = vadd.f32 %v5218, %v5342
  %v5375 = vadd.f32 %v5219, %v5343
  %v5376 = vadd.f32 %v5220, %v5344
  %v5377 = vadd.f32 %v5221, %v5345
  %v5378 = vadd.f32 %v5222, %v5346
  %v5379 = vadd.f32 %v5223, %v5347
  %v5380 = vadd.f32 %v5224, %v5348
  %v5381 = vadd.f32 %v5225, %v5349
  %v5382 = vadd.f32 %v5226, %v5350
  %v5383 = vadd.f32 %v5227, %v5351
  %v5384 = vadd.f32 %v5228, %v5352
  %v5385 = vadd.f32 %v5229, %v5353
  %v5386 = vadd.f32 %v5230, %v5354
  %v5387 = vadd.f32 %v5231, %v5355
  %v5388 = vadd.f32 %v5232, %v5356
  %v5389 = vadd.f32 %v5233, %v5357
  %v5390 = vlaneseq
  %v5391 = vshrl.u32 %v5390, 7
  %v5392 = vsub.s32 5, %v5391
  %v5393 = vrot.slane %v27, %v5392
  %v5394 = vmul.f32 %v5278, %v5393
  %v5395 = vmul.f32 %v5279, %v5393
  %v5396 = vmul.f32 %v5280, %v5393
  %v5397 = vmul.f32 %v5281, %v5393
  %v5398 = vmul.f32 %v5282, %v5393
  %v5399 = vmul.f32 %v5283, %v5393
  %v5400 = vmul.f32 %v5284, %v5393
  %v5401 = vmul.f32 %v5285, %v5393
  %v5402 = vmul.f32 %v5286, %v5393
  %v5403 = vmul.f32 %v5287, %v5393
  %v5404 = vmul.f32 %v5288, %v5393
  %v5405 = vmul.f32 %v5289, %v5393
  %v5406 = vmul.f32 %v5290, %v5393
  %v5407 = vmul.f32 %v5291, %v5393
  %v5408 = vmul.f32 %v5292, %v5393
  %v5409 = vmul.f32 %v5293, %v5393
  %v5410 = vmul.f32 %v5294, %v5393
  %v5411 = vmul.f32 %v5295, %v5393
  %v5412 = vmul.f32 %v5296, %v5393
  %v5413 = vmul.f32 %v5297, %v5393
  %v5414 = vmul.f32 %v5298, %v5393
  %v5415 = vmul.f32 %v5299, %v5393
  %v5416 = vmul.f32 %v5300, %v5393
  %v5417 = vmul.f32 %v5301, %v5393
  %v5418 = vmul.f32 %v5302, %v5393
  %v5419 = vmul.f32 %v5303, %v5393
  %v5420 = vmul.f32 %v5304, %v5393
  %v5421 = vmul.f32 %v5305, %v5393
  %v5422 = vmul.f32 %v5306, %v5393
  %v5423 = vmul.f32 %v5307, %v5393
  %v5424 = vmul.f32 %v5308, %v5393
  %v5425 = vmul.f32 %v5309, %v5393
  %v5426 = vadd.f32 %v5358, %v5394
  %v5427 = vadd.f32 %v5359, %v5395
  %v5428 = vadd.f32 %v5360, %v5396
  %v5429 = vadd.f32 %v5361, %v5397
  %v5430 = vadd.f32 %v5362, %v5398
  %v5431 = vadd.f32 %v5363, %v5399
  %v5432 = vadd.f32 %v5364, %v5400
  %v5433 = vadd.f32 %v5365, %v5401
  %v5434 = vadd.f32 %v5366, %v5402
  %v5435 = vadd.f32 %v5367, %v5403
  %v5436 = vadd.f32 %v5368, %v5404
  %v5437 = vadd.f32 %v5369, %v5405
  %v5438 = vadd.f32 %v5370, %v5406
  %v5439 = vadd.f32 %v5371, %v5407
  %v5440 = vadd.f32 %v5372, %v5408
  %v5441 = vadd.f32 %v5373, %v5409
  %v5442 = vadd.f32 %v5374, %v5410
  %v5443 = vadd.f32 %v5375, %v5411
  %v5444 = vadd.f32 %v5376, %v5412
  %v5445 = vadd.f32 %v5377, %v5413
  %v5446 = vadd.f32 %v5378, %v5414
  %v5447 = vadd.f32 %v5379, %v5415
  %v5448 = vadd.f32 %v5380, %v5416
  %v5449 = vadd.f32 %v5381, %v5417
  %v5450 = vadd.f32 %v5382, %v5418
  %v5451 = vadd.f32 %v5383, %v5419
  %v5452 = vadd.f32 %v5384, %v5420
  %v5453 = vadd.f32 %v5385, %v5421
  %v5454 = vadd.f32 %v5386, %v5422
  %v5455 = vadd.f32 %v5387, %v5423
  %v5456 = vadd.f32 %v5388, %v5424
  %v5457 = vadd.f32 %v5389, %v5425
  %v5458 = vlaneseq
  %v5459 = vshrl.u32 %v5458, 7
  %v5460 = vsub.s32 4, %v5459
  %v5461 = vrot.slane %v21, %v5460
  %v5462 = vmul.f32 %v5236, %v5461
  %v5463 = vmul.f32 %v5237, %v5461
  %v5464 = vmul.f32 %v5238, %v5461
  %v5465 = vmul.f32 %v5239, %v5461
  %v5466 = vmul.f32 %v5240, %v5461
  %v5467 = vmul.f32 %v5241, %v5461
  %v5468 = vmul.f32 %v5242, %v5461
  %v5469 = vmul.f32 %v5243, %v5461
  %v5470 = vmul.f32 %v5244, %v5461
  %v5471 = vmul.f32 %v5245, %v5461
  %v5472 = vmul.f32 %v5246, %v5461
  %v5473 = vmul.f32 %v5247, %v5461
  %v5474 = vmul.f32 %v5248, %v5461
  %v5475 = vmul.f32 %v5249, %v5461
  %v5476 = vmul.f32 %v5250, %v5461
  %v5477 = vmul.f32 %v5251, %v5461
  %v5478 = vmul.f32 %v5252, %v5461
  %v5479 = vmul.f32 %v5253, %v5461
  %v5480 = vmul.f32 %v5254, %v5461
  %v5481 = vmul.f32 %v5255, %v5461
  %v5482 = vmul.f32 %v5256, %v5461
  %v5483 = vmul.f32 %v5257, %v5461
  %v5484 = vmul.f32 %v5258, %v5461
  %v5485 = vmul.f32 %v5259, %v5461
  %v5486 = vmul.f32 %v5260, %v5461
  %v5487 = vmul.f32 %v5261, %v5461
  %v5488 = vmul.f32 %v5262, %v5461
  %v5489 = vmul.f32 %v5263, %v5461
  %v5490 = vmul.f32 %v5264, %v5461
  %v5491 = vmul.f32 %v5265, %v5461
  %v5492 = vmul.f32 %v5266, %v5461
  %v5493 = vmul.f32 %v5267, %v5461
  %v5494 = vadd.f32 %v5426, %v5462
  %v5495 = vadd.f32 %v5427, %v5463
  %v5496 = vadd.f32 %v5428, %v5464
  %v5497 = vadd.f32 %v5429, %v5465
  %v5498 = vadd.f32 %v5430, %v5466
  %v5499 = vadd.f32 %v5431, %v5467
  %v5500 = vadd.f32 %v5432, %v5468
  %v5501 = vadd.f32 %v5433, %v5469
  %v5502 = vadd.f32 %v5434, %v5470
  %v5503 = vadd.f32 %v5435, %v5471
  %v5504 = vadd.f32 %v5436, %v5472
  %v5505 = vadd.f32 %v5437, %v5473
  %v5506 = vadd.f32 %v5438, %v5474
  %v5507 = vadd.f32 %v5439, %v5475
  %v5508 = vadd.f32 %v5440, %v5476
  %v5509 = vadd.f32 %v5441, %v5477
  %v5510 = vadd.f32 %v5442, %v5478
  %v5511 = vadd.f32 %v5443, %v5479
  %v5512 = vadd.f32 %v5444, %v5480
  %v5513 = vadd.f32 %v5445, %v5481
  %v5514 = vadd.f32 %v5446, %v5482
  %v5515 = vadd.f32 %v5447, %v5483
  %v5516 = vadd.f32 %v5448, %v5484
  %v5517 = vadd.f32 %v5449, %v5485
  %v5518 = vadd.f32 %v5450, %v5486
  %v5519 = vadd.f32 %v5451, %v5487
  %v5520 = vadd.f32 %v5452, %v5488
  %v5521 = vadd.f32 %v5453, %v5489
  %v5522 = vadd.f32 %v5454, %v5490
  %v5523 = vadd.f32 %v5455, %v5491
  %v5524 = vadd.f32 %v5456, %v5492
  %v5525 = vadd.f32 %v5457, %v5493
  %v5526 = vlaneseq
  %v5527 = vshrl.u32 %v5526, 7
  %v5528 = vsub.s32 4, %v5527
  %v5529 = vrot.slane %v28, %v5528
  %v5530 = vmul.f32 %v5280, %v5529
  %v5531 = vmul.f32 %v5281, %v5529
  %v5532 = vmul.f32 %v5282, %v5529
  %v5533 = vmul.f32 %v5283, %v5529
  %v5534 = vmul.f32 %v5284, %v5529
  %v5535 = vmul.f32 %v5285, %v5529
  %v5536 = vmul.f32 %v5286, %v5529
  %v5537 = vmul.f32 %v5287, %v5529
  %v5538 = vmul.f32 %v5288, %v5529
  %v5539 = vmul.f32 %v5289, %v5529
  %v5540 = vmul.f32 %v5290, %v5529
  %v5541 = vmul.f32 %v5291, %v5529
  %v5542 = vmul.f32 %v5292, %v5529
  %v5543 = vmul.f32 %v5293, %v5529
  %v5544 = vmul.f32 %v5294, %v5529
  %v5545 = vmul.f32 %v5295, %v5529
  %v5546 = vmul.f32 %v5296, %v5529
  %v5547 = vmul.f32 %v5297, %v5529
  %v5548 = vmul.f32 %v5298, %v5529
  %v5549 = vmul.f32 %v5299, %v5529
  %v5550 = vmul.f32 %v5300, %v5529
  %v5551 = vmul.f32 %v5301, %v5529
  %v5552 = vmul.f32 %v5302, %v5529
  %v5553 = vmul.f32 %v5303, %v5529
  %v5554 = vmul.f32 %v5304, %v5529
  %v5555 = vmul.f32 %v5305, %v5529
  %v5556 = vmul.f32 %v5306, %v5529
  %v5557 = vmul.f32 %v5307, %v5529
  %v5558 = vmul.f32 %v5308, %v5529
  %v5559 = vmul.f32 %v5309, %v5529
  %v5560 = vmul.f32 %v5310, %v5529
  %v5561 = vmul.f32 %v5311, %v5529
  %v5562 = vadd.f32 %v5494, %v5530
  %v5563 = vadd.f32 %v5495, %v5531
  %v5564 = vadd.f32 %v5496, %v5532
  %v5565 = vadd.f32 %v5497, %v5533
  %v5566 = vadd.f32 %v5498, %v5534
  %v5567 = vadd.f32 %v5499, %v5535
  %v5568 = vadd.f32 %v5500, %v5536
  %v5569 = vadd.f32 %v5501, %v5537
  %v5570 = vadd.f32 %v5502, %v5538
  %v5571 = vadd.f32 %v5503, %v5539
  %v5572 = vadd.f32 %v5504, %v5540
  %v5573 = vadd.f32 %v5505, %v5541
  %v5574 = vadd.f32 %v5506, %v5542
  %v5575 = vadd.f32 %v5507, %v5543
  %v5576 = vadd.f32 %v5508, %v5544
  %v5577 = vadd.f32 %v5509, %v5545
  %v5578 = vadd.f32 %v5510, %v5546
  %v5579 = vadd.f32 %v5511, %v5547
  %v5580 = vadd.f32 %v5512, %v5548
  %v5581 = vadd.f32 %v5513, %v5549
  %v5582 = vadd.f32 %v5514, %v5550
  %v5583 = vadd.f32 %v5515, %v5551
  %v5584 = vadd.f32 %v5516, %v5552
  %v5585 = vadd.f32 %v5517, %v5553
  %v5586 = vadd.f32 %v5518, %v5554
  %v5587 = vadd.f32 %v5519, %v5555
  %v5588 = vadd.f32 %v5520, %v5556
  %v5589 = vadd.f32 %v5521, %v5557
  %v5590 = vadd.f32 %v5522, %v5558
  %v5591 = vadd.f32 %v5523, %v5559
  %v5592 = vadd.f32 %v5524, %v5560
  %v5593 = vadd.f32 %v5525, %v5561
  %v5594 = vlaneseq
  %v5595 = vshrl.u32 %v5594, 7
  %v5596 = vsub.s32 3, %v5595
  %v5597 = vrot.slane %v22, %v5596
  %v5598 = vmul.f32 %v5238, %v5597
  %v5599 = vmul.f32 %v5239, %v5597
  %v5600 = vmul.f32 %v5240, %v5597
  %v5601 = vmul.f32 %v5241, %v5597
  %v5602 = vmul.f32 %v5242, %v5597
  %v5603 = vmul.f32 %v5243, %v5597
  %v5604 = vmul.f32 %v5244, %v5597
  %v5605 = vmul.f32 %v5245, %v5597
  %v5606 = vmul.f32 %v5246, %v5597
  %v5607 = vmul.f32 %v5247, %v5597
  %v5608 = vmul.f32 %v5248, %v5597
  %v5609 = vmul.f32 %v5249, %v5597
  %v5610 = vmul.f32 %v5250, %v5597
  %v5611 = vmul.f32 %v5251, %v5597
  %v5612 = vmul.f32 %v5252, %v5597
  %v5613 = vmul.f32 %v5253, %v5597
  %v5614 = vmul.f32 %v5254, %v5597
  %v5615 = vmul.f32 %v5255, %v5597
  %v5616 = vmul.f32 %v5256, %v5597
  %v5617 = vmul.f32 %v5257, %v5597
  %v5618 = vmul.f32 %v5258, %v5597
  %v5619 = vmul.f32 %v5259, %v5597
  %v5620 = vmul.f32 %v5260, %v5597
  %v5621 = vmul.f32 %v5261, %v5597
  %v5622 = vmul.f32 %v5262, %v5597
  %v5623 = vmul.f32 %v5263, %v5597
  %v5624 = vmul.f32 %v5264, %v5597
  %v5625 = vmul.f32 %v5265, %v5597
  %v5626 = vmul.f32 %v5266, %v5597
  %v5627 = vmul.f32 %v5267, %v5597
  %v5628 = vmul.f32 %v5268, %v5597
  %v5629 = vmul.f32 %v5269, %v5597
  %v5630 = vadd.f32 %v5562, %v5598
  %v5631 = vadd.f32 %v5563, %v5599
  %v5632 = vadd.f32 %v5564, %v5600
  %v5633 = vadd.f32 %v5565, %v5601
  %v5634 = vadd.f32 %v5566, %v5602
  %v5635 = vadd.f32 %v5567, %v5603
  %v5636 = vadd.f32 %v5568, %v5604
  %v5637 = vadd.f32 %v5569, %v5605
  %v5638 = vadd.f32 %v5570, %v5606
  %v5639 = vadd.f32 %v5571, %v5607
  %v5640 = vadd.f32 %v5572, %v5608
  %v5641 = vadd.f32 %v5573, %v5609
  %v5642 = vadd.f32 %v5574, %v5610
  %v5643 = vadd.f32 %v5575, %v5611
  %v5644 = vadd.f32 %v5576, %v5612
  %v5645 = vadd.f32 %v5577, %v5613
  %v5646 = vadd.f32 %v5578, %v5614
  %v5647 = vadd.f32 %v5579, %v5615
  %v5648 = vadd.f32 %v5580, %v5616
  %v5649 = vadd.f32 %v5581, %v5617
  %v5650 = vadd.f32 %v5582, %v5618
  %v5651 = vadd.f32 %v5583, %v5619
  %v5652 = vadd.f32 %v5584, %v5620
  %v5653 = vadd.f32 %v5585, %v5621
  %v5654 = vadd.f32 %v5586, %v5622
  %v5655 = vadd.f32 %v5587, %v5623
  %v5656 = vadd.f32 %v5588, %v5624
  %v5657 = vadd.f32 %v5589, %v5625
  %v5658 = vadd.f32 %v5590, %v5626
  %v5659 = vadd.f32 %v5591, %v5627
  %v5660 = vadd.f32 %v5592, %v5628
  %v5661 = vadd.f32 %v5593, %v5629
  %v5662 = vlaneseq
  %v5663 = vshrl.u32 %v5662, 7
  %v5664 = vsub.s32 3, %v5663
  %v5665 = vrot.slane %v29, %v5664
  %v5666 = vmul.f32 %v5282, %v5665
  %v5667 = vmul.f32 %v5283, %v5665
  %v5668 = vmul.f32 %v5284, %v5665
  %v5669 = vmul.f32 %v5285, %v5665
  %v5670 = vmul.f32 %v5286, %v5665
  %v5671 = vmul.f32 %v5287, %v5665
  %v5672 = vmul.f32 %v5288, %v5665
  %v5673 = vmul.f32 %v5289, %v5665
  %v5674 = vmul.f32 %v5290, %v5665
  %v5675 = vmul.f32 %v5291, %v5665
  %v5676 = vmul.f32 %v5292, %v5665
  %v5677 = vmul.f32 %v5293, %v5665
  %v5678 = vmul.f32 %v5294, %v5665
  %v5679 = vmul.f32 %v5295, %v5665
  %v5680 = vmul.f32 %v5296, %v5665
  %v5681 = vmul.f32 %v5297, %v5665
  %v5682 = vmul.f32 %v5298, %v5665
  %v5683 = vmul.f32 %v5299, %v5665
  %v5684 = vmul.f32 %v5300, %v5665
  %v5685 = vmul.f32 %v5301, %v5665
  %v5686 = vmul.f32 %v5302, %v5665
  %v5687 = vmul.f32 %v5303, %v5665
  %v5688 = vmul.f32 %v5304, %v5665
  %v5689 = vmul.f32 %v5305, %v5665
  %v5690 = vmul.f32 %v5306, %v5665
  %v5691 = vmul.f32 %v5307, %v5665
  %v5692 = vmul.f32 %v5308, %v5665
  %v5693 = vmul.f32 %v5309, %v5665
  %v5694 = vmul.f32 %v5310, %v5665
  %v5695 = vmul.f32 %v5311, %v5665
  %v5696 = vmul.f32 %v5312, %v5665
  %v5697 = vmul.f32 %v5313, %v5665
  %v5698 = vadd.f32 %v5630, %v5666
  %v5699 = vadd.f32 %v5631, %v5667
  %v5700 = vadd.f32 %v5632, %v5668
  %v5701 = vadd.f32 %v5633, %v5669
  %v5702 = vadd.f32 %v5634, %v5670
  %v5703 = vadd.f32 %v5635, %v5671
  %v5704 = vadd.f32 %v5636, %v5672
  %v5705 = vadd.f32 %v5637, %v5673
  %v5706 = vadd.f32 %v5638, %v5674
  %v5707 = vadd.f32 %v5639, %v5675
  %v5708 = vadd.f32 %v5640, %v5676
  %v5709 = vadd.f32 %v5641, %v5677
  %v5710 = vadd.f32 %v5642, %v5678
  %v5711 = vadd.f32 %v5643, %v5679
  %v5712 = vadd.f32 %v5644, %v5680
  %v5713 = vadd.f32 %v5645, %v5681
  %v5714 = vadd.f32 %v5646, %v5682
  %v5715 = vadd.f32 %v5647, %v5683
  %v5716 = vadd.f32 %v5648, %v5684
  %v5717 = vadd.f32 %v5649, %v5685
  %v5718 = vadd.f32 %v5650, %v5686
  %v5719 = vadd.f32 %v5651, %v5687
  %v5720 = vadd.f32 %v5652, %v5688
  %v5721 = vadd.f32 %v5653, %v5689
  %v5722 = vadd.f32 %v5654, %v5690
  %v5723 = vadd.f32 %v5655, %v5691
  %v5724 = vadd.f32 %v5656, %v5692
  %v5725 = vadd.f32 %v5657, %v5693
  %v5726 = vadd.f32 %v5658, %v5694
  %v5727 = vadd.f32 %v5659, %v5695
  %v5728 = vadd.f32 %v5660, %v5696
  %v5729 = vadd.f32 %v5661, %v5697
  %v5730 = vlaneseq
  %v5731 = vshrl.u32 %v5730, 7
  %v5732 = vsub.s32 2, %v5731
  %v5733 = vrot.slane %v23, %v5732
  %v5734 = vmul.f32 %v5240, %v5733
  %v5735 = vmul.f32 %v5241, %v5733
  %v5736 = vmul.f32 %v5242, %v5733
  %v5737 = vmul.f32 %v5243, %v5733
  %v5738 = vmul.f32 %v5244, %v5733
  %v5739 = vmul.f32 %v5245, %v5733
  %v5740 = vmul.f32 %v5246, %v5733
  %v5741 = vmul.f32 %v5247, %v5733
  %v5742 = vmul.f32 %v5248, %v5733
  %v5743 = vmul.f32 %v5249, %v5733
  %v5744 = vmul.f32 %v5250, %v5733
  %v5745 = vmul.f32 %v5251, %v5733
  %v5746 = vmul.f32 %v5252, %v5733
  %v5747 = vmul.f32 %v5253, %v5733
  %v5748 = vmul.f32 %v5254, %v5733
  %v5749 = vmul.f32 %v5255, %v5733
  %v5750 = vmul.f32 %v5256, %v5733
  %v5751 = vmul.f32 %v5257, %v5733
  %v5752 = vmul.f32 %v5258, %v5733
  %v5753 = vmul.f32 %v5259, %v5733
  %v5754 = vmul.f32 %v5260, %v5733
  %v5755 = vmul.f32 %v5261, %v5733
  %v5756 = vmul.f32 %v5262, %v5733
  %v5757 = vmul.f32 %v5263, %v5733
  %v5758 = vmul.f32 %v5264, %v5733
  %v5759 = vmul.f32 %v5265, %v5733
  %v5760 = vmul.f32 %v5266, %v5733
  %v5761 = vmul.f32 %v5267, %v5733
  %v5762 = vmul.f32 %v5268, %v5733
  %v5763 = vmul.f32 %v5269, %v5733
  %v5764 = vmul.f32 %v5270, %v5733
  %v5765 = vmul.f32 %v5271, %v5733
  %v5766 = vadd.f32 %v5698, %v5734
  %v5767 = vadd.f32 %v5699, %v5735
  %v5768 = vadd.f32 %v5700, %v5736
  %v5769 = vadd.f32 %v5701, %v5737
  %v5770 = vadd.f32 %v5702, %v5738
  %v5771 = vadd.f32 %v5703, %v5739
  %v5772 = vadd.f32 %v5704, %v5740
  %v5773 = vadd.f32 %v5705, %v5741
  %v5774 = vadd.f32 %v5706, %v5742
  %v5775 = vadd.f32 %v5707, %v5743
  %v5776 = vadd.f32 %v5708, %v5744
  %v5777 = vadd.f32 %v5709, %v5745
  %v5778 = vadd.f32 %v5710, %v5746
  %v5779 = vadd.f32 %v5711, %v5747
  %v5780 = vadd.f32 %v5712, %v5748
  %v5781 = vadd.f32 %v5713, %v5749
  %v5782 = vadd.f32 %v5714, %v5750
  %v5783 = vadd.f32 %v5715, %v5751
  %v5784 = vadd.f32 %v5716, %v5752
  %v5785 = vadd.f32 %v5717, %v5753
  %v5786 = vadd.f32 %v5718, %v5754
  %v5787 = vadd.f32 %v5719, %v5755
  %v5788 = vadd.f32 %v5720, %v5756
  %v5789 = vadd.f32 %v5721, %v5757
  %v5790 = vadd.f32 %v5722, %v5758
  %v5791 = vadd.f32 %v5723, %v5759
  %v5792 = vadd.f32 %v5724, %v5760
  %v5793 = vadd.f32 %v5725, %v5761
  %v5794 = vadd.f32 %v5726, %v5762
  %v5795 = vadd.f32 %v5727, %v5763
  %v5796 = vadd.f32 %v5728, %v5764
  %v5797 = vadd.f32 %v5729, %v5765
  %v5798 = vlaneseq
  %v5799 = vshrl.u32 %v5798, 7
  %v5800 = vsub.s32 2, %v5799
  %v5801 = vrot.slane %v30, %v5800
  %v5802 = vmul.f32 %v5284, %v5801
  %v5803 = vmul.f32 %v5285, %v5801
  %v5804 = vmul.f32 %v5286, %v5801
  %v5805 = vmul.f32 %v5287, %v5801
  %v5806 = vmul.f32 %v5288, %v5801
  %v5807 = vmul.f32 %v5289, %v5801
  %v5808 = vmul.f32 %v5290, %v5801
  %v5809 = vmul.f32 %v5291, %v5801
  %v5810 = vmul.f32 %v5292, %v5801
  %v5811 = vmul.f32 %v5293, %v5801
  %v5812 = vmul.f32 %v5294, %v5801
  %v5813 = vmul.f32 %v5295, %v5801
  %v5814 = vmul.f32 %v5296, %v5801
  %v5815 = vmul.f32 %v5297, %v5801
  %v5816 = vmul.f32 %v5298, %v5801
  %v5817 = vmul.f32 %v5299, %v5801
  %v5818 = vmul.f32 %v5300, %v5801
  %v5819 = vmul.f32 %v5301, %v5801
  %v5820 = vmul.f32 %v5302, %v5801
  %v5821 = vmul.f32 %v5303, %v5801
  %v5822 = vmul.f32 %v5304, %v5801
  %v5823 = vmul.f32 %v5305, %v5801
  %v5824 = vmul.f32 %v5306, %v5801
  %v5825 = vmul.f32 %v5307, %v5801
  %v5826 = vmul.f32 %v5308, %v5801
  %v5827 = vmul.f32 %v5309, %v5801
  %v5828 = vmul.f32 %v5310, %v5801
  %v5829 = vmul.f32 %v5311, %v5801
  %v5830 = vmul.f32 %v5312, %v5801
  %v5831 = vmul.f32 %v5313, %v5801
  %v5832 = vmul.f32 %v5314, %v5801
  %v5833 = vmul.f32 %v5315, %v5801
  %v5834 = vadd.f32 %v5766, %v5802
  %v5835 = vadd.f32 %v5767, %v5803
  %v5836 = vadd.f32 %v5768, %v5804
  %v5837 = vadd.f32 %v5769, %v5805
  %v5838 = vadd.f32 %v5770, %v5806
  %v5839 = vadd.f32 %v5771, %v5807
  %v5840 = vadd.f32 %v5772, %v5808
  %v5841 = vadd.f32 %v5773, %v5809
  %v5842 = vadd.f32 %v5774, %v5810
  %v5843 = vadd.f32 %v5775, %v5811
  %v5844 = vadd.f32 %v5776, %v5812
  %v5845 = vadd.f32 %v5777, %v5813
  %v5846 = vadd.f32 %v5778, %v5814
  %v5847 = vadd.f32 %v5779, %v5815
  %v5848 = vadd.f32 %v5780, %v5816
  %v5849 = vadd.f32 %v5781, %v5817
  %v5850 = vadd.f32 %v5782, %v5818
  %v5851 = vadd.f32 %v5783, %v5819
  %v5852 = vadd.f32 %v5784, %v5820
  %v5853 = vadd.f32 %v5785, %v5821
  %v5854 = vadd.f32 %v5786, %v5822
  %v5855 = vadd.f32 %v5787, %v5823
  %v5856 = vadd.f32 %v5788, %v5824
  %v5857 = vadd.f32 %v5789, %v5825
  %v5858 = vadd.f32 %v5790, %v5826
  %v5859 = vadd.f32 %v5791, %v5827
  %v5860 = vadd.f32 %v5792, %v5828
  %v5861 = vadd.f32 %v5793, %v5829
  %v5862 = vadd.f32 %v5794, %v5830
  %v5863 = vadd.f32 %v5795, %v5831
  %v5864 = vadd.f32 %v5796, %v5832
  %v5865 = vadd.f32 %v5797, %v5833
  %v5866 = vlaneseq
  %v5867 = vshrl.u32 %v5866, 7
  %v5868 = vsub.s32 1, %v5867
  %v5869 = vrot.slane %v24, %v5868
  %v5870 = vmul.f32 %v5242, %v5869
  %v5871 = vmul.f32 %v5243, %v5869
  %v5872 = vmul.f32 %v5244, %v5869
  %v5873 = vmul.f32 %v5245, %v5869
  %v5874 = vmul.f32 %v5246, %v5869
  %v5875 = vmul.f32 %v5247, %v5869
  %v5876 = vmul.f32 %v5248, %v5869
  %v5877 = vmul.f32 %v5249, %v5869
  %v5878 = vmul.f32 %v5250, %v5869
  %v5879 = vmul.f32 %v5251, %v5869
  %v5880 = vmul.f32 %v5252, %v5869
  %v5881 = vmul.f32 %v5253, %v5869
  %v5882 = vmul.f32 %v5254, %v5869
  %v5883 = vmul.f32 %v5255, %v5869
  %v5884 = vmul.f32 %v5256, %v5869
  %v5885 = vmul.f32 %v5257, %v5869
  %v5886 = vmul.f32 %v5258, %v5869
  %v5887 = vmul.f32 %v5259, %v5869
  %v5888 = vmul.f32 %v5260, %v5869
  %v5889 = vmul.f32 %v5261, %v5869
  %v5890 = vmul.f32 %v5262, %v5869
  %v5891 = vmul.f32 %v5263, %v5869
  %v5892 = vmul.f32 %v5264, %v5869
  %v5893 = vmul.f32 %v5265, %v5869
  %v5894 = vmul.f32 %v5266, %v5869
  %v5895 = vmul.f32 %v5267, %v5869
  %v5896 = vmul.f32 %v5268, %v5869
  %v5897 = vmul.f32 %v5269, %v5869
  %v5898 = vmul.f32 %v5270, %v5869
  %v5899 = vmul.f32 %v5271, %v5869
  %v5900 = vmul.f32 %v5272, %v5869
  %v5901 = vmul.f32 %v5273, %v5869
  %v5902 = vadd.f32 %v5834, %v5870
  %v5903 = vadd.f32 %v5835, %v5871
  %v5904 = vadd.f32 %v5836, %v5872
  %v5905 = vadd.f32 %v5837, %v5873
  %v5906 = vadd.f32 %v5838, %v5874
  %v5907 = vadd.f32 %v5839, %v5875
  %v5908 = vadd.f32 %v5840, %v5876
  %v5909 = vadd.f32 %v5841, %v5877
  %v5910 = vadd.f32 %v5842, %v5878
  %v5911 = vadd.f32 %v5843, %v5879
  %v5912 = vadd.f32 %v5844, %v5880
  %v5913 = vadd.f32 %v5845, %v5881
  %v5914 = vadd.f32 %v5846, %v5882
  %v5915 = vadd.f32 %v5847, %v5883
  %v5916 = vadd.f32 %v5848, %v5884
  %v5917 = vadd.f32 %v5849, %v5885
  %v5918 = vadd.f32 %v5850, %v5886
  %v5919 = vadd.f32 %v5851, %v5887
  %v5920 = vadd.f32 %v5852, %v5888
  %v5921 = vadd.f32 %v5853, %v5889
  %v5922 = vadd.f32 %v5854, %v5890
  %v5923 = vadd.f32 %v5855, %v5891
  %v5924 = vadd.f32 %v5856, %v5892
  %v5925 = vadd.f32 %v5857, %v5893
  %v5926 = vadd.f32 %v5858, %v5894
  %v5927 = vadd.f32 %v5859, %v5895
  %v5928 = vadd.f32 %v5860, %v5896
  %v5929 = vadd.f32 %v5861, %v5897
  %v5930 = vadd.f32 %v5862, %v5898
  %v5931 = vadd.f32 %v5863, %v5899
  %v5932 = vadd.f32 %v5864, %v5900
  %v5933 = vadd.f32 %v5865, %v5901
  %v5934 = vlaneseq
  %v5935 = vshrl.u32 %v5934, 7
  %v5936 = vsub.s32 1, %v5935
  %v5937 = vrot.slane %v31, %v5936
  %v5938 = vmul.f32 %v5286, %v5937
  %v5939 = vmul.f32 %v5287, %v5937
  %v5940 = vmul.f32 %v5288, %v5937
  %v5941 = vmul.f32 %v5289, %v5937
  %v5942 = vmul.f32 %v5290, %v5937
  %v5943 = vmul.f32 %v5291, %v5937
  %v5944 = vmul.f32 %v5292, %v5937
  %v5945 = vmul.f32 %v5293, %v5937
  %v5946 = vmul.f32 %v5294, %v5937
  %v5947 = vmul.f32 %v5295, %v5937
  %v5948 = vmul.f32 %v5296, %v5937
  %v5949 = vmul.f32 %v5297, %v5937
  %v5950 = vmul.f32 %v5298, %v5937
  %v5951 = vmul.f32 %v5299, %v5937
  %v5952 = vmul.f32 %v5300, %v5937
  %v5953 = vmul.f32 %v5301, %v5937
  %v5954 = vmul.f32 %v5302, %v5937
  %v5955 = vmul.f32 %v5303, %v5937
  %v5956 = vmul.f32 %v5304, %v5937
  %v5957 = vmul.f32 %v5305, %v5937
  %v5958 = vmul.f32 %v5306, %v5937
  %v5959 = vmul.f32 %v5307, %v5937
  %v5960 = vmul.f32 %v5308, %v5937
  %v5961 = vmul.f32 %v5309, %v5937
  %v5962 = vmul.f32 %v5310, %v5937
  %v5963 = vmul.f32 %v5311, %v5937
  %v5964 = vmul.f32 %v5312, %v5937
  %v5965 = vmul.f32 %v5313, %v5937
  %v5966 = vmul.f32 %v5314, %v5937
  %v5967 = vmul.f32 %v5315, %v5937
  %v5968 = vmul.f32 %v5316, %v5937
  %v5969 = vmul.f32 %v5317, %v5937
  %v5970 = vadd.f32 %v5902, %v5938
  %v5971 = vadd.f32 %v5903, %v5939
  %v5972 = vadd.f32 %v5904, %v5940
  %v5973 = vadd.f32 %v5905, %v5941
  %v5974 = vadd.f32 %v5906, %v5942
  %v5975 = vadd.f32 %v5907, %v5943
  %v5976 = vadd.f32 %v5908, %v5944
  %v5977 = vadd.f32 %v5909, %v5945
  %v5978 = vadd.f32 %v5910, %v5946
  %v5979 = vadd.f32 %v5911, %v5947
  %v5980 = vadd.f32 %v5912, %v5948
  %v5981 = vadd.f32 %v5913, %v5949
  %v5982 = vadd.f32 %v5914, %v5950
  %v5983 = vadd.f32 %v5915, %v5951
  %v5984 = vadd.f32 %v5916, %v5952
  %v5985 = vadd.f32 %v5917, %v5953
  %v5986 = vadd.f32 %v5918, %v5954
  %v5987 = vadd.f32 %v5919, %v5955
  %v5988 = vadd.f32 %v5920, %v5956
  %v5989 = vadd.f32 %v5921, %v5957
  %v5990 = vadd.f32 %v5922, %v5958
  %v5991 = vadd.f32 %v5923, %v5959
  %v5992 = vadd.f32 %v5924, %v5960
  %v5993 = vadd.f32 %v5925, %v5961
  %v5994 = vadd.f32 %v5926, %v5962
  %v5995 = vadd.f32 %v5927, %v5963
  %v5996 = vadd.f32 %v5928, %v5964
  %v5997 = vadd.f32 %v5929, %v5965
  %v5998 = vadd.f32 %v5930, %v5966
  %v5999 = vadd.f32 %v5931, %v5967
  %v6000 = vadd.f32 %v5932, %v5968
  %v6001 = vadd.f32 %v5933, %v5969
  %v6002 = vlaneseq
  %v6003 = vshrl.u32 %v6002, 7
  %v6004 = vsub.s32 0, %v6003
  %v6005 = vrot.slane %v25, %v6004
  %v6006 = vmul.f32 %v5244, %v6005
  %v6007 = vmul.f32 %v5245, %v6005
  %v6008 = vmul.f32 %v5246, %v6005
  %v6009 = vmul.f32 %v5247, %v6005
  %v6010 = vmul.f32 %v5248, %v6005
  %v6011 = vmul.f32 %v5249, %v6005
  %v6012 = vmul.f32 %v5250, %v6005
  %v6013 = vmul.f32 %v5251, %v6005
  %v6014 = vmul.f32 %v5252, %v6005
  %v6015 = vmul.f32 %v5253, %v6005
  %v6016 = vmul.f32 %v5254, %v6005
  %v6017 = vmul.f32 %v5255, %v6005
  %v6018 = vmul.f32 %v5256, %v6005
  %v6019 = vmul.f32 %v5257, %v6005
  %v6020 = vmul.f32 %v5258, %v6005
  %v6021 = vmul.f32 %v5259, %v6005
  %v6022 = vmul.f32 %v5260, %v6005
  %v6023 = vmul.f32 %v5261, %v6005
  %v6024 = vmul.f32 %v5262, %v6005
  %v6025 = vmul.f32 %v5263, %v6005
  %v6026 = vmul.f32 %v5264, %v6005
  %v6027 = vmul.f32 %v5265, %v6005
  %v6028 = vmul.f32 %v5266, %v6005
  %v6029 = vmul.f32 %v5267, %v6005
  %v6030 = vmul.f32 %v5268, %v6005
  %v6031 = vmul.f32 %v5269, %v6005
  %v6032 = vmul.f32 %v5270, %v6005
  %v6033 = vmul.f32 %v5271, %v6005
  %v6034 = vmul.f32 %v5272, %v6005
  %v6035 = vmul.f32 %v5273, %v6005
  %v6036 = vmul.f32 %v5274, %v6005
  %v6037 = vmul.f32 %v5275, %v6005
  %v6038 = vadd.f32 %v5970, %v6006
  %v6039 = vadd.f32 %v5971, %v6007
  %v6040 = vadd.f32 %v5972, %v6008
  %v6041 = vadd.f32 %v5973, %v6009
  %v6042 = vadd.f32 %v5974, %v6010
  %v6043 = vadd.f32 %v5975, %v6011
  %v6044 = vadd.f32 %v5976, %v6012
  %v6045 = vadd.f32 %v5977, %v6013
  %v6046 = vadd.f32 %v5978, %v6014
  %v6047 = vadd.f32 %v5979, %v6015
  %v6048 = vadd.f32 %v5980, %v6016
  %v6049 = vadd.f32 %v5981, %v6017
  %v6050 = vadd.f32 %v5982, %v6018
  %v6051 = vadd.f32 %v5983, %v6019
  %v6052 = vadd.f32 %v5984, %v6020
  %v6053 = vadd.f32 %v5985, %v6021
  %v6054 = vadd.f32 %v5986, %v6022
  %v6055 = vadd.f32 %v5987, %v6023
  %v6056 = vadd.f32 %v5988, %v6024
  %v6057 = vadd.f32 %v5989, %v6025
  %v6058 = vadd.f32 %v5990, %v6026
  %v6059 = vadd.f32 %v5991, %v6027
  %v6060 = vadd.f32 %v5992, %v6028
  %v6061 = vadd.f32 %v5993, %v6029
  %v6062 = vadd.f32 %v5994, %v6030
  %v6063 = vadd.f32 %v5995, %v6031
  %v6064 = vadd.f32 %v5996, %v6032
  %v6065 = vadd.f32 %v5997, %v6033
  %v6066 = vadd.f32 %v5998, %v6034
  %v6067 = vadd.f32 %v5999, %v6035
  %v6068 = vadd.f32 %v6000, %v6036
  %v6069 = vadd.f32 %v6001, %v6037
  %v6070 = vlaneseq
  %v6071 = vshrl.u32 %v6070, 7
  %v6072 = vsub.s32 0, %v6071
  %v6073 = vrot.slane %v32, %v6072
  %v6074 = vmul.f32 %v5288, %v6073
  %v6075 = vmul.f32 %v5289, %v6073
  %v6076 = vmul.f32 %v5290, %v6073
  %v6077 = vmul.f32 %v5291, %v6073
  %v6078 = vmul.f32 %v5292, %v6073
  %v6079 = vmul.f32 %v5293, %v6073
  %v6080 = vmul.f32 %v5294, %v6073
  %v6081 = vmul.f32 %v5295, %v6073
  %v6082 = vmul.f32 %v5296, %v6073
  %v6083 = vmul.f32 %v5297, %v6073
  %v6084 = vmul.f32 %v5298, %v6073
  %v6085 = vmul.f32 %v5299, %v6073
  %v6086 = vmul.f32 %v5300, %v6073
  %v6087 = vmul.f32 %v5301, %v6073
  %v6088 = vmul.f32 %v5302, %v6073
  %v6089 = vmul.f32 %v5303, %v6073
  %v6090 = vmul.f32 %v5304, %v6073
  %v6091 = vmul.f32 %v5305, %v6073
  %v6092 = vmul.f32 %v5306, %v6073
  %v6093 = vmul.f32 %v5307, %v6073
  %v6094 = vmul.f32 %v5308, %v6073
  %v6095 = vmul.f32 %v5309, %v6073
  %v6096 = vmul.f32 %v5310, %v6073
  %v6097 = vmul.f32 %v5311, %v6073
  %v6098 = vmul.f32 %v5312, %v6073
  %v6099 = vmul.f32 %v5313, %v6073
  %v6100 = vmul.f32 %v5314, %v6073
  %v6101 = vmul.f32 %v5315, %v6073
  %v6102 = vmul.f32 %v5316, %v6073
  %v6103 = vmul.f32 %v5317, %v6073
  %v6104 = vmul.f32 %v5318, %v6073
  %v6105 = vmul.f32 %v5319, %v6073
  %v6106 = vadd.f32 %v6038, %v6074
  %v6107 = vadd.f32 %v6039, %v6075
  %v6108 = vadd.f32 %v6040, %v6076
  %v6109 = vadd.f32 %v6041, %v6077
  %v6110 = vadd.f32 %v6042, %v6078
  %v6111 = vadd.f32 %v6043, %v6079
  %v6112 = vadd.f32 %v6044, %v6080
  %v6113 = vadd.f32 %v6045, %v6081
  %v6114 = vadd.f32 %v6046, %v6082
  %v6115 = vadd.f32 %v6047, %v6083
  %v6116 = vadd.f32 %v6048, %v6084
  %v6117 = vadd.f32 %v6049, %v6085
  %v6118 = vadd.f32 %v6050, %v6086
  %v6119 = vadd.f32 %v6051, %v6087
  %v6120 = vadd.f32 %v6052, %v6088
  %v6121 = vadd.f32 %v6053, %v6089
  %v6122 = vadd.f32 %v6054, %v6090
  %v6123 = vadd.f32 %v6055, %v6091
  %v6124 = vadd.f32 %v6056, %v6092
  %v6125 = vadd.f32 %v6057, %v6093
  %v6126 = vadd.f32 %v6058, %v6094
  %v6127 = vadd.f32 %v6059, %v6095
  %v6128 = vadd.f32 %v6060, %v6096
  %v6129 = vadd.f32 %v6061, %v6097
  %v6130 = vadd.f32 %v6062, %v6098
  %v6131 = vadd.f32 %v6063, %v6099
  %v6132 = vadd.f32 %v6064, %v6100
  %v6133 = vadd.f32 %v6065, %v6101
  %v6134 = vadd.f32 %v6066, %v6102
  %v6135 = vadd.f32 %v6067, %v6103
  %v6136 = vadd.f32 %v6068, %v6104
  %v6137 = vadd.f32 %v6069, %v6105
  %v6138 = vlaneseq
  %v6139 = vshrl.u32 %v6138, 7
  %v6140 = vsub.s32 7, %v6139
  %v6141 = vrot.slane %v25, %v6140
  %v6142 = vmul.f32 %v5246, %v6141
  %v6143 = vmul.f32 %v5247, %v6141
  %v6144 = vmul.f32 %v5248, %v6141
  %v6145 = vmul.f32 %v5249, %v6141
  %v6146 = vmul.f32 %v5250, %v6141
  %v6147 = vmul.f32 %v5251, %v6141
  %v6148 = vmul.f32 %v5252, %v6141
  %v6149 = vmul.f32 %v5253, %v6141
  %v6150 = vmul.f32 %v5254, %v6141
  %v6151 = vmul.f32 %v5255, %v6141
  %v6152 = vmul.f32 %v5256, %v6141
  %v6153 = vmul.f32 %v5257, %v6141
  %v6154 = vmul.f32 %v5258, %v6141
  %v6155 = vmul.f32 %v5259, %v6141
  %v6156 = vmul.f32 %v5260, %v6141
  %v6157 = vmul.f32 %v5261, %v6141
  %v6158 = vmul.f32 %v5262, %v6141
  %v6159 = vmul.f32 %v5263, %v6141
  %v6160 = vmul.f32 %v5264, %v6141
  %v6161 = vmul.f32 %v5265, %v6141
  %v6162 = vmul.f32 %v5266, %v6141
  %v6163 = vmul.f32 %v5267, %v6141
  %v6164 = vmul.f32 %v5268, %v6141
  %v6165 = vmul.f32 %v5269, %v6141
  %v6166 = vmul.f32 %v5270, %v6141
  %v6167 = vmul.f32 %v5271, %v6141
  %v6168 = vmul.f32 %v5272, %v6141
  %v6169 = vmul.f32 %v5273, %v6141
  %v6170 = vmul.f32 %v5274, %v6141
  %v6171 = vmul.f32 %v5275, %v6141
  %v6172 = vmul.f32 %v5276, %v6141
  %v6173 = vmul.f32 %v5277, %v6141
  %v6174 = vadd.f32 %v6106, %v6142
  %v6175 = vadd.f32 %v6107, %v6143
  %v6176 = vadd.f32 %v6108, %v6144
  %v6177 = vadd.f32 %v6109, %v6145
  %v6178 = vadd.f32 %v6110, %v6146
  %v6179 = vadd.f32 %v6111, %v6147
  %v6180 = vadd.f32 %v6112, %v6148
  %v6181 = vadd.f32 %v6113, %v6149
  %v6182 = vadd.f32 %v6114, %v6150
  %v6183 = vadd.f32 %v6115, %v6151
  %v6184 = vadd.f32 %v6116, %v6152
  %v6185 = vadd.f32 %v6117, %v6153
  %v6186 = vadd.f32 %v6118, %v6154
  %v6187 = vadd.f32 %v6119, %v6155
  %v6188 = vadd.f32 %v6120, %v6156
  %v6189 = vadd.f32 %v6121, %v6157
  %v6190 = vadd.f32 %v6122, %v6158
  %v6191 = vadd.f32 %v6123, %v6159
  %v6192 = vadd.f32 %v6124, %v6160
  %v6193 = vadd.f32 %v6125, %v6161
  %v6194 = vadd.f32 %v6126, %v6162
  %v6195 = vadd.f32 %v6127, %v6163
  %v6196 = vadd.f32 %v6128, %v6164
  %v6197 = vadd.f32 %v6129, %v6165
  %v6198 = vadd.f32 %v6130, %v6166
  %v6199 = vadd.f32 %v6131, %v6167
  %v6200 = vadd.f32 %v6132, %v6168
  %v6201 = vadd.f32 %v6133, %v6169
  %v6202 = vadd.f32 %v6134, %v6170
  %v6203 = vadd.f32 %v6135, %v6171
  %v6204 = vadd.f32 %v6136, %v6172
  %v6205 = vadd.f32 %v6137, %v6173
  %v6206 = vlaneseq
  %v6207 = vshrl.u32 %v6206, 7
  %v6208 = vsub.s32 7, %v6207
  %v6209 = vrot.slane %v32, %v6208
  %v6210 = vmul.f32 %v5290, %v6209
  %v6211 = vmul.f32 %v5291, %v6209
  %v6212 = vmul.f32 %v5292, %v6209
  %v6213 = vmul.f32 %v5293, %v6209
  %v6214 = vmul.f32 %v5294, %v6209
  %v6215 = vmul.f32 %v5295, %v6209
  %v6216 = vmul.f32 %v5296, %v6209
  %v6217 = vmul.f32 %v5297, %v6209
  %v6218 = vmul.f32 %v5298, %v6209
  %v6219 = vmul.f32 %v5299, %v6209
  %v6220 = vmul.f32 %v5300, %v6209
  %v6221 = vmul.f32 %v5301, %v6209
  %v6222 = vmul.f32 %v5302, %v6209
  %v6223 = vmul.f32 %v5303, %v6209
  %v6224 = vmul.f32 %v5304, %v6209
  %v6225 = vmul.f32 %v5305, %v6209
  %v6226 = vmul.f32 %v5306, %v6209
  %v6227 = vmul.f32 %v5307, %v6209
  %v6228 = vmul.f32 %v5308, %v6209
  %v6229 = vmul.f32 %v5309, %v6209
  %v6230 = vmul.f32 %v5310, %v6209
  %v6231 = vmul.f32 %v5311, %v6209
  %v6232 = vmul.f32 %v5312, %v6209
  %v6233 = vmul.f32 %v5313, %v6209
  %v6234 = vmul.f32 %v5314, %v6209
  %v6235 = vmul.f32 %v5315, %v6209
  %v6236 = vmul.f32 %v5316, %v6209
  %v6237 = vmul.f32 %v5317, %v6209
  %v6238 = vmul.f32 %v5318, %v6209
  %v6239 = vmul.f32 %v5319, %v6209
  %v6240 = vmul.f32 %v5320, %v6209
  %v6241 = vmul.f32 %v5321, %v6209
  %v6242 = vadd.f32 %v6174, %v6210
  %v6243 = vadd.f32 %v6175, %v6211
  %v6244 = vadd.f32 %v6176, %v6212
  %v6245 = vadd.f32 %v6177, %v6213
  %v6246 = vadd.f32 %v6178, %v6214
  %v6247 = vadd.f32 %v6179, %v6215
  %v6248 = vadd.f32 %v6180, %v6216
  %v6249 = vadd.f32 %v6181, %v6217
  %v6250 = vadd.f32 %v6182, %v6218
  %v6251 = vadd.f32 %v6183, %v6219
  %v6252 = vadd.f32 %v6184, %v6220
  %v6253 = vadd.f32 %v6185, %v6221
  %v6254 = vadd.f32 %v6186, %v6222
  %v6255 = vadd.f32 %v6187, %v6223
  %v6256 = vadd.f32 %v6188, %v6224
  %v6257 = vadd.f32 %v6189, %v6225
  %v6258 = vadd.f32 %v6190, %v6226
  %v6259 = vadd.f32 %v6191, %v6227
  %v6260 = vadd.f32 %v6192, %v6228
  %v6261 = vadd.f32 %v6193, %v6229
  %v6262 = vadd.f32 %v6194, %v6230
  %v6263 = vadd.f32 %v6195, %v6231
  %v6264 = vadd.f32 %v6196, %v6232
  %v6265 = vadd.f32 %v6197, %v6233
  %v6266 = vadd.f32 %v6198, %v6234
  %v6267 = vadd.f32 %v6199, %v6235
  %v6268 = vadd.f32 %v6200, %v6236
  %v6269 = vadd.f32 %v6201, %v6237
  %v6270 = vadd.f32 %v6202, %v6238
  %v6271 = vadd.f32 %v6203, %v6239
  %v6272 = vadd.f32 %v6204, %v6240
  %v6273 = vadd.f32 %v6205, %v6241
  %v6274 = vld [vmem:[%s0 + $0x6] sm:$0xff]
  %v6275 = vld [vmem:[%s0 + $0xe] sm:$0xff]
  %v6276 = vld [vmem:[%s0 + $0x1e] sm:$0xff]
  %v6277 = vld [vmem:[%s0 + $0x26] sm:$0xff]
  %v6278 = vld [vmem:[%s0 + $0x36] sm:$0xff]
  %v6279 = vld [vmem:[%s0 + $0x3e] sm:$0xff]
  %v6280 = vld [vmem:[%s0 + $0x4e] sm:$0xff]
  %v6281 = vld [vmem:[%s0 + $0x56] sm:$0xff]
  %v6282 = vld [vmem:[%s0 + $0x66] sm:$0xff]
  %v6283 = vld [vmem:[%s0 + $0x6e] sm:$0xff]
  %v6284 = vld [vmem:[%s0 + $0x7e] sm:$0xff]
  %v6285 = vld [vmem:[%s0 + $0x86] sm:$0xff]
  %v6286 = vld [vmem:[%s0 + $0x96] sm:$0xff]
  %v6287 = vld [vmem:[%s0 + $0x9e] sm:$0xff]
  %v6288 = vld [vmem:[%s0 + $0xae] sm:$0xff]
  %v6289 = vld [vmem:[%s0 + $0xb6] sm:$0xff]
  %v6290 = vld [vmem:[%s0 + $0xc6] sm:$0xff]
  %v6291 = vld [vmem:[%s0 + $0xce] sm:$0xff]
  %v6292 = vld [vmem:[%s0 + $0xde] sm:$0xff]
  %v6293 = vld [vmem:[%s0 + $0xe6] sm:$0xff]
  %v6294 = vld [vmem:[%s0 + $0xf6] sm:$0xff]
  %v6295 = vld [vmem:[%s0 + $0xfe] sm:$0xff]
  %v6296 = vld [vmem:[%s0 + $0x10e] sm:$0xff]
  %v6297 = vld [vmem:[%s0 + $0x116] sm:$0xff]
  %v6298 = vld [vmem:[%s0 + $0x126] sm:$0xff]
  %v6299 = vld [vmem:[%s0 + $0x12e] sm:$0xff]
  %v6300 = vld [vmem:[%s0 + $0x13e] sm:$0xff]
  %v6301 = vld [vmem:[%s0 + $0x146] sm:$0xff]
  %v6302 = vld [vmem:[%s0 + $0x156] sm:$0xff]
  %v6303 = vld [vmem:[%s0 + $0x15e] sm:$0xff]
  %v6304 = vld [vmem:[%s0 + $0x16e] sm:$0xff]
  %v6305 = vld [vmem:[%s0 + $0x176] sm:$0xff]
  %v6306 = vld [vmem:[%s0 + $0x186] sm:$0xff]
  %v6307 = vld [vmem:[%s0 + $0x18e] sm:$0xff]
  %v6308 = vld [vmem:[%s0 + $0x19e] sm:$0xff]
  %v6309 = vld [vmem:[%s0 + $0x1a6] sm:$0xff]
  %v6310 = vld [vmem:[%s0 + $0x1b6] sm:$0xff]
  %v6311 = vld [vmem:[%s0 + $0x1be] sm:$0xff]
  %v6312 = vld [vmem:[%s0 + $0x1ce] sm:$0xff]
  %v6313 = vld [vmem:[%s0 + $0x1d6] sm:$0xff]
  %v6314 = vld [vmem:[%s0 + $0x1e6] sm:$0xff]
  %v6315 = vld [vmem:[%s0 + $0x1ee] sm:$0xff]
  %v6316 = vld [vmem:[%s0 + $0x1fe] sm:$0xff]
  %v6317 = vld [vmem:[%s0 + $0x206] sm:$0xff]
  %v6318 = vld [vmem:[%s1 + $0x6] sm:$0xff]
  %v6319 = vld [vmem:[%s1 + $0xe] sm:$0xff]
  %v6320 = vld [vmem:[%s1 + $0x1e] sm:$0xff]
  %v6321 = vld [vmem:[%s1 + $0x26] sm:$0xff]
  %v6322 = vld [vmem:[%s1 + $0x36] sm:$0xff]
  %v6323 = vld [vmem:[%s1 + $0x3e] sm:$0xff]
  %v6324 = vld [vmem:[%s1 + $0x4e] sm:$0xff]
  %v6325 = vld [vmem:[%s1 + $0x56] sm:$0xff]
  %v6326 = vld [vmem:[%s1 + $0x66] sm:$0xff]
  %v6327 = vld [vmem:[%s1 + $0x6e] sm:$0xff]
  %v6328 = vld [vmem:[%s1 + $0x7e] sm:$0xff]
  %v6329 = vld [vmem:[%s1 + $0x86] sm:$0xff]
  %v6330 = vld [vmem:[%s1 + $0x96] sm:$0xff]
  %v6331 = vld [vmem:[%s1 + $0x9e] sm:$0xff]
  %v6332 = vld [vmem:[%s1 + $0xae] sm:$0xff]
  %v6333 = vld [vmem:[%s1 + $0xb6] sm:$0xff]
  %v6334 = vld [vmem:[%s1 + $0xc6] sm:$0xff]
  %v6335 = vld [vmem:[%s1 + $0xce] sm:$0xff]
  %v6336 = vld [vmem:[%s1 + $0xde] sm:$0xff]
  %v6337 = vld [vmem:[%s1 + $0xe6] sm:$0xff]
  %v6338 = vld [vmem:[%s1 + $0xf6] sm:$0xff]
  %v6339 = vld [vmem:[%s1 + $0xfe] sm:$0xff]
  %v6340 = vld [vmem:[%s1 + $0x10e] sm:$0xff]
  %v6341 = vld [vmem:[%s1 + $0x116] sm:$0xff]
  %v6342 = vld [vmem:[%s1 + $0x126] sm:$0xff]
  %v6343 = vld [vmem:[%s1 + $0x12e] sm:$0xff]
  %v6344 = vld [vmem:[%s1 + $0x13e] sm:$0xff]
  %v6345 = vld [vmem:[%s1 + $0x146] sm:$0xff]
  %v6346 = vld [vmem:[%s1 + $0x156] sm:$0xff]
  %v6347 = vld [vmem:[%s1 + $0x15e] sm:$0xff]
  %v6348 = vld [vmem:[%s1 + $0x16e] sm:$0xff]
  %v6349 = vld [vmem:[%s1 + $0x176] sm:$0xff]
  %v6350 = vld [vmem:[%s1 + $0x186] sm:$0xff]
  %v6351 = vld [vmem:[%s1 + $0x18e] sm:$0xff]
  %v6352 = vld [vmem:[%s1 + $0x19e] sm:$0xff]
  %v6353 = vld [vmem:[%s1 + $0x1a6] sm:$0xff]
  %v6354 = vld [vmem:[%s1 + $0x1b6] sm:$0xff]
  %v6355 = vld [vmem:[%s1 + $0x1be] sm:$0xff]
  %v6356 = vld [vmem:[%s1 + $0x1ce] sm:$0xff]
  %v6357 = vld [vmem:[%s1 + $0x1d6] sm:$0xff]
  %v6358 = vld [vmem:[%s1 + $0x1e6] sm:$0xff]
  %v6359 = vld [vmem:[%s1 + $0x1ee] sm:$0xff]
  %v6360 = vld [vmem:[%s1 + $0x1fe] sm:$0xff]
  %v6361 = vld [vmem:[%s1 + $0x206] sm:$0xff]
  %v6362 = vlaneseq
  %v6363 = vshrl.u32 %v6362, 7
  %v6364 = vsub.s32 6, %v6363
  %v6365 = vrot.slane %v20, %v6364
  %v6366 = vmul.f32 %v6274, %v6365
  %v6367 = vmul.f32 %v6275, %v6365
  %v6368 = vmul.f32 %v6276, %v6365
  %v6369 = vmul.f32 %v6277, %v6365
  %v6370 = vmul.f32 %v6278, %v6365
  %v6371 = vmul.f32 %v6279, %v6365
  %v6372 = vmul.f32 %v6280, %v6365
  %v6373 = vmul.f32 %v6281, %v6365
  %v6374 = vmul.f32 %v6282, %v6365
  %v6375 = vmul.f32 %v6283, %v6365
  %v6376 = vmul.f32 %v6284, %v6365
  %v6377 = vmul.f32 %v6285, %v6365
  %v6378 = vmul.f32 %v6286, %v6365
  %v6379 = vmul.f32 %v6287, %v6365
  %v6380 = vmul.f32 %v6288, %v6365
  %v6381 = vmul.f32 %v6289, %v6365
  %v6382 = vmul.f32 %v6290, %v6365
  %v6383 = vmul.f32 %v6291, %v6365
  %v6384 = vmul.f32 %v6292, %v6365
  %v6385 = vmul.f32 %v6293, %v6365
  %v6386 = vmul.f32 %v6294, %v6365
  %v6387 = vmul.f32 %v6295, %v6365
  %v6388 = vmul.f32 %v6296, %v6365
  %v6389 = vmul.f32 %v6297, %v6365
  %v6390 = vmul.f32 %v6298, %v6365
  %v6391 = vmul.f32 %v6299, %v6365
  %v6392 = vmul.f32 %v6300, %v6365
  %v6393 = vmul.f32 %v6301, %v6365
  %v6394 = vmul.f32 %v6302, %v6365
  %v6395 = vmul.f32 %v6303, %v6365
  %v6396 = vmul.f32 %v6304, %v6365
  %v6397 = vmul.f32 %v6305, %v6365
  %v6398 = vadd.f32 %v6242, %v6366
  %v6399 = vadd.f32 %v6243, %v6367
  %v6400 = vadd.f32 %v6244, %v6368
  %v6401 = vadd.f32 %v6245, %v6369
  %v6402 = vadd.f32 %v6246, %v6370
  %v6403 = vadd.f32 %v6247, %v6371
  %v6404 = vadd.f32 %v6248, %v6372
  %v6405 = vadd.f32 %v6249, %v6373
  %v6406 = vadd.f32 %v6250, %v6374
  %v6407 = vadd.f32 %v6251, %v6375
  %v6408 = vadd.f32 %v6252, %v6376
  %v6409 = vadd.f32 %v6253, %v6377
  %v6410 = vadd.f32 %v6254, %v6378
  %v6411 = vadd.f32 %v6255, %v6379
  %v6412 = vadd.f32 %v6256, %v6380
  %v6413 = vadd.f32 %v6257, %v6381
  %v6414 = vadd.f32 %v6258, %v6382
  %v6415 = vadd.f32 %v6259, %v6383
  %v6416 = vadd.f32 %v6260, %v6384
  %v6417 = vadd.f32 %v6261, %v6385
  %v6418 = vadd.f32 %v6262, %v6386
  %v6419 = vadd.f32 %v6263, %v6387
  %v6420 = vadd.f32 %v6264, %v6388
  %v6421 = vadd.f32 %v6265, %v6389
  %v6422 = vadd.f32 %v6266, %v6390
  %v6423 = vadd.f32 %v6267, %v6391
  %v6424 = vadd.f32 %v6268, %v6392
  %v6425 = vadd.f32 %v6269, %v6393
  %v6426 = vadd.f32 %v6270, %v6394
  %v6427 = vadd.f32 %v6271, %v6395
  %v6428 = vadd.f32 %v6272, %v6396
  %v6429 = vadd.f32 %v6273, %v6397
  %v6430 = vlaneseq
  %v6431 = vshrl.u32 %v6430, 7
  %v6432 = vsub.s32 6, %v6431
  %v6433 = vrot.slane %v27, %v6432
  %v6434 = vmul.f32 %v6318, %v6433
  %v6435 = vmul.f32 %v6319, %v6433
  %v6436 = vmul.f32 %v6320, %v6433
  %v6437 = vmul.f32 %v6321, %v6433
  %v6438 = vmul.f32 %v6322, %v6433
  %v6439 = vmul.f32 %v6323, %v6433
  %v6440 = vmul.f32 %v6324, %v6433
  %v6441 = vmul.f32 %v6325, %v6433
  %v6442 = vmul.f32 %v6326, %v6433
  %v6443 = vmul.f32 %v6327, %v6433
  %v6444 = vmul.f32 %v6328, %v6433
  %v6445 = vmul.f32 %v6329, %v6433
  %v6446 = vmul.f32 %v6330, %v6433
  %v6447 = vmul.f32 %v6331, %v6433
  %v6448 = vmul.f32 %v6332, %v6433
  %v6449 = vmul.f32 %v6333, %v6433
  %v6450 = vmul.f32 %v6334, %v6433
  %v6451 = vmul.f32 %v6335, %v6433
  %v6452 = vmul.f32 %v6336, %v6433
  %v6453 = vmul.f32 %v6337, %v6433
  %v6454 = vmul.f32 %v6338, %v6433
  %v6455 = vmul.f32 %v6339, %v6433
  %v6456 = vmul.f32 %v6340, %v6433
  %v6457 = vmul.f32 %v6341, %v6433
  %v6458 = vmul.f32 %v6342, %v6433
  %v6459 = vmul.f32 %v6343, %v6433
  %v6460 = vmul.f32 %v6344, %v6433
  %v6461 = vmul.f32 %v6345, %v6433
  %v6462 = vmul.f32 %v6346, %v6433
  %v6463 = vmul.f32 %v6347, %v6433
  %v6464 = vmul.f32 %v6348, %v6433
  %v6465 = vmul.f32 %v6349, %v6433
  %v6466 = vadd.f32 %v6398, %v6434
  %v6467 = vadd.f32 %v6399, %v6435
  %v6468 = vadd.f32 %v6400, %v6436
  %v6469 = vadd.f32 %v6401, %v6437
  %v6470 = vadd.f32 %v6402, %v6438
  %v6471 = vadd.f32 %v6403, %v6439
  %v6472 = vadd.f32 %v6404, %v6440
  %v6473 = vadd.f32 %v6405, %v6441
  %v6474 = vadd.f32 %v6406, %v6442
  %v6475 = vadd.f32 %v6407, %v6443
  %v6476 = vadd.f32 %v6408, %v6444
  %v6477 = vadd.f32 %v6409, %v6445
  %v6478 = vadd.f32 %v6410, %v6446
  %v6479 = vadd.f32 %v6411, %v6447
  %v6480 = vadd.f32 %v6412, %v6448
  %v6481 = vadd.f32 %v6413, %v6449
  %v6482 = vadd.f32 %v6414, %v6450
  %v6483 = vadd.f32 %v6415, %v6451
  %v6484 = vadd.f32 %v6416, %v6452
  %v6485 = vadd.f32 %v6417, %v6453
  %v6486 = vadd.f32 %v6418, %v6454
  %v6487 = vadd.f32 %v6419, %v6455
  %v6488 = vadd.f32 %v6420, %v6456
  %v6489 = vadd.f32 %v6421, %v6457
  %v6490 = vadd.f32 %v6422, %v6458
  %v6491 = vadd.f32 %v6423, %v6459
  %v6492 = vadd.f32 %v6424, %v6460
  %v6493 = vadd.f32 %v6425, %v6461
  %v6494 = vadd.f32 %v6426, %v6462
  %v6495 = vadd.f32 %v6427, %v6463
  %v6496 = vadd.f32 %v6428, %v6464
  %v6497 = vadd.f32 %v6429, %v6465
  %v6498 = vlaneseq
  %v6499 = vshrl.u32 %v6498, 7
  %v6500 = vsub.s32 5, %v6499
  %v6501 = vrot.slane %v21, %v6500
  %v6502 = vmul.f32 %v6276, %v6501
  %v6503 = vmul.f32 %v6277, %v6501
  %v6504 = vmul.f32 %v6278, %v6501
  %v6505 = vmul.f32 %v6279, %v6501
  %v6506 = vmul.f32 %v6280, %v6501
  %v6507 = vmul.f32 %v6281, %v6501
  %v6508 = vmul.f32 %v6282, %v6501
  %v6509 = vmul.f32 %v6283, %v6501
  %v6510 = vmul.f32 %v6284, %v6501
  %v6511 = vmul.f32 %v6285, %v6501
  %v6512 = vmul.f32 %v6286, %v6501
  %v6513 = vmul.f32 %v6287, %v6501
  %v6514 = vmul.f32 %v6288, %v6501
  %v6515 = vmul.f32 %v6289, %v6501
  %v6516 = vmul.f32 %v6290, %v6501
  %v6517 = vmul.f32 %v6291, %v6501
  %v6518 = vmul.f32 %v6292, %v6501
  %v6519 = vmul.f32 %v6293, %v6501
  %v6520 = vmul.f32 %v6294, %v6501
  %v6521 = vmul.f32 %v6295, %v6501
  %v6522 = vmul.f32 %v6296, %v6501
  %v6523 = vmul.f32 %v6297, %v6501
  %v6524 = vmul.f32 %v6298, %v6501
  %v6525 = vmul.f32 %v6299, %v6501
  %v6526 = vmul.f32 %v6300, %v6501
  %v6527 = vmul.f32 %v6301, %v6501
  %v6528 = vmul.f32 %v6302, %v6501
  %v6529 = vmul.f32 %v6303, %v6501
  %v6530 = vmul.f32 %v6304, %v6501
  %v6531 = vmul.f32 %v6305, %v6501
  %v6532 = vmul.f32 %v6306, %v6501
  %v6533 = vmul.f32 %v6307, %v6501
  %v6534 = vadd.f32 %v6466, %v6502
  %v6535 = vadd.f32 %v6467, %v6503
  %v6536 = vadd.f32 %v6468, %v6504
  %v6537 = vadd.f32 %v6469, %v6505
  %v6538 = vadd.f32 %v6470, %v6506
  %v6539 = vadd.f32 %v6471, %v6507
  %v6540 = vadd.f32 %v6472, %v6508
  %v6541 = vadd.f32 %v6473, %v6509
  %v6542 = vadd.f32 %v6474, %v6510
  %v6543 = vadd.f32 %v6475, %v6511
  %v6544 = vadd.f32 %v6476, %v6512
  %v6545 = vadd.f32 %v6477, %v6513
  %v6546 = vadd.f32 %v6478, %v6514
  %v6547 = vadd.f32 %v6479, %v6515
  %v6548 = vadd.f32 %v6480, %v6516
  %v6549 = vadd.f32 %v6481, %v6517
  %v6550 = vadd.f32 %v6482, %v6518
  %v6551 = vadd.f32 %v6483, %v6519
  %v6552 = vadd.f32 %v6484, %v6520
  %v6553 = vadd.f32 %v6485, %v6521
  %v6554 = vadd.f32 %v6486, %v6522
  %v6555 = vadd.f32 %v6487, %v6523
  %v6556 = vadd.f32 %v6488, %v6524
  %v6557 = vadd.f32 %v6489, %v6525
  %v6558 = vadd.f32 %v6490, %v6526
  %v6559 = vadd.f32 %v6491, %v6527
  %v6560 = vadd.f32 %v6492, %v6528
  %v6561 = vadd.f32 %v6493, %v6529
  %v6562 = vadd.f32 %v6494, %v6530
  %v6563 = vadd.f32 %v6495, %v6531
  %v6564 = vadd.f32 %v6496, %v6532
  %v6565 = vadd.f32 %v6497, %v6533
  %v6566 = vlaneseq
  %v6567 = vshrl.u32 %v6566, 7
  %v6568 = vsub.s32 5, %v6567
  %v6569 = vrot.slane %v28, %v6568
  %v6570 = vmul.f32 %v6320, %v6569
  %v6571 = vmul.f32 %v6321, %v6569
  %v6572 = vmul.f32 %v6322, %v6569
  %v6573 = vmul.f32 %v6323, %v6569
  %v6574 = vmul.f32 %v6324, %v6569
  %v6575 = vmul.f32 %v6325, %v6569
  %v6576 = vmul.f32 %v6326, %v6569
  %v6577 = vmul.f32 %v6327, %v6569
  %v6578 = vmul.f32 %v6328, %v6569
  %v6579 = vmul.f32 %v6329, %v6569
  %v6580 = vmul.f32 %v6330, %v6569
  %v6581 = vmul.f32 %v6331, %v6569
  %v6582 = vmul.f32 %v6332, %v6569
  %v6583 = vmul.f32 %v6333, %v6569
  %v6584 = vmul.f32 %v6334, %v6569
  %v6585 = vmul.f32 %v6335, %v6569
  %v6586 = vmul.f32 %v6336, %v6569
  %v6587 = vmul.f32 %v6337, %v6569
  %v6588 = vmul.f32 %v6338, %v6569
  %v6589 = vmul.f32 %v6339, %v6569
  %v6590 = vmul.f32 %v6340, %v6569
  %v6591 = vmul.f32 %v6341, %v6569
  %v6592 = vmul.f32 %v6342, %v6569
  %v6593 = vmul.f32 %v6343, %v6569
  %v6594 = vmul.f32 %v6344, %v6569
  %v6595 = vmul.f32 %v6345, %v6569
  %v6596 = vmul.f32 %v6346, %v6569
  %v6597 = vmul.f32 %v6347, %v6569
  %v6598 = vmul.f32 %v6348, %v6569
  %v6599 = vmul.f32 %v6349, %v6569
  %v6600 = vmul.f32 %v6350, %v6569
  %v6601 = vmul.f32 %v6351, %v6569
  %v6602 = vadd.f32 %v6534, %v6570
  %v6603 = vadd.f32 %v6535, %v6571
  %v6604 = vadd.f32 %v6536, %v6572
  %v6605 = vadd.f32 %v6537, %v6573
  %v6606 = vadd.f32 %v6538, %v6574
  %v6607 = vadd.f32 %v6539, %v6575
  %v6608 = vadd.f32 %v6540, %v6576
  %v6609 = vadd.f32 %v6541, %v6577
  %v6610 = vadd.f32 %v6542, %v6578
  %v6611 = vadd.f32 %v6543, %v6579
  %v6612 = vadd.f32 %v6544, %v6580
  %v6613 = vadd.f32 %v6545, %v6581
  %v6614 = vadd.f32 %v6546, %v6582
  %v6615 = vadd.f32 %v6547, %v6583
  %v6616 = vadd.f32 %v6548, %v6584
  %v6617 = vadd.f32 %v6549, %v6585
  %v6618 = vadd.f32 %v6550, %v6586
  %v6619 = vadd.f32 %v6551, %v6587
  %v6620 = vadd.f32 %v6552, %v6588
  %v6621 = vadd.f32 %v6553, %v6589
  %v6622 = vadd.f32 %v6554, %v6590
  %v6623 = vadd.f32 %v6555, %v6591
  %v6624 = vadd.f32 %v6556, %v6592
  %v6625 = vadd.f32 %v6557, %v6593
  %v6626 = vadd.f32 %v6558, %v6594
  %v6627 = vadd.f32 %v6559, %v6595
  %v6628 = vadd.f32 %v6560, %v6596
  %v6629 = vadd.f32 %v6561, %v6597
  %v6630 = vadd.f32 %v6562, %v6598
  %v6631 = vadd.f32 %v6563, %v6599
  %v6632 = vadd.f32 %v6564, %v6600
  %v6633 = vadd.f32 %v6565, %v6601
  %v6634 = vlaneseq
  %v6635 = vshrl.u32 %v6634, 7
  %v6636 = vsub.s32 4, %v6635
  %v6637 = vrot.slane %v22, %v6636
  %v6638 = vmul.f32 %v6278, %v6637
  %v6639 = vmul.f32 %v6279, %v6637
  %v6640 = vmul.f32 %v6280, %v6637
  %v6641 = vmul.f32 %v6281, %v6637
  %v6642 = vmul.f32 %v6282, %v6637
  %v6643 = vmul.f32 %v6283, %v6637
  %v6644 = vmul.f32 %v6284, %v6637
  %v6645 = vmul.f32 %v6285, %v6637
  %v6646 = vmul.f32 %v6286, %v6637
  %v6647 = vmul.f32 %v6287, %v6637
  %v6648 = vmul.f32 %v6288, %v6637
  %v6649 = vmul.f32 %v6289, %v6637
  %v6650 = vmul.f32 %v6290, %v6637
  %v6651 = vmul.f32 %v6291, %v6637
  %v6652 = vmul.f32 %v6292, %v6637
  %v6653 = vmul.f32 %v6293, %v6637
  %v6654 = vmul.f32 %v6294, %v6637
  %v6655 = vmul.f32 %v6295, %v6637
  %v6656 = vmul.f32 %v6296, %v6637
  %v6657 = vmul.f32 %v6297, %v6637
  %v6658 = vmul.f32 %v6298, %v6637
  %v6659 = vmul.f32 %v6299, %v6637
  %v6660 = vmul.f32 %v6300, %v6637
  %v6661 = vmul.f32 %v6301, %v6637
  %v6662 = vmul.f32 %v6302, %v6637
  %v6663 = vmul.f32 %v6303, %v6637
  %v6664 = vmul.f32 %v6304, %v6637
  %v6665 = vmul.f32 %v6305, %v6637
  %v6666 = vmul.f32 %v6306, %v6637
  %v6667 = vmul.f32 %v6307, %v6637
  %v6668 = vmul.f32 %v6308, %v6637
  %v6669 = vmul.f32 %v6309, %v6637
  %v6670 = vadd.f32 %v6602, %v6638
  %v6671 = vadd.f32 %v6603, %v6639
  %v6672 = vadd.f32 %v6604, %v6640
  %v6673 = vadd.f32 %v6605, %v6641
  %v6674 = vadd.f32 %v6606, %v6642
  %v6675 = vadd.f32 %v6607, %v6643
  %v6676 = vadd.f32 %v6608, %v6644
  %v6677 = vadd.f32 %v6609, %v6645
  %v6678 = vadd.f32 %v6610, %v6646
  %v6679 = vadd.f32 %v6611, %v6647
  %v6680 = vadd.f32 %v6612, %v6648
  %v6681 = vadd.f32 %v6613, %v6649
  %v6682 = vadd.f32 %v6614, %v6650
  %v6683 = vadd.f32 %v6615, %v6651
  %v6684 = vadd.f32 %v6616, %v6652
  %v6685 = vadd.f32 %v6617, %v6653
  %v6686 = vadd.f32 %v6618, %v6654
  %v6687 = vadd.f32 %v6619, %v6655
  %v6688 = vadd.f32 %v6620, %v6656
  %v6689 = vadd.f32 %v6621, %v6657
  %v6690 = vadd.f32 %v6622, %v6658
  %v6691 = vadd.f32 %v6623, %v6659
  %v6692 = vadd.f32 %v6624, %v6660
  %v6693 = vadd.f32 %v6625, %v6661
  %v6694 = vadd.f32 %v6626, %v6662
  %v6695 = vadd.f32 %v6627, %v6663
  %v6696 = vadd.f32 %v6628, %v6664
  %v6697 = vadd.f32 %v6629, %v6665
  %v6698 = vadd.f32 %v6630, %v6666
  %v6699 = vadd.f32 %v6631, %v6667
  %v6700 = vadd.f32 %v6632, %v6668
  %v6701 = vadd.f32 %v6633, %v6669
  %v6702 = vlaneseq
  %v6703 = vshrl.u32 %v6702, 7
  %v6704 = vsub.s32 4, %v6703
  %v6705 = vrot.slane %v29, %v6704
  %v6706 = vmul.f32 %v6322, %v6705
  %v6707 = vmul.f32 %v6323, %v6705
  %v6708 = vmul.f32 %v6324, %v6705
  %v6709 = vmul.f32 %v6325, %v6705
  %v6710 = vmul.f32 %v6326, %v6705
  %v6711 = vmul.f32 %v6327, %v6705
  %v6712 = vmul.f32 %v6328, %v6705
  %v6713 = vmul.f32 %v6329, %v6705
  %v6714 = vmul.f32 %v6330, %v6705
  %v6715 = vmul.f32 %v6331, %v6705
  %v6716 = vmul.f32 %v6332, %v6705
  %v6717 = vmul.f32 %v6333, %v6705
  %v6718 = vmul.f32 %v6334, %v6705
  %v6719 = vmul.f32 %v6335, %v6705
  %v6720 = vmul.f32 %v6336, %v6705
  %v6721 = vmul.f32 %v6337, %v6705
  %v6722 = vmul.f32 %v6338, %v6705
  %v6723 = vmul.f32 %v6339, %v6705
  %v6724 = vmul.f32 %v6340, %v6705
  %v6725 = vmul.f32 %v6341, %v6705
  %v6726 = vmul.f32 %v6342, %v6705
  %v6727 = vmul.f32 %v6343, %v6705
  %v6728 = vmul.f32 %v6344, %v6705
  %v6729 = vmul.f32 %v6345, %v6705
  %v6730 = vmul.f32 %v6346, %v6705
  %v6731 = vmul.f32 %v6347, %v6705
  %v6732 = vmul.f32 %v6348, %v6705
  %v6733 = vmul.f32 %v6349, %v6705
  %v6734 = vmul.f32 %v6350, %v6705
  %v6735 = vmul.f32 %v6351, %v6705
  %v6736 = vmul.f32 %v6352, %v6705
  %v6737 = vmul.f32 %v6353, %v6705
  %v6738 = vadd.f32 %v6670, %v6706
  %v6739 = vadd.f32 %v6671, %v6707
  %v6740 = vadd.f32 %v6672, %v6708
  %v6741 = vadd.f32 %v6673, %v6709
  %v6742 = vadd.f32 %v6674, %v6710
  %v6743 = vadd.f32 %v6675, %v6711
  %v6744 = vadd.f32 %v6676, %v6712
  %v6745 = vadd.f32 %v6677, %v6713
  %v6746 = vadd.f32 %v6678, %v6714
  %v6747 = vadd.f32 %v6679, %v6715
  %v6748 = vadd.f32 %v6680, %v6716
  %v6749 = vadd.f32 %v6681, %v6717
  %v6750 = vadd.f32 %v6682, %v6718
  %v6751 = vadd.f32 %v6683, %v6719
  %v6752 = vadd.f32 %v6684, %v6720
  %v6753 = vadd.f32 %v6685, %v6721
  %v6754 = vadd.f32 %v6686, %v6722
  %v6755 = vadd.f32 %v6687, %v6723
  %v6756 = vadd.f32 %v6688, %v6724
  %v6757 = vadd.f32 %v6689, %v6725
  %v6758 = vadd.f32 %v6690, %v6726
  %v6759 = vadd.f32 %v6691, %v6727
  %v6760 = vadd.f32 %v6692, %v6728
  %v6761 = vadd.f32 %v6693, %v6729
  %v6762 = vadd.f32 %v6694, %v6730
  %v6763 = vadd.f32 %v6695, %v6731
  %v6764 = vadd.f32 %v6696, %v6732
  %v6765 = vadd.f32 %v6697, %v6733
  %v6766 = vadd.f32 %v6698, %v6734
  %v6767 = vadd.f32 %v6699, %v6735
  %v6768 = vadd.f32 %v6700, %v6736
  %v6769 = vadd.f32 %v6701, %v6737
  %v6770 = vlaneseq
  %v6771 = vshrl.u32 %v6770, 7
  %v6772 = vsub.s32 3, %v6771
  %v6773 = vrot.slane %v23, %v6772
  %v6774 = vmul.f32 %v6280, %v6773
  %v6775 = vmul.f32 %v6281, %v6773
  %v6776 = vmul.f32 %v6282, %v6773
  %v6777 = vmul.f32 %v6283, %v6773
  %v6778 = vmul.f32 %v6284, %v6773
  %v6779 = vmul.f32 %v6285, %v6773
  %v6780 = vmul.f32 %v6286, %v6773
  %v6781 = vmul.f32 %v6287, %v6773
  %v6782 = vmul.f32 %v6288, %v6773
  %v6783 = vmul.f32 %v6289, %v6773
  %v6784 = vmul.f32 %v6290, %v6773
  %v6785 = vmul.f32 %v6291, %v6773
  %v6786 = vmul.f32 %v6292, %v6773
  %v6787 = vmul.f32 %v6293, %v6773
  %v6788 = vmul.f32 %v6294, %v6773
  %v6789 = vmul.f32 %v6295, %v6773
  %v6790 = vmul.f32 %v6296, %v6773
  %v6791 = vmul.f32 %v6297, %v6773
  %v6792 = vmul.f32 %v6298, %v6773
  %v6793 = vmul.f32 %v6299, %v6773
  %v6794 = vmul.f32 %v6300, %v6773
  %v6795 = vmul.f32 %v6301, %v6773
  %v6796 = vmul.f32 %v6302, %v6773
  %v6797 = vmul.f32 %v6303, %v6773
  %v6798 = vmul.f32 %v6304, %v6773
  %v6799 = vmul.f32 %v6305, %v6773
  %v6800 = vmul.f32 %v6306, %v6773
  %v6801 = vmul.f32 %v6307, %v6773
  %v6802 = vmul.f32 %v6308, %v6773
  %v6803 = vmul.f32 %v6309, %v6773
  %v6804 = vmul.f32 %v6310, %v6773
  %v6805 = vmul.f32 %v6311, %v6773
  %v6806 = vadd.f32 %v6738, %v6774
  %v6807 = vadd.f32 %v6739, %v6775
  %v6808 = vadd.f32 %v6740, %v6776
  %v6809 = vadd.f32 %v6741, %v6777
  %v6810 = vadd.f32 %v6742, %v6778
  %v6811 = vadd.f32 %v6743, %v6779
  %v6812 = vadd.f32 %v6744, %v6780
  %v6813 = vadd.f32 %v6745, %v6781
  %v6814 = vadd.f32 %v6746, %v6782
  %v6815 = vadd.f32 %v6747, %v6783
  %v6816 = vadd.f32 %v6748, %v6784
  %v6817 = vadd.f32 %v6749, %v6785
  %v6818 = vadd.f32 %v6750, %v6786
  %v6819 = vadd.f32 %v6751, %v6787
  %v6820 = vadd.f32 %v6752, %v6788
  %v6821 = vadd.f32 %v6753, %v6789
  %v6822 = vadd.f32 %v6754, %v6790
  %v6823 = vadd.f32 %v6755, %v6791
  %v6824 = vadd.f32 %v6756, %v6792
  %v6825 = vadd.f32 %v6757, %v6793
  %v6826 = vadd.f32 %v6758, %v6794
  %v6827 = vadd.f32 %v6759, %v6795
  %v6828 = vadd.f32 %v6760, %v6796
  %v6829 = vadd.f32 %v6761, %v6797
  %v6830 = vadd.f32 %v6762, %v6798
  %v6831 = vadd.f32 %v6763, %v6799
  %v6832 = vadd.f32 %v6764, %v6800
  %v6833 = vadd.f32 %v6765, %v6801
  %v6834 = vadd.f32 %v6766, %v6802
  %v6835 = vadd.f32 %v6767, %v6803
  %v6836 = vadd.f32 %v6768, %v6804
  %v6837 = vadd.f32 %v6769, %v6805
  %v6838 = vlaneseq
  %v6839 = vshrl.u32 %v6838, 7
  %v6840 = vsub.s32 3, %v6839
  %v6841 = vrot.slane %v30, %v6840
  %v6842 = vmul.f32 %v6324, %v6841
  %v6843 = vmul.f32 %v6325, %v6841
  %v6844 = vmul.f32 %v6326, %v6841
  %v6845 = vmul.f32 %v6327, %v6841
  %v6846 = vmul.f32 %v6328, %v6841
  %v6847 = vmul.f32 %v6329, %v6841
  %v6848 = vmul.f32 %v6330, %v6841
  %v6849 = vmul.f32 %v6331, %v6841
  %v6850 = vmul.f32 %v6332, %v6841
  %v6851 = vmul.f32 %v6333, %v6841
  %v6852 = vmul.f32 %v6334, %v6841
  %v6853 = vmul.f32 %v6335, %v6841
  %v6854 = vmul.f32 %v6336, %v6841
  %v6855 = vmul.f32 %v6337, %v6841
  %v6856 = vmul.f32 %v6338, %v6841
  %v6857 = vmul.f32 %v6339, %v6841
  %v6858 = vmul.f32 %v6340, %v6841
  %v6859 = vmul.f32 %v6341, %v6841
  %v6860 = vmul.f32 %v6342, %v6841
  %v6861 = vmul.f32 %v6343, %v6841
  %v6862 = vmul.f32 %v6344, %v6841
  %v6863 = vmul.f32 %v6345, %v6841
  %v6864 = vmul.f32 %v6346, %v6841
  %v6865 = vmul.f32 %v6347, %v6841
  %v6866 = vmul.f32 %v6348, %v6841
  %v6867 = vmul.f32 %v6349, %v6841
  %v6868 = vmul.f32 %v6350, %v6841
  %v6869 = vmul.f32 %v6351, %v6841
  %v6870 = vmul.f32 %v6352, %v6841
  %v6871 = vmul.f32 %v6353, %v6841
  %v6872 = vmul.f32 %v6354, %v6841
  %v6873 = vmul.f32 %v6355, %v6841
  %v6874 = vadd.f32 %v6806, %v6842
  %v6875 = vadd.f32 %v6807, %v6843
  %v6876 = vadd.f32 %v6808, %v6844
  %v6877 = vadd.f32 %v6809, %v6845
  %v6878 = vadd.f32 %v6810, %v6846
  %v6879 = vadd.f32 %v6811, %v6847
  %v6880 = vadd.f32 %v6812, %v6848
  %v6881 = vadd.f32 %v6813, %v6849
  %v6882 = vadd.f32 %v6814, %v6850
  %v6883 = vadd.f32 %v6815, %v6851
  %v6884 = vadd.f32 %v6816, %v6852
  %v6885 = vadd.f32 %v6817, %v6853
  %v6886 = vadd.f32 %v6818, %v6854
  %v6887 = vadd.f32 %v6819, %v6855
  %v6888 = vadd.f32 %v6820, %v6856
  %v6889 = vadd.f32 %v6821, %v6857
  %v6890 = vadd.f32 %v6822, %v6858
  %v6891 = vadd.f32 %v6823, %v6859
  %v6892 = vadd.f32 %v6824, %v6860
  %v6893 = vadd.f32 %v6825, %v6861
  %v6894 = vadd.f32 %v6826, %v6862
  %v6895 = vadd.f32 %v6827, %v6863
  %v6896 = vadd.f32 %v6828, %v6864
  %v6897 = vadd.f32 %v6829, %v6865
  %v6898 = vadd.f32 %v6830, %v6866
  %v6899 = vadd.f32 %v6831, %v6867
  %v6900 = vadd.f32 %v6832, %v6868
  %v6901 = vadd.f32 %v6833, %v6869
  %v6902 = vadd.f32 %v6834, %v6870
  %v6903 = vadd.f32 %v6835, %v6871
  %v6904 = vadd.f32 %v6836, %v6872
  %v6905 = vadd.f32 %v6837, %v6873
  %v6906 = vlaneseq
  %v6907 = vshrl.u32 %v6906, 7
  %v6908 = vsub.s32 2, %v6907
  %v6909 = vrot.slane %v24, %v6908
  %v6910 = vmul.f32 %v6282, %v6909
  %v6911 = vmul.f32 %v6283, %v6909
  %v6912 = vmul.f32 %v6284, %v6909
  %v6913 = vmul.f32 %v6285, %v6909
  %v6914 = vmul.f32 %v6286, %v6909
  %v6915 = vmul.f32 %v6287, %v6909
  %v6916 = vmul.f32 %v6288, %v6909
  %v6917 = vmul.f32 %v6289, %v6909
  %v6918 = vmul.f32 %v6290, %v6909
  %v6919 = vmul.f32 %v6291, %v6909
  %v6920 = vmul.f32 %v6292, %v6909
  %v6921 = vmul.f32 %v6293, %v6909
  %v6922 = vmul.f32 %v6294, %v6909
  %v6923 = vmul.f32 %v6295, %v6909
  %v6924 = vmul.f32 %v6296, %v6909
  %v6925 = vmul.f32 %v6297, %v6909
  %v6926 = vmul.f32 %v6298, %v6909
  %v6927 = vmul.f32 %v6299, %v6909
  %v6928 = vmul.f32 %v6300, %v6909
  %v6929 = vmul.f32 %v6301, %v6909
  %v6930 = vmul.f32 %v6302, %v6909
  %v6931 = vmul.f32 %v6303, %v6909
  %v6932 = vmul.f32 %v6304, %v6909
  %v6933 = vmul.f32 %v6305, %v6909
  %v6934 = vmul.f32 %v6306, %v6909
  %v6935 = vmul.f32 %v6307, %v6909
  %v6936 = vmul.f32 %v6308, %v6909
  %v6937 = vmul.f32 %v6309, %v6909
  %v6938 = vmul.f32 %v6310, %v6909
  %v6939 = vmul.f32 %v6311, %v6909
  %v6940 = vmul.f32 %v6312, %v6909
  %v6941 = vmul.f32 %v6313, %v6909
  %v6942 = vadd.f32 %v6874, %v6910
  %v6943 = vadd.f32 %v6875, %v6911
  %v6944 = vadd.f32 %v6876, %v6912
  %v6945 = vadd.f32 %v6877, %v6913
  %v6946 = vadd.f32 %v6878, %v6914
  %v6947 = vadd.f32 %v6879, %v6915
  %v6948 = vadd.f32 %v6880, %v6916
  %v6949 = vadd.f32 %v6881, %v6917
  %v6950 = vadd.f32 %v6882, %v6918
  %v6951 = vadd.f32 %v6883, %v6919
  %v6952 = vadd.f32 %v6884, %v6920
  %v6953 = vadd.f32 %v6885, %v6921
  %v6954 = vadd.f32 %v6886, %v6922
  %v6955 = vadd.f32 %v6887, %v6923
  %v6956 = vadd.f32 %v6888, %v6924
  %v6957 = vadd.f32 %v6889, %v6925
  %v6958 = vadd.f32 %v6890, %v6926
  %v6959 = vadd.f32 %v6891, %v6927
  %v6960 = vadd.f32 %v6892, %v6928
  %v6961 = vadd.f32 %v6893, %v6929
  %v6962 = vadd.f32 %v6894, %v6930
  %v6963 = vadd.f32 %v6895, %v6931
  %v6964 = vadd.f32 %v6896, %v6932
  %v6965 = vadd.f32 %v6897, %v6933
  %v6966 = vadd.f32 %v6898, %v6934
  %v6967 = vadd.f32 %v6899, %v6935
  %v6968 = vadd.f32 %v6900, %v6936
  %v6969 = vadd.f32 %v6901, %v6937
  %v6970 = vadd.f32 %v6902, %v6938
  %v6971 = vadd.f32 %v6903, %v6939
  %v6972 = vadd.f32 %v6904, %v6940
  %v6973 = vadd.f32 %v6905, %v6941
  %v6974 = vlaneseq
  %v6975 = vshrl.u32 %v6974, 7
  %v6976 = vsub.s32 2, %v6975
  %v6977 = vrot.slane %v31, %v6976
  %v6978 = vmul.f32 %v6326, %v6977
  %v6979 = vmul.f32 %v6327, %v6977
  %v6980 = vmul.f32 %v6328, %v6977
  %v6981 = vmul.f32 %v6329, %v6977
  %v6982 = vmul.f32 %v6330, %v6977
  %v6983 = vmul.f32 %v6331, %v6977
  %v6984 = vmul.f32 %v6332, %v6977
  %v6985 = vmul.f32 %v6333, %v6977
  %v6986 = vmul.f32 %v6334, %v6977
  %v6987 = vmul.f32 %v6335, %v6977
  %v6988 = vmul.f32 %v6336, %v6977
  %v6989 = vmul.f32 %v6337, %v6977
  %v6990 = vmul.f32 %v6338, %v6977
  %v6991 = vmul.f32 %v6339, %v6977
  %v6992 = vmul.f32 %v6340, %v6977
  %v6993 = vmul.f32 %v6341, %v6977
  %v6994 = vmul.f32 %v6342, %v6977
  %v6995 = vmul.f32 %v6343, %v6977
  %v6996 = vmul.f32 %v6344, %v6977
  %v6997 = vmul.f32 %v6345, %v6977
  %v6998 = vmul.f32 %v6346, %v6977
  %v6999 = vmul.f32 %v6347, %v6977
  %v7000 = vmul.f32 %v6348, %v6977
  %v7001 = vmul.f32 %v6349, %v6977
  %v7002 = vmul.f32 %v6350, %v6977
  %v7003 = vmul.f32 %v6351, %v6977
  %v7004 = vmul.f32 %v6352, %v6977
  %v7005 = vmul.f32 %v6353, %v6977
  %v7006 = vmul.f32 %v6354, %v6977
  %v7007 = vmul.f32 %v6355, %v6977
  %v7008 = vmul.f32 %v6356, %v6977
  %v7009 = vmul.f32 %v6357, %v6977
  %v7010 = vadd.f32 %v6942, %v6978
  %v7011 = vadd.f32 %v6943, %v6979
  %v7012 = vadd.f32 %v6944, %v6980
  %v7013 = vadd.f32 %v6945, %v6981
  %v7014 = vadd.f32 %v6946, %v6982
  %v7015 = vadd.f32 %v6947, %v6983
  %v7016 = vadd.f32 %v6948, %v6984
  %v7017 = vadd.f32 %v6949, %v6985
  %v7018 = vadd.f32 %v6950, %v6986
  %v7019 = vadd.f32 %v6951, %v6987
  %v7020 = vadd.f32 %v6952, %v6988
  %v7021 = vadd.f32 %v6953, %v6989
  %v7022 = vadd.f32 %v6954, %v6990
  %v7023 = vadd.f32 %v6955, %v6991
  %v7024 = vadd.f32 %v6956, %v6992
  %v7025 = vadd.f32 %v6957, %v6993
  %v7026 = vadd.f32 %v6958, %v6994
  %v7027 = vadd.f32 %v6959, %v6995
  %v7028 = vadd.f32 %v6960, %v6996
  %v7029 = vadd.f32 %v6961, %v6997
  %v7030 = vadd.f32 %v6962, %v6998
  %v7031 = vadd.f32 %v6963, %v6999
  %v7032 = vadd.f32 %v6964, %v7000
  %v7033 = vadd.f32 %v6965, %v7001
  %v7034 = vadd.f32 %v6966, %v7002
  %v7035 = vadd.f32 %v6967, %v7003
  %v7036 = vadd.f32 %v6968, %v7004
  %v7037 = vadd.f32 %v6969, %v7005
  %v7038 = vadd.f32 %v6970, %v7006
  %v7039 = vadd.f32 %v6971, %v7007
  %v7040 = vadd.f32 %v6972, %v7008
  %v7041 = vadd.f32 %v6973, %v7009
  %v7042 = vlaneseq
  %v7043 = vshrl.u32 %v7042, 7
  %v7044 = vsub.s32 1, %v7043
  %v7045 = vrot.slane %v25, %v7044
  %v7046 = vmul.f32 %v6284, %v7045
  %v7047 = vmul.f32 %v6285, %v7045
  %v7048 = vmul.f32 %v6286, %v7045
  %v7049 = vmul.f32 %v6287, %v7045
  %v7050 = vmul.f32 %v6288, %v7045
  %v7051 = vmul.f32 %v6289, %v7045
  %v7052 = vmul.f32 %v6290, %v7045
  %v7053 = vmul.f32 %v6291, %v7045
  %v7054 = vmul.f32 %v6292, %v7045
  %v7055 = vmul.f32 %v6293, %v7045
  %v7056 = vmul.f32 %v6294, %v7045
  %v7057 = vmul.f32 %v6295, %v7045
  %v7058 = vmul.f32 %v6296, %v7045
  %v7059 = vmul.f32 %v6297, %v7045
  %v7060 = vmul.f32 %v6298, %v7045
  %v7061 = vmul.f32 %v6299, %v7045
  %v7062 = vmul.f32 %v6300, %v7045
  %v7063 = vmul.f32 %v6301, %v7045
  %v7064 = vmul.f32 %v6302, %v7045
  %v7065 = vmul.f32 %v6303, %v7045
  %v7066 = vmul.f32 %v6304, %v7045
  %v7067 = vmul.f32 %v6305, %v7045
  %v7068 = vmul.f32 %v6306, %v7045
  %v7069 = vmul.f32 %v6307, %v7045
  %v7070 = vmul.f32 %v6308, %v7045
  %v7071 = vmul.f32 %v6309, %v7045
  %v7072 = vmul.f32 %v6310, %v7045
  %v7073 = vmul.f32 %v6311, %v7045
  %v7074 = vmul.f32 %v6312, %v7045
  %v7075 = vmul.f32 %v6313, %v7045
  %v7076 = vmul.f32 %v6314, %v7045
  %v7077 = vmul.f32 %v6315, %v7045
  %v7078 = vadd.f32 %v7010, %v7046
  %v7079 = vadd.f32 %v7011, %v7047
  %v7080 = vadd.f32 %v7012, %v7048
  %v7081 = vadd.f32 %v7013, %v7049
  %v7082 = vadd.f32 %v7014, %v7050
  %v7083 = vadd.f32 %v7015, %v7051
  %v7084 = vadd.f32 %v7016, %v7052
  %v7085 = vadd.f32 %v7017, %v7053
  %v7086 = vadd.f32 %v7018, %v7054
  %v7087 = vadd.f32 %v7019, %v7055
  %v7088 = vadd.f32 %v7020, %v7056
  %v7089 = vadd.f32 %v7021, %v7057
  %v7090 = vadd.f32 %v7022, %v7058
  %v7091 = vadd.f32 %v7023, %v7059
  %v7092 = vadd.f32 %v7024, %v7060
  %v7093 = vadd.f32 %v7025, %v7061
  %v7094 = vadd.f32 %v7026, %v7062
  %v7095 = vadd.f32 %v7027, %v7063
  %v7096 = vadd.f32 %v7028, %v7064
  %v7097 = vadd.f32 %v7029, %v7065
  %v7098 = vadd.f32 %v7030, %v7066
  %v7099 = vadd.f32 %v7031, %v7067
  %v7100 = vadd.f32 %v7032, %v7068
  %v7101 = vadd.f32 %v7033, %v7069
  %v7102 = vadd.f32 %v7034, %v7070
  %v7103 = vadd.f32 %v7035, %v7071
  %v7104 = vadd.f32 %v7036, %v7072
  %v7105 = vadd.f32 %v7037, %v7073
  %v7106 = vadd.f32 %v7038, %v7074
  %v7107 = vadd.f32 %v7039, %v7075
  %v7108 = vadd.f32 %v7040, %v7076
  %v7109 = vadd.f32 %v7041, %v7077
  %v7110 = vlaneseq
  %v7111 = vshrl.u32 %v7110, 7
  %v7112 = vsub.s32 1, %v7111
  %v7113 = vrot.slane %v32, %v7112
  %v7114 = vmul.f32 %v6328, %v7113
  %v7115 = vmul.f32 %v6329, %v7113
  %v7116 = vmul.f32 %v6330, %v7113
  %v7117 = vmul.f32 %v6331, %v7113
  %v7118 = vmul.f32 %v6332, %v7113
  %v7119 = vmul.f32 %v6333, %v7113
  %v7120 = vmul.f32 %v6334, %v7113
  %v7121 = vmul.f32 %v6335, %v7113
  %v7122 = vmul.f32 %v6336, %v7113
  %v7123 = vmul.f32 %v6337, %v7113
  %v7124 = vmul.f32 %v6338, %v7113
  %v7125 = vmul.f32 %v6339, %v7113
  %v7126 = vmul.f32 %v6340, %v7113
  %v7127 = vmul.f32 %v6341, %v7113
  %v7128 = vmul.f32 %v6342, %v7113
  %v7129 = vmul.f32 %v6343, %v7113
  %v7130 = vmul.f32 %v6344, %v7113
  %v7131 = vmul.f32 %v6345, %v7113
  %v7132 = vmul.f32 %v6346, %v7113
  %v7133 = vmul.f32 %v6347, %v7113
  %v7134 = vmul.f32 %v6348, %v7113
  %v7135 = vmul.f32 %v6349, %v7113
  %v7136 = vmul.f32 %v6350, %v7113
  %v7137 = vmul.f32 %v6351, %v7113
  %v7138 = vmul.f32 %v6352, %v7113
  %v7139 = vmul.f32 %v6353, %v7113
  %v7140 = vmul.f32 %v6354, %v7113
  %v7141 = vmul.f32 %v6355, %v7113
  %v7142 = vmul.f32 %v6356, %v7113
  %v7143 = vmul.f32 %v6357, %v7113
  %v7144 = vmul.f32 %v6358, %v7113
  %v7145 = vmul.f32 %v6359, %v7113
  %v7146 = vadd.f32 %v7078, %v7114
  %v7147 = vadd.f32 %v7079, %v7115
  %v7148 = vadd.f32 %v7080, %v7116
  %v7149 = vadd.f32 %v7081, %v7117
  %v7150 = vadd.f32 %v7082, %v7118
  %v7151 = vadd.f32 %v7083, %v7119
  %v7152 = vadd.f32 %v7084, %v7120
  %v7153 = vadd.f32 %v7085, %v7121
  %v7154 = vadd.f32 %v7086, %v7122
  %v7155 = vadd.f32 %v7087, %v7123
  %v7156 = vadd.f32 %v7088, %v7124
  %v7157 = vadd.f32 %v7089, %v7125
  %v7158 = vadd.f32 %v7090, %v7126
  %v7159 = vadd.f32 %v7091, %v7127
  %v7160 = vadd.f32 %v7092, %v7128
  %v7161 = vadd.f32 %v7093, %v7129
  %v7162 = vadd.f32 %v7094, %v7130
  %v7163 = vadd.f32 %v7095, %v7131
  %v7164 = vadd.f32 %v7096, %v7132
  %v7165 = vadd.f32 %v7097, %v7133
  %v7166 = vadd.f32 %v7098, %v7134
  %v7167 = vadd.f32 %v7099, %v7135
  %v7168 = vadd.f32 %v7100, %v7136
  %v7169 = vadd.f32 %v7101, %v7137
  %v7170 = vadd.f32 %v7102, %v7138
  %v7171 = vadd.f32 %v7103, %v7139
  %v7172 = vadd.f32 %v7104, %v7140
  %v7173 = vadd.f32 %v7105, %v7141
  %v7174 = vadd.f32 %v7106, %v7142
  %v7175 = vadd.f32 %v7107, %v7143
  %v7176 = vadd.f32 %v7108, %v7144
  %v7177 = vadd.f32 %v7109, %v7145
  %v7178 = vlaneseq
  %v7179 = vshrl.u32 %v7178, 7
  %v7180 = vsub.s32 0, %v7179
  %v7181 = vrot.slane %v26, %v7180
  %v7182 = vmul.f32 %v6286, %v7181
  %v7183 = vmul.f32 %v6287, %v7181
  %v7184 = vmul.f32 %v6288, %v7181
  %v7185 = vmul.f32 %v6289, %v7181
  %v7186 = vmul.f32 %v6290, %v7181
  %v7187 = vmul.f32 %v6291, %v7181
  %v7188 = vmul.f32 %v6292, %v7181
  %v7189 = vmul.f32 %v6293, %v7181
  %v7190 = vmul.f32 %v6294, %v7181
  %v7191 = vmul.f32 %v6295, %v7181
  %v7192 = vmul.f32 %v6296, %v7181
  %v7193 = vmul.f32 %v6297, %v7181
  %v7194 = vmul.f32 %v6298, %v7181
  %v7195 = vmul.f32 %v6299, %v7181
  %v7196 = vmul.f32 %v6300, %v7181
  %v7197 = vmul.f32 %v6301, %v7181
  %v7198 = vmul.f32 %v6302, %v7181
  %v7199 = vmul.f32 %v6303, %v7181
  %v7200 = vmul.f32 %v6304, %v7181
  %v7201 = vmul.f32 %v6305, %v7181
  %v7202 = vmul.f32 %v6306, %v7181
  %v7203 = vmul.f32 %v6307, %v7181
  %v7204 = vmul.f32 %v6308, %v7181
  %v7205 = vmul.f32 %v6309, %v7181
  %v7206 = vmul.f32 %v6310, %v7181
  %v7207 = vmul.f32 %v6311, %v7181
  %v7208 = vmul.f32 %v6312, %v7181
  %v7209 = vmul.f32 %v6313, %v7181
  %v7210 = vmul.f32 %v6314, %v7181
  %v7211 = vmul.f32 %v6315, %v7181
  %v7212 = vmul.f32 %v6316, %v7181
  %v7213 = vmul.f32 %v6317, %v7181
  %v7214 = vadd.f32 %v7146, %v7182
  %v7215 = vadd.f32 %v7147, %v7183
  %v7216 = vadd.f32 %v7148, %v7184
  %v7217 = vadd.f32 %v7149, %v7185
  %v7218 = vadd.f32 %v7150, %v7186
  %v7219 = vadd.f32 %v7151, %v7187
  %v7220 = vadd.f32 %v7152, %v7188
  %v7221 = vadd.f32 %v7153, %v7189
  %v7222 = vadd.f32 %v7154, %v7190
  %v7223 = vadd.f32 %v7155, %v7191
  %v7224 = vadd.f32 %v7156, %v7192
  %v7225 = vadd.f32 %v7157, %v7193
  %v7226 = vadd.f32 %v7158, %v7194
  %v7227 = vadd.f32 %v7159, %v7195
  %v7228 = vadd.f32 %v7160, %v7196
  %v7229 = vadd.f32 %v7161, %v7197
  %v7230 = vadd.f32 %v7162, %v7198
  %v7231 = vadd.f32 %v7163, %v7199
  %v7232 = vadd.f32 %v7164, %v7200
  %v7233 = vadd.f32 %v7165, %v7201
  %v7234 = vadd.f32 %v7166, %v7202
  %v7235 = vadd.f32 %v7167, %v7203
  %v7236 = vadd.f32 %v7168, %v7204
  %v7237 = vadd.f32 %v7169, %v7205
  %v7238 = vadd.f32 %v7170, %v7206
  %v7239 = vadd.f32 %v7171, %v7207
  %v7240 = vadd.f32 %v7172, %v7208
  %v7241 = vadd.f32 %v7173, %v7209
  %v7242 = vadd.f32 %v7174, %v7210
  %v7243 = vadd.f32 %v7175, %v7211
  %v7244 = vadd.f32 %v7176, %v7212
  %v7245 = vadd.f32 %v7177, %v7213
  %v7246 = vlaneseq
  %v7247 = vshrl.u32 %v7246, 7
  %v7248 = vsub.s32 0, %v7247
  %v7249 = vrot.slane %v33, %v7248
  %v7250 = vmul.f32 %v6330, %v7249
  %v7251 = vmul.f32 %v6331, %v7249
  %v7252 = vmul.f32 %v6332, %v7249
  %v7253 = vmul.f32 %v6333, %v7249
  %v7254 = vmul.f32 %v6334, %v7249
  %v7255 = vmul.f32 %v6335, %v7249
  %v7256 = vmul.f32 %v6336, %v7249
  %v7257 = vmul.f32 %v6337, %v7249
  %v7258 = vmul.f32 %v6338, %v7249
  %v7259 = vmul.f32 %v6339, %v7249
  %v7260 = vmul.f32 %v6340, %v7249
  %v7261 = vmul.f32 %v6341, %v7249
  %v7262 = vmul.f32 %v6342, %v7249
  %v7263 = vmul.f32 %v6343, %v7249
  %v7264 = vmul.f32 %v6344, %v7249
  %v7265 = vmul.f32 %v6345, %v7249
  %v7266 = vmul.f32 %v6346, %v7249
  %v7267 = vmul.f32 %v6347, %v7249
  %v7268 = vmul.f32 %v6348, %v7249
  %v7269 = vmul.f32 %v6349, %v7249
  %v7270 = vmul.f32 %v6350, %v7249
  %v7271 = vmul.f32 %v6351, %v7249
  %v7272 = vmul.f32 %v6352, %v7249
  %v7273 = vmul.f32 %v6353, %v7249
  %v7274 = vmul.f32 %v6354, %v7249
  %v7275 = vmul.f32 %v6355, %v7249
  %v7276 = vmul.f32 %v6356, %v7249
  %v7277 = vmul.f32 %v6357, %v7249
  %v7278 = vmul.f32 %v6358, %v7249
  %v7279 = vmul.f32 %v6359, %v7249
  %v7280 = vmul.f32 %v6360, %v7249
  %v7281 = vmul.f32 %v6361, %v7249
  %v7282 = vadd.f32 %v7214, %v7250
  %v7283 = vadd.f32 %v7215, %v7251
  %v7284 = vadd.f32 %v7216, %v7252
  %v7285 = vadd.f32 %v7217, %v7253
  %v7286 = vadd.f32 %v7218, %v7254
  %v7287 = vadd.f32 %v7219, %v7255
  %v7288 = vadd.f32 %v7220, %v7256
  %v7289 = vadd.f32 %v7221, %v7257
  %v7290 = vadd.f32 %v7222, %v7258
  %v7291 = vadd.f32 %v7223, %v7259
  %v7292 = vadd.f32 %v7224, %v7260
  %v7293 = vadd.f32 %v7225, %v7261
  %v7294 = vadd.f32 %v7226, %v7262
  %v7295 = vadd.f32 %v7227, %v7263
  %v7296 = vadd.f32 %v7228, %v7264
  %v7297 = vadd.f32 %v7229, %v7265
  %v7298 = vadd.f32 %v7230, %v7266
  %v7299 = vadd.f32 %v7231, %v7267
  %v7300 = vadd.f32 %v7232, %v7268
  %v7301 = vadd.f32 %v7233, %v7269
  %v7302 = vadd.f32 %v7234, %v7270
  %v7303 = vadd.f32 %v7235, %v7271
  %v7304 = vadd.f32 %v7236, %v7272
  %v7305 = vadd.f32 %v7237, %v7273
  %v7306 = vadd.f32 %v7238, %v7274
  %v7307 = vadd.f32 %v7239, %v7275
  %v7308 = vadd.f32 %v7240, %v7276
  %v7309 = vadd.f32 %v7241, %v7277
  %v7310 = vadd.f32 %v7242, %v7278
  %v7311 = vadd.f32 %v7243, %v7279
  %v7312 = vadd.f32 %v7244, %v7280
  %v7313 = vadd.f32 %v7245, %v7281
  %v7314 = vld [vmem:[%s4] sm:$0x1]
  %v7316 = vlaneseq
  %v7317 = vshrl.u32 %v7316, 7
  %v7318 = vsub.s32 0, %v7317
  %v7319 = vrot.slane %v7314, %v7318
  %v7321 = vadd.f32 %v7282, %v7319
  %v7322 = vadd.f32 %v7283, %v7319
  %v7323 = vadd.f32 %v7284, %v7319
  %v7324 = vadd.f32 %v7285, %v7319
  %v7325 = vadd.f32 %v7286, %v7319
  %v7326 = vadd.f32 %v7287, %v7319
  %v7327 = vadd.f32 %v7288, %v7319
  %v7328 = vadd.f32 %v7289, %v7319
  %v7329 = vadd.f32 %v7290, %v7319
  %v7330 = vadd.f32 %v7291, %v7319
  %v7331 = vadd.f32 %v7292, %v7319
  %v7332 = vadd.f32 %v7293, %v7319
  %v7333 = vadd.f32 %v7294, %v7319
  %v7334 = vadd.f32 %v7295, %v7319
  %v7335 = vadd.f32 %v7296, %v7319
  %v7336 = vadd.f32 %v7297, %v7319
  %v7337 = vadd.f32 %v7298, %v7319
  %v7338 = vadd.f32 %v7299, %v7319
  %v7339 = vadd.f32 %v7300, %v7319
  %v7340 = vadd.f32 %v7301, %v7319
  %v7341 = vadd.f32 %v7302, %v7319
  %v7342 = vadd.f32 %v7303, %v7319
  %v7343 = vadd.f32 %v7304, %v7319
  %v7344 = vadd.f32 %v7305, %v7319
  %v7345 = vadd.f32 %v7306, %v7319
  %v7346 = vadd.f32 %v7307, %v7319
  %v7347 = vadd.f32 %v7308, %v7319
  %v7348 = vadd.f32 %v7309, %v7319
  %v7349 = vadd.f32 %v7310, %v7319
  %v7350 = vadd.f32 %v7311, %v7319
  %v7351 = vadd.f32 %v7312, %v7319
  %v7352 = vadd.f32 %v7313, %v7319
  %v7353 = vsub.f32 0.0, %v7321
  %v7354 = vsub.f32 0.0, %v7322
  %v7355 = vsub.f32 0.0, %v7323
  %v7356 = vsub.f32 0.0, %v7324
  %v7357 = vsub.f32 0.0, %v7325
  %v7358 = vsub.f32 0.0, %v7326
  %v7359 = vsub.f32 0.0, %v7327
  %v7360 = vsub.f32 0.0, %v7328
  %v7361 = vsub.f32 0.0, %v7329
  %v7362 = vsub.f32 0.0, %v7330
  %v7363 = vsub.f32 0.0, %v7331
  %v7364 = vsub.f32 0.0, %v7332
  %v7365 = vsub.f32 0.0, %v7333
  %v7366 = vsub.f32 0.0, %v7334
  %v7367 = vsub.f32 0.0, %v7335
  %v7368 = vsub.f32 0.0, %v7336
  %v7369 = vsub.f32 0.0, %v7337
  %v7370 = vsub.f32 0.0, %v7338
  %v7371 = vsub.f32 0.0, %v7339
  %v7372 = vsub.f32 0.0, %v7340
  %v7373 = vsub.f32 0.0, %v7341
  %v7374 = vsub.f32 0.0, %v7342
  %v7375 = vsub.f32 0.0, %v7343
  %v7376 = vsub.f32 0.0, %v7344
  %v7377 = vsub.f32 0.0, %v7345
  %v7378 = vsub.f32 0.0, %v7346
  %v7379 = vsub.f32 0.0, %v7347
  %v7380 = vsub.f32 0.0, %v7348
  %v7381 = vsub.f32 0.0, %v7349
  %v7382 = vsub.f32 0.0, %v7350
  %v7383 = vsub.f32 0.0, %v7351
  %v7384 = vsub.f32 0.0, %v7352
  %v7385 = vmul.f32 %v7353, 1.442695
  %v7386 = vpow.pop %v7385
  %v7387 = vmul.f32 %v7354, 1.442695
  %v7388 = vpow.pop %v7387
  %v7389 = vmul.f32 %v7355, 1.442695
  %v7390 = vpow.pop %v7389
  %v7391 = vmul.f32 %v7356, 1.442695
  %v7392 = vpow.pop %v7391
  %v7393 = vmul.f32 %v7357, 1.442695
  %v7394 = vpow.pop %v7393
  %v7395 = vmul.f32 %v7358, 1.442695
  %v7396 = vpow.pop %v7395
  %v7397 = vmul.f32 %v7359, 1.442695
  %v7398 = vpow.pop %v7397
  %v7399 = vmul.f32 %v7360, 1.442695
  %v7400 = vpow.pop %v7399
  %v7401 = vmul.f32 %v7361, 1.442695
  %v7402 = vpow.pop %v7401
  %v7403 = vmul.f32 %v7362, 1.442695
  %v7404 = vpow.pop %v7403
  %v7405 = vmul.f32 %v7363, 1.442695
  %v7406 = vpow.pop %v7405
  %v7407 = vmul.f32 %v7364, 1.442695
  %v7408 = vpow.pop %v7407
  %v7409 = vmul.f32 %v7365, 1.442695
  %v7410 = vpow.pop %v7409
  %v7411 = vmul.f32 %v7366, 1.442695
  %v7412 = vpow.pop %v7411
  %v7413 = vmul.f32 %v7367, 1.442695
  %v7414 = vpow.pop %v7413
  %v7415 = vmul.f32 %v7368, 1.442695
  %v7416 = vpow.pop %v7415
  %v7417 = vmul.f32 %v7369, 1.442695
  %v7418 = vpow.pop %v7417
  %v7419 = vmul.f32 %v7370, 1.442695
  %v7420 = vpow.pop %v7419
  %v7421 = vmul.f32 %v7371, 1.442695
  %v7422 = vpow.pop %v7421
  %v7423 = vmul.f32 %v7372, 1.442695
  %v7424 = vpow.pop %v7423
  %v7425 = vmul.f32 %v7373, 1.442695
  %v7426 = vpow.pop %v7425
  %v7427 = vmul.f32 %v7374, 1.442695
  %v7428 = vpow.pop %v7427
  %v7429 = vmul.f32 %v7375, 1.442695
  %v7430 = vpow.pop %v7429
  %v7431 = vmul.f32 %v7376, 1.442695
  %v7432 = vpow.pop %v7431
  %v7433 = vmul.f32 %v7377, 1.442695
  %v7434 = vpow.pop %v7433
  %v7435 = vmul.f32 %v7378, 1.442695
  %v7436 = vpow.pop %v7435
  %v7437 = vmul.f32 %v7379, 1.442695
  %v7438 = vpow.pop %v7437
  %v7439 = vmul.f32 %v7380, 1.442695
  %v7440 = vpow.pop %v7439
  %v7441 = vmul.f32 %v7381, 1.442695
  %v7442 = vpow.pop %v7441
  %v7443 = vmul.f32 %v7382, 1.442695
  %v7444 = vpow.pop %v7443
  %v7445 = vmul.f32 %v7383, 1.442695
  %v7446 = vpow.pop %v7445
  %v7447 = vmul.f32 %v7384, 1.442695
  %v7448 = vpow.pop %v7447
  %v7449 = vadd.f32 %v7386, 1.0
  %v7450 = vadd.f32 %v7388, 1.0
  %v7451 = vadd.f32 %v7390, 1.0
  %v7452 = vadd.f32 %v7392, 1.0
  %v7453 = vadd.f32 %v7394, 1.0
  %v7454 = vadd.f32 %v7396, 1.0
  %v7455 = vadd.f32 %v7398, 1.0
  %v7456 = vadd.f32 %v7400, 1.0
  %v7457 = vadd.f32 %v7402, 1.0
  %v7458 = vadd.f32 %v7404, 1.0
  %v7459 = vadd.f32 %v7406, 1.0
  %v7460 = vadd.f32 %v7408, 1.0
  %v7461 = vadd.f32 %v7410, 1.0
  %v7462 = vadd.f32 %v7412, 1.0
  %v7463 = vadd.f32 %v7414, 1.0
  %v7464 = vadd.f32 %v7416, 1.0
  %v7465 = vadd.f32 %v7418, 1.0
  %v7466 = vadd.f32 %v7420, 1.0
  %v7467 = vadd.f32 %v7422, 1.0
  %v7468 = vadd.f32 %v7424, 1.0
  %v7469 = vadd.f32 %v7426, 1.0
  %v7470 = vadd.f32 %v7428, 1.0
  %v7471 = vadd.f32 %v7430, 1.0
  %v7472 = vadd.f32 %v7432, 1.0
  %v7473 = vadd.f32 %v7434, 1.0
  %v7474 = vadd.f32 %v7436, 1.0
  %v7475 = vadd.f32 %v7438, 1.0
  %v7476 = vadd.f32 %v7440, 1.0
  %v7477 = vadd.f32 %v7442, 1.0
  %v7478 = vadd.f32 %v7444, 1.0
  %v7479 = vadd.f32 %v7446, 1.0
  %v7480 = vadd.f32 %v7448, 1.0
  %v7481 = vrcp.pop %v7449
  %v7482 = vmul.f32 1.0, %v7481
  %v7483 = vrcp.pop %v7450
  %v7484 = vmul.f32 1.0, %v7483
  %v7485 = vrcp.pop %v7451
  %v7486 = vmul.f32 1.0, %v7485
  %v7487 = vrcp.pop %v7452
  %v7488 = vmul.f32 1.0, %v7487
  %v7489 = vrcp.pop %v7453
  %v7490 = vmul.f32 1.0, %v7489
  %v7491 = vrcp.pop %v7454
  %v7492 = vmul.f32 1.0, %v7491
  %v7493 = vrcp.pop %v7455
  %v7494 = vmul.f32 1.0, %v7493
  %v7495 = vrcp.pop %v7456
  %v7496 = vmul.f32 1.0, %v7495
  %v7497 = vrcp.pop %v7457
  %v7498 = vmul.f32 1.0, %v7497
  %v7499 = vrcp.pop %v7458
  %v7500 = vmul.f32 1.0, %v7499
  %v7501 = vrcp.pop %v7459
  %v7502 = vmul.f32 1.0, %v7501
  %v7503 = vrcp.pop %v7460
  %v7504 = vmul.f32 1.0, %v7503
  %v7505 = vrcp.pop %v7461
  %v7506 = vmul.f32 1.0, %v7505
  %v7507 = vrcp.pop %v7462
  %v7508 = vmul.f32 1.0, %v7507
  %v7509 = vrcp.pop %v7463
  %v7510 = vmul.f32 1.0, %v7509
  %v7511 = vrcp.pop %v7464
  %v7512 = vmul.f32 1.0, %v7511
  %v7513 = vrcp.pop %v7465
  %v7514 = vmul.f32 1.0, %v7513
  %v7515 = vrcp.pop %v7466
  %v7516 = vmul.f32 1.0, %v7515
  %v7517 = vrcp.pop %v7467
  %v7518 = vmul.f32 1.0, %v7517
  %v7519 = vrcp.pop %v7468
  %v7520 = vmul.f32 1.0, %v7519
  %v7521 = vrcp.pop %v7469
  %v7522 = vmul.f32 1.0, %v7521
  %v7523 = vrcp.pop %v7470
  %v7524 = vmul.f32 1.0, %v7523
  %v7525 = vrcp.pop %v7471
  %v7526 = vmul.f32 1.0, %v7525
  %v7527 = vrcp.pop %v7472
  %v7528 = vmul.f32 1.0, %v7527
  %v7529 = vrcp.pop %v7473
  %v7530 = vmul.f32 1.0, %v7529
  %v7531 = vrcp.pop %v7474
  %v7532 = vmul.f32 1.0, %v7531
  %v7533 = vrcp.pop %v7475
  %v7534 = vmul.f32 1.0, %v7533
  %v7535 = vrcp.pop %v7476
  %v7536 = vmul.f32 1.0, %v7535
  %v7537 = vrcp.pop %v7477
  %v7538 = vmul.f32 1.0, %v7537
  %v7539 = vrcp.pop %v7478
  %v7540 = vmul.f32 1.0, %v7539
  %v7541 = vrcp.pop %v7479
  %v7542 = vmul.f32 1.0, %v7541
  %v7543 = vrcp.pop %v7480
  %v7544 = vmul.f32 1.0, %v7543
  %vm7545 = vcmask 64512
  %7546 = vst.msk [vmem:[%s5] sm:$0xff] %vm7545, %v7482
  %7547 = vst.msk [vmem:[%s5 + $0x8] sm:$0xff] %vm7545, %v7484
  %7548 = vst.msk [vmem:[%s5 + $0x10] sm:$0xff] %vm7545, %v7486
  %7549 = vst.msk [vmem:[%s5 + $0x18] sm:$0xff] %vm7545, %v7488
  %7550 = vst.msk [vmem:[%s5 + $0x20] sm:$0xff] %vm7545, %v7490
  %7551 = vst.msk [vmem:[%s5 + $0x28] sm:$0xff] %vm7545, %v7492
  %7552 = vst.msk [vmem:[%s5 + $0x30] sm:$0xff] %vm7545, %v7494
  %7553 = vst.msk [vmem:[%s5 + $0x38] sm:$0xff] %vm7545, %v7496
  %7554 = vst.msk [vmem:[%s5 + $0x40] sm:$0xff] %vm7545, %v7498
  %7555 = vst.msk [vmem:[%s5 + $0x48] sm:$0xff] %vm7545, %v7500
  %7556 = vst.msk [vmem:[%s5 + $0x50] sm:$0xff] %vm7545, %v7502
  %7557 = vst.msk [vmem:[%s5 + $0x58] sm:$0xff] %vm7545, %v7504
  %7558 = vst.msk [vmem:[%s5 + $0x60] sm:$0xff] %vm7545, %v7506
  %7559 = vst.msk [vmem:[%s5 + $0x68] sm:$0xff] %vm7545, %v7508
  %7560 = vst.msk [vmem:[%s5 + $0x70] sm:$0xff] %vm7545, %v7510
  %7561 = vst.msk [vmem:[%s5 + $0x78] sm:$0xff] %vm7545, %v7512
  %7562 = vst.msk [vmem:[%s5 + $0x80] sm:$0xff] %vm7545, %v7514
  %7563 = vst.msk [vmem:[%s5 + $0x88] sm:$0xff] %vm7545, %v7516
  %7564 = vst.msk [vmem:[%s5 + $0x90] sm:$0xff] %vm7545, %v7518
  %7565 = vst.msk [vmem:[%s5 + $0x98] sm:$0xff] %vm7545, %v7520
  %7566 = vst.msk [vmem:[%s5 + $0xa0] sm:$0xff] %vm7545, %v7522
  %7567 = vst.msk [vmem:[%s5 + $0xa8] sm:$0xff] %vm7545, %v7524
  %7568 = vst.msk [vmem:[%s5 + $0xb0] sm:$0xff] %vm7545, %v7526
  %7569 = vst.msk [vmem:[%s5 + $0xb8] sm:$0xff] %vm7545, %v7528
  %7570 = vst.msk [vmem:[%s5 + $0xc0] sm:$0xff] %vm7545, %v7530
  %7571 = vst.msk [vmem:[%s5 + $0xc8] sm:$0xff] %vm7545, %v7532
  %7572 = vst.msk [vmem:[%s5 + $0xd0] sm:$0xff] %vm7545, %v7534
  %7573 = vst.msk [vmem:[%s5 + $0xd8] sm:$0xff] %vm7545, %v7536
  %7574 = vst.msk [vmem:[%s5 + $0xe0] sm:$0xff] %vm7545, %v7538
  %7575 = vst.msk [vmem:[%s5 + $0xe8] sm:$0xff] %vm7545, %v7540
  %7576 = vst.msk [vmem:[%s5 + $0xf0] sm:$0xff] %vm7545, %v7542
  %7577 = vst.msk [vmem:[%s5 + $0xf8] sm:$0xff] %vm7545, %v7544
  // Predicated region
  $region22: #{tpu_custom_call.1} parent=0 // pred_check
    _
  $region23: #{tpu_custom_call.1} parent=0 // pred_check_branch
    %7579 = sbr.rel (0) target = $region25
  $region24: #{tpu_custom_call.1} parent=0 // pred_region
    _
  $region25: #{tpu_custom_call.1} parent=0 // pred_fallthru
    _
  // Predicated region
  $region26: #{tpu_custom_call.1} parent=0 // pred_check
    _
  $region27: #{tpu_custom_call.1} parent=0 // pred_check_branch
    %7581 = sbr.rel (0) target = $region29
  $region28: #{tpu_custom_call.1} parent=0 // pred_region
    _
  $region29: #{tpu_custom_call.1} parent=0 // pred_fallthru
    _

</llo_original>
